<compile_context>
chip_gen: v7x
topology: tpu7x:2x2x1
jax: 0.10.0
libtpu: 0.0.40
codegen_flags: <defaults>
</compile_context>

<pallas_src>
import functools

import jax
import jax.numpy as jnp
from jax import lax
from jax.experimental import pallas as pl
from jax.experimental.pallas import tpu as pltpu

_EPS = 1e-5                 # PyTorch BatchNorm2d default
_MXU_DTYPE = jnp.float32    # set to jnp.bfloat16 for production (f32 acc kept)


def _full_spec(shape):
    """BlockSpec covering the entire array (grid=(1,))."""
    ndim = len(shape)
    return pl.BlockSpec(shape, lambda i, _nd=ndim: (0,) * _nd)


def _residual_block_kernel(x_ref, w1_ref, w2_ref, g1_ref, bt1_ref, g2_ref, bt2_ref,
                           o_ref, pad_ref, *, eps: float):
    """Fused ResidualBlock forward.

    x_ref            : (N, H, W, C)       input, NHWC (channels on lanes)
    w1_ref, w2_ref   : (9*C, C)           im2col conv weights, (ky, kx, cin)-major
    g*_ref, bt*_ref  : (1, C)             BN gamma / beta
    o_ref            : (N, H, W, C)       output
    pad_ref          : (N, H+2, W+2, C)   VMEM zero-halo scratch, reused by both convs
    """
    N, H, W, C = x_ref.shape
    NHW = N * H * W
    Wp = W + 2

    def zero_halo_strips():
        # Zero only the halo strips (not the whole buffer); interior is written
        # per stage, and the strips stay valid for the second conv.
        row0 = jnp.zeros((N, 1, Wp, C), jnp.float32)
        pad_ref[:, 0:1, :, :] = row0
        pad_ref[:, H + 1:H + 2, :, :] = row0
        col0 = jnp.zeros((N, H, 1, C), jnp.float32)
        pad_ref[:, 1:H + 1, 0:1, :] = col0
        pad_ref[:, 1:H + 1, W + 1:W + 2, :] = col0

    def conv3x3(w_ref):
        # im2col: one (NHW, 9C) slab, one MXU matmul with K = 9*C, f32 accumulate.
        taps = []
        for dy in range(3):
            for dx in range(3):
                t = pad_ref[:, dy:dy + H, dx:dx + W, :]          # (N, H, W, C)
                taps.append(t.reshape(NHW, C))
        col = jnp.concatenate(taps, axis=-1)                      # (NHW, 9C)
        return jnp.dot(col.astype(_MXU_DTYPE), w_ref[...].astype(_MXU_DTYPE),
                       preferred_element_type=jnp.float32)        # (NHW, C) f32

    def bn_affine(acc, g_ref, bt_ref):
        # Training-mode BN (batch stats over N,H,W; biased variance), hoisted to a
        # per-channel scale/shift.  Two-pass (centered) variance in f32.
        mean = jnp.mean(acc, axis=0, keepdims=True)                     # (1, C)
        var = jnp.mean(jnp.square(acc - mean), axis=0, keepdims=True)   # (1, C)
        scale = g_ref[...] * lax.rsqrt(var + eps)
        shift = bt_ref[...] - mean * scale
        return scale, shift

    x4 = x_ref[...].astype(jnp.float32)                  # (N, H, W, C)
    x2d = x4.reshape(NHW, C)                             # residual, f32

    # stage 1: conv1 -> bn1 -> relu   (conv bias exactly cancelled by BN mean)
    zero_halo_strips()
    pad_ref[:, 1:H + 1, 1:W + 1, :] = x4
    acc1 = conv3x3(w1_ref)
    s1, b1 = bn_affine(acc1, g1_ref, bt1_ref)
    h = jnp.maximum(acc1 * s1 + b1, 0.0)                 # single fused affine+ReLU pass

    # stage 2: conv2 -> bn2           (same halo scratch; h never leaves VMEM)
    pad_ref[:, 1:H + 1, 1:W + 1, :] = h.reshape(N, H, W, C)
    acc2 = conv3x3(w2_ref)
    s2, b2 = bn_affine(acc2, g2_ref, bt2_ref)

    # residual add + final relu, one fused pass
    y = jnp.maximum(acc2 * s2 + b2 + x2d, 0.0)
    o_ref[...] = y.reshape(N, H, W, C).astype(o_ref.dtype)


def residual_block(x_nchw, params, eps=_EPS):
    """Forward pass equivalent to the PyTorch ResidualBlock (NCHW in/out)."""
    # Layout plumbing stays in the wrapper (free XLA work): NCHW -> NHWC, and the
    # (3,3,Cin,Cout) weights become the im2col (9*Cin, Cout) matrices.
    x = jnp.transpose(x_nchw, (0, 2, 3, 1)).astype(jnp.float32)
    N, H, W, C = x.shape

    w1 = params["w1"].reshape(9 * C, C)      # (ky, kx, cin)-major rows
    w2 = params["w2"].reshape(9 * C, C)
    g1 = params["g1"].reshape(1, C)
    bt1 = params["beta1"].reshape(1, C)
    g2 = params["g2"].reshape(1, C)
    bt2 = params["beta2"].reshape(1, C)

    kernel = functools.partial(_residual_block_kernel, eps=eps)
    y = pl.pallas_call(
        kernel,
        out_shape=jax.ShapeDtypeStruct((N, H, W, C), jnp.float32),
        grid=(1,),
        in_specs=[
            _full_spec((N, H, W, C)),
            _full_spec((9 * C, C)),
            _full_spec((9 * C, C)),
            _full_spec((1, C)),
            _full_spec((1, C)),
            _full_spec((1, C)),
            _full_spec((1, C)),
        ],
        out_specs=_full_spec((N, H, W, C)),
        scratch_shapes=[
            pltpu.VMEM((N, H + 2, W + 2, C), jnp.float32),   # single reused halo scratch
        ],
        compiler_params=pltpu.CompilerParams(
            dimension_semantics=("arbitrary",),
            vmem_limit_bytes=32 * 1024 * 1024,   # explicit budget (safe on v5e/v6e/v7x)
        ),
    )(x, w1, w2, g1, bt1, g2, bt2)
    return jnp.transpose(y, (0, 3, 1, 2))    # NHWC -> NCHW


def init_params(key, channels):
    ks = jax.random.split(key, 8)
    c = channels
    return {
        "w1": 0.1 * jax.random.normal(ks[0], (3, 3, c, c), jnp.float32),   # HWIO
        "b1": 0.1 * jax.random.normal(ks[1], (c,), jnp.float32),   # reference only (BN cancels it)
        "g1": 1.0 + 0.1 * jax.random.normal(ks[2], (c,), jnp.float32),
        "beta1": 0.1 * jax.random.normal(ks[3], (c,), jnp.float32),
        "w2": 0.1 * jax.random.normal(ks[4], (3, 3, c, c), jnp.float32),
        "b2": 0.1 * jax.random.normal(ks[5], (c,), jnp.float32),   # reference only (BN cancels it)
        "g2": 1.0 + 0.1 * jax.random.normal(ks[6], (c,), jnp.float32),
        "beta2": 0.1 * jax.random.normal(ks[7], (c,), jnp.float32),
    }


def _reference_block(x_nchw, params, eps=_EPS):
    """Pure-JAX reference (lax.conv) used only for a correctness check."""
    def conv(x, w, b):
        y = lax.conv_general_dilated(
            x, w, window_strides=(1, 1), padding="SAME",
            dimension_numbers=("NCHW", "HWIO", "NCHW"),
            precision=lax.Precision.HIGHEST)
        return y + b[None, :, None, None]

    def bn(x, g, bt):
        mean = jnp.mean(x, axis=(0, 2, 3), keepdims=True)
        var = jnp.mean((x - mean) ** 2, axis=(0, 2, 3), keepdims=True)
        return (x - mean) * lax.rsqrt(var + eps) * g[None, :, None, None] + bt[None, :, None, None]

    h = jnp.maximum(bn(conv(x_nchw, params["w1"], params["b1"]), params["g1"], params["beta1"]), 0.0)
    y = bn(conv(h, params["w2"], params["b2"]), params["g2"], params["beta2"])
    return jnp.maximum(y + x_nchw, 0.0)


if __name__ == "__main__":
    N, C, H, W = 2, 4, 16, 16

    key = jax.random.PRNGKey(0)
    k_x, k_p = jax.random.split(key)
    x = jax.random.normal(k_x, (N, C, H, W), jnp.float32)  # NCHW, like PyTorch
    params = init_params(k_p, C)

    out = jax.block_until_ready(residual_block(x, params))

    ref = _reference_block(x, params)
    assert out.shape == (N, C, H, W), out.shape
    assert jnp.allclose(out, ref, atol=1e-4, rtol=1e-4), float(jnp.max(jnp.abs(out - ref)))

    print("KERNEL_OK")
</pallas_src>

<mosaic_0001>
module attributes {stable_mosaic.version = 11 : i64} {
  func.func @_residual_block_kernel(%arg0: i32, %arg1: memref<2x16x16x4xf32, #tpu.memory_space<vmem>>, %arg2: memref<36x4xf32, #tpu.memory_space<vmem>>, %arg3: memref<36x4xf32, #tpu.memory_space<vmem>>, %arg4: memref<1x4xf32, #tpu.memory_space<vmem>>, %arg5: memref<1x4xf32, #tpu.memory_space<vmem>>, %arg6: memref<1x4xf32, #tpu.memory_space<vmem>>, %arg7: memref<1x4xf32, #tpu.memory_space<vmem>>, %arg8: memref<2x16x16x4xf32, #tpu.memory_space<vmem>>, %arg9: memref<2x18x18x4xf32, #tpu.memory_space<vmem>>) attributes {dimension_semantics = [#tpu.dimension_semantics<arbitrary>], iteration_bounds = array<i64: 1>, scalar_prefetch = 0 : i64, scratch_operands = 1 : i64, tpu.core_type = #tpu.core_type<tc>, window_params = [{pipeline_mode = #tpu.pipeline_mode<synchronous>, transform_indices = @transform_0, window_bounds = array<i64: 2, 16, 16, 4>}, {pipeline_mode = #tpu.pipeline_mode<synchronous>, transform_indices = @transform_1, window_bounds = array<i64: 36, 4>}, {pipeline_mode = #tpu.pipeline_mode<synchronous>, transform_indices = @transform_2, window_bounds = array<i64: 36, 4>}, {pipeline_mode = #tpu.pipeline_mode<synchronous>, transform_indices = @transform_3, window_bounds = array<i64: 1, 4>}, {pipeline_mode = #tpu.pipeline_mode<synchronous>, transform_indices = @transform_4, window_bounds = array<i64: 1, 4>}, {pipeline_mode = #tpu.pipeline_mode<synchronous>, transform_indices = @transform_5, window_bounds = array<i64: 1, 4>}, {pipeline_mode = #tpu.pipeline_mode<synchronous>, transform_indices = @transform_6, window_bounds = array<i64: 1, 4>}, {pipeline_mode = #tpu.pipeline_mode<synchronous>, transform_indices = @transform_7, window_bounds = array<i64: 2, 16, 16, 4>}]} {
    %c0 = arith.constant 0 : index
    %c0_0 = arith.constant 0 : index
    %c0_1 = arith.constant 0 : index
    %c0_2 = arith.constant 0 : index
    %0 = vector.load %arg1[%c0, %c0_0, %c0_1, %c0_2] : memref<2x16x16x4xf32, #tpu.memory_space<vmem>>, vector<2x16x16x4xf32>
    %1 = vector.shape_cast %0 : vector<2x16x16x4xf32> to vector<512x4xf32>
    %cst = arith.constant 0.000000e+00 : f32
    %2 = vector.broadcast %cst : f32 to vector<2x1x18x4xf32>
    %c0_3 = arith.constant 0 : index
    %c0_4 = arith.constant 0 : index
    %c0_5 = arith.constant 0 : index
    %c0_6 = arith.constant 0 : index
    %3 = vector.load %arg9[%c0_3, %c0_4, %c0_5, %c0_6] : memref<2x18x18x4xf32, #tpu.memory_space<vmem>>, vector<2x1x18x4xf32>
    tpu.vector_store %arg9[%c0_3, %c0_4, %c0_5, %c0_6], %2 {strides = array<i32>} : memref<2x18x18x4xf32, #tpu.memory_space<vmem>>, vector<2x1x18x4xf32>,
    %c0_7 = arith.constant 0 : index
    %c17 = arith.constant 17 : index
    %c0_8 = arith.constant 0 : index
    %c0_9 = arith.constant 0 : index
    %4 = vector.load %arg9[%c0_7, %c17, %c0_8, %c0_9] : memref<2x18x18x4xf32, #tpu.memory_space<vmem>>, vector<2x1x18x4xf32>
    tpu.vector_store %arg9[%c0_7, %c17, %c0_8, %c0_9], %2 {strides = array<i32>} : memref<2x18x18x4xf32, #tpu.memory_space<vmem>>, vector<2x1x18x4xf32>,
    %cst_10 = arith.constant 0.000000e+00 : f32
    %5 = vector.broadcast %cst_10 : f32 to vector<2x16x1x4xf32>
    %c0_11 = arith.constant 0 : index
    %c1 = arith.constant 1 : index
    %c0_12 = arith.constant 0 : index
    %c0_13 = arith.constant 0 : index
    %6 = vector.load %arg9[%c0_11, %c1, %c0_12, %c0_13] : memref<2x18x18x4xf32, #tpu.memory_space<vmem>>, vector<2x16x1x4xf32>
    tpu.vector_store %arg9[%c0_11, %c1, %c0_12, %c0_13], %5 {strides = array<i32>} : memref<2x18x18x4xf32, #tpu.memory_space<vmem>>, vector<2x16x1x4xf32>,
    %c0_14 = arith.constant 0 : index
    %c1_15 = arith.constant 1 : index
    %c17_16 = arith.constant 17 : index
    %c0_17 = arith.constant 0 : index
    %7 = vector.load %arg9[%c0_14, %c1_15, %c17_16, %c0_17] : memref<2x18x18x4xf32, #tpu.memory_space<vmem>>, vector<2x16x1x4xf32>
    tpu.vector_store %arg9[%c0_14, %c1_15, %c17_16, %c0_17], %5 {strides = array<i32>} : memref<2x18x18x4xf32, #tpu.memory_space<vmem>>, vector<2x16x1x4xf32>,
    %c0_18 = arith.constant 0 : index
    %c1_19 = arith.constant 1 : index
    %c1_20 = arith.constant 1 : index
    %c0_21 = arith.constant 0 : index
    %8 = vector.load %arg9[%c0_18, %c1_19, %c1_20, %c0_21] : memref<2x18x18x4xf32, #tpu.memory_space<vmem>>, vector<2x16x16x4xf32>
    tpu.vector_store %arg9[%c0_18, %c1_19, %c1_20, %c0_21], %0 {strides = array<i32>} : memref<2x18x18x4xf32, #tpu.memory_space<vmem>>, vector<2x16x16x4xf32>,
    %c0_22 = arith.constant 0 : index
    %c0_23 = arith.constant 0 : index
    %c0_24 = arith.constant 0 : index
    %c0_25 = arith.constant 0 : index
    %9 = vector.load %arg9[%c0_22, %c0_23, %c0_24, %c0_25] : memref<2x18x18x4xf32, #tpu.memory_space<vmem>>, vector<2x16x16x4xf32>
    %10 = vector.shape_cast %9 : vector<2x16x16x4xf32> to vector<512x4xf32>
    %c0_26 = arith.constant 0 : index
    %c0_27 = arith.constant 0 : index
    %c1_28 = arith.constant 1 : index
    %c0_29 = arith.constant 0 : index
    %11 = vector.load %arg9[%c0_26, %c0_27, %c1_28, %c0_29] : memref<2x18x18x4xf32, #tpu.memory_space<vmem>>, vector<2x16x16x4xf32>
    %12 = vector.shape_cast %11 : vector<2x16x16x4xf32> to vector<512x4xf32>
    %c0_30 = arith.constant 0 : index
    %c0_31 = arith.constant 0 : index
    %c2 = arith.constant 2 : index
    %c0_32 = arith.constant 0 : index
    %13 = vector.load %arg9[%c0_30, %c0_31, %c2, %c0_32] : memref<2x18x18x4xf32, #tpu.memory_space<vmem>>, vector<2x16x16x4xf32>
    %14 = vector.shape_cast %13 : vector<2x16x16x4xf32> to vector<512x4xf32>
    %c0_33 = arith.constant 0 : index
    %c1_34 = arith.constant 1 : index
    %c0_35 = arith.constant 0 : index
    %c0_36 = arith.constant 0 : index
    %15 = vector.load %arg9[%c0_33, %c1_34, %c0_35, %c0_36] : memref<2x18x18x4xf32, #tpu.memory_space<vmem>>, vector<2x16x16x4xf32>
    %16 = vector.shape_cast %15 : vector<2x16x16x4xf32> to vector<512x4xf32>
    %c0_37 = arith.constant 0 : index
    %c1_38 = arith.constant 1 : index
    %c1_39 = arith.constant 1 : index
    %c0_40 = arith.constant 0 : index
    %17 = vector.load %arg9[%c0_37, %c1_38, %c1_39, %c0_40] : memref<2x18x18x4xf32, #tpu.memory_space<vmem>>, vector<2x16x16x4xf32>
    %18 = vector.shape_cast %17 : vector<2x16x16x4xf32> to vector<512x4xf32>
    %c0_41 = arith.constant 0 : index
    %c1_42 = arith.constant 1 : index
    %c2_43 = arith.constant 2 : index
    %c0_44 = arith.constant 0 : index
    %19 = vector.load %arg9[%c0_41, %c1_42, %c2_43, %c0_44] : memref<2x18x18x4xf32, #tpu.memory_space<vmem>>, vector<2x16x16x4xf32>
    %20 = vector.shape_cast %19 : vector<2x16x16x4xf32> to vector<512x4xf32>
    %c0_45 = arith.constant 0 : index
    %c2_46 = arith.constant 2 : index
    %c0_47 = arith.constant 0 : index
    %c0_48 = arith.constant 0 : index
    %21 = vector.load %arg9[%c0_45, %c2_46, %c0_47, %c0_48] : memref<2x18x18x4xf32, #tpu.memory_space<vmem>>, vector<2x16x16x4xf32>
    %22 = vector.shape_cast %21 : vector<2x16x16x4xf32> to vector<512x4xf32>
    %c0_49 = arith.constant 0 : index
    %c2_50 = arith.constant 2 : index
    %c1_51 = arith.constant 1 : index
    %c0_52 = arith.constant 0 : index
    %23 = vector.load %arg9[%c0_49, %c2_50, %c1_51, %c0_52] : memref<2x18x18x4xf32, #tpu.memory_space<vmem>>, vector<2x16x16x4xf32>
    %24 = vector.shape_cast %23 : vector<2x16x16x4xf32> to vector<512x4xf32>
    %c0_53 = arith.constant 0 : index
    %c2_54 = arith.constant 2 : index
    %c2_55 = arith.constant 2 : index
    %c0_56 = arith.constant 0 : index
    %25 = vector.load %arg9[%c0_53, %c2_54, %c2_55, %c0_56] : memref<2x18x18x4xf32, #tpu.memory_space<vmem>>, vector<2x16x16x4xf32>
    %26 = vector.shape_cast %25 : vector<2x16x16x4xf32> to vector<512x4xf32>
    %27 = tpu.concatenate %10, %12, %14, %16, %18, %20, %22, %24, %26 in 1 : vector<512x4xf32>, vector<512x4xf32>, vector<512x4xf32>, vector<512x4xf32>, vector<512x4xf32>, vector<512x4xf32>, vector<512x4xf32>, vector<512x4xf32>, vector<512x4xf32> -> vector<512x36xf32>
    %c0_57 = arith.constant 0 : index
    %c0_58 = arith.constant 0 : index
    %28 = vector.load %arg2[%c0_57, %c0_58] : memref<36x4xf32, #tpu.memory_space<vmem>>, vector<36x4xf32>
    %cst_59 = arith.constant dense<0.000000e+00> : vector<512x4xf32>
    %29 = tpu.matmul %27, %28, %cst_59 {dimension_numbers = #tpu.dot_dimension_numbers<[1], [0], [0], [1], [0, 0, 1, 1], [], []>} : vector<512x36xf32>, vector<36x4xf32>, vector<512x4xf32> -> vector<512x4xf32>
    %cst_60 = arith.constant dense<0.000000e+00> : vector<4xf32>
    %30 = vector.multi_reduction <add>, %29, %cst_60 [0] : vector<512x4xf32> to vector<4xf32>
    %31 = vector.shape_cast %30 : vector<4xf32> to vector<1x4xf32>
    %cst_61 = arith.constant 5.120000e+02 : f32
    %32 = vector.broadcast %cst_61 : f32 to vector<1x4xf32>
    %33 = arith.divf %31, %32 : vector<1x4xf32>
    %34 = vector.broadcast %33 : vector<1x4xf32> to vector<512x4xf32>
    %35 = arith.subf %29, %34 : vector<512x4xf32>
    %36 = arith.mulf %35, %35 : vector<512x4xf32>
    %cst_62 = arith.constant dense<0.000000e+00> : vector<4xf32>
    %37 = vector.multi_reduction <add>, %36, %cst_62 [0] : vector<512x4xf32> to vector<4xf32>
    %38 = vector.shape_cast %37 : vector<4xf32> to vector<1x4xf32>
    %cst_63 = arith.constant 5.120000e+02 : f32
    %39 = vector.broadcast %cst_63 : f32 to vector<1x4xf32>
    %40 = arith.divf %38, %39 : vector<1x4xf32>
    %c0_64 = arith.constant 0 : index
    %c0_65 = arith.constant 0 : index
    %41 = vector.load %arg4[%c0_64, %c0_65] : memref<1x4xf32, #tpu.memory_space<vmem>>, vector<1x4xf32>
    %cst_66 = arith.constant 9.99999974E-6 : f32
    %42 = vector.broadcast %cst_66 : f32 to vector<1x4xf32>
    %43 = arith.addf %40, %42 : vector<1x4xf32>
    %44 = math.rsqrt %43 : vector<1x4xf32>
    %45 = arith.mulf %41, %44 : vector<1x4xf32>
    %c0_67 = arith.constant 0 : index
    %c0_68 = arith.constant 0 : index
    %46 = vector.load %arg5[%c0_67, %c0_68] : memref<1x4xf32, #tpu.memory_space<vmem>>, vector<1x4xf32>
    %47 = arith.mulf %33, %45 : vector<1x4xf32>
    %48 = arith.subf %46, %47 : vector<1x4xf32>
    %49 = vector.broadcast %45 : vector<1x4xf32> to vector<512x4xf32>
    %50 = arith.mulf %29, %49 : vector<512x4xf32>
    %51 = vector.broadcast %48 : vector<1x4xf32> to vector<512x4xf32>
    %52 = arith.addf %50, %51 : vector<512x4xf32>
    %cst_69 = arith.constant 0.000000e+00 : f32
    %53 = vector.broadcast %cst_69 : f32 to vector<512x4xf32>
    %54 = arith.maximumf %52, %53 : vector<512x4xf32>
    %55 = vector.shape_cast %54 : vector<512x4xf32> to vector<2x16x16x4xf32>
    %c0_70 = arith.constant 0 : index
    %c1_71 = arith.constant 1 : index
    %c1_72 = arith.constant 1 : index
    %c0_73 = arith.constant 0 : index
    %56 = vector.load %arg9[%c0_70, %c1_71, %c1_72, %c0_73] : memref<2x18x18x4xf32, #tpu.memory_space<vmem>>, vector<2x16x16x4xf32>
    tpu.vector_store %arg9[%c0_70, %c1_71, %c1_72, %c0_73], %55 {strides = array<i32>} : memref<2x18x18x4xf32, #tpu.memory_space<vmem>>, vector<2x16x16x4xf32>,
    %c0_74 = arith.constant 0 : index
    %c0_75 = arith.constant 0 : index
    %c0_76 = arith.constant 0 : index
    %c0_77 = arith.constant 0 : index
    %57 = vector.load %arg9[%c0_74, %c0_75, %c0_76, %c0_77] : memref<2x18x18x4xf32, #tpu.memory_space<vmem>>, vector<2x16x16x4xf32>
    %58 = vector.shape_cast %57 : vector<2x16x16x4xf32> to vector<512x4xf32>
    %c0_78 = arith.constant 0 : index
    %c0_79 = arith.constant 0 : index
    %c1_80 = arith.constant 1 : index
    %c0_81 = arith.constant 0 : index
    %59 = vector.load %arg9[%c0_78, %c0_79, %c1_80, %c0_81] : memref<2x18x18x4xf32, #tpu.memory_space<vmem>>, vector<2x16x16x4xf32>
    %60 = vector.shape_cast %59 : vector<2x16x16x4xf32> to vector<512x4xf32>
    %c0_82 = arith.constant 0 : index
    %c0_83 = arith.constant 0 : index
    %c2_84 = arith.constant 2 : index
    %c0_85 = arith.constant 0 : index
    %61 = vector.load %arg9[%c0_82, %c0_83, %c2_84, %c0_85] : memref<2x18x18x4xf32, #tpu.memory_space<vmem>>, vector<2x16x16x4xf32>
    %62 = vector.shape_cast %61 : vector<2x16x16x4xf32> to vector<512x4xf32>
    %c0_86 = arith.constant 0 : index
    %c1_87 = arith.constant 1 : index
    %c0_88 = arith.constant 0 : index
    %c0_89 = arith.constant 0 : index
    %63 = vector.load %arg9[%c0_86, %c1_87, %c0_88, %c0_89] : memref<2x18x18x4xf32, #tpu.memory_space<vmem>>, vector<2x16x16x4xf32>
    %64 = vector.shape_cast %63 : vector<2x16x16x4xf32> to vector<512x4xf32>
    %c0_90 = arith.constant 0 : index
    %c1_91 = arith.constant 1 : index
    %c1_92 = arith.constant 1 : index
    %c0_93 = arith.constant 0 : index
    %65 = vector.load %arg9[%c0_90, %c1_91, %c1_92, %c0_93] : memref<2x18x18x4xf32, #tpu.memory_space<vmem>>, vector<2x16x16x4xf32>
    %66 = vector.shape_cast %65 : vector<2x16x16x4xf32> to vector<512x4xf32>
    %c0_94 = arith.constant 0 : index
    %c1_95 = arith.constant 1 : index
    %c2_96 = arith.constant 2 : index
    %c0_97 = arith.constant 0 : index
    %67 = vector.load %arg9[%c0_94, %c1_95, %c2_96, %c0_97] : memref<2x18x18x4xf32, #tpu.memory_space<vmem>>, vector<2x16x16x4xf32>
    %68 = vector.shape_cast %67 : vector<2x16x16x4xf32> to vector<512x4xf32>
    %c0_98 = arith.constant 0 : index
    %c2_99 = arith.constant 2 : index
    %c0_100 = arith.constant 0 : index
    %c0_101 = arith.constant 0 : index
    %69 = vector.load %arg9[%c0_98, %c2_99, %c0_100, %c0_101] : memref<2x18x18x4xf32, #tpu.memory_space<vmem>>, vector<2x16x16x4xf32>
    %70 = vector.shape_cast %69 : vector<2x16x16x4xf32> to vector<512x4xf32>
    %c0_102 = arith.constant 0 : index
    %c2_103 = arith.constant 2 : index
    %c1_104 = arith.constant 1 : index
    %c0_105 = arith.constant 0 : index
    %71 = vector.load %arg9[%c0_102, %c2_103, %c1_104, %c0_105] : memref<2x18x18x4xf32, #tpu.memory_space<vmem>>, vector<2x16x16x4xf32>
    %72 = vector.shape_cast %71 : vector<2x16x16x4xf32> to vector<512x4xf32>
    %c0_106 = arith.constant 0 : index
    %c2_107 = arith.constant 2 : index
    %c2_108 = arith.constant 2 : index
    %c0_109 = arith.constant 0 : index
    %73 = vector.load %arg9[%c0_106, %c2_107, %c2_108, %c0_109] : memref<2x18x18x4xf32, #tpu.memory_space<vmem>>, vector<2x16x16x4xf32>
    %74 = vector.shape_cast %73 : vector<2x16x16x4xf32> to vector<512x4xf32>
    %75 = tpu.concatenate %58, %60, %62, %64, %66, %68, %70, %72, %74 in 1 : vector<512x4xf32>, vector<512x4xf32>, vector<512x4xf32>, vector<512x4xf32>, vector<512x4xf32>, vector<512x4xf32>, vector<512x4xf32>, vector<512x4xf32>, vector<512x4xf32> -> vector<512x36xf32>
    %c0_110 = arith.constant 0 : index
    %c0_111 = arith.constant 0 : index
    %76 = vector.load %arg3[%c0_110, %c0_111] : memref<36x4xf32, #tpu.memory_space<vmem>>, vector<36x4xf32>
    %cst_112 = arith.constant dense<0.000000e+00> : vector<512x4xf32>
    %77 = tpu.matmul %75, %76, %cst_112 {dimension_numbers = #tpu.dot_dimension_numbers<[1], [0], [0], [1], [0, 0, 1, 1], [], []>} : vector<512x36xf32>, vector<36x4xf32>, vector<512x4xf32> -> vector<512x4xf32>
    %cst_113 = arith.constant dense<0.000000e+00> : vector<4xf32>
    %78 = vector.multi_reduction <add>, %77, %cst_113 [0] : vector<512x4xf32> to vector<4xf32>
    %79 = vector.shape_cast %78 : vector<4xf32> to vector<1x4xf32>
    %cst_114 = arith.constant 5.120000e+02 : f32
    %80 = vector.broadcast %cst_114 : f32 to vector<1x4xf32>
    %81 = arith.divf %79, %80 : vector<1x4xf32>
    %82 = vector.broadcast %81 : vector<1x4xf32> to vector<512x4xf32>
    %83 = arith.subf %77, %82 : vector<512x4xf32>
    %84 = arith.mulf %83, %83 : vector<512x4xf32>
    %cst_115 = arith.constant dense<0.000000e+00> : vector<4xf32>
    %85 = vector.multi_reduction <add>, %84, %cst_115 [0] : vector<512x4xf32> to vector<4xf32>
    %86 = vector.shape_cast %85 : vector<4xf32> to vector<1x4xf32>
    %cst_116 = arith.constant 5.120000e+02 : f32
    %87 = vector.broadcast %cst_116 : f32 to vector<1x4xf32>
    %88 = arith.divf %86, %87 : vector<1x4xf32>
    %c0_117 = arith.constant 0 : index
    %c0_118 = arith.constant 0 : index
    %89 = vector.load %arg6[%c0_117, %c0_118] : memref<1x4xf32, #tpu.memory_space<vmem>>, vector<1x4xf32>
    %cst_119 = arith.constant 9.99999974E-6 : f32
    %90 = vector.broadcast %cst_119 : f32 to vector<1x4xf32>
    %91 = arith.addf %88, %90 : vector<1x4xf32>
    %92 = math.rsqrt %91 : vector<1x4xf32>
    %93 = arith.mulf %89, %92 : vector<1x4xf32>
    %c0_120 = arith.constant 0 : index
    %c0_121 = arith.constant 0 : index
    %94 = vector.load %arg7[%c0_120, %c0_121] : memref<1x4xf32, #tpu.memory_space<vmem>>, vector<1x4xf32>
    %95 = arith.mulf %81, %93 : vector<1x4xf32>
    %96 = arith.subf %94, %95 : vector<1x4xf32>
    %97 = vector.broadcast %93 : vector<1x4xf32> to vector<512x4xf32>
    %98 = arith.mulf %77, %97 : vector<512x4xf32>
    %99 = vector.broadcast %96 : vector<1x4xf32> to vector<512x4xf32>
    %100 = arith.addf %98, %99 : vector<512x4xf32>
    %101 = arith.addf %100, %1 : vector<512x4xf32>
    %cst_122 = arith.constant 0.000000e+00 : f32
    %102 = vector.broadcast %cst_122 : f32 to vector<512x4xf32>
    %103 = arith.maximumf %101, %102 : vector<512x4xf32>
    %104 = vector.shape_cast %103 : vector<512x4xf32> to vector<2x16x16x4xf32>
    %c0_123 = arith.constant 0 : index
    %c0_124 = arith.constant 0 : index
    %c0_125 = arith.constant 0 : index
    %c0_126 = arith.constant 0 : index
    %105 = vector.load %arg8[%c0_123, %c0_124, %c0_125, %c0_126] : memref<2x16x16x4xf32, #tpu.memory_space<vmem>>, vector<2x16x16x4xf32>
    tpu.vector_store %arg8[%c0_123, %c0_124, %c0_125, %c0_126], %104 {strides = array<i32>} : memref<2x16x16x4xf32, #tpu.memory_space<vmem>>, vector<2x16x16x4xf32>,
    return
  }
  func.func @transform_0(%arg0: i32) -> (i32, i32, i32, i32) {
    %c0_i32 = arith.constant 0 : i32
    %c0_i32_0 = arith.constant 0 : i32
    %c0_i32_1 = arith.constant 0 : i32
    %c0_i32_2 = arith.constant 0 : i32
    %c0_i32_3 = arith.constant 0 : i32
    return %c0_i32, %c0_i32_0, %c0_i32_1, %c0_i32_2 : i32, i32, i32, i32
  }
  func.func @transform_1(%arg0: i32) -> (i32, i32) {
    %c0_i32 = arith.constant 0 : i32
    %c0_i32_0 = arith.constant 0 : i32
    %c0_i32_1 = arith.constant 0 : i32
    return %c0_i32, %c0_i32_0 : i32, i32
  }
  func.func @transform_2(%arg0: i32) -> (i32, i32) {
    %c0_i32 = arith.constant 0 : i32
    %c0_i32_0 = arith.constant 0 : i32
    %c0_i32_1 = arith.constant 0 : i32
    return %c0_i32, %c0_i32_0 : i32, i32
  }
  func.func @transform_3(%arg0: i32) -> (i32, i32) {
    %c0_i32 = arith.constant 0 : i32
    %c0_i32_0 = arith.constant 0 : i32
    %c0_i32_1 = arith.constant 0 : i32
    return %c0_i32, %c0_i32_0 : i32, i32
  }
  func.func @transform_4(%arg0: i32) -> (i32, i32) {
    %c0_i32 = arith.constant 0 : i32
    %c0_i32_0 = arith.constant 0 : i32
    %c0_i32_1 = arith.constant 0 : i32
    return %c0_i32, %c0_i32_0 : i32, i32
  }
  func.func @transform_5(%arg0: i32) -> (i32, i32) {
    %c0_i32 = arith.constant 0 : i32
    %c0_i32_0 = arith.constant 0 : i32
    %c0_i32_1 = arith.constant 0 : i32
    return %c0_i32, %c0_i32_0 : i32, i32
  }
  func.func @transform_6(%arg0: i32) -> (i32, i32) {
    %c0_i32 = arith.constant 0 : i32
    %c0_i32_0 = arith.constant 0 : i32
    %c0_i32_1 = arith.constant 0 : i32
    return %c0_i32, %c0_i32_0 : i32, i32
  }
  func.func @transform_7(%arg0: i32) -> (i32, i32, i32, i32) {
    %c0_i32 = arith.constant 0 : i32
    %c0_i32_0 = arith.constant 0 : i32
    %c0_i32_1 = arith.constant 0 : i32
    %c0_i32_2 = arith.constant 0 : i32
    %c0_i32_3 = arith.constant 0 : i32
    return %c0_i32, %c0_i32_0, %c0_i32_1, %c0_i32_2 : i32, i32, i32, i32
  }
}

</mosaic_0001>

<llo_original>
// kernel: tpu_custom_call.1
$region0: #{tpu_custom_call.1}
  #allocation0 [shape = 'u32[]', space=smem, size = 0x4, offset = 0x4, fixed_abs, tag = 'smem constant byte address 0x4 - core index']
  #allocation1 [shape = 'u32[144,128]{1,0:T(1,128)}', space=vmem, size = 0x12000, scoped, tag = 'internal scratch']
  #allocation2 [shape = 'f32[2,18,18,4]{3,2,1,0:T(8,128)}', space=vmem, size = 0x6c000, scoped, tag = 'scratch operand']
  %s0 = inlined_call_operand.vmem [shape: f32[2,16,16,4], index: 0, kind: input, shape index: {}]
  %s1 = inlined_call_operand.vmem [shape: f32[36,4], index: 1, kind: input, shape index: {}]
  %s2 = inlined_call_operand.vmem [shape: f32[36,4], index: 2, kind: input, shape index: {}]
  %s3 = inlined_call_operand.vmem [shape: f32[1,4], index: 3, kind: input, shape index: {}]
  %s4 = inlined_call_operand.vmem [shape: f32[1,4], index: 4, kind: input, shape index: {}]
  %s5 = inlined_call_operand.vmem [shape: f32[1,4], index: 5, kind: input, shape index: {}]
  %s6 = inlined_call_operand.vmem [shape: f32[1,4], index: 6, kind: input, shape index: {}]
  %s7 = inlined_call_operand.vmem [shape: f32[2,16,16,4], index: 7, kind: output, shape index: {}]
  %s8 = sld [smem:[#allocation0]]
  $region38: #{tpu_custom_call.1} parent=0
    _
  %s10 = ssub.s32 1, %s8
  %s11 = scalar_select 0, %s10, %s8
  // Predicated region
  $region2: #{tpu_custom_call.1} parent=0 // pred_check
    _
  $region3: #{tpu_custom_call.1} parent=0 // pred_check_branch
    %13 = sbr.rel (0) target = $region5
  $region4: #{tpu_custom_call.1} parent=0 // pred_region
    _
  $region5: #{tpu_custom_call.1} parent=0 // pred_fallthru
    _
  // Predicated region
  $region6: #{tpu_custom_call.1} parent=0 // pred_check
    _
  $region7: #{tpu_custom_call.1} parent=0 // pred_check_branch
    %15 = sbr.rel (0) target = $region9
  $region8: #{tpu_custom_call.1} parent=0 // pred_region
    _
  $region9: #{tpu_custom_call.1} parent=0 // pred_fallthru
    _
  // Predicated region
  $region10: #{tpu_custom_call.1} parent=0 // pred_check
    _
  $region11: #{tpu_custom_call.1} parent=0 // pred_check_branch
    %17 = sbr.rel (0) target = $region13
  $region12: #{tpu_custom_call.1} parent=0 // pred_region
    _
  $region13: #{tpu_custom_call.1} parent=0 // pred_fallthru
    _
  // Predicated region
  $region14: #{tpu_custom_call.1} parent=0 // pred_check
    _
  $region15: #{tpu_custom_call.1} parent=0 // pred_check_branch
    %19 = sbr.rel (0) target = $region17
  $region16: #{tpu_custom_call.1} parent=0 // pred_region
    _
  $region17: #{tpu_custom_call.1} parent=0 // pred_fallthru
    _
  // Predicated region
  $region18: #{tpu_custom_call.1} parent=0 // pred_check
    _
  $region19: #{tpu_custom_call.1} parent=0 // pred_check_branch
    %21 = sbr.rel (0) target = $region21
  $region20: #{tpu_custom_call.1} parent=0 // pred_region
    _
  $region21: #{tpu_custom_call.1} parent=0 // pred_fallthru
    _
  // Predicated region
  $region22: #{tpu_custom_call.1} parent=0 // pred_check
    _
  $region23: #{tpu_custom_call.1} parent=0 // pred_check_branch
    %23 = sbr.rel (0) target = $region25
  $region24: #{tpu_custom_call.1} parent=0 // pred_region
    _
  $region25: #{tpu_custom_call.1} parent=0 // pred_fallthru
    _
  // Predicated region
  $region26: #{tpu_custom_call.1} parent=0 // pred_check
    _
  $region27: #{tpu_custom_call.1} parent=0 // pred_check_branch
    %25 = sbr.rel (0) target = $region29
  $region28: #{tpu_custom_call.1} parent=0 // pred_region
    _
  $region29: #{tpu_custom_call.1} parent=0 // pred_fallthru
    _
  %v26 = vld [vmem:[%s0] sm:$0xff]
  %v27 = vld [vmem:[%s0 + $0x8] sm:$0xff]
  %v28 = vld [vmem:[%s0 + $0x10] sm:$0xff]
  %v29 = vld [vmem:[%s0 + $0x18] sm:$0xff]
  %v30 = vld [vmem:[%s0 + $0x20] sm:$0xff]
  %v31 = vld [vmem:[%s0 + $0x28] sm:$0xff]
  %v32 = vld [vmem:[%s0 + $0x30] sm:$0xff]
  %v33 = vld [vmem:[%s0 + $0x38] sm:$0xff]
  %v34 = vld [vmem:[%s0 + $0x40] sm:$0xff]
  %v35 = vld [vmem:[%s0 + $0x48] sm:$0xff]
  %v36 = vld [vmem:[%s0 + $0x50] sm:$0xff]
  %v37 = vld [vmem:[%s0 + $0x58] sm:$0xff]
  %v38 = vld [vmem:[%s0 + $0x60] sm:$0xff]
  %v39 = vld [vmem:[%s0 + $0x68] sm:$0xff]
  %v40 = vld [vmem:[%s0 + $0x70] sm:$0xff]
  %v41 = vld [vmem:[%s0 + $0x78] sm:$0xff]
  %v42 = vld [vmem:[%s0 + $0x80] sm:$0xff]
  %v43 = vld [vmem:[%s0 + $0x88] sm:$0xff]
  %v44 = vld [vmem:[%s0 + $0x90] sm:$0xff]
  %v45 = vld [vmem:[%s0 + $0x98] sm:$0xff]
  %v46 = vld [vmem:[%s0 + $0xa0] sm:$0xff]
  %v47 = vld [vmem:[%s0 + $0xa8] sm:$0xff]
  %v48 = vld [vmem:[%s0 + $0xb0] sm:$0xff]
  %v49 = vld [vmem:[%s0 + $0xb8] sm:$0xff]
  %v50 = vld [vmem:[%s0 + $0xc0] sm:$0xff]
  %v51 = vld [vmem:[%s0 + $0xc8] sm:$0xff]
  %v52 = vld [vmem:[%s0 + $0xd0] sm:$0xff]
  %v53 = vld [vmem:[%s0 + $0xd8] sm:$0xff]
  %v54 = vld [vmem:[%s0 + $0xe0] sm:$0xff]
  %v55 = vld [vmem:[%s0 + $0xe8] sm:$0xff]
  %v56 = vld [vmem:[%s0 + $0xf0] sm:$0xff]
  %v57 = vld [vmem:[%s0 + $0xf8] sm:$0xff]
  %v58 = vld [vmem:[%s0 + $0x100] sm:$0xff]
  %v59 = vld [vmem:[%s0 + $0x108] sm:$0xff]
  %v60 = vld [vmem:[%s0 + $0x110] sm:$0xff]
  %v61 = vld [vmem:[%s0 + $0x118] sm:$0xff]
  %v62 = vld [vmem:[%s0 + $0x120] sm:$0xff]
  %v63 = vld [vmem:[%s0 + $0x128] sm:$0xff]
  %v64 = vld [vmem:[%s0 + $0x130] sm:$0xff]
  %v65 = vld [vmem:[%s0 + $0x138] sm:$0xff]
  %v66 = vld [vmem:[%s0 + $0x140] sm:$0xff]
  %v67 = vld [vmem:[%s0 + $0x148] sm:$0xff]
  %v68 = vld [vmem:[%s0 + $0x150] sm:$0xff]
  %v69 = vld [vmem:[%s0 + $0x158] sm:$0xff]
  %v70 = vld [vmem:[%s0 + $0x160] sm:$0xff]
  %v71 = vld [vmem:[%s0 + $0x168] sm:$0xff]
  %v72 = vld [vmem:[%s0 + $0x170] sm:$0xff]
  %v73 = vld [vmem:[%s0 + $0x178] sm:$0xff]
  %v74 = vld [vmem:[%s0 + $0x180] sm:$0xff]
  %v75 = vld [vmem:[%s0 + $0x188] sm:$0xff]
  %v76 = vld [vmem:[%s0 + $0x190] sm:$0xff]
  %v77 = vld [vmem:[%s0 + $0x198] sm:$0xff]
  %v78 = vld [vmem:[%s0 + $0x1a0] sm:$0xff]
  %v79 = vld [vmem:[%s0 + $0x1a8] sm:$0xff]
  %v80 = vld [vmem:[%s0 + $0x1b0] sm:$0xff]
  %v81 = vld [vmem:[%s0 + $0x1b8] sm:$0xff]
  %v82 = vld [vmem:[%s0 + $0x1c0] sm:$0xff]
  %v83 = vld [vmem:[%s0 + $0x1c8] sm:$0xff]
  %v84 = vld [vmem:[%s0 + $0x1d0] sm:$0xff]
  %v85 = vld [vmem:[%s0 + $0x1d8] sm:$0xff]
  %v86 = vld [vmem:[%s0 + $0x1e0] sm:$0xff]
  %v87 = vld [vmem:[%s0 + $0x1e8] sm:$0xff]
  %v88 = vld [vmem:[%s0 + $0x1f0] sm:$0xff]
  %v89 = vld [vmem:[%s0 + $0x1f8] sm:$0xff]
  %vm90 = vcmask 31744
  %91 = vst.msk [vmem:[#allocation2] sm:$0xff] %vm90, 0.0
  %92 = vst.msk [vmem:[#allocation2 + $0x8] sm:$0xff] %vm90, 0.0
  %vm93 = vcmask 25600
  %94 = vst.msk [vmem:[#allocation2 + $0x10] sm:$0x3] %vm93, 0.0
  %95 = vst.msk [vmem:[#allocation2 + $0x1b0] sm:$0xff] %vm90, 0.0
  %96 = vst.msk [vmem:[#allocation2 + $0x1b8] sm:$0xff] %vm90, 0.0
  %97 = vst.msk [vmem:[#allocation2 + $0x1c0] sm:$0x3] %vm93, 0.0
  %s98 = scalar_lea.vmem [#allocation2], 408
  %99 = vst.msk [vmem:[%s98] sm:$0xff] %vm90, 0.0
  %100 = vst.msk [vmem:[%s98 + $0x8] sm:$0xff] %vm90, 0.0
  %101 = vst.msk [vmem:[%s98 + $0x10] sm:$0x3] %vm93, 0.0
  %102 = vst.msk [vmem:[%s98 + $0x1b0] sm:$0xff] %vm90, 0.0
  %103 = vst.msk [vmem:[%s98 + $0x1b8] sm:$0xff] %vm90, 0.0
  %104 = vst.msk [vmem:[%s98 + $0x1c0] sm:$0x3] %vm93, 0.0
  %s105 = scalar_lea.vmem [#allocation2], 24
  %vm106 = vcmask 24576
  %107 = vst.msk [vmem:[%s105] sm:$0x1] %vm106, 0.0
  %108 = vst.msk [vmem:[%s105 + $0x18] sm:$0x1] %vm106, 0.0
  %109 = vst.msk [vmem:[%s105 + $0x30] sm:$0x1] %vm106, 0.0
  %110 = vst.msk [vmem:[%s105 + $0x48] sm:$0x1] %vm106, 0.0
  %111 = vst.msk [vmem:[%s105 + $0x60] sm:$0x1] %vm106, 0.0
  %112 = vst.msk [vmem:[%s105 + $0x78] sm:$0x1] %vm106, 0.0
  %113 = vst.msk [vmem:[%s105 + $0x90] sm:$0x1] %vm106, 0.0
  %114 = vst.msk [vmem:[%s105 + $0xa8] sm:$0x1] %vm106, 0.0
  %115 = vst.msk [vmem:[%s105 + $0xc0] sm:$0x1] %vm106, 0.0
  %116 = vst.msk [vmem:[%s105 + $0xd8] sm:$0x1] %vm106, 0.0
  %117 = vst.msk [vmem:[%s105 + $0xf0] sm:$0x1] %vm106, 0.0
  %118 = vst.msk [vmem:[%s105 + $0x108] sm:$0x1] %vm106, 0.0
  %119 = vst.msk [vmem:[%s105 + $0x120] sm:$0x1] %vm106, 0.0
  %120 = vst.msk [vmem:[%s105 + $0x138] sm:$0x1] %vm106, 0.0
  %121 = vst.msk [vmem:[%s105 + $0x150] sm:$0x1] %vm106, 0.0
  %122 = vst.msk [vmem:[%s105 + $0x168] sm:$0x1] %vm106, 0.0
  %123 = vst.msk [vmem:[%s105 + $0x1b0] sm:$0x1] %vm106, 0.0
  %124 = vst.msk [vmem:[%s105 + $0x1c8] sm:$0x1] %vm106, 0.0
  %125 = vst.msk [vmem:[%s105 + $0x1e0] sm:$0x1] %vm106, 0.0
  %126 = vst.msk [vmem:[%s105 + $0x1f8] sm:$0x1] %vm106, 0.0
  %127 = vst.msk [vmem:[%s105 + $0x210] sm:$0x1] %vm106, 0.0
  %128 = vst.msk [vmem:[%s105 + $0x228] sm:$0x1] %vm106, 0.0
  %129 = vst.msk [vmem:[%s105 + $0x240] sm:$0x1] %vm106, 0.0
  %130 = vst.msk [vmem:[%s105 + $0x258] sm:$0x1] %vm106, 0.0
  %131 = vst.msk [vmem:[%s105 + $0x270] sm:$0x1] %vm106, 0.0
  %132 = vst.msk [vmem:[%s105 + $0x288] sm:$0x1] %vm106, 0.0
  %133 = vst.msk [vmem:[%s105 + $0x2a0] sm:$0x1] %vm106, 0.0
  %134 = vst.msk [vmem:[%s105 + $0x2b8] sm:$0x1] %vm106, 0.0
  %135 = vst.msk [vmem:[%s105 + $0x2d0] sm:$0x1] %vm106, 0.0
  %136 = vst.msk [vmem:[%s105 + $0x2e8] sm:$0x1] %vm106, 0.0
  %137 = vst.msk [vmem:[%s105 + $0x300] sm:$0x1] %vm106, 0.0
  %138 = vst.msk [vmem:[%s105 + $0x318] sm:$0x1] %vm106, 0.0
  %139 = vst.msk [vmem:[%s105 + $0x11] sm:$0x1] %vm106, 0.0
  %140 = vst.msk [vmem:[%s105 + $0x29] sm:$0x1] %vm106, 0.0
  %141 = vst.msk [vmem:[%s105 + $0x41] sm:$0x1] %vm106, 0.0
  %142 = vst.msk [vmem:[%s105 + $0x59] sm:$0x1] %vm106, 0.0
  %143 = vst.msk [vmem:[%s105 + $0x71] sm:$0x1] %vm106, 0.0
  %144 = vst.msk [vmem:[%s105 + $0x89] sm:$0x1] %vm106, 0.0
  %145 = vst.msk [vmem:[%s105 + $0xa1] sm:$0x1] %vm106, 0.0
  %146 = vst.msk [vmem:[%s105 + $0xb9] sm:$0x1] %vm106, 0.0
  %147 = vst.msk [vmem:[%s105 + $0xd1] sm:$0x1] %vm106, 0.0
  %148 = vst.msk [vmem:[%s105 + $0xe9] sm:$0x1] %vm106, 0.0
  %149 = vst.msk [vmem:[%s105 + $0x101] sm:$0x1] %vm106, 0.0
  %150 = vst.msk [vmem:[%s105 + $0x119] sm:$0x1] %vm106, 0.0
  %151 = vst.msk [vmem:[%s105 + $0x131] sm:$0x1] %vm106, 0.0
  %152 = vst.msk [vmem:[%s105 + $0x149] sm:$0x1] %vm106, 0.0
  %153 = vst.msk [vmem:[%s105 + $0x161] sm:$0x1] %vm106, 0.0
  %154 = vst.msk [vmem:[%s105 + $0x179] sm:$0x1] %vm106, 0.0
  %155 = vst.msk [vmem:[%s105 + $0x1c1] sm:$0x1] %vm106, 0.0
  %156 = vst.msk [vmem:[%s105 + $0x1d9] sm:$0x1] %vm106, 0.0
  %157 = vst.msk [vmem:[%s105 + $0x1f1] sm:$0x1] %vm106, 0.0
  %158 = vst.msk [vmem:[%s105 + $0x209] sm:$0x1] %vm106, 0.0
  %159 = vst.msk [vmem:[%s105 + $0x221] sm:$0x1] %vm106, 0.0
  %160 = vst.msk [vmem:[%s105 + $0x239] sm:$0x1] %vm106, 0.0
  %161 = vst.msk [vmem:[%s105 + $0x251] sm:$0x1] %vm106, 0.0
  %162 = vst.msk [vmem:[%s105 + $0x269] sm:$0x1] %vm106, 0.0
  %163 = vst.msk [vmem:[%s105 + $0x281] sm:$0x1] %vm106, 0.0
  %164 = vst.msk [vmem:[%s105 + $0x299] sm:$0x1] %vm106, 0.0
  %165 = vst.msk [vmem:[%s105 + $0x2b1] sm:$0x1] %vm106, 0.0
  %166 = vst.msk [vmem:[%s105 + $0x2c9] sm:$0x1] %vm106, 0.0
  %167 = vst.msk [vmem:[%s105 + $0x2e1] sm:$0x1] %vm106, 0.0
  %168 = vst.msk [vmem:[%s105 + $0x2f9] sm:$0x1] %vm106, 0.0
  %169 = vst.msk [vmem:[%s105 + $0x311] sm:$0x1] %vm106, 0.0
  %170 = vst.msk [vmem:[%s105 + $0x329] sm:$0x1] %vm106, 0.0
  %171 = vst.msk [vmem:[%s105 + $0x1] sm:$0xff] %vm90, %v26
  %172 = vst.msk [vmem:[%s105 + $0x9] sm:$0xff] %vm90, %v27
  %173 = vst.msk [vmem:[%s105 + $0x19] sm:$0xff] %vm90, %v28
  %174 = vst.msk [vmem:[%s105 + $0x21] sm:$0xff] %vm90, %v29
  %175 = vst.msk [vmem:[%s105 + $0x31] sm:$0xff] %vm90, %v30
  %176 = vst.msk [vmem:[%s105 + $0x39] sm:$0xff] %vm90, %v31
  %177 = vst.msk [vmem:[%s105 + $0x49] sm:$0xff] %vm90, %v32
  %178 = vst.msk [vmem:[%s105 + $0x51] sm:$0xff] %vm90, %v33
  %179 = vst.msk [vmem:[%s105 + $0x61] sm:$0xff] %vm90, %v34
  %180 = vst.msk [vmem:[%s105 + $0x69] sm:$0xff] %vm90, %v35
  %181 = vst.msk [vmem:[%s105 + $0x79] sm:$0xff] %vm90, %v36
  %182 = vst.msk [vmem:[%s105 + $0x81] sm:$0xff] %vm90, %v37
  %183 = vst.msk [vmem:[%s105 + $0x91] sm:$0xff] %vm90, %v38
  %184 = vst.msk [vmem:[%s105 + $0x99] sm:$0xff] %vm90, %v39
  %185 = vst.msk [vmem:[%s105 + $0xa9] sm:$0xff] %vm90, %v40
  %186 = vst.msk [vmem:[%s105 + $0xb1] sm:$0xff] %vm90, %v41
  %187 = vst.msk [vmem:[%s105 + $0xc1] sm:$0xff] %vm90, %v42
  %188 = vst.msk [vmem:[%s105 + $0xc9] sm:$0xff] %vm90, %v43
  %189 = vst.msk [vmem:[%s105 + $0xd9] sm:$0xff] %vm90, %v44
  %190 = vst.msk [vmem:[%s105 + $0xe1] sm:$0xff] %vm90, %v45
  %191 = vst.msk [vmem:[%s105 + $0xf1] sm:$0xff] %vm90, %v46
  %192 = vst.msk [vmem:[%s105 + $0xf9] sm:$0xff] %vm90, %v47
  %193 = vst.msk [vmem:[%s105 + $0x109] sm:$0xff] %vm90, %v48
  %194 = vst.msk [vmem:[%s105 + $0x111] sm:$0xff] %vm90, %v49
  %195 = vst.msk [vmem:[%s105 + $0x121] sm:$0xff] %vm90, %v50
  %196 = vst.msk [vmem:[%s105 + $0x129] sm:$0xff] %vm90, %v51
  %197 = vst.msk [vmem:[%s105 + $0x139] sm:$0xff] %vm90, %v52
  %198 = vst.msk [vmem:[%s105 + $0x141] sm:$0xff] %vm90, %v53
  %199 = vst.msk [vmem:[%s105 + $0x151] sm:$0xff] %vm90, %v54
  %200 = vst.msk [vmem:[%s105 + $0x159] sm:$0xff] %vm90, %v55
  %201 = vst.msk [vmem:[%s105 + $0x169] sm:$0xff] %vm90, %v56
  %202 = vst.msk [vmem:[%s105 + $0x171] sm:$0xff] %vm90, %v57
  %203 = vst.msk [vmem:[%s105 + $0x1b1] sm:$0xff] %vm90, %v58
  %204 = vst.msk [vmem:[%s105 + $0x1b9] sm:$0xff] %vm90, %v59
  %205 = vst.msk [vmem:[%s105 + $0x1c9] sm:$0xff] %vm90, %v60
  %206 = vst.msk [vmem:[%s105 + $0x1d1] sm:$0xff] %vm90, %v61
  %207 = vst.msk [vmem:[%s105 + $0x1e1] sm:$0xff] %vm90, %v62
  %208 = vst.msk [vmem:[%s105 + $0x1e9] sm:$0xff] %vm90, %v63
  %209 = vst.msk [vmem:[%s105 + $0x1f9] sm:$0xff] %vm90, %v64
  %210 = vst.msk [vmem:[%s105 + $0x201] sm:$0xff] %vm90, %v65
  %211 = vst.msk [vmem:[%s105 + $0x211] sm:$0xff] %vm90, %v66
  %212 = vst.msk [vmem:[%s105 + $0x219] sm:$0xff] %vm90, %v67
  %213 = vst.msk [vmem:[%s105 + $0x229] sm:$0xff] %vm90, %v68
  %214 = vst.msk [vmem:[%s105 + $0x231] sm:$0xff] %vm90, %v69
  %215 = vst.msk [vmem:[%s105 + $0x241] sm:$0xff] %vm90, %v70
  %216 = vst.msk [vmem:[%s105 + $0x249] sm:$0xff] %vm90, %v71
  %217 = vst.msk [vmem:[%s105 + $0x259] sm:$0xff] %vm90, %v72
  %218 = vst.msk [vmem:[%s105 + $0x261] sm:$0xff] %vm90, %v73
  %219 = vst.msk [vmem:[%s105 + $0x271] sm:$0xff] %vm90, %v74
  %220 = vst.msk [vmem:[%s105 + $0x279] sm:$0xff] %vm90, %v75
  %221 = vst.msk [vmem:[%s105 + $0x289] sm:$0xff] %vm90, %v76
  %222 = vst.msk [vmem:[%s105 + $0x291] sm:$0xff] %vm90, %v77
  %223 = vst.msk [vmem:[%s105 + $0x2a1] sm:$0xff] %vm90, %v78
  %224 = vst.msk [vmem:[%s105 + $0x2a9] sm:$0xff] %vm90, %v79
  %225 = vst.msk [vmem:[%s105 + $0x2b9] sm:$0xff] %vm90, %v80
  %226 = vst.msk [vmem:[%s105 + $0x2c1] sm:$0xff] %vm90, %v81
  %227 = vst.msk [vmem:[%s105 + $0x2d1] sm:$0xff] %vm90, %v82
  %228 = vst.msk [vmem:[%s105 + $0x2d9] sm:$0xff] %vm90, %v83
  %229 = vst.msk [vmem:[%s105 + $0x2e9] sm:$0xff] %vm90, %v84
  %230 = vst.msk [vmem:[%s105 + $0x2f1] sm:$0xff] %vm90, %v85
  %231 = vst.msk [vmem:[%s105 + $0x301] sm:$0xff] %vm90, %v86
  %232 = vst.msk [vmem:[%s105 + $0x309] sm:$0xff] %vm90, %v87
  %233 = vst.msk [vmem:[%s105 + $0x319] sm:$0xff] %vm90, %v88
  %234 = vst.msk [vmem:[%s105 + $0x321] sm:$0xff] %vm90, %v89
  %v235 = vld [vmem:[#allocation2] sm:$0xff]
  %v236 = vld [vmem:[#allocation2 + $0x8] sm:$0xff]
  %v237 = vld [vmem:[#allocation2 + $0x18] sm:$0xff]
  %v238 = vld [vmem:[#allocation2 + $0x20] sm:$0xff]
  %v239 = vld [vmem:[#allocation2 + $0x30] sm:$0xff]
  %v240 = vld [vmem:[#allocation2 + $0x38] sm:$0xff]
  %v241 = vld [vmem:[#allocation2 + $0x48] sm:$0xff]
  %v242 = vld [vmem:[#allocation2 + $0x50] sm:$0xff]
  %v243 = vld [vmem:[#allocation2 + $0x60] sm:$0xff]
  %v244 = vld [vmem:[#allocation2 + $0x68] sm:$0xff]
  %v245 = vld [vmem:[#allocation2 + $0x78] sm:$0xff]
  %v246 = vld [vmem:[#allocation2 + $0x80] sm:$0xff]
  %v247 = vld [vmem:[#allocation2 + $0x90] sm:$0xff]
  %v248 = vld [vmem:[#allocation2 + $0x98] sm:$0xff]
  %v249 = vld [vmem:[#allocation2 + $0xa8] sm:$0xff]
  %v250 = vld [vmem:[#allocation2 + $0xb0] sm:$0xff]
  %v251 = vld [vmem:[#allocation2 + $0xc0] sm:$0xff]
  %v252 = vld [vmem:[#allocation2 + $0xc8] sm:$0xff]
  %v253 = vld [vmem:[#allocation2 + $0xd8] sm:$0xff]
  %v254 = vld [vmem:[#allocation2 + $0xe0] sm:$0xff]
  %v255 = vld [vmem:[#allocation2 + $0xf0] sm:$0xff]
  %v256 = vld [vmem:[#allocation2 + $0xf8] sm:$0xff]
  %v257 = vld [vmem:[#allocation2 + $0x108] sm:$0xff]
  %v258 = vld [vmem:[#allocation2 + $0x110] sm:$0xff]
  %v259 = vld [vmem:[#allocation2 + $0x120] sm:$0xff]
  %v260 = vld [vmem:[#allocation2 + $0x128] sm:$0xff]
  %v261 = vld [vmem:[#allocation2 + $0x138] sm:$0xff]
  %v262 = vld [vmem:[#allocation2 + $0x140] sm:$0xff]
  %v263 = vld [vmem:[#allocation2 + $0x150] sm:$0xff]
  %v264 = vld [vmem:[#allocation2 + $0x158] sm:$0xff]
  %v265 = vld [vmem:[#allocation2 + $0x168] sm:$0xff]
  %v266 = vld [vmem:[#allocation2 + $0x170] sm:$0xff]
  %v267 = vld [vmem:[#allocation2 + $0x1b0] sm:$0xff]
  %v268 = vld [vmem:[#allocation2 + $0x1b8] sm:$0xff]
  %v269 = vld [vmem:[#allocation2 + $0x1c8] sm:$0xff]
  %v270 = vld [vmem:[#allocation2 + $0x1d0] sm:$0xff]
  %v271 = vld [vmem:[#allocation2 + $0x1e0] sm:$0xff]
  %v272 = vld [vmem:[#allocation2 + $0x1e8] sm:$0xff]
  %v273 = vld [vmem:[#allocation2 + $0x1f8] sm:$0xff]
  %v274 = vld [vmem:[#allocation2 + $0x200] sm:$0xff]
  %v275 = vld [vmem:[#allocation2 + $0x210] sm:$0xff]
  %v276 = vld [vmem:[#allocation2 + $0x218] sm:$0xff]
  %v277 = vld [vmem:[#allocation2 + $0x228] sm:$0xff]
  %v278 = vld [vmem:[#allocation2 + $0x230] sm:$0xff]
  %v279 = vld [vmem:[#allocation2 + $0x240] sm:$0xff]
  %v280 = vld [vmem:[#allocation2 + $0x248] sm:$0xff]
  %v281 = vld [vmem:[#allocation2 + $0x258] sm:$0xff]
  %v282 = vld [vmem:[#allocation2 + $0x260] sm:$0xff]
  %v283 = vld [vmem:[#allocation2 + $0x270] sm:$0xff]
  %v284 = vld [vmem:[#allocation2 + $0x278] sm:$0xff]
  %v285 = vld [vmem:[#allocation2 + $0x288] sm:$0xff]
  %v286 = vld [vmem:[#allocation2 + $0x290] sm:$0xff]
  %v287 = vld [vmem:[#allocation2 + $0x2a0] sm:$0xff]
  %v288 = vld [vmem:[#allocation2 + $0x2a8] sm:$0xff]
  %v289 = vld [vmem:[#allocation2 + $0x2b8] sm:$0xff]
  %v290 = vld [vmem:[#allocation2 + $0x2c0] sm:$0xff]
  %v291 = vld [vmem:[#allocation2 + $0x2d0] sm:$0xff]
  %v292 = vld [vmem:[#allocation2 + $0x2d8] sm:$0xff]
  %v293 = vld [vmem:[#allocation2 + $0x2e8] sm:$0xff]
  %v294 = vld [vmem:[#allocation2 + $0x2f0] sm:$0xff]
  %v295 = vld [vmem:[#allocation2 + $0x300] sm:$0xff]
  %v296 = vld [vmem:[#allocation2 + $0x308] sm:$0xff]
  %v297 = vld [vmem:[#allocation2 + $0x318] sm:$0xff]
  %v298 = vld [vmem:[#allocation2 + $0x320] sm:$0xff]
  %v299 = vld [vmem:[#allocation2 + $0x1] sm:$0xff]
  %v300 = vld [vmem:[#allocation2 + $0x9] sm:$0xff]
  %v301 = vld [vmem:[#allocation2 + $0x19] sm:$0xff]
  %v302 = vld [vmem:[#allocation2 + $0x21] sm:$0xff]
  %v303 = vld [vmem:[#allocation2 + $0x31] sm:$0xff]
  %v304 = vld [vmem:[#allocation2 + $0x39] sm:$0xff]
  %v305 = vld [vmem:[#allocation2 + $0x49] sm:$0xff]
  %v306 = vld [vmem:[#allocation2 + $0x51] sm:$0xff]
  %v307 = vld [vmem:[#allocation2 + $0x61] sm:$0xff]
  %v308 = vld [vmem:[#allocation2 + $0x69] sm:$0xff]
  %v309 = vld [vmem:[#allocation2 + $0x79] sm:$0xff]
  %v310 = vld [vmem:[#allocation2 + $0x81] sm:$0xff]
  %v311 = vld [vmem:[#allocation2 + $0x91] sm:$0xff]
  %v312 = vld [vmem:[#allocation2 + $0x99] sm:$0xff]
  %v313 = vld [vmem:[#allocation2 + $0xa9] sm:$0xff]
  %v314 = vld [vmem:[#allocation2 + $0xb1] sm:$0xff]
  %v315 = vld [vmem:[#allocation2 + $0xc1] sm:$0xff]
  %v316 = vld [vmem:[#allocation2 + $0xc9] sm:$0xff]
  %v317 = vld [vmem:[#allocation2 + $0xd9] sm:$0xff]
  %v318 = vld [vmem:[#allocation2 + $0xe1] sm:$0xff]
  %v319 = vld [vmem:[#allocation2 + $0xf1] sm:$0xff]
  %v320 = vld [vmem:[#allocation2 + $0xf9] sm:$0xff]
  %v321 = vld [vmem:[#allocation2 + $0x109] sm:$0xff]
  %v322 = vld [vmem:[#allocation2 + $0x111] sm:$0xff]
  %v323 = vld [vmem:[#allocation2 + $0x121] sm:$0xff]
  %v324 = vld [vmem:[#allocation2 + $0x129] sm:$0xff]
  %v325 = vld [vmem:[#allocation2 + $0x139] sm:$0xff]
  %v326 = vld [vmem:[#allocation2 + $0x141] sm:$0xff]
  %v327 = vld [vmem:[#allocation2 + $0x151] sm:$0xff]
  %v328 = vld [vmem:[#allocation2 + $0x159] sm:$0xff]
  %v329 = vld [vmem:[#allocation2 + $0x169] sm:$0xff]
  %v330 = vld [vmem:[#allocation2 + $0x171] sm:$0xff]
  %v331 = vld [vmem:[#allocation2 + $0x1b1] sm:$0xff]
  %v332 = vld [vmem:[#allocation2 + $0x1b9] sm:$0xff]
  %v333 = vld [vmem:[#allocation2 + $0x1c9] sm:$0xff]
  %v334 = vld [vmem:[#allocation2 + $0x1d1] sm:$0xff]
  %v335 = vld [vmem:[#allocation2 + $0x1e1] sm:$0xff]
  %v336 = vld [vmem:[#allocation2 + $0x1e9] sm:$0xff]
  %v337 = vld [vmem:[#allocation2 + $0x1f9] sm:$0xff]
  %v338 = vld [vmem:[#allocation2 + $0x201] sm:$0xff]
  %v339 = vld [vmem:[#allocation2 + $0x211] sm:$0xff]
  %v340 = vld [vmem:[#allocation2 + $0x219] sm:$0xff]
  %v341 = vld [vmem:[#allocation2 + $0x229] sm:$0xff]
  %v342 = vld [vmem:[#allocation2 + $0x231] sm:$0xff]
  %v343 = vld [vmem:[#allocation2 + $0x241] sm:$0xff]
  %v344 = vld [vmem:[#allocation2 + $0x249] sm:$0xff]
  %v345 = vld [vmem:[#allocation2 + $0x259] sm:$0xff]
  %v346 = vld [vmem:[#allocation2 + $0x261] sm:$0xff]
  %v347 = vld [vmem:[#allocation2 + $0x271] sm:$0xff]
  %v348 = vld [vmem:[#allocation2 + $0x279] sm:$0xff]
  %v349 = vld [vmem:[#allocation2 + $0x289] sm:$0xff]
  %v350 = vld [vmem:[#allocation2 + $0x291] sm:$0xff]
  %v351 = vld [vmem:[#allocation2 + $0x2a1] sm:$0xff]
  %v352 = vld [vmem:[#allocation2 + $0x2a9] sm:$0xff]
  %v353 = vld [vmem:[#allocation2 + $0x2b9] sm:$0xff]
  %v354 = vld [vmem:[#allocation2 + $0x2c1] sm:$0xff]
  %v355 = vld [vmem:[#allocation2 + $0x2d1] sm:$0xff]
  %v356 = vld [vmem:[#allocation2 + $0x2d9] sm:$0xff]
  %v357 = vld [vmem:[#allocation2 + $0x2e9] sm:$0xff]
  %v358 = vld [vmem:[#allocation2 + $0x2f1] sm:$0xff]
  %v359 = vld [vmem:[#allocation2 + $0x301] sm:$0xff]
  %v360 = vld [vmem:[#allocation2 + $0x309] sm:$0xff]
  %v361 = vld [vmem:[#allocation2 + $0x319] sm:$0xff]
  %v362 = vld [vmem:[#allocation2 + $0x321] sm:$0xff]
  %v363 = vld [vmem:[#allocation2 + $0x2] sm:$0xff]
  %v364 = vld [vmem:[#allocation2 + $0xa] sm:$0xff]
  %v365 = vld [vmem:[#allocation2 + $0x1a] sm:$0xff]
  %v366 = vld [vmem:[#allocation2 + $0x22] sm:$0xff]
  %v367 = vld [vmem:[#allocation2 + $0x32] sm:$0xff]
  %v368 = vld [vmem:[#allocation2 + $0x3a] sm:$0xff]
  %v369 = vld [vmem:[#allocation2 + $0x4a] sm:$0xff]
  %v370 = vld [vmem:[#allocation2 + $0x52] sm:$0xff]
  %v371 = vld [vmem:[#allocation2 + $0x62] sm:$0xff]
  %v372 = vld [vmem:[#allocation2 + $0x6a] sm:$0xff]
  %v373 = vld [vmem:[#allocation2 + $0x7a] sm:$0xff]
  %v374 = vld [vmem:[#allocation2 + $0x82] sm:$0xff]
  %v375 = vld [vmem:[#allocation2 + $0x92] sm:$0xff]
  %v376 = vld [vmem:[#allocation2 + $0x9a] sm:$0xff]
  %v377 = vld [vmem:[#allocation2 + $0xaa] sm:$0xff]
  %v378 = vld [vmem:[#allocation2 + $0xb2] sm:$0xff]
  %v379 = vld [vmem:[#allocation2 + $0xc2] sm:$0xff]
  %v380 = vld [vmem:[#allocation2 + $0xca] sm:$0xff]
  %v381 = vld [vmem:[#allocation2 + $0xda] sm:$0xff]
  %v382 = vld [vmem:[#allocation2 + $0xe2] sm:$0xff]
  %v383 = vld [vmem:[#allocation2 + $0xf2] sm:$0xff]
  %v384 = vld [vmem:[#allocation2 + $0xfa] sm:$0xff]
  %v385 = vld [vmem:[#allocation2 + $0x10a] sm:$0xff]
  %v386 = vld [vmem:[#allocation2 + $0x112] sm:$0xff]
  %v387 = vld [vmem:[#allocation2 + $0x122] sm:$0xff]
  %v388 = vld [vmem:[#allocation2 + $0x12a] sm:$0xff]
  %v389 = vld [vmem:[#allocation2 + $0x13a] sm:$0xff]
  %v390 = vld [vmem:[#allocation2 + $0x142] sm:$0xff]
  %v391 = vld [vmem:[#allocation2 + $0x152] sm:$0xff]
  %v392 = vld [vmem:[#allocation2 + $0x15a] sm:$0xff]
  %v393 = vld [vmem:[#allocation2 + $0x16a] sm:$0xff]
  %v394 = vld [vmem:[#allocation2 + $0x172] sm:$0xff]
  %v395 = vld [vmem:[#allocation2 + $0x1b2] sm:$0xff]
  %v396 = vld [vmem:[#allocation2 + $0x1ba] sm:$0xff]
  %v397 = vld [vmem:[#allocation2 + $0x1ca] sm:$0xff]
  %v398 = vld [vmem:[#allocation2 + $0x1d2] sm:$0xff]
  %v399 = vld [vmem:[#allocation2 + $0x1e2] sm:$0xff]
  %v400 = vld [vmem:[#allocation2 + $0x1ea] sm:$0xff]
  %v401 = vld [vmem:[#allocation2 + $0x1fa] sm:$0xff]
  %v402 = vld [vmem:[#allocation2 + $0x202] sm:$0xff]
  %v403 = vld [vmem:[#allocation2 + $0x212] sm:$0xff]
  %v404 = vld [vmem:[#allocation2 + $0x21a] sm:$0xff]
  %v405 = vld [vmem:[#allocation2 + $0x22a] sm:$0xff]
  %v406 = vld [vmem:[#allocation2 + $0x232] sm:$0xff]
  %v407 = vld [vmem:[#allocation2 + $0x242] sm:$0xff]
  %v408 = vld [vmem:[#allocation2 + $0x24a] sm:$0xff]
  %v409 = vld [vmem:[#allocation2 + $0x25a] sm:$0xff]
  %v410 = vld [vmem:[#allocation2 + $0x262] sm:$0xff]
  %v411 = vld [vmem:[#allocation2 + $0x272] sm:$0xff]
  %v412 = vld [vmem:[#allocation2 + $0x27a] sm:$0xff]
  %v413 = vld [vmem:[#allocation2 + $0x28a] sm:$0xff]
  %v414 = vld [vmem:[#allocation2 + $0x292] sm:$0xff]
  %v415 = vld [vmem:[#allocation2 + $0x2a2] sm:$0xff]
  %v416 = vld [vmem:[#allocation2 + $0x2aa] sm:$0xff]
  %v417 = vld [vmem:[#allocation2 + $0x2ba] sm:$0xff]
  %v418 = vld [vmem:[#allocation2 + $0x2c2] sm:$0xff]
  %v419 = vld [vmem:[#allocation2 + $0x2d2] sm:$0xff]
  %v420 = vld [vmem:[#allocation2 + $0x2da] sm:$0xff]
  %v421 = vld [vmem:[#allocation2 + $0x2ea] sm:$0xff]
  %v422 = vld [vmem:[#allocation2 + $0x2f2] sm:$0xff]
  %v423 = vld [vmem:[#allocation2 + $0x302] sm:$0xff]
  %v424 = vld [vmem:[#allocation2 + $0x30a] sm:$0xff]
  %v425 = vld [vmem:[#allocation2 + $0x31a] sm:$0xff]
  %v426 = vld [vmem:[#allocation2 + $0x322] sm:$0xff]
  %v427 = vld [vmem:[%s105] sm:$0xff]
  %v428 = vld [vmem:[%s105 + $0x8] sm:$0xff]
  %v429 = vld [vmem:[%s105 + $0x18] sm:$0xff]
  %v430 = vld [vmem:[%s105 + $0x20] sm:$0xff]
  %v431 = vld [vmem:[%s105 + $0x30] sm:$0xff]
  %v432 = vld [vmem:[%s105 + $0x38] sm:$0xff]
  %v433 = vld [vmem:[%s105 + $0x48] sm:$0xff]
  %v434 = vld [vmem:[%s105 + $0x50] sm:$0xff]
  %v435 = vld [vmem:[%s105 + $0x60] sm:$0xff]
  %v436 = vld [vmem:[%s105 + $0x68] sm:$0xff]
  %v437 = vld [vmem:[%s105 + $0x78] sm:$0xff]
  %v438 = vld [vmem:[%s105 + $0x80] sm:$0xff]
  %v439 = vld [vmem:[%s105 + $0x90] sm:$0xff]
  %v440 = vld [vmem:[%s105 + $0x98] sm:$0xff]
  %v441 = vld [vmem:[%s105 + $0xa8] sm:$0xff]
  %v442 = vld [vmem:[%s105 + $0xb0] sm:$0xff]
  %v443 = vld [vmem:[%s105 + $0xc0] sm:$0xff]
  %v444 = vld [vmem:[%s105 + $0xc8] sm:$0xff]
  %v445 = vld [vmem:[%s105 + $0xd8] sm:$0xff]
  %v446 = vld [vmem:[%s105 + $0xe0] sm:$0xff]
  %v447 = vld [vmem:[%s105 + $0xf0] sm:$0xff]
  %v448 = vld [vmem:[%s105 + $0xf8] sm:$0xff]
  %v449 = vld [vmem:[%s105 + $0x108] sm:$0xff]
  %v450 = vld [vmem:[%s105 + $0x110] sm:$0xff]
  %v451 = vld [vmem:[%s105 + $0x120] sm:$0xff]
  %v452 = vld [vmem:[%s105 + $0x128] sm:$0xff]
  %v453 = vld [vmem:[%s105 + $0x138] sm:$0xff]
  %v454 = vld [vmem:[%s105 + $0x140] sm:$0xff]
  %v455 = vld [vmem:[%s105 + $0x150] sm:$0xff]
  %v456 = vld [vmem:[%s105 + $0x158] sm:$0xff]
  %v457 = vld [vmem:[%s105 + $0x168] sm:$0xff]
  %v458 = vld [vmem:[%s105 + $0x170] sm:$0xff]
  %v459 = vld [vmem:[%s105 + $0x1b0] sm:$0xff]
  %v460 = vld [vmem:[%s105 + $0x1b8] sm:$0xff]
  %v461 = vld [vmem:[%s105 + $0x1c8] sm:$0xff]
  %v462 = vld [vmem:[%s105 + $0x1d0] sm:$0xff]
  %v463 = vld [vmem:[%s105 + $0x1e0] sm:$0xff]
  %v464 = vld [vmem:[%s105 + $0x1e8] sm:$0xff]
  %v465 = vld [vmem:[%s105 + $0x1f8] sm:$0xff]
  %v466 = vld [vmem:[%s105 + $0x200] sm:$0xff]
  %v467 = vld [vmem:[%s105 + $0x210] sm:$0xff]
  %v468 = vld [vmem:[%s105 + $0x218] sm:$0xff]
  %v469 = vld [vmem:[%s105 + $0x228] sm:$0xff]
  %v470 = vld [vmem:[%s105 + $0x230] sm:$0xff]
  %v471 = vld [vmem:[%s105 + $0x240] sm:$0xff]
  %v472 = vld [vmem:[%s105 + $0x248] sm:$0xff]
  %v473 = vld [vmem:[%s105 + $0x258] sm:$0xff]
  %v474 = vld [vmem:[%s105 + $0x260] sm:$0xff]
  %v475 = vld [vmem:[%s105 + $0x270] sm:$0xff]
  %v476 = vld [vmem:[%s105 + $0x278] sm:$0xff]
  %v477 = vld [vmem:[%s105 + $0x288] sm:$0xff]
  %v478 = vld [vmem:[%s105 + $0x290] sm:$0xff]
  %v479 = vld [vmem:[%s105 + $0x2a0] sm:$0xff]
  %v480 = vld [vmem:[%s105 + $0x2a8] sm:$0xff]
  %v481 = vld [vmem:[%s105 + $0x2b8] sm:$0xff]
  %v482 = vld [vmem:[%s105 + $0x2c0] sm:$0xff]
  %v483 = vld [vmem:[%s105 + $0x2d0] sm:$0xff]
  %v484 = vld [vmem:[%s105 + $0x2d8] sm:$0xff]
  %v485 = vld [vmem:[%s105 + $0x2e8] sm:$0xff]
  %v486 = vld [vmem:[%s105 + $0x2f0] sm:$0xff]
  %v487 = vld [vmem:[%s105 + $0x300] sm:$0xff]
  %v488 = vld [vmem:[%s105 + $0x308] sm:$0xff]
  %v489 = vld [vmem:[%s105 + $0x318] sm:$0xff]
  %v490 = vld [vmem:[%s105 + $0x320] sm:$0xff]
  %v491 = vld [vmem:[%s105 + $0x1] sm:$0xff]
  %v492 = vld [vmem:[%s105 + $0x9] sm:$0xff]
  %v493 = vld [vmem:[%s105 + $0x19] sm:$0xff]
  %v494 = vld [vmem:[%s105 + $0x21] sm:$0xff]
  %v495 = vld [vmem:[%s105 + $0x31] sm:$0xff]
  %v496 = vld [vmem:[%s105 + $0x39] sm:$0xff]
  %v497 = vld [vmem:[%s105 + $0x49] sm:$0xff]
  %v498 = vld [vmem:[%s105 + $0x51] sm:$0xff]
  %v499 = vld [vmem:[%s105 + $0x61] sm:$0xff]
  %v500 = vld [vmem:[%s105 + $0x69] sm:$0xff]
  %v501 = vld [vmem:[%s105 + $0x79] sm:$0xff]
  %v502 = vld [vmem:[%s105 + $0x81] sm:$0xff]
  %v503 = vld [vmem:[%s105 + $0x91] sm:$0xff]
  %v504 = vld [vmem:[%s105 + $0x99] sm:$0xff]
  %v505 = vld [vmem:[%s105 + $0xa9] sm:$0xff]
  %v506 = vld [vmem:[%s105 + $0xb1] sm:$0xff]
  %v507 = vld [vmem:[%s105 + $0xc1] sm:$0xff]
  %v508 = vld [vmem:[%s105 + $0xc9] sm:$0xff]
  %v509 = vld [vmem:[%s105 + $0xd9] sm:$0xff]
  %v510 = vld [vmem:[%s105 + $0xe1] sm:$0xff]
  %v511 = vld [vmem:[%s105 + $0xf1] sm:$0xff]
  %v512 = vld [vmem:[%s105 + $0xf9] sm:$0xff]
  %v513 = vld [vmem:[%s105 + $0x109] sm:$0xff]
  %v514 = vld [vmem:[%s105 + $0x111] sm:$0xff]
  %v515 = vld [vmem:[%s105 + $0x121] sm:$0xff]
  %v516 = vld [vmem:[%s105 + $0x129] sm:$0xff]
  %v517 = vld [vmem:[%s105 + $0x139] sm:$0xff]
  %v518 = vld [vmem:[%s105 + $0x141] sm:$0xff]
  %v519 = vld [vmem:[%s105 + $0x151] sm:$0xff]
  %v520 = vld [vmem:[%s105 + $0x159] sm:$0xff]
  %v521 = vld [vmem:[%s105 + $0x169] sm:$0xff]
  %v522 = vld [vmem:[%s105 + $0x171] sm:$0xff]
  %v523 = vld [vmem:[%s105 + $0x1b1] sm:$0xff]
  %v524 = vld [vmem:[%s105 + $0x1b9] sm:$0xff]
  %v525 = vld [vmem:[%s105 + $0x1c9] sm:$0xff]
  %v526 = vld [vmem:[%s105 + $0x1d1] sm:$0xff]
  %v527 = vld [vmem:[%s105 + $0x1e1] sm:$0xff]
  %v528 = vld [vmem:[%s105 + $0x1e9] sm:$0xff]
  %v529 = vld [vmem:[%s105 + $0x1f9] sm:$0xff]
  %v530 = vld [vmem:[%s105 + $0x201] sm:$0xff]
  %v531 = vld [vmem:[%s105 + $0x211] sm:$0xff]
  %v532 = vld [vmem:[%s105 + $0x219] sm:$0xff]
  %v533 = vld [vmem:[%s105 + $0x229] sm:$0xff]
  %v534 = vld [vmem:[%s105 + $0x231] sm:$0xff]
  %v535 = vld [vmem:[%s105 + $0x241] sm:$0xff]
  %v536 = vld [vmem:[%s105 + $0x249] sm:$0xff]
  %v537 = vld [vmem:[%s105 + $0x259] sm:$0xff]
  %v538 = vld [vmem:[%s105 + $0x261] sm:$0xff]
  %v539 = vld [vmem:[%s105 + $0x271] sm:$0xff]
  %v540 = vld [vmem:[%s105 + $0x279] sm:$0xff]
  %v541 = vld [vmem:[%s105 + $0x289] sm:$0xff]
  %v542 = vld [vmem:[%s105 + $0x291] sm:$0xff]
  %v543 = vld [vmem:[%s105 + $0x2a1] sm:$0xff]
  %v544 = vld [vmem:[%s105 + $0x2a9] sm:$0xff]
  %v545 = vld [vmem:[%s105 + $0x2b9] sm:$0xff]
  %v546 = vld [vmem:[%s105 + $0x2c1] sm:$0xff]
  %v547 = vld [vmem:[%s105 + $0x2d1] sm:$0xff]
  %v548 = vld [vmem:[%s105 + $0x2d9] sm:$0xff]
  %v549 = vld [vmem:[%s105 + $0x2e9] sm:$0xff]
  %v550 = vld [vmem:[%s105 + $0x2f1] sm:$0xff]
  %v551 = vld [vmem:[%s105 + $0x301] sm:$0xff]
  %v552 = vld [vmem:[%s105 + $0x309] sm:$0xff]
  %v553 = vld [vmem:[%s105 + $0x319] sm:$0xff]
  %v554 = vld [vmem:[%s105 + $0x321] sm:$0xff]
  %v555 = vld [vmem:[%s105 + $0x2] sm:$0xff]
  %v556 = vld [vmem:[%s105 + $0xa] sm:$0xff]
  %v557 = vld [vmem:[%s105 + $0x1a] sm:$0xff]
  %v558 = vld [vmem:[%s105 + $0x22] sm:$0xff]
  %v559 = vld [vmem:[%s105 + $0x32] sm:$0xff]
  %v560 = vld [vmem:[%s105 + $0x3a] sm:$0xff]
  %v561 = vld [vmem:[%s105 + $0x4a] sm:$0xff]
  %v562 = vld [vmem:[%s105 + $0x52] sm:$0xff]
  %v563 = vld [vmem:[%s105 + $0x62] sm:$0xff]
  %v564 = vld [vmem:[%s105 + $0x6a] sm:$0xff]
  %v565 = vld [vmem:[%s105 + $0x7a] sm:$0xff]
  %v566 = vld [vmem:[%s105 + $0x82] sm:$0xff]
  %v567 = vld [vmem:[%s105 + $0x92] sm:$0xff]
  %v568 = vld [vmem:[%s105 + $0x9a] sm:$0xff]
  %v569 = vld [vmem:[%s105 + $0xaa] sm:$0xff]
  %v570 = vld [vmem:[%s105 + $0xb2] sm:$0xff]
  %v571 = vld [vmem:[%s105 + $0xc2] sm:$0xff]
  %v572 = vld [vmem:[%s105 + $0xca] sm:$0xff]
  %v573 = vld [vmem:[%s105 + $0xda] sm:$0xff]
  %v574 = vld [vmem:[%s105 + $0xe2] sm:$0xff]
  %v575 = vld [vmem:[%s105 + $0xf2] sm:$0xff]
  %v576 = vld [vmem:[%s105 + $0xfa] sm:$0xff]
  %v577 = vld [vmem:[%s105 + $0x10a] sm:$0xff]
  %v578 = vld [vmem:[%s105 + $0x112] sm:$0xff]
  %v579 = vld [vmem:[%s105 + $0x122] sm:$0xff]
  %v580 = vld [vmem:[%s105 + $0x12a] sm:$0xff]
  %v581 = vld [vmem:[%s105 + $0x13a] sm:$0xff]
  %v582 = vld [vmem:[%s105 + $0x142] sm:$0xff]
  %v583 = vld [vmem:[%s105 + $0x152] sm:$0xff]
  %v584 = vld [vmem:[%s105 + $0x15a] sm:$0xff]
  %v585 = vld [vmem:[%s105 + $0x16a] sm:$0xff]
  %v586 = vld [vmem:[%s105 + $0x172] sm:$0xff]
  %v587 = vld [vmem:[%s105 + $0x1b2] sm:$0xff]
  %v588 = vld [vmem:[%s105 + $0x1ba] sm:$0xff]
  %v589 = vld [vmem:[%s105 + $0x1ca] sm:$0xff]
  %v590 = vld [vmem:[%s105 + $0x1d2] sm:$0xff]
  %v591 = vld [vmem:[%s105 + $0x1e2] sm:$0xff]
  %v592 = vld [vmem:[%s105 + $0x1ea] sm:$0xff]
  %v593 = vld [vmem:[%s105 + $0x1fa] sm:$0xff]
  %v594 = vld [vmem:[%s105 + $0x202] sm:$0xff]
  %v595 = vld [vmem:[%s105 + $0x212] sm:$0xff]
  %v596 = vld [vmem:[%s105 + $0x21a] sm:$0xff]
  %v597 = vld [vmem:[%s105 + $0x22a] sm:$0xff]
  %v598 = vld [vmem:[%s105 + $0x232] sm:$0xff]
  %v599 = vld [vmem:[%s105 + $0x242] sm:$0xff]
  %v600 = vld [vmem:[%s105 + $0x24a] sm:$0xff]
  %v601 = vld [vmem:[%s105 + $0x25a] sm:$0xff]
  %v602 = vld [vmem:[%s105 + $0x262] sm:$0xff]
  %v603 = vld [vmem:[%s105 + $0x272] sm:$0xff]
  %v604 = vld [vmem:[%s105 + $0x27a] sm:$0xff]
  %v605 = vld [vmem:[%s105 + $0x28a] sm:$0xff]
  %v606 = vld [vmem:[%s105 + $0x292] sm:$0xff]
  %v607 = vld [vmem:[%s105 + $0x2a2] sm:$0xff]
  %v608 = vld [vmem:[%s105 + $0x2aa] sm:$0xff]
  %v609 = vld [vmem:[%s105 + $0x2ba] sm:$0xff]
  %v610 = vld [vmem:[%s105 + $0x2c2] sm:$0xff]
  %v611 = vld [vmem:[%s105 + $0x2d2] sm:$0xff]
  %v612 = vld [vmem:[%s105 + $0x2da] sm:$0xff]
  %v613 = vld [vmem:[%s105 + $0x2ea] sm:$0xff]
  %v614 = vld [vmem:[%s105 + $0x2f2] sm:$0xff]
  %v615 = vld [vmem:[%s105 + $0x302] sm:$0xff]
  %v616 = vld [vmem:[%s105 + $0x30a] sm:$0xff]
  %v617 = vld [vmem:[%s105 + $0x31a] sm:$0xff]
  %v618 = vld [vmem:[%s105 + $0x322] sm:$0xff]
  %s619 = scalar_lea.vmem [#allocation2], 48
  %v620 = vld [vmem:[%s619] sm:$0xff]
  %v621 = vld [vmem:[%s619 + $0x8] sm:$0xff]
  %v622 = vld [vmem:[%s619 + $0x18] sm:$0xff]
  %v623 = vld [vmem:[%s619 + $0x20] sm:$0xff]
  %v624 = vld [vmem:[%s619 + $0x30] sm:$0xff]
  %v625 = vld [vmem:[%s619 + $0x38] sm:$0xff]
  %v626 = vld [vmem:[%s619 + $0x48] sm:$0xff]
  %v627 = vld [vmem:[%s619 + $0x50] sm:$0xff]
  %v628 = vld [vmem:[%s619 + $0x60] sm:$0xff]
  %v629 = vld [vmem:[%s619 + $0x68] sm:$0xff]
  %v630 = vld [vmem:[%s619 + $0x78] sm:$0xff]
  %v631 = vld [vmem:[%s619 + $0x80] sm:$0xff]
  %v632 = vld [vmem:[%s619 + $0x90] sm:$0xff]
  %v633 = vld [vmem:[%s619 + $0x98] sm:$0xff]
  %v634 = vld [vmem:[%s619 + $0xa8] sm:$0xff]
  %v635 = vld [vmem:[%s619 + $0xb0] sm:$0xff]
  %v636 = vld [vmem:[%s619 + $0xc0] sm:$0xff]
  %v637 = vld [vmem:[%s619 + $0xc8] sm:$0xff]
  %v638 = vld [vmem:[%s619 + $0xd8] sm:$0xff]
  %v639 = vld [vmem:[%s619 + $0xe0] sm:$0xff]
  %v640 = vld [vmem:[%s619 + $0xf0] sm:$0xff]
  %v641 = vld [vmem:[%s619 + $0xf8] sm:$0xff]
  %v642 = vld [vmem:[%s619 + $0x108] sm:$0xff]
  %v643 = vld [vmem:[%s619 + $0x110] sm:$0xff]
  %v644 = vld [vmem:[%s619 + $0x120] sm:$0xff]
  %v645 = vld [vmem:[%s619 + $0x128] sm:$0xff]
  %v646 = vld [vmem:[%s619 + $0x138] sm:$0xff]
  %v647 = vld [vmem:[%s619 + $0x140] sm:$0xff]
  %v648 = vld [vmem:[%s619 + $0x150] sm:$0xff]
  %v649 = vld [vmem:[%s619 + $0x158] sm:$0xff]
  %v650 = vld [vmem:[%s619 + $0x168] sm:$0xff]
  %v651 = vld [vmem:[%s619 + $0x170] sm:$0xff]
  %v652 = vld [vmem:[%s619 + $0x1b0] sm:$0xff]
  %v653 = vld [vmem:[%s619 + $0x1b8] sm:$0xff]
  %v654 = vld [vmem:[%s619 + $0x1c8] sm:$0xff]
  %v655 = vld [vmem:[%s619 + $0x1d0] sm:$0xff]
  %v656 = vld [vmem:[%s619 + $0x1e0] sm:$0xff]
  %v657 = vld [vmem:[%s619 + $0x1e8] sm:$0xff]
  %v658 = vld [vmem:[%s619 + $0x1f8] sm:$0xff]
  %v659 = vld [vmem:[%s619 + $0x200] sm:$0xff]
  %v660 = vld [vmem:[%s619 + $0x210] sm:$0xff]
  %v661 = vld [vmem:[%s619 + $0x218] sm:$0xff]
  %v662 = vld [vmem:[%s619 + $0x228] sm:$0xff]
  %v663 = vld [vmem:[%s619 + $0x230] sm:$0xff]
  %v664 = vld [vmem:[%s619 + $0x240] sm:$0xff]
  %v665 = vld [vmem:[%s619 + $0x248] sm:$0xff]
  %v666 = vld [vmem:[%s619 + $0x258] sm:$0xff]
  %v667 = vld [vmem:[%s619 + $0x260] sm:$0xff]
  %v668 = vld [vmem:[%s619 + $0x270] sm:$0xff]
  %v669 = vld [vmem:[%s619 + $0x278] sm:$0xff]
  %v670 = vld [vmem:[%s619 + $0x288] sm:$0xff]
  %v671 = vld [vmem:[%s619 + $0x290] sm:$0xff]
  %v672 = vld [vmem:[%s619 + $0x2a0] sm:$0xff]
  %v673 = vld [vmem:[%s619 + $0x2a8] sm:$0xff]
  %v674 = vld [vmem:[%s619 + $0x2b8] sm:$0xff]
  %v675 = vld [vmem:[%s619 + $0x2c0] sm:$0xff]
  %v676 = vld [vmem:[%s619 + $0x2d0] sm:$0xff]
  %v677 = vld [vmem:[%s619 + $0x2d8] sm:$0xff]
  %v678 = vld [vmem:[%s619 + $0x2e8] sm:$0xff]
  %v679 = vld [vmem:[%s619 + $0x2f0] sm:$0xff]
  %v680 = vld [vmem:[%s619 + $0x300] sm:$0xff]
  %v681 = vld [vmem:[%s619 + $0x308] sm:$0xff]
  %v682 = vld [vmem:[%s619 + $0x318] sm:$0xff]
  %v683 = vld [vmem:[%s619 + $0x320] sm:$0xff]
  %v684 = vld [vmem:[%s619 + $0x1] sm:$0xff]
  %v685 = vld [vmem:[%s619 + $0x9] sm:$0xff]
  %v686 = vld [vmem:[%s619 + $0x19] sm:$0xff]
  %v687 = vld [vmem:[%s619 + $0x21] sm:$0xff]
  %v688 = vld [vmem:[%s619 + $0x31] sm:$0xff]
  %v689 = vld [vmem:[%s619 + $0x39] sm:$0xff]
  %v690 = vld [vmem:[%s619 + $0x49] sm:$0xff]
  %v691 = vld [vmem:[%s619 + $0x51] sm:$0xff]
  %v692 = vld [vmem:[%s619 + $0x61] sm:$0xff]
  %v693 = vld [vmem:[%s619 + $0x69] sm:$0xff]
  %v694 = vld [vmem:[%s619 + $0x79] sm:$0xff]
  %v695 = vld [vmem:[%s619 + $0x81] sm:$0xff]
  %v696 = vld [vmem:[%s619 + $0x91] sm:$0xff]
  %v697 = vld [vmem:[%s619 + $0x99] sm:$0xff]
  %v698 = vld [vmem:[%s619 + $0xa9] sm:$0xff]
  %v699 = vld [vmem:[%s619 + $0xb1] sm:$0xff]
  %v700 = vld [vmem:[%s619 + $0xc1] sm:$0xff]
  %v701 = vld [vmem:[%s619 + $0xc9] sm:$0xff]
  %v702 = vld [vmem:[%s619 + $0xd9] sm:$0xff]
  %v703 = vld [vmem:[%s619 + $0xe1] sm:$0xff]
  %v704 = vld [vmem:[%s619 + $0xf1] sm:$0xff]
  %v705 = vld [vmem:[%s619 + $0xf9] sm:$0xff]
  %v706 = vld [vmem:[%s619 + $0x109] sm:$0xff]
  %v707 = vld [vmem:[%s619 + $0x111] sm:$0xff]
  %v708 = vld [vmem:[%s619 + $0x121] sm:$0xff]
  %v709 = vld [vmem:[%s619 + $0x129] sm:$0xff]
  %v710 = vld [vmem:[%s619 + $0x139] sm:$0xff]
  %v711 = vld [vmem:[%s619 + $0x141] sm:$0xff]
  %v712 = vld [vmem:[%s619 + $0x151] sm:$0xff]
  %v713 = vld [vmem:[%s619 + $0x159] sm:$0xff]
  %v714 = vld [vmem:[%s619 + $0x169] sm:$0xff]
  %v715 = vld [vmem:[%s619 + $0x171] sm:$0xff]
  %v716 = vld [vmem:[%s619 + $0x1b1] sm:$0xff]
  %v717 = vld [vmem:[%s619 + $0x1b9] sm:$0xff]
  %v718 = vld [vmem:[%s619 + $0x1c9] sm:$0xff]
  %v719 = vld [vmem:[%s619 + $0x1d1] sm:$0xff]
  %v720 = vld [vmem:[%s619 + $0x1e1] sm:$0xff]
  %v721 = vld [vmem:[%s619 + $0x1e9] sm:$0xff]
  %v722 = vld [vmem:[%s619 + $0x1f9] sm:$0xff]
  %v723 = vld [vmem:[%s619 + $0x201] sm:$0xff]
  %v724 = vld [vmem:[%s619 + $0x211] sm:$0xff]
  %v725 = vld [vmem:[%s619 + $0x219] sm:$0xff]
  %v726 = vld [vmem:[%s619 + $0x229] sm:$0xff]
  %v727 = vld [vmem:[%s619 + $0x231] sm:$0xff]
  %v728 = vld [vmem:[%s619 + $0x241] sm:$0xff]
  %v729 = vld [vmem:[%s619 + $0x249] sm:$0xff]
  %v730 = vld [vmem:[%s619 + $0x259] sm:$0xff]
  %v731 = vld [vmem:[%s619 + $0x261] sm:$0xff]
  %v732 = vld [vmem:[%s619 + $0x271] sm:$0xff]
  %v733 = vld [vmem:[%s619 + $0x279] sm:$0xff]
  %v734 = vld [vmem:[%s619 + $0x289] sm:$0xff]
  %v735 = vld [vmem:[%s619 + $0x291] sm:$0xff]
  %v736 = vld [vmem:[%s619 + $0x2a1] sm:$0xff]
  %v737 = vld [vmem:[%s619 + $0x2a9] sm:$0xff]
  %v738 = vld [vmem:[%s619 + $0x2b9] sm:$0xff]
  %v739 = vld [vmem:[%s619 + $0x2c1] sm:$0xff]
  %v740 = vld [vmem:[%s619 + $0x2d1] sm:$0xff]
  %v741 = vld [vmem:[%s619 + $0x2d9] sm:$0xff]
  %v742 = vld [vmem:[%s619 + $0x2e9] sm:$0xff]
  %v743 = vld [vmem:[%s619 + $0x2f1] sm:$0xff]
  %v744 = vld [vmem:[%s619 + $0x301] sm:$0xff]
  %v745 = vld [vmem:[%s619 + $0x309] sm:$0xff]
  %v746 = vld [vmem:[%s619 + $0x319] sm:$0xff]
  %v747 = vld [vmem:[%s619 + $0x321] sm:$0xff]
  %v748 = vld [vmem:[%s619 + $0x2] sm:$0xff]
  %v749 = vld [vmem:[%s619 + $0xa] sm:$0xff]
  %v750 = vld [vmem:[%s619 + $0x1a] sm:$0xff]
  %v751 = vld [vmem:[%s619 + $0x22] sm:$0xff]
  %v752 = vld [vmem:[%s619 + $0x32] sm:$0xff]
  %v753 = vld [vmem:[%s619 + $0x3a] sm:$0xff]
  %v754 = vld [vmem:[%s619 + $0x4a] sm:$0xff]
  %v755 = vld [vmem:[%s619 + $0x52] sm:$0xff]
  %v756 = vld [vmem:[%s619 + $0x62] sm:$0xff]
  %v757 = vld [vmem:[%s619 + $0x6a] sm:$0xff]
  %v758 = vld [vmem:[%s619 + $0x7a] sm:$0xff]
  %v759 = vld [vmem:[%s619 + $0x82] sm:$0xff]
  %v760 = vld [vmem:[%s619 + $0x92] sm:$0xff]
  %v761 = vld [vmem:[%s619 + $0x9a] sm:$0xff]
  %v762 = vld [vmem:[%s619 + $0xaa] sm:$0xff]
  %v763 = vld [vmem:[%s619 + $0xb2] sm:$0xff]
  %v764 = vld [vmem:[%s619 + $0xc2] sm:$0xff]
  %v765 = vld [vmem:[%s619 + $0xca] sm:$0xff]
  %v766 = vld [vmem:[%s619 + $0xda] sm:$0xff]
  %v767 = vld [vmem:[%s619 + $0xe2] sm:$0xff]
  %v768 = vld [vmem:[%s619 + $0xf2] sm:$0xff]
  %v769 = vld [vmem:[%s619 + $0xfa] sm:$0xff]
  %v770 = vld [vmem:[%s619 + $0x10a] sm:$0xff]
  %v771 = vld [vmem:[%s619 + $0x112] sm:$0xff]
  %v772 = vld [vmem:[%s619 + $0x122] sm:$0xff]
  %v773 = vld [vmem:[%s619 + $0x12a] sm:$0xff]
  %v774 = vld [vmem:[%s619 + $0x13a] sm:$0xff]
  %v775 = vld [vmem:[%s619 + $0x142] sm:$0xff]
  %v776 = vld [vmem:[%s619 + $0x152] sm:$0xff]
  %v777 = vld [vmem:[%s619 + $0x15a] sm:$0xff]
  %v778 = vld [vmem:[%s619 + $0x16a] sm:$0xff]
  %v779 = vld [vmem:[%s619 + $0x172] sm:$0xff]
  %v780 = vld [vmem:[%s619 + $0x1b2] sm:$0xff]
  %v781 = vld [vmem:[%s619 + $0x1ba] sm:$0xff]
  %v782 = vld [vmem:[%s619 + $0x1ca] sm:$0xff]
  %v783 = vld [vmem:[%s619 + $0x1d2] sm:$0xff]
  %v784 = vld [vmem:[%s619 + $0x1e2] sm:$0xff]
  %v785 = vld [vmem:[%s619 + $0x1ea] sm:$0xff]
  %v786 = vld [vmem:[%s619 + $0x1fa] sm:$0xff]
  %v787 = vld [vmem:[%s619 + $0x202] sm:$0xff]
  %v788 = vld [vmem:[%s619 + $0x212] sm:$0xff]
  %v789 = vld [vmem:[%s619 + $0x21a] sm:$0xff]
  %v790 = vld [vmem:[%s619 + $0x22a] sm:$0xff]
  %v791 = vld [vmem:[%s619 + $0x232] sm:$0xff]
  %v792 = vld [vmem:[%s619 + $0x242] sm:$0xff]
  %v793 = vld [vmem:[%s619 + $0x24a] sm:$0xff]
  %v794 = vld [vmem:[%s619 + $0x25a] sm:$0xff]
  %v795 = vld [vmem:[%s619 + $0x262] sm:$0xff]
  %v796 = vld [vmem:[%s619 + $0x272] sm:$0xff]
  %v797 = vld [vmem:[%s619 + $0x27a] sm:$0xff]
  %v798 = vld [vmem:[%s619 + $0x28a] sm:$0xff]
  %v799 = vld [vmem:[%s619 + $0x292] sm:$0xff]
  %v800 = vld [vmem:[%s619 + $0x2a2] sm:$0xff]
  %v801 = vld [vmem:[%s619 + $0x2aa] sm:$0xff]
  %v802 = vld [vmem:[%s619 + $0x2ba] sm:$0xff]
  %v803 = vld [vmem:[%s619 + $0x2c2] sm:$0xff]
  %v804 = vld [vmem:[%s619 + $0x2d2] sm:$0xff]
  %v805 = vld [vmem:[%s619 + $0x2da] sm:$0xff]
  %v806 = vld [vmem:[%s619 + $0x2ea] sm:$0xff]
  %v807 = vld [vmem:[%s619 + $0x2f2] sm:$0xff]
  %v808 = vld [vmem:[%s619 + $0x302] sm:$0xff]
  %v809 = vld [vmem:[%s619 + $0x30a] sm:$0xff]
  %v810 = vld [vmem:[%s619 + $0x31a] sm:$0xff]
  %v811 = vld [vmem:[%s619 + $0x322] sm:$0xff]
  %876 = vrot.lane.b32.xlu0 %v299, 4
  %v877 = vpop.permute.xlu0 %876
  %878 = vrot.lane.b32.xlu0 %v300, 4
  %v879 = vpop.permute.xlu0 %878
  %880 = vrot.lane.b32.xlu0 %v301, 4
  %v881 = vpop.permute.xlu0 %880
  %882 = vrot.lane.b32.xlu0 %v302, 4
  %v883 = vpop.permute.xlu0 %882
  %884 = vrot.lane.b32.xlu0 %v303, 4
  %v885 = vpop.permute.xlu0 %884
  %886 = vrot.lane.b32.xlu0 %v304, 4
  %v887 = vpop.permute.xlu0 %886
  %888 = vrot.lane.b32.xlu0 %v305, 4
  %v889 = vpop.permute.xlu0 %888
  %890 = vrot.lane.b32.xlu0 %v306, 4
  %v891 = vpop.permute.xlu0 %890
  %892 = vrot.lane.b32.xlu0 %v307, 4
  %v893 = vpop.permute.xlu0 %892
  %894 = vrot.lane.b32.xlu0 %v308, 4
  %v895 = vpop.permute.xlu0 %894
  %896 = vrot.lane.b32.xlu0 %v309, 4
  %v897 = vpop.permute.xlu0 %896
  %898 = vrot.lane.b32.xlu0 %v310, 4
  %v899 = vpop.permute.xlu0 %898
  %900 = vrot.lane.b32.xlu0 %v311, 4
  %v901 = vpop.permute.xlu0 %900
  %902 = vrot.lane.b32.xlu0 %v312, 4
  %v903 = vpop.permute.xlu0 %902
  %904 = vrot.lane.b32.xlu0 %v313, 4
  %v905 = vpop.permute.xlu0 %904
  %906 = vrot.lane.b32.xlu0 %v314, 4
  %v907 = vpop.permute.xlu0 %906
  %908 = vrot.lane.b32.xlu0 %v315, 4
  %v909 = vpop.permute.xlu0 %908
  %910 = vrot.lane.b32.xlu0 %v316, 4
  %v911 = vpop.permute.xlu0 %910
  %912 = vrot.lane.b32.xlu0 %v317, 4
  %v913 = vpop.permute.xlu0 %912
  %914 = vrot.lane.b32.xlu0 %v318, 4
  %v915 = vpop.permute.xlu0 %914
  %916 = vrot.lane.b32.xlu0 %v319, 4
  %v917 = vpop.permute.xlu0 %916
  %918 = vrot.lane.b32.xlu0 %v320, 4
  %v919 = vpop.permute.xlu0 %918
  %920 = vrot.lane.b32.xlu0 %v321, 4
  %v921 = vpop.permute.xlu0 %920
  %922 = vrot.lane.b32.xlu0 %v322, 4
  %v923 = vpop.permute.xlu0 %922
  %924 = vrot.lane.b32.xlu0 %v323, 4
  %v925 = vpop.permute.xlu0 %924
  %926 = vrot.lane.b32.xlu0 %v324, 4
  %v927 = vpop.permute.xlu0 %926
  %928 = vrot.lane.b32.xlu0 %v325, 4
  %v929 = vpop.permute.xlu0 %928
  %930 = vrot.lane.b32.xlu0 %v326, 4
  %v931 = vpop.permute.xlu0 %930
  %932 = vrot.lane.b32.xlu0 %v327, 4
  %v933 = vpop.permute.xlu0 %932
  %934 = vrot.lane.b32.xlu0 %v328, 4
  %v935 = vpop.permute.xlu0 %934
  %936 = vrot.lane.b32.xlu0 %v329, 4
  %v937 = vpop.permute.xlu0 %936
  %938 = vrot.lane.b32.xlu0 %v330, 4
  %v939 = vpop.permute.xlu0 %938
  %940 = vrot.lane.b32.xlu0 %v331, 4
  %v941 = vpop.permute.xlu0 %940
  %942 = vrot.lane.b32.xlu0 %v332, 4
  %v943 = vpop.permute.xlu0 %942
  %944 = vrot.lane.b32.xlu0 %v333, 4
  %v945 = vpop.permute.xlu0 %944
  %946 = vrot.lane.b32.xlu0 %v334, 4
  %v947 = vpop.permute.xlu0 %946
  %948 = vrot.lane.b32.xlu0 %v335, 4
  %v949 = vpop.permute.xlu0 %948
  %950 = vrot.lane.b32.xlu0 %v336, 4
  %v951 = vpop.permute.xlu0 %950
  %952 = vrot.lane.b32.xlu0 %v337, 4
  %v953 = vpop.permute.xlu0 %952
  %954 = vrot.lane.b32.xlu0 %v338, 4
  %v955 = vpop.permute.xlu0 %954
  %956 = vrot.lane.b32.xlu0 %v339, 4
  %v957 = vpop.permute.xlu0 %956
  %958 = vrot.lane.b32.xlu0 %v340, 4
  %v959 = vpop.permute.xlu0 %958
  %960 = vrot.lane.b32.xlu0 %v341, 4
  %v961 = vpop.permute.xlu0 %960
  %962 = vrot.lane.b32.xlu0 %v342, 4
  %v963 = vpop.permute.xlu0 %962
  %964 = vrot.lane.b32.xlu0 %v343, 4
  %v965 = vpop.permute.xlu0 %964
  %966 = vrot.lane.b32.xlu0 %v344, 4
  %v967 = vpop.permute.xlu0 %966
  %968 = vrot.lane.b32.xlu0 %v345, 4
  %v969 = vpop.permute.xlu0 %968
  %970 = vrot.lane.b32.xlu0 %v346, 4
  %v971 = vpop.permute.xlu0 %970
  %972 = vrot.lane.b32.xlu0 %v347, 4
  %v973 = vpop.permute.xlu0 %972
  %974 = vrot.lane.b32.xlu0 %v348, 4
  %v975 = vpop.permute.xlu0 %974
  %976 = vrot.lane.b32.xlu0 %v349, 4
  %v977 = vpop.permute.xlu0 %976
  %978 = vrot.lane.b32.xlu0 %v350, 4
  %v979 = vpop.permute.xlu0 %978
  %980 = vrot.lane.b32.xlu0 %v351, 4
  %v981 = vpop.permute.xlu0 %980
  %982 = vrot.lane.b32.xlu0 %v352, 4
  %v983 = vpop.permute.xlu0 %982
  %984 = vrot.lane.b32.xlu0 %v353, 4
  %v985 = vpop.permute.xlu0 %984
  %986 = vrot.lane.b32.xlu0 %v354, 4
  %v987 = vpop.permute.xlu0 %986
  %988 = vrot.lane.b32.xlu0 %v355, 4
  %v989 = vpop.permute.xlu0 %988
  %990 = vrot.lane.b32.xlu0 %v356, 4
  %v991 = vpop.permute.xlu0 %990
  %992 = vrot.lane.b32.xlu0 %v357, 4
  %v993 = vpop.permute.xlu0 %992
  %994 = vrot.lane.b32.xlu0 %v358, 4
  %v995 = vpop.permute.xlu0 %994
  %996 = vrot.lane.b32.xlu0 %v359, 4
  %v997 = vpop.permute.xlu0 %996
  %998 = vrot.lane.b32.xlu0 %v360, 4
  %v999 = vpop.permute.xlu0 %998
  %1000 = vrot.lane.b32.xlu0 %v361, 4
  %v1001 = vpop.permute.xlu0 %1000
  %1002 = vrot.lane.b32.xlu0 %v362, 4
  %v1003 = vpop.permute.xlu0 %1002
  %1132 = vrot.lane.b32.xlu0 %v363, 8
  %v1133 = vpop.permute.xlu0 %1132
  %1134 = vrot.lane.b32.xlu0 %v364, 8
  %v1135 = vpop.permute.xlu0 %1134
  %1136 = vrot.lane.b32.xlu0 %v365, 8
  %v1137 = vpop.permute.xlu0 %1136
  %1138 = vrot.lane.b32.xlu0 %v366, 8
  %v1139 = vpop.permute.xlu0 %1138
  %1140 = vrot.lane.b32.xlu0 %v367, 8
  %v1141 = vpop.permute.xlu0 %1140
  %1142 = vrot.lane.b32.xlu0 %v368, 8
  %v1143 = vpop.permute.xlu0 %1142
  %1144 = vrot.lane.b32.xlu0 %v369, 8
  %v1145 = vpop.permute.xlu0 %1144
  %1146 = vrot.lane.b32.xlu0 %v370, 8
  %v1147 = vpop.permute.xlu0 %1146
  %1148 = vrot.lane.b32.xlu0 %v371, 8
  %v1149 = vpop.permute.xlu0 %1148
  %1150 = vrot.lane.b32.xlu0 %v372, 8
  %v1151 = vpop.permute.xlu0 %1150
  %1152 = vrot.lane.b32.xlu0 %v373, 8
  %v1153 = vpop.permute.xlu0 %1152
  %1154 = vrot.lane.b32.xlu0 %v374, 8
  %v1155 = vpop.permute.xlu0 %1154
  %1156 = vrot.lane.b32.xlu0 %v375, 8
  %v1157 = vpop.permute.xlu0 %1156
  %1158 = vrot.lane.b32.xlu0 %v376, 8
  %v1159 = vpop.permute.xlu0 %1158
  %1160 = vrot.lane.b32.xlu0 %v377, 8
  %v1161 = vpop.permute.xlu0 %1160
  %1162 = vrot.lane.b32.xlu0 %v378, 8
  %v1163 = vpop.permute.xlu0 %1162
  %1164 = vrot.lane.b32.xlu0 %v379, 8
  %v1165 = vpop.permute.xlu0 %1164
  %1166 = vrot.lane.b32.xlu0 %v380, 8
  %v1167 = vpop.permute.xlu0 %1166
  %1168 = vrot.lane.b32.xlu0 %v381, 8
  %v1169 = vpop.permute.xlu0 %1168
  %1170 = vrot.lane.b32.xlu0 %v382, 8
  %v1171 = vpop.permute.xlu0 %1170
  %1172 = vrot.lane.b32.xlu0 %v383, 8
  %v1173 = vpop.permute.xlu0 %1172
  %1174 = vrot.lane.b32.xlu0 %v384, 8
  %v1175 = vpop.permute.xlu0 %1174
  %1176 = vrot.lane.b32.xlu0 %v385, 8
  %v1177 = vpop.permute.xlu0 %1176
  %1178 = vrot.lane.b32.xlu0 %v386, 8
  %v1179 = vpop.permute.xlu0 %1178
  %1180 = vrot.lane.b32.xlu0 %v387, 8
  %v1181 = vpop.permute.xlu0 %1180
  %1182 = vrot.lane.b32.xlu0 %v388, 8
  %v1183 = vpop.permute.xlu0 %1182
  %1184 = vrot.lane.b32.xlu0 %v389, 8
  %v1185 = vpop.permute.xlu0 %1184
  %1186 = vrot.lane.b32.xlu0 %v390, 8
  %v1187 = vpop.permute.xlu0 %1186
  %1188 = vrot.lane.b32.xlu0 %v391, 8
  %v1189 = vpop.permute.xlu0 %1188
  %1190 = vrot.lane.b32.xlu0 %v392, 8
  %v1191 = vpop.permute.xlu0 %1190
  %1192 = vrot.lane.b32.xlu0 %v393, 8
  %v1193 = vpop.permute.xlu0 %1192
  %1194 = vrot.lane.b32.xlu0 %v394, 8
  %v1195 = vpop.permute.xlu0 %1194
  %1196 = vrot.lane.b32.xlu0 %v395, 8
  %v1197 = vpop.permute.xlu0 %1196
  %1198 = vrot.lane.b32.xlu0 %v396, 8
  %v1199 = vpop.permute.xlu0 %1198
  %1200 = vrot.lane.b32.xlu0 %v397, 8
  %v1201 = vpop.permute.xlu0 %1200
  %1202 = vrot.lane.b32.xlu0 %v398, 8
  %v1203 = vpop.permute.xlu0 %1202
  %1204 = vrot.lane.b32.xlu0 %v399, 8
  %v1205 = vpop.permute.xlu0 %1204
  %1206 = vrot.lane.b32.xlu0 %v400, 8
  %v1207 = vpop.permute.xlu0 %1206
  %1208 = vrot.lane.b32.xlu0 %v401, 8
  %v1209 = vpop.permute.xlu0 %1208
  %1210 = vrot.lane.b32.xlu0 %v402, 8
  %v1211 = vpop.permute.xlu0 %1210
  %1212 = vrot.lane.b32.xlu0 %v403, 8
  %v1213 = vpop.permute.xlu0 %1212
  %1214 = vrot.lane.b32.xlu0 %v404, 8
  %v1215 = vpop.permute.xlu0 %1214
  %1216 = vrot.lane.b32.xlu0 %v405, 8
  %v1217 = vpop.permute.xlu0 %1216
  %1218 = vrot.lane.b32.xlu0 %v406, 8
  %v1219 = vpop.permute.xlu0 %1218
  %1220 = vrot.lane.b32.xlu0 %v407, 8
  %v1221 = vpop.permute.xlu0 %1220
  %1222 = vrot.lane.b32.xlu0 %v408, 8
  %v1223 = vpop.permute.xlu0 %1222
  %1224 = vrot.lane.b32.xlu0 %v409, 8
  %v1225 = vpop.permute.xlu0 %1224
  %1226 = vrot.lane.b32.xlu0 %v410, 8
  %v1227 = vpop.permute.xlu0 %1226
  %1228 = vrot.lane.b32.xlu0 %v411, 8
  %v1229 = vpop.permute.xlu0 %1228
  %1230 = vrot.lane.b32.xlu0 %v412, 8
  %v1231 = vpop.permute.xlu0 %1230
  %1232 = vrot.lane.b32.xlu0 %v413, 8
  %v1233 = vpop.permute.xlu0 %1232
  %1234 = vrot.lane.b32.xlu0 %v414, 8
  %v1235 = vpop.permute.xlu0 %1234
  %1236 = vrot.lane.b32.xlu0 %v415, 8
  %v1237 = vpop.permute.xlu0 %1236
  %1238 = vrot.lane.b32.xlu0 %v416, 8
  %v1239 = vpop.permute.xlu0 %1238
  %1240 = vrot.lane.b32.xlu0 %v417, 8
  %v1241 = vpop.permute.xlu0 %1240
  %1242 = vrot.lane.b32.xlu0 %v418, 8
  %v1243 = vpop.permute.xlu0 %1242
  %1244 = vrot.lane.b32.xlu0 %v419, 8
  %v1245 = vpop.permute.xlu0 %1244
  %1246 = vrot.lane.b32.xlu0 %v420, 8
  %v1247 = vpop.permute.xlu0 %1246
  %1248 = vrot.lane.b32.xlu0 %v421, 8
  %v1249 = vpop.permute.xlu0 %1248
  %1250 = vrot.lane.b32.xlu0 %v422, 8
  %v1251 = vpop.permute.xlu0 %1250
  %1252 = vrot.lane.b32.xlu0 %v423, 8
  %v1253 = vpop.permute.xlu0 %1252
  %1254 = vrot.lane.b32.xlu0 %v424, 8
  %v1255 = vpop.permute.xlu0 %1254
  %1256 = vrot.lane.b32.xlu0 %v425, 8
  %v1257 = vpop.permute.xlu0 %1256
  %1258 = vrot.lane.b32.xlu0 %v426, 8
  %v1259 = vpop.permute.xlu0 %1258
  %1388 = vrot.lane.b32.xlu0 %v427, 12
  %v1389 = vpop.permute.xlu0 %1388
  %1390 = vrot.lane.b32.xlu0 %v428, 12
  %v1391 = vpop.permute.xlu0 %1390
  %1392 = vrot.lane.b32.xlu0 %v429, 12
  %v1393 = vpop.permute.xlu0 %1392
  %1394 = vrot.lane.b32.xlu0 %v430, 12
  %v1395 = vpop.permute.xlu0 %1394
  %1396 = vrot.lane.b32.xlu0 %v431, 12
  %v1397 = vpop.permute.xlu0 %1396
  %1398 = vrot.lane.b32.xlu0 %v432, 12
  %v1399 = vpop.permute.xlu0 %1398
  %1400 = vrot.lane.b32.xlu0 %v433, 12
  %v1401 = vpop.permute.xlu0 %1400
  %1402 = vrot.lane.b32.xlu0 %v434, 12
  %v1403 = vpop.permute.xlu0 %1402
  %1404 = vrot.lane.b32.xlu0 %v435, 12
  %v1405 = vpop.permute.xlu0 %1404
  %1406 = vrot.lane.b32.xlu0 %v436, 12
  %v1407 = vpop.permute.xlu0 %1406
  %1408 = vrot.lane.b32.xlu0 %v437, 12
  %v1409 = vpop.permute.xlu0 %1408
  %1410 = vrot.lane.b32.xlu0 %v438, 12
  %v1411 = vpop.permute.xlu0 %1410
  %1412 = vrot.lane.b32.xlu0 %v439, 12
  %v1413 = vpop.permute.xlu0 %1412
  %1414 = vrot.lane.b32.xlu0 %v440, 12
  %v1415 = vpop.permute.xlu0 %1414
  %1416 = vrot.lane.b32.xlu0 %v441, 12
  %v1417 = vpop.permute.xlu0 %1416
  %1418 = vrot.lane.b32.xlu0 %v442, 12
  %v1419 = vpop.permute.xlu0 %1418
  %1420 = vrot.lane.b32.xlu0 %v443, 12
  %v1421 = vpop.permute.xlu0 %1420
  %1422 = vrot.lane.b32.xlu0 %v444, 12
  %v1423 = vpop.permute.xlu0 %1422
  %1424 = vrot.lane.b32.xlu0 %v445, 12
  %v1425 = vpop.permute.xlu0 %1424
  %1426 = vrot.lane.b32.xlu0 %v446, 12
  %v1427 = vpop.permute.xlu0 %1426
  %1428 = vrot.lane.b32.xlu0 %v447, 12
  %v1429 = vpop.permute.xlu0 %1428
  %1430 = vrot.lane.b32.xlu0 %v448, 12
  %v1431 = vpop.permute.xlu0 %1430
  %1432 = vrot.lane.b32.xlu0 %v449, 12
  %v1433 = vpop.permute.xlu0 %1432
  %1434 = vrot.lane.b32.xlu0 %v450, 12
  %v1435 = vpop.permute.xlu0 %1434
  %1436 = vrot.lane.b32.xlu0 %v451, 12
  %v1437 = vpop.permute.xlu0 %1436
  %1438 = vrot.lane.b32.xlu0 %v452, 12
  %v1439 = vpop.permute.xlu0 %1438
  %1440 = vrot.lane.b32.xlu0 %v453, 12
  %v1441 = vpop.permute.xlu0 %1440
  %1442 = vrot.lane.b32.xlu0 %v454, 12
  %v1443 = vpop.permute.xlu0 %1442
  %1444 = vrot.lane.b32.xlu0 %v455, 12
  %v1445 = vpop.permute.xlu0 %1444
  %1446 = vrot.lane.b32.xlu0 %v456, 12
  %v1447 = vpop.permute.xlu0 %1446
  %1448 = vrot.lane.b32.xlu0 %v457, 12
  %v1449 = vpop.permute.xlu0 %1448
  %1450 = vrot.lane.b32.xlu0 %v458, 12
  %v1451 = vpop.permute.xlu0 %1450
  %1452 = vrot.lane.b32.xlu0 %v459, 12
  %v1453 = vpop.permute.xlu0 %1452
  %1454 = vrot.lane.b32.xlu0 %v460, 12
  %v1455 = vpop.permute.xlu0 %1454
  %1456 = vrot.lane.b32.xlu0 %v461, 12
  %v1457 = vpop.permute.xlu0 %1456
  %1458 = vrot.lane.b32.xlu0 %v462, 12
  %v1459 = vpop.permute.xlu0 %1458
  %1460 = vrot.lane.b32.xlu0 %v463, 12
  %v1461 = vpop.permute.xlu0 %1460
  %1462 = vrot.lane.b32.xlu0 %v464, 12
  %v1463 = vpop.permute.xlu0 %1462
  %1464 = vrot.lane.b32.xlu0 %v465, 12
  %v1465 = vpop.permute.xlu0 %1464
  %1466 = vrot.lane.b32.xlu0 %v466, 12
  %v1467 = vpop.permute.xlu0 %1466
  %1468 = vrot.lane.b32.xlu0 %v467, 12
  %v1469 = vpop.permute.xlu0 %1468
  %1470 = vrot.lane.b32.xlu0 %v468, 12
  %v1471 = vpop.permute.xlu0 %1470
  %1472 = vrot.lane.b32.xlu0 %v469, 12
  %v1473 = vpop.permute.xlu0 %1472
  %1474 = vrot.lane.b32.xlu0 %v470, 12
  %v1475 = vpop.permute.xlu0 %1474
  %1476 = vrot.lane.b32.xlu0 %v471, 12
  %v1477 = vpop.permute.xlu0 %1476
  %1478 = vrot.lane.b32.xlu0 %v472, 12
  %v1479 = vpop.permute.xlu0 %1478
  %1480 = vrot.lane.b32.xlu0 %v473, 12
  %v1481 = vpop.permute.xlu0 %1480
  %1482 = vrot.lane.b32.xlu0 %v474, 12
  %v1483 = vpop.permute.xlu0 %1482
  %1484 = vrot.lane.b32.xlu0 %v475, 12
  %v1485 = vpop.permute.xlu0 %1484
  %1486 = vrot.lane.b32.xlu0 %v476, 12
  %v1487 = vpop.permute.xlu0 %1486
  %1488 = vrot.lane.b32.xlu0 %v477, 12
  %v1489 = vpop.permute.xlu0 %1488
  %1490 = vrot.lane.b32.xlu0 %v478, 12
  %v1491 = vpop.permute.xlu0 %1490
  %1492 = vrot.lane.b32.xlu0 %v479, 12
  %v1493 = vpop.permute.xlu0 %1492
  %1494 = vrot.lane.b32.xlu0 %v480, 12
  %v1495 = vpop.permute.xlu0 %1494
  %1496 = vrot.lane.b32.xlu0 %v481, 12
  %v1497 = vpop.permute.xlu0 %1496
  %1498 = vrot.lane.b32.xlu0 %v482, 12
  %v1499 = vpop.permute.xlu0 %1498
  %1500 = vrot.lane.b32.xlu0 %v483, 12
  %v1501 = vpop.permute.xlu0 %1500
  %1502 = vrot.lane.b32.xlu0 %v484, 12
  %v1503 = vpop.permute.xlu0 %1502
  %1504 = vrot.lane.b32.xlu0 %v485, 12
  %v1505 = vpop.permute.xlu0 %1504
  %1506 = vrot.lane.b32.xlu0 %v486, 12
  %v1507 = vpop.permute.xlu0 %1506
  %1508 = vrot.lane.b32.xlu0 %v487, 12
  %v1509 = vpop.permute.xlu0 %1508
  %1510 = vrot.lane.b32.xlu0 %v488, 12
  %v1511 = vpop.permute.xlu0 %1510
  %1512 = vrot.lane.b32.xlu0 %v489, 12
  %v1513 = vpop.permute.xlu0 %1512
  %1514 = vrot.lane.b32.xlu0 %v490, 12
  %v1515 = vpop.permute.xlu0 %1514
  %1644 = vrot.lane.b32.xlu0 %v491, 16
  %v1645 = vpop.permute.xlu0 %1644
  %1646 = vrot.lane.b32.xlu0 %v492, 16
  %v1647 = vpop.permute.xlu0 %1646
  %1648 = vrot.lane.b32.xlu0 %v493, 16
  %v1649 = vpop.permute.xlu0 %1648
  %1650 = vrot.lane.b32.xlu0 %v494, 16
  %v1651 = vpop.permute.xlu0 %1650
  %1652 = vrot.lane.b32.xlu0 %v495, 16
  %v1653 = vpop.permute.xlu0 %1652
  %1654 = vrot.lane.b32.xlu0 %v496, 16
  %v1655 = vpop.permute.xlu0 %1654
  %1656 = vrot.lane.b32.xlu0 %v497, 16
  %v1657 = vpop.permute.xlu0 %1656
  %1658 = vrot.lane.b32.xlu0 %v498, 16
  %v1659 = vpop.permute.xlu0 %1658
  %1660 = vrot.lane.b32.xlu0 %v499, 16
  %v1661 = vpop.permute.xlu0 %1660
  %1662 = vrot.lane.b32.xlu0 %v500, 16
  %v1663 = vpop.permute.xlu0 %1662
  %1664 = vrot.lane.b32.xlu0 %v501, 16
  %v1665 = vpop.permute.xlu0 %1664
  %1666 = vrot.lane.b32.xlu0 %v502, 16
  %v1667 = vpop.permute.xlu0 %1666
  %1668 = vrot.lane.b32.xlu0 %v503, 16
  %v1669 = vpop.permute.xlu0 %1668
  %1670 = vrot.lane.b32.xlu0 %v504, 16
  %v1671 = vpop.permute.xlu0 %1670
  %1672 = vrot.lane.b32.xlu0 %v505, 16
  %v1673 = vpop.permute.xlu0 %1672
  %1674 = vrot.lane.b32.xlu0 %v506, 16
  %v1675 = vpop.permute.xlu0 %1674
  %1676 = vrot.lane.b32.xlu0 %v507, 16
  %v1677 = vpop.permute.xlu0 %1676
  %1678 = vrot.lane.b32.xlu0 %v508, 16
  %v1679 = vpop.permute.xlu0 %1678
  %1680 = vrot.lane.b32.xlu0 %v509, 16
  %v1681 = vpop.permute.xlu0 %1680
  %1682 = vrot.lane.b32.xlu0 %v510, 16
  %v1683 = vpop.permute.xlu0 %1682
  %1684 = vrot.lane.b32.xlu0 %v511, 16
  %v1685 = vpop.permute.xlu0 %1684
  %1686 = vrot.lane.b32.xlu0 %v512, 16
  %v1687 = vpop.permute.xlu0 %1686
  %1688 = vrot.lane.b32.xlu0 %v513, 16
  %v1689 = vpop.permute.xlu0 %1688
  %1690 = vrot.lane.b32.xlu0 %v514, 16
  %v1691 = vpop.permute.xlu0 %1690
  %1692 = vrot.lane.b32.xlu0 %v515, 16
  %v1693 = vpop.permute.xlu0 %1692
  %1694 = vrot.lane.b32.xlu0 %v516, 16
  %v1695 = vpop.permute.xlu0 %1694
  %1696 = vrot.lane.b32.xlu0 %v517, 16
  %v1697 = vpop.permute.xlu0 %1696
  %1698 = vrot.lane.b32.xlu0 %v518, 16
  %v1699 = vpop.permute.xlu0 %1698
  %1700 = vrot.lane.b32.xlu0 %v519, 16
  %v1701 = vpop.permute.xlu0 %1700
  %1702 = vrot.lane.b32.xlu0 %v520, 16
  %v1703 = vpop.permute.xlu0 %1702
  %1704 = vrot.lane.b32.xlu0 %v521, 16
  %v1705 = vpop.permute.xlu0 %1704
  %1706 = vrot.lane.b32.xlu0 %v522, 16
  %v1707 = vpop.permute.xlu0 %1706
  %1708 = vrot.lane.b32.xlu0 %v523, 16
  %v1709 = vpop.permute.xlu0 %1708
  %1710 = vrot.lane.b32.xlu0 %v524, 16
  %v1711 = vpop.permute.xlu0 %1710
  %1712 = vrot.lane.b32.xlu0 %v525, 16
  %v1713 = vpop.permute.xlu0 %1712
  %1714 = vrot.lane.b32.xlu0 %v526, 16
  %v1715 = vpop.permute.xlu0 %1714
  %1716 = vrot.lane.b32.xlu0 %v527, 16
  %v1717 = vpop.permute.xlu0 %1716
  %1718 = vrot.lane.b32.xlu0 %v528, 16
  %v1719 = vpop.permute.xlu0 %1718
  %1720 = vrot.lane.b32.xlu0 %v529, 16
  %v1721 = vpop.permute.xlu0 %1720
  %1722 = vrot.lane.b32.xlu0 %v530, 16
  %v1723 = vpop.permute.xlu0 %1722
  %1724 = vrot.lane.b32.xlu0 %v531, 16
  %v1725 = vpop.permute.xlu0 %1724
  %1726 = vrot.lane.b32.xlu0 %v532, 16
  %v1727 = vpop.permute.xlu0 %1726
  %1728 = vrot.lane.b32.xlu0 %v533, 16
  %v1729 = vpop.permute.xlu0 %1728
  %1730 = vrot.lane.b32.xlu0 %v534, 16
  %v1731 = vpop.permute.xlu0 %1730
  %1732 = vrot.lane.b32.xlu0 %v535, 16
  %v1733 = vpop.permute.xlu0 %1732
  %1734 = vrot.lane.b32.xlu0 %v536, 16
  %v1735 = vpop.permute.xlu0 %1734
  %1736 = vrot.lane.b32.xlu0 %v537, 16
  %v1737 = vpop.permute.xlu0 %1736
  %1738 = vrot.lane.b32.xlu0 %v538, 16
  %v1739 = vpop.permute.xlu0 %1738
  %1740 = vrot.lane.b32.xlu0 %v539, 16
  %v1741 = vpop.permute.xlu0 %1740
  %1742 = vrot.lane.b32.xlu0 %v540, 16
  %v1743 = vpop.permute.xlu0 %1742
  %1744 = vrot.lane.b32.xlu0 %v541, 16
  %v1745 = vpop.permute.xlu0 %1744
  %1746 = vrot.lane.b32.xlu0 %v542, 16
  %v1747 = vpop.permute.xlu0 %1746
  %1748 = vrot.lane.b32.xlu0 %v543, 16
  %v1749 = vpop.permute.xlu0 %1748
  %1750 = vrot.lane.b32.xlu0 %v544, 16
  %v1751 = vpop.permute.xlu0 %1750
  %1752 = vrot.lane.b32.xlu0 %v545, 16
  %v1753 = vpop.permute.xlu0 %1752
  %1754 = vrot.lane.b32.xlu0 %v546, 16
  %v1755 = vpop.permute.xlu0 %1754
  %1756 = vrot.lane.b32.xlu0 %v547, 16
  %v1757 = vpop.permute.xlu0 %1756
  %1758 = vrot.lane.b32.xlu0 %v548, 16
  %v1759 = vpop.permute.xlu0 %1758
  %1760 = vrot.lane.b32.xlu0 %v549, 16
  %v1761 = vpop.permute.xlu0 %1760
  %1762 = vrot.lane.b32.xlu0 %v550, 16
  %v1763 = vpop.permute.xlu0 %1762
  %1764 = vrot.lane.b32.xlu0 %v551, 16
  %v1765 = vpop.permute.xlu0 %1764
  %1766 = vrot.lane.b32.xlu0 %v552, 16
  %v1767 = vpop.permute.xlu0 %1766
  %1768 = vrot.lane.b32.xlu0 %v553, 16
  %v1769 = vpop.permute.xlu0 %1768
  %1770 = vrot.lane.b32.xlu0 %v554, 16
  %v1771 = vpop.permute.xlu0 %1770
  %1900 = vrot.lane.b32.xlu0 %v555, 20
  %v1901 = vpop.permute.xlu0 %1900
  %1902 = vrot.lane.b32.xlu0 %v556, 20
  %v1903 = vpop.permute.xlu0 %1902
  %1904 = vrot.lane.b32.xlu0 %v557, 20
  %v1905 = vpop.permute.xlu0 %1904
  %1906 = vrot.lane.b32.xlu0 %v558, 20
  %v1907 = vpop.permute.xlu0 %1906
  %1908 = vrot.lane.b32.xlu0 %v559, 20
  %v1909 = vpop.permute.xlu0 %1908
  %1910 = vrot.lane.b32.xlu0 %v560, 20
  %v1911 = vpop.permute.xlu0 %1910
  %1912 = vrot.lane.b32.xlu0 %v561, 20
  %v1913 = vpop.permute.xlu0 %1912
  %1914 = vrot.lane.b32.xlu0 %v562, 20
  %v1915 = vpop.permute.xlu0 %1914
  %1916 = vrot.lane.b32.xlu0 %v563, 20
  %v1917 = vpop.permute.xlu0 %1916
  %1918 = vrot.lane.b32.xlu0 %v564, 20
  %v1919 = vpop.permute.xlu0 %1918
  %1920 = vrot.lane.b32.xlu0 %v565, 20
  %v1921 = vpop.permute.xlu0 %1920
  %1922 = vrot.lane.b32.xlu0 %v566, 20
  %v1923 = vpop.permute.xlu0 %1922
  %1924 = vrot.lane.b32.xlu0 %v567, 20
  %v1925 = vpop.permute.xlu0 %1924
  %1926 = vrot.lane.b32.xlu0 %v568, 20
  %v1927 = vpop.permute.xlu0 %1926
  %1928 = vrot.lane.b32.xlu0 %v569, 20
  %v1929 = vpop.permute.xlu0 %1928
  %1930 = vrot.lane.b32.xlu0 %v570, 20
  %v1931 = vpop.permute.xlu0 %1930
  %1932 = vrot.lane.b32.xlu0 %v571, 20
  %v1933 = vpop.permute.xlu0 %1932
  %1934 = vrot.lane.b32.xlu0 %v572, 20
  %v1935 = vpop.permute.xlu0 %1934
  %1936 = vrot.lane.b32.xlu0 %v573, 20
  %v1937 = vpop.permute.xlu0 %1936
  %1938 = vrot.lane.b32.xlu0 %v574, 20
  %v1939 = vpop.permute.xlu0 %1938
  %1940 = vrot.lane.b32.xlu0 %v575, 20
  %v1941 = vpop.permute.xlu0 %1940
  %1942 = vrot.lane.b32.xlu0 %v576, 20
  %v1943 = vpop.permute.xlu0 %1942
  %1944 = vrot.lane.b32.xlu0 %v577, 20
  %v1945 = vpop.permute.xlu0 %1944
  %1946 = vrot.lane.b32.xlu0 %v578, 20
  %v1947 = vpop.permute.xlu0 %1946
  %1948 = vrot.lane.b32.xlu0 %v579, 20
  %v1949 = vpop.permute.xlu0 %1948
  %1950 = vrot.lane.b32.xlu0 %v580, 20
  %v1951 = vpop.permute.xlu0 %1950
  %1952 = vrot.lane.b32.xlu0 %v581, 20
  %v1953 = vpop.permute.xlu0 %1952
  %1954 = vrot.lane.b32.xlu0 %v582, 20
  %v1955 = vpop.permute.xlu0 %1954
  %1956 = vrot.lane.b32.xlu0 %v583, 20
  %v1957 = vpop.permute.xlu0 %1956
  %1958 = vrot.lane.b32.xlu0 %v584, 20
  %v1959 = vpop.permute.xlu0 %1958
  %1960 = vrot.lane.b32.xlu0 %v585, 20
  %v1961 = vpop.permute.xlu0 %1960
  %1962 = vrot.lane.b32.xlu0 %v586, 20
  %v1963 = vpop.permute.xlu0 %1962
  %1964 = vrot.lane.b32.xlu0 %v587, 20
  %v1965 = vpop.permute.xlu0 %1964
  %1966 = vrot.lane.b32.xlu0 %v588, 20
  %v1967 = vpop.permute.xlu0 %1966
  %1968 = vrot.lane.b32.xlu0 %v589, 20
  %v1969 = vpop.permute.xlu0 %1968
  %1970 = vrot.lane.b32.xlu0 %v590, 20
  %v1971 = vpop.permute.xlu0 %1970
  %1972 = vrot.lane.b32.xlu0 %v591, 20
  %v1973 = vpop.permute.xlu0 %1972
  %1974 = vrot.lane.b32.xlu0 %v592, 20
  %v1975 = vpop.permute.xlu0 %1974
  %1976 = vrot.lane.b32.xlu0 %v593, 20
  %v1977 = vpop.permute.xlu0 %1976
  %1978 = vrot.lane.b32.xlu0 %v594, 20
  %v1979 = vpop.permute.xlu0 %1978
  %1980 = vrot.lane.b32.xlu0 %v595, 20
  %v1981 = vpop.permute.xlu0 %1980
  %1982 = vrot.lane.b32.xlu0 %v596, 20
  %v1983 = vpop.permute.xlu0 %1982
  %1984 = vrot.lane.b32.xlu0 %v597, 20
  %v1985 = vpop.permute.xlu0 %1984
  %1986 = vrot.lane.b32.xlu0 %v598, 20
  %v1987 = vpop.permute.xlu0 %1986
  %1988 = vrot.lane.b32.xlu0 %v599, 20
  %v1989 = vpop.permute.xlu0 %1988
  %1990 = vrot.lane.b32.xlu0 %v600, 20
  %v1991 = vpop.permute.xlu0 %1990
  %1992 = vrot.lane.b32.xlu0 %v601, 20
  %v1993 = vpop.permute.xlu0 %1992
  %1994 = vrot.lane.b32.xlu0 %v602, 20
  %v1995 = vpop.permute.xlu0 %1994
  %1996 = vrot.lane.b32.xlu0 %v603, 20
  %v1997 = vpop.permute.xlu0 %1996
  %1998 = vrot.lane.b32.xlu0 %v604, 20
  %v1999 = vpop.permute.xlu0 %1998
  %2000 = vrot.lane.b32.xlu0 %v605, 20
  %v2001 = vpop.permute.xlu0 %2000
  %2002 = vrot.lane.b32.xlu0 %v606, 20
  %v2003 = vpop.permute.xlu0 %2002
  %2004 = vrot.lane.b32.xlu0 %v607, 20
  %v2005 = vpop.permute.xlu0 %2004
  %2006 = vrot.lane.b32.xlu0 %v608, 20
  %v2007 = vpop.permute.xlu0 %2006
  %2008 = vrot.lane.b32.xlu0 %v609, 20
  %v2009 = vpop.permute.xlu0 %2008
  %2010 = vrot.lane.b32.xlu0 %v610, 20
  %v2011 = vpop.permute.xlu0 %2010
  %2012 = vrot.lane.b32.xlu0 %v611, 20
  %v2013 = vpop.permute.xlu0 %2012
  %2014 = vrot.lane.b32.xlu0 %v612, 20
  %v2015 = vpop.permute.xlu0 %2014
  %2016 = vrot.lane.b32.xlu0 %v613, 20
  %v2017 = vpop.permute.xlu0 %2016
  %2018 = vrot.lane.b32.xlu0 %v614, 20
  %v2019 = vpop.permute.xlu0 %2018
  %2020 = vrot.lane.b32.xlu0 %v615, 20
  %v2021 = vpop.permute.xlu0 %2020
  %2022 = vrot.lane.b32.xlu0 %v616, 20
  %v2023 = vpop.permute.xlu0 %2022
  %2024 = vrot.lane.b32.xlu0 %v617, 20
  %v2025 = vpop.permute.xlu0 %2024
  %2026 = vrot.lane.b32.xlu0 %v618, 20
  %v2027 = vpop.permute.xlu0 %2026
  %2156 = vrot.lane.b32.xlu0 %v620, 24
  %v2157 = vpop.permute.xlu0 %2156
  %2158 = vrot.lane.b32.xlu0 %v621, 24
  %v2159 = vpop.permute.xlu0 %2158
  %2160 = vrot.lane.b32.xlu0 %v622, 24
  %v2161 = vpop.permute.xlu0 %2160
  %2162 = vrot.lane.b32.xlu0 %v623, 24
  %v2163 = vpop.permute.xlu0 %2162
  %2164 = vrot.lane.b32.xlu0 %v624, 24
  %v2165 = vpop.permute.xlu0 %2164
  %2166 = vrot.lane.b32.xlu0 %v625, 24
  %v2167 = vpop.permute.xlu0 %2166
  %2168 = vrot.lane.b32.xlu0 %v626, 24
  %v2169 = vpop.permute.xlu0 %2168
  %2170 = vrot.lane.b32.xlu0 %v627, 24
  %v2171 = vpop.permute.xlu0 %2170
  %2172 = vrot.lane.b32.xlu0 %v628, 24
  %v2173 = vpop.permute.xlu0 %2172
  %2174 = vrot.lane.b32.xlu0 %v629, 24
  %v2175 = vpop.permute.xlu0 %2174
  %2176 = vrot.lane.b32.xlu0 %v630, 24
  %v2177 = vpop.permute.xlu0 %2176
  %2178 = vrot.lane.b32.xlu0 %v631, 24
  %v2179 = vpop.permute.xlu0 %2178
  %2180 = vrot.lane.b32.xlu0 %v632, 24
  %v2181 = vpop.permute.xlu0 %2180
  %2182 = vrot.lane.b32.xlu0 %v633, 24
  %v2183 = vpop.permute.xlu0 %2182
  %2184 = vrot.lane.b32.xlu0 %v634, 24
  %v2185 = vpop.permute.xlu0 %2184
  %2186 = vrot.lane.b32.xlu0 %v635, 24
  %v2187 = vpop.permute.xlu0 %2186
  %2188 = vrot.lane.b32.xlu0 %v636, 24
  %v2189 = vpop.permute.xlu0 %2188
  %2190 = vrot.lane.b32.xlu0 %v637, 24
  %v2191 = vpop.permute.xlu0 %2190
  %2192 = vrot.lane.b32.xlu0 %v638, 24
  %v2193 = vpop.permute.xlu0 %2192
  %2194 = vrot.lane.b32.xlu0 %v639, 24
  %v2195 = vpop.permute.xlu0 %2194
  %2196 = vrot.lane.b32.xlu0 %v640, 24
  %v2197 = vpop.permute.xlu0 %2196
  %2198 = vrot.lane.b32.xlu0 %v641, 24
  %v2199 = vpop.permute.xlu0 %2198
  %2200 = vrot.lane.b32.xlu0 %v642, 24
  %v2201 = vpop.permute.xlu0 %2200
  %2202 = vrot.lane.b32.xlu0 %v643, 24
  %v2203 = vpop.permute.xlu0 %2202
  %2204 = vrot.lane.b32.xlu0 %v644, 24
  %v2205 = vpop.permute.xlu0 %2204
  %2206 = vrot.lane.b32.xlu0 %v645, 24
  %v2207 = vpop.permute.xlu0 %2206
  %2208 = vrot.lane.b32.xlu0 %v646, 24
  %v2209 = vpop.permute.xlu0 %2208
  %2210 = vrot.lane.b32.xlu0 %v647, 24
  %v2211 = vpop.permute.xlu0 %2210
  %2212 = vrot.lane.b32.xlu0 %v648, 24
  %v2213 = vpop.permute.xlu0 %2212
  %2214 = vrot.lane.b32.xlu0 %v649, 24
  %v2215 = vpop.permute.xlu0 %2214
  %2216 = vrot.lane.b32.xlu0 %v650, 24
  %v2217 = vpop.permute.xlu0 %2216
  %2218 = vrot.lane.b32.xlu0 %v651, 24
  %v2219 = vpop.permute.xlu0 %2218
  %2220 = vrot.lane.b32.xlu0 %v652, 24
  %v2221 = vpop.permute.xlu0 %2220
  %2222 = vrot.lane.b32.xlu0 %v653, 24
  %v2223 = vpop.permute.xlu0 %2222
  %2224 = vrot.lane.b32.xlu0 %v654, 24
  %v2225 = vpop.permute.xlu0 %2224
  %2226 = vrot.lane.b32.xlu0 %v655, 24
  %v2227 = vpop.permute.xlu0 %2226
  %2228 = vrot.lane.b32.xlu0 %v656, 24
  %v2229 = vpop.permute.xlu0 %2228
  %2230 = vrot.lane.b32.xlu0 %v657, 24
  %v2231 = vpop.permute.xlu0 %2230
  %2232 = vrot.lane.b32.xlu0 %v658, 24
  %v2233 = vpop.permute.xlu0 %2232
  %2234 = vrot.lane.b32.xlu0 %v659, 24
  %v2235 = vpop.permute.xlu0 %2234
  %2236 = vrot.lane.b32.xlu0 %v660, 24
  %v2237 = vpop.permute.xlu0 %2236
  %2238 = vrot.lane.b32.xlu0 %v661, 24
  %v2239 = vpop.permute.xlu0 %2238
  %2240 = vrot.lane.b32.xlu0 %v662, 24
  %v2241 = vpop.permute.xlu0 %2240
  %2242 = vrot.lane.b32.xlu0 %v663, 24
  %v2243 = vpop.permute.xlu0 %2242
  %2244 = vrot.lane.b32.xlu0 %v664, 24
  %v2245 = vpop.permute.xlu0 %2244
  %2246 = vrot.lane.b32.xlu0 %v665, 24
  %v2247 = vpop.permute.xlu0 %2246
  %2248 = vrot.lane.b32.xlu0 %v666, 24
  %v2249 = vpop.permute.xlu0 %2248
  %2250 = vrot.lane.b32.xlu0 %v667, 24
  %v2251 = vpop.permute.xlu0 %2250
  %2252 = vrot.lane.b32.xlu0 %v668, 24
  %v2253 = vpop.permute.xlu0 %2252
  %2254 = vrot.lane.b32.xlu0 %v669, 24
  %v2255 = vpop.permute.xlu0 %2254
  %2256 = vrot.lane.b32.xlu0 %v670, 24
  %v2257 = vpop.permute.xlu0 %2256
  %2258 = vrot.lane.b32.xlu0 %v671, 24
  %v2259 = vpop.permute.xlu0 %2258
  %2260 = vrot.lane.b32.xlu0 %v672, 24
  %v2261 = vpop.permute.xlu0 %2260
  %2262 = vrot.lane.b32.xlu0 %v673, 24
  %v2263 = vpop.permute.xlu0 %2262
  %2264 = vrot.lane.b32.xlu0 %v674, 24
  %v2265 = vpop.permute.xlu0 %2264
  %2266 = vrot.lane.b32.xlu0 %v675, 24
  %v2267 = vpop.permute.xlu0 %2266
  %2268 = vrot.lane.b32.xlu0 %v676, 24
  %v2269 = vpop.permute.xlu0 %2268
  %2270 = vrot.lane.b32.xlu0 %v677, 24
  %v2271 = vpop.permute.xlu0 %2270
  %2272 = vrot.lane.b32.xlu0 %v678, 24
  %v2273 = vpop.permute.xlu0 %2272
  %2274 = vrot.lane.b32.xlu0 %v679, 24
  %v2275 = vpop.permute.xlu0 %2274
  %2276 = vrot.lane.b32.xlu0 %v680, 24
  %v2277 = vpop.permute.xlu0 %2276
  %2278 = vrot.lane.b32.xlu0 %v681, 24
  %v2279 = vpop.permute.xlu0 %2278
  %2280 = vrot.lane.b32.xlu0 %v682, 24
  %v2281 = vpop.permute.xlu0 %2280
  %2282 = vrot.lane.b32.xlu0 %v683, 24
  %v2283 = vpop.permute.xlu0 %2282
  %2412 = vrot.lane.b32.xlu0 %v684, 28
  %v2413 = vpop.permute.xlu0 %2412
  %2414 = vrot.lane.b32.xlu0 %v685, 28
  %v2415 = vpop.permute.xlu0 %2414
  %2416 = vrot.lane.b32.xlu0 %v686, 28
  %v2417 = vpop.permute.xlu0 %2416
  %2418 = vrot.lane.b32.xlu0 %v687, 28
  %v2419 = vpop.permute.xlu0 %2418
  %2420 = vrot.lane.b32.xlu0 %v688, 28
  %v2421 = vpop.permute.xlu0 %2420
  %2422 = vrot.lane.b32.xlu0 %v689, 28
  %v2423 = vpop.permute.xlu0 %2422
  %2424 = vrot.lane.b32.xlu0 %v690, 28
  %v2425 = vpop.permute.xlu0 %2424
  %2426 = vrot.lane.b32.xlu0 %v691, 28
  %v2427 = vpop.permute.xlu0 %2426
  %2428 = vrot.lane.b32.xlu0 %v692, 28
  %v2429 = vpop.permute.xlu0 %2428
  %2430 = vrot.lane.b32.xlu0 %v693, 28
  %v2431 = vpop.permute.xlu0 %2430
  %2432 = vrot.lane.b32.xlu0 %v694, 28
  %v2433 = vpop.permute.xlu0 %2432
  %2434 = vrot.lane.b32.xlu0 %v695, 28
  %v2435 = vpop.permute.xlu0 %2434
  %2436 = vrot.lane.b32.xlu0 %v696, 28
  %v2437 = vpop.permute.xlu0 %2436
  %2438 = vrot.lane.b32.xlu0 %v697, 28
  %v2439 = vpop.permute.xlu0 %2438
  %2440 = vrot.lane.b32.xlu0 %v698, 28
  %v2441 = vpop.permute.xlu0 %2440
  %2442 = vrot.lane.b32.xlu0 %v699, 28
  %v2443 = vpop.permute.xlu0 %2442
  %2444 = vrot.lane.b32.xlu0 %v700, 28
  %v2445 = vpop.permute.xlu0 %2444
  %2446 = vrot.lane.b32.xlu0 %v701, 28
  %v2447 = vpop.permute.xlu0 %2446
  %2448 = vrot.lane.b32.xlu0 %v702, 28
  %v2449 = vpop.permute.xlu0 %2448
  %2450 = vrot.lane.b32.xlu0 %v703, 28
  %v2451 = vpop.permute.xlu0 %2450
  %2452 = vrot.lane.b32.xlu0 %v704, 28
  %v2453 = vpop.permute.xlu0 %2452
  %2454 = vrot.lane.b32.xlu0 %v705, 28
  %v2455 = vpop.permute.xlu0 %2454
  %2456 = vrot.lane.b32.xlu0 %v706, 28
  %v2457 = vpop.permute.xlu0 %2456
  %2458 = vrot.lane.b32.xlu0 %v707, 28
  %v2459 = vpop.permute.xlu0 %2458
  %2460 = vrot.lane.b32.xlu0 %v708, 28
  %v2461 = vpop.permute.xlu0 %2460
  %2462 = vrot.lane.b32.xlu0 %v709, 28
  %v2463 = vpop.permute.xlu0 %2462
  %2464 = vrot.lane.b32.xlu0 %v710, 28
  %v2465 = vpop.permute.xlu0 %2464
  %2466 = vrot.lane.b32.xlu0 %v711, 28
  %v2467 = vpop.permute.xlu0 %2466
  %2468 = vrot.lane.b32.xlu0 %v712, 28
  %v2469 = vpop.permute.xlu0 %2468
  %2470 = vrot.lane.b32.xlu0 %v713, 28
  %v2471 = vpop.permute.xlu0 %2470
  %2472 = vrot.lane.b32.xlu0 %v714, 28
  %v2473 = vpop.permute.xlu0 %2472
  %2474 = vrot.lane.b32.xlu0 %v715, 28
  %v2475 = vpop.permute.xlu0 %2474
  %2476 = vrot.lane.b32.xlu0 %v716, 28
  %v2477 = vpop.permute.xlu0 %2476
  %2478 = vrot.lane.b32.xlu0 %v717, 28
  %v2479 = vpop.permute.xlu0 %2478
  %2480 = vrot.lane.b32.xlu0 %v718, 28
  %v2481 = vpop.permute.xlu0 %2480
  %2482 = vrot.lane.b32.xlu0 %v719, 28
  %v2483 = vpop.permute.xlu0 %2482
  %2484 = vrot.lane.b32.xlu0 %v720, 28
  %v2485 = vpop.permute.xlu0 %2484
  %2486 = vrot.lane.b32.xlu0 %v721, 28
  %v2487 = vpop.permute.xlu0 %2486
  %2488 = vrot.lane.b32.xlu0 %v722, 28
  %v2489 = vpop.permute.xlu0 %2488
  %2490 = vrot.lane.b32.xlu0 %v723, 28
  %v2491 = vpop.permute.xlu0 %2490
  %2492 = vrot.lane.b32.xlu0 %v724, 28
  %v2493 = vpop.permute.xlu0 %2492
  %2494 = vrot.lane.b32.xlu0 %v725, 28
  %v2495 = vpop.permute.xlu0 %2494
  %2496 = vrot.lane.b32.xlu0 %v726, 28
  %v2497 = vpop.permute.xlu0 %2496
  %2498 = vrot.lane.b32.xlu0 %v727, 28
  %v2499 = vpop.permute.xlu0 %2498
  %2500 = vrot.lane.b32.xlu0 %v728, 28
  %v2501 = vpop.permute.xlu0 %2500
  %2502 = vrot.lane.b32.xlu0 %v729, 28
  %v2503 = vpop.permute.xlu0 %2502
  %2504 = vrot.lane.b32.xlu0 %v730, 28
  %v2505 = vpop.permute.xlu0 %2504
  %2506 = vrot.lane.b32.xlu0 %v731, 28
  %v2507 = vpop.permute.xlu0 %2506
  %2508 = vrot.lane.b32.xlu0 %v732, 28
  %v2509 = vpop.permute.xlu0 %2508
  %2510 = vrot.lane.b32.xlu0 %v733, 28
  %v2511 = vpop.permute.xlu0 %2510
  %2512 = vrot.lane.b32.xlu0 %v734, 28
  %v2513 = vpop.permute.xlu0 %2512
  %2514 = vrot.lane.b32.xlu0 %v735, 28
  %v2515 = vpop.permute.xlu0 %2514
  %2516 = vrot.lane.b32.xlu0 %v736, 28
  %v2517 = vpop.permute.xlu0 %2516
  %2518 = vrot.lane.b32.xlu0 %v737, 28
  %v2519 = vpop.permute.xlu0 %2518
  %2520 = vrot.lane.b32.xlu0 %v738, 28
  %v2521 = vpop.permute.xlu0 %2520
  %2522 = vrot.lane.b32.xlu0 %v739, 28
  %v2523 = vpop.permute.xlu0 %2522
  %2524 = vrot.lane.b32.xlu0 %v740, 28
  %v2525 = vpop.permute.xlu0 %2524
  %2526 = vrot.lane.b32.xlu0 %v741, 28
  %v2527 = vpop.permute.xlu0 %2526
  %2528 = vrot.lane.b32.xlu0 %v742, 28
  %v2529 = vpop.permute.xlu0 %2528
  %2530 = vrot.lane.b32.xlu0 %v743, 28
  %v2531 = vpop.permute.xlu0 %2530
  %2532 = vrot.lane.b32.xlu0 %v744, 28
  %v2533 = vpop.permute.xlu0 %2532
  %2534 = vrot.lane.b32.xlu0 %v745, 28
  %v2535 = vpop.permute.xlu0 %2534
  %2536 = vrot.lane.b32.xlu0 %v746, 28
  %v2537 = vpop.permute.xlu0 %2536
  %2538 = vrot.lane.b32.xlu0 %v747, 28
  %v2539 = vpop.permute.xlu0 %2538
  %2668 = vrot.lane.b32.xlu0 %v748, 32
  %v2669 = vpop.permute.xlu0 %2668
  %2670 = vrot.lane.b32.xlu0 %v749, 32
  %v2671 = vpop.permute.xlu0 %2670
  %2672 = vrot.lane.b32.xlu0 %v750, 32
  %v2673 = vpop.permute.xlu0 %2672
  %2674 = vrot.lane.b32.xlu0 %v751, 32
  %v2675 = vpop.permute.xlu0 %2674
  %2676 = vrot.lane.b32.xlu0 %v752, 32
  %v2677 = vpop.permute.xlu0 %2676
  %2678 = vrot.lane.b32.xlu0 %v753, 32
  %v2679 = vpop.permute.xlu0 %2678
  %2680 = vrot.lane.b32.xlu0 %v754, 32
  %v2681 = vpop.permute.xlu0 %2680
  %2682 = vrot.lane.b32.xlu0 %v755, 32
  %v2683 = vpop.permute.xlu0 %2682
  %2684 = vrot.lane.b32.xlu0 %v756, 32
  %v2685 = vpop.permute.xlu0 %2684
  %2686 = vrot.lane.b32.xlu0 %v757, 32
  %v2687 = vpop.permute.xlu0 %2686
  %2688 = vrot.lane.b32.xlu0 %v758, 32
  %v2689 = vpop.permute.xlu0 %2688
  %2690 = vrot.lane.b32.xlu0 %v759, 32
  %v2691 = vpop.permute.xlu0 %2690
  %2692 = vrot.lane.b32.xlu0 %v760, 32
  %v2693 = vpop.permute.xlu0 %2692
  %2694 = vrot.lane.b32.xlu0 %v761, 32
  %v2695 = vpop.permute.xlu0 %2694
  %2696 = vrot.lane.b32.xlu0 %v762, 32
  %v2697 = vpop.permute.xlu0 %2696
  %2698 = vrot.lane.b32.xlu0 %v763, 32
  %v2699 = vpop.permute.xlu0 %2698
  %2700 = vrot.lane.b32.xlu0 %v764, 32
  %v2701 = vpop.permute.xlu0 %2700
  %2702 = vrot.lane.b32.xlu0 %v765, 32
  %v2703 = vpop.permute.xlu0 %2702
  %2704 = vrot.lane.b32.xlu0 %v766, 32
  %v2705 = vpop.permute.xlu0 %2704
  %2706 = vrot.lane.b32.xlu0 %v767, 32
  %v2707 = vpop.permute.xlu0 %2706
  %2708 = vrot.lane.b32.xlu0 %v768, 32
  %v2709 = vpop.permute.xlu0 %2708
  %2710 = vrot.lane.b32.xlu0 %v769, 32
  %v2711 = vpop.permute.xlu0 %2710
  %2712 = vrot.lane.b32.xlu0 %v770, 32
  %v2713 = vpop.permute.xlu0 %2712
  %2714 = vrot.lane.b32.xlu0 %v771, 32
  %v2715 = vpop.permute.xlu0 %2714
  %2716 = vrot.lane.b32.xlu0 %v772, 32
  %v2717 = vpop.permute.xlu0 %2716
  %2718 = vrot.lane.b32.xlu0 %v773, 32
  %v2719 = vpop.permute.xlu0 %2718
  %2720 = vrot.lane.b32.xlu0 %v774, 32
  %v2721 = vpop.permute.xlu0 %2720
  %2722 = vrot.lane.b32.xlu0 %v775, 32
  %v2723 = vpop.permute.xlu0 %2722
  %2724 = vrot.lane.b32.xlu0 %v776, 32
  %v2725 = vpop.permute.xlu0 %2724
  %2726 = vrot.lane.b32.xlu0 %v777, 32
  %v2727 = vpop.permute.xlu0 %2726
  %2728 = vrot.lane.b32.xlu0 %v778, 32
  %v2729 = vpop.permute.xlu0 %2728
  %2730 = vrot.lane.b32.xlu0 %v779, 32
  %v2731 = vpop.permute.xlu0 %2730
  %2732 = vrot.lane.b32.xlu0 %v780, 32
  %v2733 = vpop.permute.xlu0 %2732
  %2734 = vrot.lane.b32.xlu0 %v781, 32
  %v2735 = vpop.permute.xlu0 %2734
  %2736 = vrot.lane.b32.xlu0 %v782, 32
  %v2737 = vpop.permute.xlu0 %2736
  %2738 = vrot.lane.b32.xlu0 %v783, 32
  %v2739 = vpop.permute.xlu0 %2738
  %2740 = vrot.lane.b32.xlu0 %v784, 32
  %v2741 = vpop.permute.xlu0 %2740
  %2742 = vrot.lane.b32.xlu0 %v785, 32
  %v2743 = vpop.permute.xlu0 %2742
  %2744 = vrot.lane.b32.xlu0 %v786, 32
  %v2745 = vpop.permute.xlu0 %2744
  %2746 = vrot.lane.b32.xlu0 %v787, 32
  %v2747 = vpop.permute.xlu0 %2746
  %2748 = vrot.lane.b32.xlu0 %v788, 32
  %v2749 = vpop.permute.xlu0 %2748
  %2750 = vrot.lane.b32.xlu0 %v789, 32
  %v2751 = vpop.permute.xlu0 %2750
  %2752 = vrot.lane.b32.xlu0 %v790, 32
  %v2753 = vpop.permute.xlu0 %2752
  %2754 = vrot.lane.b32.xlu0 %v791, 32
  %v2755 = vpop.permute.xlu0 %2754
  %2756 = vrot.lane.b32.xlu0 %v792, 32
  %v2757 = vpop.permute.xlu0 %2756
  %2758 = vrot.lane.b32.xlu0 %v793, 32
  %v2759 = vpop.permute.xlu0 %2758
  %2760 = vrot.lane.b32.xlu0 %v794, 32
  %v2761 = vpop.permute.xlu0 %2760
  %2762 = vrot.lane.b32.xlu0 %v795, 32
  %v2763 = vpop.permute.xlu0 %2762
  %2764 = vrot.lane.b32.xlu0 %v796, 32
  %v2765 = vpop.permute.xlu0 %2764
  %2766 = vrot.lane.b32.xlu0 %v797, 32
  %v2767 = vpop.permute.xlu0 %2766
  %2768 = vrot.lane.b32.xlu0 %v798, 32
  %v2769 = vpop.permute.xlu0 %2768
  %2770 = vrot.lane.b32.xlu0 %v799, 32
  %v2771 = vpop.permute.xlu0 %2770
  %2772 = vrot.lane.b32.xlu0 %v800, 32
  %v2773 = vpop.permute.xlu0 %2772
  %2774 = vrot.lane.b32.xlu0 %v801, 32
  %v2775 = vpop.permute.xlu0 %2774
  %2776 = vrot.lane.b32.xlu0 %v802, 32
  %v2777 = vpop.permute.xlu0 %2776
  %2778 = vrot.lane.b32.xlu0 %v803, 32
  %v2779 = vpop.permute.xlu0 %2778
  %2780 = vrot.lane.b32.xlu0 %v804, 32
  %v2781 = vpop.permute.xlu0 %2780
  %2782 = vrot.lane.b32.xlu0 %v805, 32
  %v2783 = vpop.permute.xlu0 %2782
  %2784 = vrot.lane.b32.xlu0 %v806, 32
  %v2785 = vpop.permute.xlu0 %2784
  %2786 = vrot.lane.b32.xlu0 %v807, 32
  %v2787 = vpop.permute.xlu0 %2786
  %2788 = vrot.lane.b32.xlu0 %v808, 32
  %v2789 = vpop.permute.xlu0 %2788
  %2790 = vrot.lane.b32.xlu0 %v809, 32
  %v2791 = vpop.permute.xlu0 %2790
  %2792 = vrot.lane.b32.xlu0 %v810, 32
  %v2793 = vpop.permute.xlu0 %2792
  %2794 = vrot.lane.b32.xlu0 %v811, 32
  %v2795 = vpop.permute.xlu0 %2794
  %v2860 = vsel %vm90, %v235, %v877
  %v2861 = vsel %vm90, %v236, %v879
  %v2862 = vsel %vm90, %v237, %v881
  %v2863 = vsel %vm90, %v238, %v883
  %v2864 = vsel %vm90, %v239, %v885
  %v2865 = vsel %vm90, %v240, %v887
  %v2866 = vsel %vm90, %v241, %v889
  %v2867 = vsel %vm90, %v242, %v891
  %v2868 = vsel %vm90, %v243, %v893
  %v2869 = vsel %vm90, %v244, %v895
  %v2870 = vsel %vm90, %v245, %v897
  %v2871 = vsel %vm90, %v246, %v899
  %v2872 = vsel %vm90, %v247, %v901
  %v2873 = vsel %vm90, %v248, %v903
  %v2874 = vsel %vm90, %v249, %v905
  %v2875 = vsel %vm90, %v250, %v907
  %v2876 = vsel %vm90, %v251, %v909
  %v2877 = vsel %vm90, %v252, %v911
  %v2878 = vsel %vm90, %v253, %v913
  %v2879 = vsel %vm90, %v254, %v915
  %v2880 = vsel %vm90, %v255, %v917
  %v2881 = vsel %vm90, %v256, %v919
  %v2882 = vsel %vm90, %v257, %v921
  %v2883 = vsel %vm90, %v258, %v923
  %v2884 = vsel %vm90, %v259, %v925
  %v2885 = vsel %vm90, %v260, %v927
  %v2886 = vsel %vm90, %v261, %v929
  %v2887 = vsel %vm90, %v262, %v931
  %v2888 = vsel %vm90, %v263, %v933
  %v2889 = vsel %vm90, %v264, %v935
  %v2890 = vsel %vm90, %v265, %v937
  %v2891 = vsel %vm90, %v266, %v939
  %v2892 = vsel %vm90, %v267, %v941
  %v2893 = vsel %vm90, %v268, %v943
  %v2894 = vsel %vm90, %v269, %v945
  %v2895 = vsel %vm90, %v270, %v947
  %v2896 = vsel %vm90, %v271, %v949
  %v2897 = vsel %vm90, %v272, %v951
  %v2898 = vsel %vm90, %v273, %v953
  %v2899 = vsel %vm90, %v274, %v955
  %v2900 = vsel %vm90, %v275, %v957
  %v2901 = vsel %vm90, %v276, %v959
  %v2902 = vsel %vm90, %v277, %v961
  %v2903 = vsel %vm90, %v278, %v963
  %v2904 = vsel %vm90, %v279, %v965
  %v2905 = vsel %vm90, %v280, %v967
  %v2906 = vsel %vm90, %v281, %v969
  %v2907 = vsel %vm90, %v282, %v971
  %v2908 = vsel %vm90, %v283, %v973
  %v2909 = vsel %vm90, %v284, %v975
  %v2910 = vsel %vm90, %v285, %v977
  %v2911 = vsel %vm90, %v286, %v979
  %v2912 = vsel %vm90, %v287, %v981
  %v2913 = vsel %vm90, %v288, %v983
  %v2914 = vsel %vm90, %v289, %v985
  %v2915 = vsel %vm90, %v290, %v987
  %v2916 = vsel %vm90, %v291, %v989
  %v2917 = vsel %vm90, %v292, %v991
  %v2918 = vsel %vm90, %v293, %v993
  %v2919 = vsel %vm90, %v294, %v995
  %v2920 = vsel %vm90, %v295, %v997
  %v2921 = vsel %vm90, %v296, %v999
  %v2922 = vsel %vm90, %v297, %v1001
  %v2923 = vsel %vm90, %v298, %v1003
  %vm2924 = vcmask 64512
  %v2925 = vsel %vm2924, %v2860, %v1133
  %v2926 = vsel %vm2924, %v2861, %v1135
  %v2927 = vsel %vm2924, %v2862, %v1137
  %v2928 = vsel %vm2924, %v2863, %v1139
  %v2929 = vsel %vm2924, %v2864, %v1141
  %v2930 = vsel %vm2924, %v2865, %v1143
  %v2931 = vsel %vm2924, %v2866, %v1145
  %v2932 = vsel %vm2924, %v2867, %v1147
  %v2933 = vsel %vm2924, %v2868, %v1149
  %v2934 = vsel %vm2924, %v2869, %v1151
  %v2935 = vsel %vm2924, %v2870, %v1153
  %v2936 = vsel %vm2924, %v2871, %v1155
  %v2937 = vsel %vm2924, %v2872, %v1157
  %v2938 = vsel %vm2924, %v2873, %v1159
  %v2939 = vsel %vm2924, %v2874, %v1161
  %v2940 = vsel %vm2924, %v2875, %v1163
  %v2941 = vsel %vm2924, %v2876, %v1165
  %v2942 = vsel %vm2924, %v2877, %v1167
  %v2943 = vsel %vm2924, %v2878, %v1169
  %v2944 = vsel %vm2924, %v2879, %v1171
  %v2945 = vsel %vm2924, %v2880, %v1173
  %v2946 = vsel %vm2924, %v2881, %v1175
  %v2947 = vsel %vm2924, %v2882, %v1177
  %v2948 = vsel %vm2924, %v2883, %v1179
  %v2949 = vsel %vm2924, %v2884, %v1181
  %v2950 = vsel %vm2924, %v2885, %v1183
  %v2951 = vsel %vm2924, %v2886, %v1185
  %v2952 = vsel %vm2924, %v2887, %v1187
  %v2953 = vsel %vm2924, %v2888, %v1189
  %v2954 = vsel %vm2924, %v2889, %v1191
  %v2955 = vsel %vm2924, %v2890, %v1193
  %v2956 = vsel %vm2924, %v2891, %v1195
  %v2957 = vsel %vm2924, %v2892, %v1197
  %v2958 = vsel %vm2924, %v2893, %v1199
  %v2959 = vsel %vm2924, %v2894, %v1201
  %v2960 = vsel %vm2924, %v2895, %v1203
  %v2961 = vsel %vm2924, %v2896, %v1205
  %v2962 = vsel %vm2924, %v2897, %v1207
  %v2963 = vsel %vm2924, %v2898, %v1209
  %v2964 = vsel %vm2924, %v2899, %v1211
  %v2965 = vsel %vm2924, %v2900, %v1213
  %v2966 = vsel %vm2924, %v2901, %v1215
  %v2967 = vsel %vm2924, %v2902, %v1217
  %v2968 = vsel %vm2924, %v2903, %v1219
  %v2969 = vsel %vm2924, %v2904, %v1221
  %v2970 = vsel %vm2924, %v2905, %v1223
  %v2971 = vsel %vm2924, %v2906, %v1225
  %v2972 = vsel %vm2924, %v2907, %v1227
  %v2973 = vsel %vm2924, %v2908, %v1229
  %v2974 = vsel %vm2924, %v2909, %v1231
  %v2975 = vsel %vm2924, %v2910, %v1233
  %v2976 = vsel %vm2924, %v2911, %v1235
  %v2977 = vsel %vm2924, %v2912, %v1237
  %v2978 = vsel %vm2924, %v2913, %v1239
  %v2979 = vsel %vm2924, %v2914, %v1241
  %v2980 = vsel %vm2924, %v2915, %v1243
  %v2981 = vsel %vm2924, %v2916, %v1245
  %v2982 = vsel %vm2924, %v2917, %v1247
  %v2983 = vsel %vm2924, %v2918, %v1249
  %v2984 = vsel %vm2924, %v2919, %v1251
  %v2985 = vsel %vm2924, %v2920, %v1253
  %v2986 = vsel %vm2924, %v2921, %v1255
  %v2987 = vsel %vm2924, %v2922, %v1257
  %v2988 = vsel %vm2924, %v2923, %v1259
  %vm2989 = vcmask 97280
  %v2990 = vsel %vm2989, %v2925, %v1389
  %v2991 = vsel %vm2989, %v2926, %v1391
  %v2992 = vsel %vm2989, %v2927, %v1393
  %v2993 = vsel %vm2989, %v2928, %v1395
  %v2994 = vsel %vm2989, %v2929, %v1397
  %v2995 = vsel %vm2989, %v2930, %v1399
  %v2996 = vsel %vm2989, %v2931, %v1401
  %v2997 = vsel %vm2989, %v2932, %v1403
  %v2998 = vsel %vm2989, %v2933, %v1405
  %v2999 = vsel %vm2989, %v2934, %v1407
  %v3000 = vsel %vm2989, %v2935, %v1409
  %v3001 = vsel %vm2989, %v2936, %v1411
  %v3002 = vsel %vm2989, %v2937, %v1413
  %v3003 = vsel %vm2989, %v2938, %v1415
  %v3004 = vsel %vm2989, %v2939, %v1417
  %v3005 = vsel %vm2989, %v2940, %v1419
  %v3006 = vsel %vm2989, %v2941, %v1421
  %v3007 = vsel %vm2989, %v2942, %v1423
  %v3008 = vsel %vm2989, %v2943, %v1425
  %v3009 = vsel %vm2989, %v2944, %v1427
  %v3010 = vsel %vm2989, %v2945, %v1429
  %v3011 = vsel %vm2989, %v2946, %v1431
  %v3012 = vsel %vm2989, %v2947, %v1433
  %v3013 = vsel %vm2989, %v2948, %v1435
  %v3014 = vsel %vm2989, %v2949, %v1437
  %v3015 = vsel %vm2989, %v2950, %v1439
  %v3016 = vsel %vm2989, %v2951, %v1441
  %v3017 = vsel %vm2989, %v2952, %v1443
  %v3018 = vsel %vm2989, %v2953, %v1445
  %v3019 = vsel %vm2989, %v2954, %v1447
  %v3020 = vsel %vm2989, %v2955, %v1449
  %v3021 = vsel %vm2989, %v2956, %v1451
  %v3022 = vsel %vm2989, %v2957, %v1453
  %v3023 = vsel %vm2989, %v2958, %v1455
  %v3024 = vsel %vm2989, %v2959, %v1457
  %v3025 = vsel %vm2989, %v2960, %v1459
  %v3026 = vsel %vm2989, %v2961, %v1461
  %v3027 = vsel %vm2989, %v2962, %v1463
  %v3028 = vsel %vm2989, %v2963, %v1465
  %v3029 = vsel %vm2989, %v2964, %v1467
  %v3030 = vsel %vm2989, %v2965, %v1469
  %v3031 = vsel %vm2989, %v2966, %v1471
  %v3032 = vsel %vm2989, %v2967, %v1473
  %v3033 = vsel %vm2989, %v2968, %v1475
  %v3034 = vsel %vm2989, %v2969, %v1477
  %v3035 = vsel %vm2989, %v2970, %v1479
  %v3036 = vsel %vm2989, %v2971, %v1481
  %v3037 = vsel %vm2989, %v2972, %v1483
  %v3038 = vsel %vm2989, %v2973, %v1485
  %v3039 = vsel %vm2989, %v2974, %v1487
  %v3040 = vsel %vm2989, %v2975, %v1489
  %v3041 = vsel %vm2989, %v2976, %v1491
  %v3042 = vsel %vm2989, %v2977, %v1493
  %v3043 = vsel %vm2989, %v2978, %v1495
  %v3044 = vsel %vm2989, %v2979, %v1497
  %v3045 = vsel %vm2989, %v2980, %v1499
  %v3046 = vsel %vm2989, %v2981, %v1501
  %v3047 = vsel %vm2989, %v2982, %v1503
  %v3048 = vsel %vm2989, %v2983, %v1505
  %v3049 = vsel %vm2989, %v2984, %v1507
  %v3050 = vsel %vm2989, %v2985, %v1509
  %v3051 = vsel %vm2989, %v2986, %v1511
  %v3052 = vsel %vm2989, %v2987, %v1513
  %v3053 = vsel %vm2989, %v2988, %v1515
  %vm3054 = vcmask 130048
  %v3055 = vsel %vm3054, %v2990, %v1645
  %v3056 = vsel %vm3054, %v2991, %v1647
  %v3057 = vsel %vm3054, %v2992, %v1649
  %v3058 = vsel %vm3054, %v2993, %v1651
  %v3059 = vsel %vm3054, %v2994, %v1653
  %v3060 = vsel %vm3054, %v2995, %v1655
  %v3061 = vsel %vm3054, %v2996, %v1657
  %v3062 = vsel %vm3054, %v2997, %v1659
  %v3063 = vsel %vm3054, %v2998, %v1661
  %v3064 = vsel %vm3054, %v2999, %v1663
  %v3065 = vsel %vm3054, %v3000, %v1665
  %v3066 = vsel %vm3054, %v3001, %v1667
  %v3067 = vsel %vm3054, %v3002, %v1669
  %v3068 = vsel %vm3054, %v3003, %v1671
  %v3069 = vsel %vm3054, %v3004, %v1673
  %v3070 = vsel %vm3054, %v3005, %v1675
  %v3071 = vsel %vm3054, %v3006, %v1677
  %v3072 = vsel %vm3054, %v3007, %v1679
  %v3073 = vsel %vm3054, %v3008, %v1681
  %v3074 = vsel %vm3054, %v3009, %v1683
  %v3075 = vsel %vm3054, %v3010, %v1685
  %v3076 = vsel %vm3054, %v3011, %v1687
  %v3077 = vsel %vm3054, %v3012, %v1689
  %v3078 = vsel %vm3054, %v3013, %v1691
  %v3079 = vsel %vm3054, %v3014, %v1693
  %v3080 = vsel %vm3054, %v3015, %v1695
  %v3081 = vsel %vm3054, %v3016, %v1697
  %v3082 = vsel %vm3054, %v3017, %v1699
  %v3083 = vsel %vm3054, %v3018, %v1701
  %v3084 = vsel %vm3054, %v3019, %v1703
  %v3085 = vsel %vm3054, %v3020, %v1705
  %v3086 = vsel %vm3054, %v3021, %v1707
  %v3087 = vsel %vm3054, %v3022, %v1709
  %v3088 = vsel %vm3054, %v3023, %v1711
  %v3089 = vsel %vm3054, %v3024, %v1713
  %v3090 = vsel %vm3054, %v3025, %v1715
  %v3091 = vsel %vm3054, %v3026, %v1717
  %v3092 = vsel %vm3054, %v3027, %v1719
  %v3093 = vsel %vm3054, %v3028, %v1721
  %v3094 = vsel %vm3054, %v3029, %v1723
  %v3095 = vsel %vm3054, %v3030, %v1725
  %v3096 = vsel %vm3054, %v3031, %v1727
  %v3097 = vsel %vm3054, %v3032, %v1729
  %v3098 = vsel %vm3054, %v3033, %v1731
  %v3099 = vsel %vm3054, %v3034, %v1733
  %v3100 = vsel %vm3054, %v3035, %v1735
  %v3101 = vsel %vm3054, %v3036, %v1737
  %v3102 = vsel %vm3054, %v3037, %v1739
  %v3103 = vsel %vm3054, %v3038, %v1741
  %v3104 = vsel %vm3054, %v3039, %v1743
  %v3105 = vsel %vm3054, %v3040, %v1745
  %v3106 = vsel %vm3054, %v3041, %v1747
  %v3107 = vsel %vm3054, %v3042, %v1749
  %v3108 = vsel %vm3054, %v3043, %v1751
  %v3109 = vsel %vm3054, %v3044, %v1753
  %v3110 = vsel %vm3054, %v3045, %v1755
  %v3111 = vsel %vm3054, %v3046, %v1757
  %v3112 = vsel %vm3054, %v3047, %v1759
  %v3113 = vsel %vm3054, %v3048, %v1761
  %v3114 = vsel %vm3054, %v3049, %v1763
  %v3115 = vsel %vm3054, %v3050, %v1765
  %v3116 = vsel %vm3054, %v3051, %v1767
  %v3117 = vsel %vm3054, %v3052, %v1769
  %v3118 = vsel %vm3054, %v3053, %v1771
  %vm3119 = vcmask 162816
  %v3120 = vsel %vm3119, %v3055, %v1901
  %v3121 = vsel %vm3119, %v3056, %v1903
  %v3122 = vsel %vm3119, %v3057, %v1905
  %v3123 = vsel %vm3119, %v3058, %v1907
  %v3124 = vsel %vm3119, %v3059, %v1909
  %v3125 = vsel %vm3119, %v3060, %v1911
  %v3126 = vsel %vm3119, %v3061, %v1913
  %v3127 = vsel %vm3119, %v3062, %v1915
  %v3128 = vsel %vm3119, %v3063, %v1917
  %v3129 = vsel %vm3119, %v3064, %v1919
  %v3130 = vsel %vm3119, %v3065, %v1921
  %v3131 = vsel %vm3119, %v3066, %v1923
  %v3132 = vsel %vm3119, %v3067, %v1925
  %v3133 = vsel %vm3119, %v3068, %v1927
  %v3134 = vsel %vm3119, %v3069, %v1929
  %v3135 = vsel %vm3119, %v3070, %v1931
  %v3136 = vsel %vm3119, %v3071, %v1933
  %v3137 = vsel %vm3119, %v3072, %v1935
  %v3138 = vsel %vm3119, %v3073, %v1937
  %v3139 = vsel %vm3119, %v3074, %v1939
  %v3140 = vsel %vm3119, %v3075, %v1941
  %v3141 = vsel %vm3119, %v3076, %v1943
  %v3142 = vsel %vm3119, %v3077, %v1945
  %v3143 = vsel %vm3119, %v3078, %v1947
  %v3144 = vsel %vm3119, %v3079, %v1949
  %v3145 = vsel %vm3119, %v3080, %v1951
  %v3146 = vsel %vm3119, %v3081, %v1953
  %v3147 = vsel %vm3119, %v3082, %v1955
  %v3148 = vsel %vm3119, %v3083, %v1957
  %v3149 = vsel %vm3119, %v3084, %v1959
  %v3150 = vsel %vm3119, %v3085, %v1961
  %v3151 = vsel %vm3119, %v3086, %v1963
  %v3152 = vsel %vm3119, %v3087, %v1965
  %v3153 = vsel %vm3119, %v3088, %v1967
  %v3154 = vsel %vm3119, %v3089, %v1969
  %v3155 = vsel %vm3119, %v3090, %v1971
  %v3156 = vsel %vm3119, %v3091, %v1973
  %v3157 = vsel %vm3119, %v3092, %v1975
  %v3158 = vsel %vm3119, %v3093, %v1977
  %v3159 = vsel %vm3119, %v3094, %v1979
  %v3160 = vsel %vm3119, %v3095, %v1981
  %v3161 = vsel %vm3119, %v3096, %v1983
  %v3162 = vsel %vm3119, %v3097, %v1985
  %v3163 = vsel %vm3119, %v3098, %v1987
  %v3164 = vsel %vm3119, %v3099, %v1989
  %v3165 = vsel %vm3119, %v3100, %v1991
  %v3166 = vsel %vm3119, %v3101, %v1993
  %v3167 = vsel %vm3119, %v3102, %v1995
  %v3168 = vsel %vm3119, %v3103, %v1997
  %v3169 = vsel %vm3119, %v3104, %v1999
  %v3170 = vsel %vm3119, %v3105, %v2001
  %v3171 = vsel %vm3119, %v3106, %v2003
  %v3172 = vsel %vm3119, %v3107, %v2005
  %v3173 = vsel %vm3119, %v3108, %v2007
  %v3174 = vsel %vm3119, %v3109, %v2009
  %v3175 = vsel %vm3119, %v3110, %v2011
  %v3176 = vsel %vm3119, %v3111, %v2013
  %v3177 = vsel %vm3119, %v3112, %v2015
  %v3178 = vsel %vm3119, %v3113, %v2017
  %v3179 = vsel %vm3119, %v3114, %v2019
  %v3180 = vsel %vm3119, %v3115, %v2021
  %v3181 = vsel %vm3119, %v3116, %v2023
  %v3182 = vsel %vm3119, %v3117, %v2025
  %v3183 = vsel %vm3119, %v3118, %v2027
  %vm3184 = vcmask 195584
  %v3185 = vsel %vm3184, %v3120, %v2157
  %v3186 = vsel %vm3184, %v3121, %v2159
  %v3187 = vsel %vm3184, %v3122, %v2161
  %v3188 = vsel %vm3184, %v3123, %v2163
  %v3189 = vsel %vm3184, %v3124, %v2165
  %v3190 = vsel %vm3184, %v3125, %v2167
  %v3191 = vsel %vm3184, %v3126, %v2169
  %v3192 = vsel %vm3184, %v3127, %v2171
  %v3193 = vsel %vm3184, %v3128, %v2173
  %v3194 = vsel %vm3184, %v3129, %v2175
  %v3195 = vsel %vm3184, %v3130, %v2177
  %v3196 = vsel %vm3184, %v3131, %v2179
  %v3197 = vsel %vm3184, %v3132, %v2181
  %v3198 = vsel %vm3184, %v3133, %v2183
  %v3199 = vsel %vm3184, %v3134, %v2185
  %v3200 = vsel %vm3184, %v3135, %v2187
  %v3201 = vsel %vm3184, %v3136, %v2189
  %v3202 = vsel %vm3184, %v3137, %v2191
  %v3203 = vsel %vm3184, %v3138, %v2193
  %v3204 = vsel %vm3184, %v3139, %v2195
  %v3205 = vsel %vm3184, %v3140, %v2197
  %v3206 = vsel %vm3184, %v3141, %v2199
  %v3207 = vsel %vm3184, %v3142, %v2201
  %v3208 = vsel %vm3184, %v3143, %v2203
  %v3209 = vsel %vm3184, %v3144, %v2205
  %v3210 = vsel %vm3184, %v3145, %v2207
  %v3211 = vsel %vm3184, %v3146, %v2209
  %v3212 = vsel %vm3184, %v3147, %v2211
  %v3213 = vsel %vm3184, %v3148, %v2213
  %v3214 = vsel %vm3184, %v3149, %v2215
  %v3215 = vsel %vm3184, %v3150, %v2217
  %v3216 = vsel %vm3184, %v3151, %v2219
  %v3217 = vsel %vm3184, %v3152, %v2221
  %v3218 = vsel %vm3184, %v3153, %v2223
  %v3219 = vsel %vm3184, %v3154, %v2225
  %v3220 = vsel %vm3184, %v3155, %v2227
  %v3221 = vsel %vm3184, %v3156, %v2229
  %v3222 = vsel %vm3184, %v3157, %v2231
  %v3223 = vsel %vm3184, %v3158, %v2233
  %v3224 = vsel %vm3184, %v3159, %v2235
  %v3225 = vsel %vm3184, %v3160, %v2237
  %v3226 = vsel %vm3184, %v3161, %v2239
  %v3227 = vsel %vm3184, %v3162, %v2241
  %v3228 = vsel %vm3184, %v3163, %v2243
  %v3229 = vsel %vm3184, %v3164, %v2245
  %v3230 = vsel %vm3184, %v3165, %v2247
  %v3231 = vsel %vm3184, %v3166, %v2249
  %v3232 = vsel %vm3184, %v3167, %v2251
  %v3233 = vsel %vm3184, %v3168, %v2253
  %v3234 = vsel %vm3184, %v3169, %v2255
  %v3235 = vsel %vm3184, %v3170, %v2257
  %v3236 = vsel %vm3184, %v3171, %v2259
  %v3237 = vsel %vm3184, %v3172, %v2261
  %v3238 = vsel %vm3184, %v3173, %v2263
  %v3239 = vsel %vm3184, %v3174, %v2265
  %v3240 = vsel %vm3184, %v3175, %v2267
  %v3241 = vsel %vm3184, %v3176, %v2269
  %v3242 = vsel %vm3184, %v3177, %v2271
  %v3243 = vsel %vm3184, %v3178, %v2273
  %v3244 = vsel %vm3184, %v3179, %v2275
  %v3245 = vsel %vm3184, %v3180, %v2277
  %v3246 = vsel %vm3184, %v3181, %v2279
  %v3247 = vsel %vm3184, %v3182, %v2281
  %v3248 = vsel %vm3184, %v3183, %v2283
  %vm3249 = vcmask 228352
  %v3250 = vsel %vm3249, %v3185, %v2413
  %v3251 = vsel %vm3249, %v3186, %v2415
  %v3252 = vsel %vm3249, %v3187, %v2417
  %v3253 = vsel %vm3249, %v3188, %v2419
  %v3254 = vsel %vm3249, %v3189, %v2421
  %v3255 = vsel %vm3249, %v3190, %v2423
  %v3256 = vsel %vm3249, %v3191, %v2425
  %v3257 = vsel %vm3249, %v3192, %v2427
  %v3258 = vsel %vm3249, %v3193, %v2429
  %v3259 = vsel %vm3249, %v3194, %v2431
  %v3260 = vsel %vm3249, %v3195, %v2433
  %v3261 = vsel %vm3249, %v3196, %v2435
  %v3262 = vsel %vm3249, %v3197, %v2437
  %v3263 = vsel %vm3249, %v3198, %v2439
  %v3264 = vsel %vm3249, %v3199, %v2441
  %v3265 = vsel %vm3249, %v3200, %v2443
  %v3266 = vsel %vm3249, %v3201, %v2445
  %v3267 = vsel %vm3249, %v3202, %v2447
  %v3268 = vsel %vm3249, %v3203, %v2449
  %v3269 = vsel %vm3249, %v3204, %v2451
  %v3270 = vsel %vm3249, %v3205, %v2453
  %v3271 = vsel %vm3249, %v3206, %v2455
  %v3272 = vsel %vm3249, %v3207, %v2457
  %v3273 = vsel %vm3249, %v3208, %v2459
  %v3274 = vsel %vm3249, %v3209, %v2461
  %v3275 = vsel %vm3249, %v3210, %v2463
  %v3276 = vsel %vm3249, %v3211, %v2465
  %v3277 = vsel %vm3249, %v3212, %v2467
  %v3278 = vsel %vm3249, %v3213, %v2469
  %v3279 = vsel %vm3249, %v3214, %v2471
  %v3280 = vsel %vm3249, %v3215, %v2473
  %v3281 = vsel %vm3249, %v3216, %v2475
  %v3282 = vsel %vm3249, %v3217, %v2477
  %v3283 = vsel %vm3249, %v3218, %v2479
  %v3284 = vsel %vm3249, %v3219, %v2481
  %v3285 = vsel %vm3249, %v3220, %v2483
  %v3286 = vsel %vm3249, %v3221, %v2485
  %v3287 = vsel %vm3249, %v3222, %v2487
  %v3288 = vsel %vm3249, %v3223, %v2489
  %v3289 = vsel %vm3249, %v3224, %v2491
  %v3290 = vsel %vm3249, %v3225, %v2493
  %v3291 = vsel %vm3249, %v3226, %v2495
  %v3292 = vsel %vm3249, %v3227, %v2497
  %v3293 = vsel %vm3249, %v3228, %v2499
  %v3294 = vsel %vm3249, %v3229, %v2501
  %v3295 = vsel %vm3249, %v3230, %v2503
  %v3296 = vsel %vm3249, %v3231, %v2505
  %v3297 = vsel %vm3249, %v3232, %v2507
  %v3298 = vsel %vm3249, %v3233, %v2509
  %v3299 = vsel %vm3249, %v3234, %v2511
  %v3300 = vsel %vm3249, %v3235, %v2513
  %v3301 = vsel %vm3249, %v3236, %v2515
  %v3302 = vsel %vm3249, %v3237, %v2517
  %v3303 = vsel %vm3249, %v3238, %v2519
  %v3304 = vsel %vm3249, %v3239, %v2521
  %v3305 = vsel %vm3249, %v3240, %v2523
  %v3306 = vsel %vm3249, %v3241, %v2525
  %v3307 = vsel %vm3249, %v3242, %v2527
  %v3308 = vsel %vm3249, %v3243, %v2529
  %v3309 = vsel %vm3249, %v3244, %v2531
  %v3310 = vsel %vm3249, %v3245, %v2533
  %v3311 = vsel %vm3249, %v3246, %v2535
  %v3312 = vsel %vm3249, %v3247, %v2537
  %v3313 = vsel %vm3249, %v3248, %v2539
  %vm3314 = vcmask 261120
  %v3315 = vsel %vm3314, %v3250, %v2669
  %v3316 = vsel %vm3314, %v3251, %v2671
  %v3317 = vsel %vm3314, %v3252, %v2673
  %v3318 = vsel %vm3314, %v3253, %v2675
  %v3319 = vsel %vm3314, %v3254, %v2677
  %v3320 = vsel %vm3314, %v3255, %v2679
  %v3321 = vsel %vm3314, %v3256, %v2681
  %v3322 = vsel %vm3314, %v3257, %v2683
  %v3323 = vsel %vm3314, %v3258, %v2685
  %v3324 = vsel %vm3314, %v3259, %v2687
  %v3325 = vsel %vm3314, %v3260, %v2689
  %v3326 = vsel %vm3314, %v3261, %v2691
  %v3327 = vsel %vm3314, %v3262, %v2693
  %v3328 = vsel %vm3314, %v3263, %v2695
  %v3329 = vsel %vm3314, %v3264, %v2697
  %v3330 = vsel %vm3314, %v3265, %v2699
  %v3331 = vsel %vm3314, %v3266, %v2701
  %v3332 = vsel %vm3314, %v3267, %v2703
  %v3333 = vsel %vm3314, %v3268, %v2705
  %v3334 = vsel %vm3314, %v3269, %v2707
  %v3335 = vsel %vm3314, %v3270, %v2709
  %v3336 = vsel %vm3314, %v3271, %v2711
  %v3337 = vsel %vm3314, %v3272, %v2713
  %v3338 = vsel %vm3314, %v3273, %v2715
  %v3339 = vsel %vm3314, %v3274, %v2717
  %v3340 = vsel %vm3314, %v3275, %v2719
  %v3341 = vsel %vm3314, %v3276, %v2721
  %v3342 = vsel %vm3314, %v3277, %v2723
  %v3343 = vsel %vm3314, %v3278, %v2725
  %v3344 = vsel %vm3314, %v3279, %v2727
  %v3345 = vsel %vm3314, %v3280, %v2729
  %v3346 = vsel %vm3314, %v3281, %v2731
  %v3347 = vsel %vm3314, %v3282, %v2733
  %v3348 = vsel %vm3314, %v3283, %v2735
  %v3349 = vsel %vm3314, %v3284, %v2737
  %v3350 = vsel %vm3314, %v3285, %v2739
  %v3351 = vsel %vm3314, %v3286, %v2741
  %v3352 = vsel %vm3314, %v3287, %v2743
  %v3353 = vsel %vm3314, %v3288, %v2745
  %v3354 = vsel %vm3314, %v3289, %v2747
  %v3355 = vsel %vm3314, %v3290, %v2749
  %v3356 = vsel %vm3314, %v3291, %v2751
  %v3357 = vsel %vm3314, %v3292, %v2753
  %v3358 = vsel %vm3314, %v3293, %v2755
  %v3359 = vsel %vm3314, %v3294, %v2757
  %v3360 = vsel %vm3314, %v3295, %v2759
  %v3361 = vsel %vm3314, %v3296, %v2761
  %v3362 = vsel %vm3314, %v3297, %v2763
  %v3363 = vsel %vm3314, %v3298, %v2765
  %v3364 = vsel %vm3314, %v3299, %v2767
  %v3365 = vsel %vm3314, %v3300, %v2769
  %v3366 = vsel %vm3314, %v3301, %v2771
  %v3367 = vsel %vm3314, %v3302, %v2773
  %v3368 = vsel %vm3314, %v3303, %v2775
  %v3369 = vsel %vm3314, %v3304, %v2777
  %v3370 = vsel %vm3314, %v3305, %v2779
  %v3371 = vsel %vm3314, %v3306, %v2781
  %v3372 = vsel %vm3314, %v3307, %v2783
  %v3373 = vsel %vm3314, %v3308, %v2785
  %v3374 = vsel %vm3314, %v3309, %v2787
  %v3375 = vsel %vm3314, %v3310, %v2789
  %v3376 = vsel %vm3314, %v3311, %v2791
  %v3377 = vsel %vm3314, %v3312, %v2793
  %v3378 = vsel %vm3314, %v3313, %v2795
  %v3379 = vld [vmem:[%s1] sm:$0xff]
  %v3380 = vld [vmem:[%s1 + $0x8] sm:$0xff]
  %v3381 = vld [vmem:[%s1 + $0x10] sm:$0xff]
  %v3382 = vld [vmem:[%s1 + $0x18] sm:$0xff]
  %v3383 = vld [vmem:[%s1 + $0x20] sm:$0xf]
  %vm3384 = vcmask 293888
  %v3386 = vsel %vm3384, %v3315, 0
  %v3389 = vsel %vm3384, %v3316, 0
  %v3392 = vsel %vm3384, %v3317, 0
  %v3395 = vsel %vm3384, %v3318, 0
  %v3398 = vsel %vm3384, %v3319, 0
  %v3401 = vsel %vm3384, %v3320, 0
  %v3404 = vsel %vm3384, %v3321, 0
  %v3407 = vsel %vm3384, %v3322, 0
  %v3410 = vsel %vm3384, %v3323, 0
  %v3413 = vsel %vm3384, %v3324, 0
  %v3416 = vsel %vm3384, %v3325, 0
  %v3419 = vsel %vm3384, %v3326, 0
  %v3422 = vsel %vm3384, %v3327, 0
  %v3425 = vsel %vm3384, %v3328, 0
  %v3428 = vsel %vm3384, %v3329, 0
  %v3431 = vsel %vm3384, %v3330, 0
  %v3434 = vsel %vm3384, %v3331, 0
  %v3437 = vsel %vm3384, %v3332, 0
  %v3440 = vsel %vm3384, %v3333, 0
  %v3443 = vsel %vm3384, %v3334, 0
  %v3446 = vsel %vm3384, %v3335, 0
  %v3449 = vsel %vm3384, %v3336, 0
  %v3452 = vsel %vm3384, %v3337, 0
  %v3455 = vsel %vm3384, %v3338, 0
  %v3458 = vsel %vm3384, %v3339, 0
  %v3461 = vsel %vm3384, %v3340, 0
  %v3464 = vsel %vm3384, %v3341, 0
  %v3467 = vsel %vm3384, %v3342, 0
  %v3470 = vsel %vm3384, %v3343, 0
  %v3473 = vsel %vm3384, %v3344, 0
  %v3476 = vsel %vm3384, %v3345, 0
  %v3479 = vsel %vm3384, %v3346, 0
  %v3482 = vsel %vm3384, %v3347, 0
  %v3485 = vsel %vm3384, %v3348, 0
  %v3488 = vsel %vm3384, %v3349, 0
  %v3491 = vsel %vm3384, %v3350, 0
  %v3494 = vsel %vm3384, %v3351, 0
  %v3497 = vsel %vm3384, %v3352, 0
  %v3500 = vsel %vm3384, %v3353, 0
  %v3503 = vsel %vm3384, %v3354, 0
  %v3506 = vsel %vm3384, %v3355, 0
  %v3509 = vsel %vm3384, %v3356, 0
  %v3512 = vsel %vm3384, %v3357, 0
  %v3515 = vsel %vm3384, %v3358, 0
  %v3518 = vsel %vm3384, %v3359, 0
  %v3521 = vsel %vm3384, %v3360, 0
  %v3524 = vsel %vm3384, %v3361, 0
  %v3527 = vsel %vm3384, %v3362, 0
  %v3530 = vsel %vm3384, %v3363, 0
  %v3533 = vsel %vm3384, %v3364, 0
  %v3536 = vsel %vm3384, %v3365, 0
  %v3539 = vsel %vm3384, %v3366, 0
  %v3542 = vsel %vm3384, %v3367, 0
  %v3545 = vsel %vm3384, %v3368, 0
  %v3548 = vsel %vm3384, %v3369, 0
  %v3551 = vsel %vm3384, %v3370, 0
  %v3554 = vsel %vm3384, %v3371, 0
  %v3557 = vsel %vm3384, %v3372, 0
  %v3560 = vsel %vm3384, %v3373, 0
  %v3563 = vsel %vm3384, %v3374, 0
  %v3566 = vsel %vm3384, %v3375, 0
  %v3569 = vsel %vm3384, %v3376, 0
  %v3572 = vsel %vm3384, %v3377, 0
  %v3575 = vsel %vm3384, %v3378, 0
  %vm3577 = vcmask 1043456
  %v3579 = vsel %vm3577, %v3383, 0
  %3581 = vmatprep.subr.mxu0 0.0
  %3582 = vmatpush1.msra.mxu0 %v3379
  %3583 = vmatprep.subr.mxu0 0.0
  %3584 = vmatpush1.msra.mxu0 %v3380
  %3585 = vmatprep.subr.mxu0 0.0
  %3586 = vmatpush1.msra.mxu0 %v3381
  %3587 = vmatprep.subr.mxu0 0.0
  %3588 = vmatpush1.msra.mxu0 %v3382
  %3589 = vmatprep.subr.mxu0 0.0
  %3590 = vmatpush1.msra.mxu0 %v3579
  %3591 = vmatprep.subr.mxu0 0.0
  %3592 = vmatpush1.msra.mxu0 0.0
  %3593 = vmatprep.subr.mxu0 0.0
  %3594 = vmatpush1.msra.mxu0 0.0
  %3595 = vmatprep.subr.mxu0 0.0
  %3596 = vmatpush1.msra.mxu0 0.0
  %3597 = vmatprep.subr.mxu0 0.0
  %3598 = vmatpush1.msra.mxu0 0.0
  %3599 = vmatprep.subr.mxu0 0.0
  %3600 = vmatpush1.msra.mxu0 0.0
  %3601 = vmatprep.subr.mxu0 0.0
  %3602 = vmatpush1.msra.mxu0 0.0
  %3603 = vmatprep.subr.mxu0 0.0
  %3604 = vmatpush1.msra.mxu0 0.0
  %3605 = vmatprep.subr.mxu0 0.0
  %3606 = vmatpush1.msra.mxu0 0.0
  %3607 = vmatprep.subr.mxu0 0.0
  %3608 = vmatpush1.msra.mxu0 0.0
  %3609 = vmatprep.subr.mxu0 0.0
  %3610 = vmatpush1.msra.mxu0 0.0
  %3611 = vmatprep.subr.mxu0 0.0
  %3612 = vmatpush1.msra.mxu0 0.0
  %3613 = vmatprep.subr.mxu0 0.0
  %3614 = vmatpush1.msra.mxu0 0.0
  %3615 = vmatprep.subr.mxu0 0.0
  %3616 = vmatpush1.msra.mxu0 0.0
  %3617 = vmatprep.subr.mxu0 0.0
  %3618 = vmatpush1.msra.mxu0 0.0
  %3619 = vmatprep.subr.mxu0 0.0
  %3620 = vmatpush1.msra.mxu0 0.0
  %3621 = vmatprep.subr.mxu0 0.0
  %3622 = vmatpush1.msra.mxu0 0.0
  %3623 = vmatprep.subr.mxu0 0.0
  %3624 = vmatpush1.msra.mxu0 0.0
  %3625 = vmatprep.subr.mxu0 0.0
  %3626 = vmatpush1.msra.mxu0 0.0
  %3627 = vmatprep.subr.mxu0 0.0
  %3628 = vmatpush1.msra.mxu0 0.0
  %3629 = vmatprep.subr.mxu0 0.0
  %3630 = vmatpush1.msra.mxu0 0.0
  %3631 = vmatprep.subr.mxu0 0.0
  %3632 = vmatpush1.msra.mxu0 0.0
  %3633 = vmatprep.subr.mxu0 0.0
  %3634 = vmatpush1.msra.mxu0 0.0
  %3635 = vmatprep.subr.mxu0 0.0
  %3636 = vmatpush1.msra.mxu0 0.0
  %3637 = vmatprep.subr.mxu0 0.0
  %3638 = vmatpush1.msra.mxu0 0.0
  %3639 = vmatprep.subr.mxu0 0.0
  %3640 = vmatpush1.msra.mxu0 0.0
  %3641 = vmatprep.subr.mxu0 0.0
  %3642 = vmatpush1.msra.mxu0 0.0
  %3643 = vmatprep.subr.mxu0 0.0
  %3644 = vmatpush1.msra.mxu0 0.0
  %3645 = vmatprep.mubr.f32.mxu0 0.0
  %3646 = vmatmul.mubr.f32.gmra.mrb[0].mxu0 %v3386
  %v3647 = vpop.f32.mrb[0].mxu0
  %v3648 = vadd.f32 0.0, %v3647
  %v3649 = vpop.f32.mrb[0].mxu0
  %3650 = vmatprep.mubr.f32.mxu0 0.0
  %3651 = vmatmul.mubr.f32.gmra.mrb[0].mxu0 %v3389
  %v3652 = vpop.f32.mrb[0].mxu0
  %v3653 = vadd.f32 0.0, %v3652
  %v3654 = vpop.f32.mrb[0].mxu0
  %3655 = vmatprep.mubr.f32.mxu0 0.0
  %3656 = vmatmul.mubr.f32.gmra.mrb[0].mxu0 %v3392
  %v3657 = vpop.f32.mrb[0].mxu0
  %v3658 = vadd.f32 0.0, %v3657
  %v3659 = vpop.f32.mrb[0].mxu0
  %3660 = vmatprep.mubr.f32.mxu0 0.0
  %3661 = vmatmul.mubr.f32.gmra.mrb[0].mxu0 %v3395
  %v3662 = vpop.f32.mrb[0].mxu0
  %v3663 = vadd.f32 0.0, %v3662
  %v3664 = vpop.f32.mrb[0].mxu0
  %3665 = vmatprep.mubr.f32.mxu0 0.0
  %3666 = vmatmul.mubr.f32.gmra.mrb[0].mxu0 %v3398
  %v3667 = vpop.f32.mrb[0].mxu0
  %v3668 = vadd.f32 0.0, %v3667
  %v3669 = vpop.f32.mrb[0].mxu0
  %3670 = vmatprep.mubr.f32.mxu0 0.0
  %3671 = vmatmul.mubr.f32.gmra.mrb[0].mxu0 %v3401
  %v3672 = vpop.f32.mrb[0].mxu0
  %v3673 = vadd.f32 0.0, %v3672
  %v3674 = vpop.f32.mrb[0].mxu0
  %3675 = vmatprep.mubr.f32.mxu0 0.0
  %3676 = vmatmul.mubr.f32.gmra.mrb[0].mxu0 %v3404
  %v3677 = vpop.f32.mrb[0].mxu0
  %v3678 = vadd.f32 0.0, %v3677
  %v3679 = vpop.f32.mrb[0].mxu0
  %3680 = vmatprep.mubr.f32.mxu0 0.0
  %3681 = vmatmul.mubr.f32.gmra.mrb[0].mxu0 %v3407
  %v3682 = vpop.f32.mrb[0].mxu0
  %v3683 = vadd.f32 0.0, %v3682
  %v3684 = vpop.f32.mrb[0].mxu0
  %3685 = vmatprep.mubr.f32.mxu0 0.0
  %3686 = vmatmul.mubr.f32.gmra.mrb[0].mxu0 %v3410
  %v3687 = vpop.f32.mrb[0].mxu0
  %v3688 = vadd.f32 0.0, %v3687
  %v3689 = vpop.f32.mrb[0].mxu0
  %3690 = vmatprep.mubr.f32.mxu0 0.0
  %3691 = vmatmul.mubr.f32.gmra.mrb[0].mxu0 %v3413
  %v3692 = vpop.f32.mrb[0].mxu0
  %v3693 = vadd.f32 0.0, %v3692
  %v3694 = vpop.f32.mrb[0].mxu0
  %3695 = vmatprep.mubr.f32.mxu0 0.0
  %3696 = vmatmul.mubr.f32.gmra.mrb[0].mxu0 %v3416
  %v3697 = vpop.f32.mrb[0].mxu0
  %v3698 = vadd.f32 0.0, %v3697
  %v3699 = vpop.f32.mrb[0].mxu0
  %3700 = vmatprep.mubr.f32.mxu0 0.0
  %3701 = vmatmul.mubr.f32.gmra.mrb[0].mxu0 %v3419
  %v3702 = vpop.f32.mrb[0].mxu0
  %v3703 = vadd.f32 0.0, %v3702
  %v3704 = vpop.f32.mrb[0].mxu0
  %3705 = vmatprep.mubr.f32.mxu0 0.0
  %3706 = vmatmul.mubr.f32.gmra.mrb[0].mxu0 %v3422
  %v3707 = vpop.f32.mrb[0].mxu0
  %v3708 = vadd.f32 0.0, %v3707
  %v3709 = vpop.f32.mrb[0].mxu0
  %3710 = vmatprep.mubr.f32.mxu0 0.0
  %3711 = vmatmul.mubr.f32.gmra.mrb[0].mxu0 %v3425
  %v3712 = vpop.f32.mrb[0].mxu0
  %v3713 = vadd.f32 0.0, %v3712
  %v3714 = vpop.f32.mrb[0].mxu0
  %3715 = vmatprep.mubr.f32.mxu0 0.0
  %3716 = vmatmul.mubr.f32.gmra.mrb[0].mxu0 %v3428
  %v3717 = vpop.f32.mrb[0].mxu0
  %v3718 = vadd.f32 0.0, %v3717
  %v3719 = vpop.f32.mrb[0].mxu0
  %3720 = vmatprep.mubr.f32.mxu0 0.0
  %3721 = vmatmul.mubr.f32.gmra.mrb[0].mxu0 %v3431
  %v3722 = vpop.f32.mrb[0].mxu0
  %v3723 = vadd.f32 0.0, %v3722
  %v3724 = vpop.f32.mrb[0].mxu0
  %3725 = vmatprep.mubr.f32.mxu0 0.0
  %3726 = vmatmul.mubr.f32.gmra.mrb[0].mxu0 %v3434
  %v3727 = vpop.f32.mrb[0].mxu0
  %v3728 = vadd.f32 0.0, %v3727
  %v3729 = vpop.f32.mrb[0].mxu0
  %3730 = vmatprep.mubr.f32.mxu0 0.0
  %3731 = vmatmul.mubr.f32.gmra.mrb[0].mxu0 %v3437
  %v3732 = vpop.f32.mrb[0].mxu0
  %v3733 = vadd.f32 0.0, %v3732
  %v3734 = vpop.f32.mrb[0].mxu0
  %3735 = vmatprep.mubr.f32.mxu0 0.0
  %3736 = vmatmul.mubr.f32.gmra.mrb[0].mxu0 %v3440
  %v3737 = vpop.f32.mrb[0].mxu0
  %v3738 = vadd.f32 0.0, %v3737
  %v3739 = vpop.f32.mrb[0].mxu0
  %3740 = vmatprep.mubr.f32.mxu0 0.0
  %3741 = vmatmul.mubr.f32.gmra.mrb[0].mxu0 %v3443
  %v3742 = vpop.f32.mrb[0].mxu0
  %v3743 = vadd.f32 0.0, %v3742
  %v3744 = vpop.f32.mrb[0].mxu0
  %3745 = vmatprep.mubr.f32.mxu0 0.0
  %3746 = vmatmul.mubr.f32.gmra.mrb[0].mxu0 %v3446
  %v3747 = vpop.f32.mrb[0].mxu0
  %v3748 = vadd.f32 0.0, %v3747
  %v3749 = vpop.f32.mrb[0].mxu0
  %3750 = vmatprep.mubr.f32.mxu0 0.0
  %3751 = vmatmul.mubr.f32.gmra.mrb[0].mxu0 %v3449
  %v3752 = vpop.f32.mrb[0].mxu0
  %v3753 = vadd.f32 0.0, %v3752
  %v3754 = vpop.f32.mrb[0].mxu0
  %3755 = vmatprep.mubr.f32.mxu0 0.0
  %3756 = vmatmul.mubr.f32.gmra.mrb[0].mxu0 %v3452
  %v3757 = vpop.f32.mrb[0].mxu0
  %v3758 = vadd.f32 0.0, %v3757
  %v3759 = vpop.f32.mrb[0].mxu0
  %3760 = vmatprep.mubr.f32.mxu0 0.0
  %3761 = vmatmul.mubr.f32.gmra.mrb[0].mxu0 %v3455
  %v3762 = vpop.f32.mrb[0].mxu0
  %v3763 = vadd.f32 0.0, %v3762
  %v3764 = vpop.f32.mrb[0].mxu0
  %3765 = vmatprep.mubr.f32.mxu0 0.0
  %3766 = vmatmul.mubr.f32.gmra.mrb[0].mxu0 %v3458
  %v3767 = vpop.f32.mrb[0].mxu0
  %v3768 = vadd.f32 0.0, %v3767
  %v3769 = vpop.f32.mrb[0].mxu0
  %3770 = vmatprep.mubr.f32.mxu0 0.0
  %3771 = vmatmul.mubr.f32.gmra.mrb[0].mxu0 %v3461
  %v3772 = vpop.f32.mrb[0].mxu0
  %v3773 = vadd.f32 0.0, %v3772
  %v3774 = vpop.f32.mrb[0].mxu0
  %3775 = vmatprep.mubr.f32.mxu0 0.0
  %3776 = vmatmul.mubr.f32.gmra.mrb[0].mxu0 %v3464
  %v3777 = vpop.f32.mrb[0].mxu0
  %v3778 = vadd.f32 0.0, %v3777
  %v3779 = vpop.f32.mrb[0].mxu0
  %3780 = vmatprep.mubr.f32.mxu0 0.0
  %3781 = vmatmul.mubr.f32.gmra.mrb[0].mxu0 %v3467
  %v3782 = vpop.f32.mrb[0].mxu0
  %v3783 = vadd.f32 0.0, %v3782
  %v3784 = vpop.f32.mrb[0].mxu0
  %3785 = vmatprep.mubr.f32.mxu0 0.0
  %3786 = vmatmul.mubr.f32.gmra.mrb[0].mxu0 %v3470
  %v3787 = vpop.f32.mrb[0].mxu0
  %v3788 = vadd.f32 0.0, %v3787
  %v3789 = vpop.f32.mrb[0].mxu0
  %3790 = vmatprep.mubr.f32.mxu0 0.0
  %3791 = vmatmul.mubr.f32.gmra.mrb[0].mxu0 %v3473
  %v3792 = vpop.f32.mrb[0].mxu0
  %v3793 = vadd.f32 0.0, %v3792
  %v3794 = vpop.f32.mrb[0].mxu0
  %3795 = vmatprep.mubr.f32.mxu0 0.0
  %3796 = vmatmul.mubr.f32.gmra.mrb[0].mxu0 %v3476
  %v3797 = vpop.f32.mrb[0].mxu0
  %v3798 = vadd.f32 0.0, %v3797
  %v3799 = vpop.f32.mrb[0].mxu0
  %3800 = vmatprep.mubr.f32.mxu0 0.0
  %3801 = vmatmul.mubr.f32.gmra.mrb[0].mxu0 %v3479
  %v3802 = vpop.f32.mrb[0].mxu0
  %v3803 = vadd.f32 0.0, %v3802
  %v3804 = vpop.f32.mrb[0].mxu0
  %3805 = vmatprep.mubr.f32.mxu0 0.0
  %3806 = vmatmul.mubr.f32.gmra.mrb[0].mxu0 %v3482
  %v3807 = vpop.f32.mrb[0].mxu0
  %v3808 = vadd.f32 0.0, %v3807
  %v3809 = vpop.f32.mrb[0].mxu0
  %3810 = vmatprep.mubr.f32.mxu0 0.0
  %3811 = vmatmul.mubr.f32.gmra.mrb[0].mxu0 %v3485
  %v3812 = vpop.f32.mrb[0].mxu0
  %v3813 = vadd.f32 0.0, %v3812
  %v3814 = vpop.f32.mrb[0].mxu0
  %3815 = vmatprep.mubr.f32.mxu0 0.0
  %3816 = vmatmul.mubr.f32.gmra.mrb[0].mxu0 %v3488
  %v3817 = vpop.f32.mrb[0].mxu0
  %v3818 = vadd.f32 0.0, %v3817
  %v3819 = vpop.f32.mrb[0].mxu0
  %3820 = vmatprep.mubr.f32.mxu0 0.0
  %3821 = vmatmul.mubr.f32.gmra.mrb[0].mxu0 %v3491
  %v3822 = vpop.f32.mrb[0].mxu0
  %v3823 = vadd.f32 0.0, %v3822
  %v3824 = vpop.f32.mrb[0].mxu0
  %3825 = vmatprep.mubr.f32.mxu0 0.0
  %3826 = vmatmul.mubr.f32.gmra.mrb[0].mxu0 %v3494
  %v3827 = vpop.f32.mrb[0].mxu0
  %v3828 = vadd.f32 0.0, %v3827
  %v3829 = vpop.f32.mrb[0].mxu0
  %3830 = vmatprep.mubr.f32.mxu0 0.0
  %3831 = vmatmul.mubr.f32.gmra.mrb[0].mxu0 %v3497
  %v3832 = vpop.f32.mrb[0].mxu0
  %v3833 = vadd.f32 0.0, %v3832
  %v3834 = vpop.f32.mrb[0].mxu0
  %3835 = vmatprep.mubr.f32.mxu0 0.0
  %3836 = vmatmul.mubr.f32.gmra.mrb[0].mxu0 %v3500
  %v3837 = vpop.f32.mrb[0].mxu0
  %v3838 = vadd.f32 0.0, %v3837
  %v3839 = vpop.f32.mrb[0].mxu0
  %3840 = vmatprep.mubr.f32.mxu0 0.0
  %3841 = vmatmul.mubr.f32.gmra.mrb[0].mxu0 %v3503
  %v3842 = vpop.f32.mrb[0].mxu0
  %v3843 = vadd.f32 0.0, %v3842
  %v3844 = vpop.f32.mrb[0].mxu0
  %3845 = vmatprep.mubr.f32.mxu0 0.0
  %3846 = vmatmul.mubr.f32.gmra.mrb[0].mxu0 %v3506
  %v3847 = vpop.f32.mrb[0].mxu0
  %v3848 = vadd.f32 0.0, %v3847
  %v3849 = vpop.f32.mrb[0].mxu0
  %3850 = vmatprep.mubr.f32.mxu0 0.0
  %3851 = vmatmul.mubr.f32.gmra.mrb[0].mxu0 %v3509
  %v3852 = vpop.f32.mrb[0].mxu0
  %v3853 = vadd.f32 0.0, %v3852
  %v3854 = vpop.f32.mrb[0].mxu0
  %3855 = vmatprep.mubr.f32.mxu0 0.0
  %3856 = vmatmul.mubr.f32.gmra.mrb[0].mxu0 %v3512
  %v3857 = vpop.f32.mrb[0].mxu0
  %v3858 = vadd.f32 0.0, %v3857
  %v3859 = vpop.f32.mrb[0].mxu0
  %3860 = vmatprep.mubr.f32.mxu0 0.0
  %3861 = vmatmul.mubr.f32.gmra.mrb[0].mxu0 %v3515
  %v3862 = vpop.f32.mrb[0].mxu0
  %v3863 = vadd.f32 0.0, %v3862
  %v3864 = vpop.f32.mrb[0].mxu0
  %3865 = vmatprep.mubr.f32.mxu0 0.0
  %3866 = vmatmul.mubr.f32.gmra.mrb[0].mxu0 %v3518
  %v3867 = vpop.f32.mrb[0].mxu0
  %v3868 = vadd.f32 0.0, %v3867
  %v3869 = vpop.f32.mrb[0].mxu0
  %3870 = vmatprep.mubr.f32.mxu0 0.0
  %3871 = vmatmul.mubr.f32.gmra.mrb[0].mxu0 %v3521
  %v3872 = vpop.f32.mrb[0].mxu0
  %v3873 = vadd.f32 0.0, %v3872
  %v3874 = vpop.f32.mrb[0].mxu0
  %3875 = vmatprep.mubr.f32.mxu0 0.0
  %3876 = vmatmul.mubr.f32.gmra.mrb[0].mxu0 %v3524
  %v3877 = vpop.f32.mrb[0].mxu0
  %v3878 = vadd.f32 0.0, %v3877
  %v3879 = vpop.f32.mrb[0].mxu0
  %3880 = vmatprep.mubr.f32.mxu0 0.0
  %3881 = vmatmul.mubr.f32.gmra.mrb[0].mxu0 %v3527
  %v3882 = vpop.f32.mrb[0].mxu0
  %v3883 = vadd.f32 0.0, %v3882
  %v3884 = vpop.f32.mrb[0].mxu0
  %3885 = vmatprep.mubr.f32.mxu0 0.0
  %3886 = vmatmul.mubr.f32.gmra.mrb[0].mxu0 %v3530
  %v3887 = vpop.f32.mrb[0].mxu0
  %v3888 = vadd.f32 0.0, %v3887
  %v3889 = vpop.f32.mrb[0].mxu0
  %3890 = vmatprep.mubr.f32.mxu0 0.0
  %3891 = vmatmul.mubr.f32.gmra.mrb[0].mxu0 %v3533
  %v3892 = vpop.f32.mrb[0].mxu0
  %v3893 = vadd.f32 0.0, %v3892
  %v3894 = vpop.f32.mrb[0].mxu0
  %3895 = vmatprep.mubr.f32.mxu0 0.0
  %3896 = vmatmul.mubr.f32.gmra.mrb[0].mxu0 %v3536
  %v3897 = vpop.f32.mrb[0].mxu0
  %v3898 = vadd.f32 0.0, %v3897
  %v3899 = vpop.f32.mrb[0].mxu0
  %3900 = vmatprep.mubr.f32.mxu0 0.0
  %3901 = vmatmul.mubr.f32.gmra.mrb[0].mxu0 %v3539
  %v3902 = vpop.f32.mrb[0].mxu0
  %v3903 = vadd.f32 0.0, %v3902
  %v3904 = vpop.f32.mrb[0].mxu0
  %3905 = vmatprep.mubr.f32.mxu0 0.0
  %3906 = vmatmul.mubr.f32.gmra.mrb[0].mxu0 %v3542
  %v3907 = vpop.f32.mrb[0].mxu0
  %v3908 = vadd.f32 0.0, %v3907
  %v3909 = vpop.f32.mrb[0].mxu0
  %3910 = vmatprep.mubr.f32.mxu0 0.0
  %3911 = vmatmul.mubr.f32.gmra.mrb[0].mxu0 %v3545
  %v3912 = vpop.f32.mrb[0].mxu0
  %v3913 = vadd.f32 0.0, %v3912
  %v3914 = vpop.f32.mrb[0].mxu0
  %3915 = vmatprep.mubr.f32.mxu0 0.0
  %3916 = vmatmul.mubr.f32.gmra.mrb[0].mxu0 %v3548
  %v3917 = vpop.f32.mrb[0].mxu0
  %v3918 = vadd.f32 0.0, %v3917
  %v3919 = vpop.f32.mrb[0].mxu0
  %3920 = vmatprep.mubr.f32.mxu0 0.0
  %3921 = vmatmul.mubr.f32.gmra.mrb[0].mxu0 %v3551
  %v3922 = vpop.f32.mrb[0].mxu0
  %v3923 = vadd.f32 0.0, %v3922
  %v3924 = vpop.f32.mrb[0].mxu0
  %3925 = vmatprep.mubr.f32.mxu0 0.0
  %3926 = vmatmul.mubr.f32.gmra.mrb[0].mxu0 %v3554
  %v3927 = vpop.f32.mrb[0].mxu0
  %v3928 = vadd.f32 0.0, %v3927
  %v3929 = vpop.f32.mrb[0].mxu0
  %3930 = vmatprep.mubr.f32.mxu0 0.0
  %3931 = vmatmul.mubr.f32.gmra.mrb[0].mxu0 %v3557
  %v3932 = vpop.f32.mrb[0].mxu0
  %v3933 = vadd.f32 0.0, %v3932
  %v3934 = vpop.f32.mrb[0].mxu0
  %3935 = vmatprep.mubr.f32.mxu0 0.0
  %3936 = vmatmul.mubr.f32.gmra.mrb[0].mxu0 %v3560
  %v3937 = vpop.f32.mrb[0].mxu0
  %v3938 = vadd.f32 0.0, %v3937
  %v3939 = vpop.f32.mrb[0].mxu0
  %3940 = vmatprep.mubr.f32.mxu0 0.0
  %3941 = vmatmul.mubr.f32.gmra.mrb[0].mxu0 %v3563
  %v3942 = vpop.f32.mrb[0].mxu0
  %v3943 = vadd.f32 0.0, %v3942
  %v3944 = vpop.f32.mrb[0].mxu0
  %3945 = vmatprep.mubr.f32.mxu0 0.0
  %3946 = vmatmul.mubr.f32.gmra.mrb[0].mxu0 %v3566
  %v3947 = vpop.f32.mrb[0].mxu0
  %v3948 = vadd.f32 0.0, %v3947
  %v3949 = vpop.f32.mrb[0].mxu0
  %3950 = vmatprep.mubr.f32.mxu0 0.0
  %3951 = vmatmul.mubr.f32.gmra.mrb[0].mxu0 %v3569
  %v3952 = vpop.f32.mrb[0].mxu0
  %v3953 = vadd.f32 0.0, %v3952
  %v3954 = vpop.f32.mrb[0].mxu0
  %3955 = vmatprep.mubr.f32.mxu0 0.0
  %3956 = vmatmul.mubr.f32.gmra.mrb[0].mxu0 %v3572
  %v3957 = vpop.f32.mrb[0].mxu0
  %v3958 = vadd.f32 0.0, %v3957
  %v3959 = vpop.f32.mrb[0].mxu0
  %3960 = vmatprep.mubr.f32.mxu0 0.0
  %3961 = vmatmul.mubr.f32.gmra.mrb[0].mxu0 %v3575
  %v3962 = vpop.f32.mrb[0].mxu0
  %v3963 = vadd.f32 0.0, %v3962
  %v3964 = vpop.f32.mrb[0].mxu0
  %3965 = vdwg.mxu0
  %v3966 = vsel %vm90, %v3648, 0.0
  %v3967 = vsel %vm90, %v3653, 0.0
  %v3968 = vadd.f32 %v3966, %v3967
  %v3969 = vsel %vm90, %v3658, 0.0
  %v3970 = vadd.f32 %v3968, %v3969
  %v3971 = vsel %vm90, %v3663, 0.0
  %v3972 = vadd.f32 %v3970, %v3971
  %v3973 = vsel %vm90, %v3668, 0.0
  %v3974 = vadd.f32 %v3972, %v3973
  %v3975 = vsel %vm90, %v3673, 0.0
  %v3976 = vadd.f32 %v3974, %v3975
  %v3977 = vsel %vm90, %v3678, 0.0
  %v3978 = vadd.f32 %v3976, %v3977
  %v3979 = vsel %vm90, %v3683, 0.0
  %v3980 = vadd.f32 %v3978, %v3979
  %v3981 = vsel %vm90, %v3688, 0.0
  %v3982 = vadd.f32 %v3980, %v3981
  %v3983 = vsel %vm90, %v3693, 0.0
  %v3984 = vadd.f32 %v3982, %v3983
  %v3985 = vsel %vm90, %v3698, 0.0
  %v3986 = vadd.f32 %v3984, %v3985
  %v3987 = vsel %vm90, %v3703, 0.0
  %v3988 = vadd.f32 %v3986, %v3987
  %v3989 = vsel %vm90, %v3708, 0.0
  %v3990 = vadd.f32 %v3988, %v3989
  %v3991 = vsel %vm90, %v3713, 0.0
  %v3992 = vadd.f32 %v3990, %v3991
  %v3993 = vsel %vm90, %v3718, 0.0
  %v3994 = vadd.f32 %v3992, %v3993
  %v3995 = vsel %vm90, %v3723, 0.0
  %v3996 = vadd.f32 %v3994, %v3995
  %v3997 = vsel %vm90, %v3728, 0.0
  %v3998 = vadd.f32 %v3996, %v3997
  %v3999 = vsel %vm90, %v3733, 0.0
  %v4000 = vadd.f32 %v3998, %v3999
  %v4001 = vsel %vm90, %v3738, 0.0
  %v4002 = vadd.f32 %v4000, %v4001
  %v4003 = vsel %vm90, %v3743, 0.0
  %v4004 = vadd.f32 %v4002, %v4003
  %v4005 = vsel %vm90, %v3748, 0.0
  %v4006 = vadd.f32 %v4004, %v4005
  %v4007 = vsel %vm90, %v3753, 0.0
  %v4008 = vadd.f32 %v4006, %v4007
  %v4009 = vsel %vm90, %v3758, 0.0
  %v4010 = vadd.f32 %v4008, %v4009
  %v4011 = vsel %vm90, %v3763, 0.0
  %v4012 = vadd.f32 %v4010, %v4011
  %v4013 = vsel %vm90, %v3768, 0.0
  %v4014 = vadd.f32 %v4012, %v4013
  %v4015 = vsel %vm90, %v3773, 0.0
  %v4016 = vadd.f32 %v4014, %v4015
  %v4017 = vsel %vm90, %v3778, 0.0
  %v4018 = vadd.f32 %v4016, %v4017
  %v4019 = vsel %vm90, %v3783, 0.0
  %v4020 = vadd.f32 %v4018, %v4019
  %v4021 = vsel %vm90, %v3788, 0.0
  %v4022 = vadd.f32 %v4020, %v4021
  %v4023 = vsel %vm90, %v3793, 0.0
  %v4024 = vadd.f32 %v4022, %v4023
  %v4025 = vsel %vm90, %v3798, 0.0
  %v4026 = vadd.f32 %v4024, %v4025
  %v4027 = vsel %vm90, %v3803, 0.0
  %v4028 = vadd.f32 %v4026, %v4027
  %v4029 = vsel %vm90, %v3808, 0.0
  %v4030 = vadd.f32 %v4028, %v4029
  %v4031 = vsel %vm90, %v3813, 0.0
  %v4032 = vadd.f32 %v4030, %v4031
  %v4033 = vsel %vm90, %v3818, 0.0
  %v4034 = vadd.f32 %v4032, %v4033
  %v4035 = vsel %vm90, %v3823, 0.0
  %v4036 = vadd.f32 %v4034, %v4035
  %v4037 = vsel %vm90, %v3828, 0.0
  %v4038 = vadd.f32 %v4036, %v4037
  %v4039 = vsel %vm90, %v3833, 0.0
  %v4040 = vadd.f32 %v4038, %v4039
  %v4041 = vsel %vm90, %v3838, 0.0
  %v4042 = vadd.f32 %v4040, %v4041
  %v4043 = vsel %vm90, %v3843, 0.0
  %v4044 = vadd.f32 %v4042, %v4043
  %v4045 = vsel %vm90, %v3848, 0.0
  %v4046 = vadd.f32 %v4044, %v4045
  %v4047 = vsel %vm90, %v3853, 0.0
  %v4048 = vadd.f32 %v4046, %v4047
  %v4049 = vsel %vm90, %v3858, 0.0
  %v4050 = vadd.f32 %v4048, %v4049
  %v4051 = vsel %vm90, %v3863, 0.0
  %v4052 = vadd.f32 %v4050, %v4051
  %v4053 = vsel %vm90, %v3868, 0.0
  %v4054 = vadd.f32 %v4052, %v4053
  %v4055 = vsel %vm90, %v3873, 0.0
  %v4056 = vadd.f32 %v4054, %v4055
  %v4057 = vsel %vm90, %v3878, 0.0
  %v4058 = vadd.f32 %v4056, %v4057
  %v4059 = vsel %vm90, %v3883, 0.0
  %v4060 = vadd.f32 %v4058, %v4059
  %v4061 = vsel %vm90, %v3888, 0.0
  %v4062 = vadd.f32 %v4060, %v4061
  %v4063 = vsel %vm90, %v3893, 0.0
  %v4064 = vadd.f32 %v4062, %v4063
  %v4065 = vsel %vm90, %v3898, 0.0
  %v4066 = vadd.f32 %v4064, %v4065
  %v4067 = vsel %vm90, %v3903, 0.0
  %v4068 = vadd.f32 %v4066, %v4067
  %v4069 = vsel %vm90, %v3908, 0.0
  %v4070 = vadd.f32 %v4068, %v4069
  %v4071 = vsel %vm90, %v3913, 0.0
  %v4072 = vadd.f32 %v4070, %v4071
  %v4073 = vsel %vm90, %v3918, 0.0
  %v4074 = vadd.f32 %v4072, %v4073
  %v4075 = vsel %vm90, %v3923, 0.0
  %v4076 = vadd.f32 %v4074, %v4075
  %v4077 = vsel %vm90, %v3928, 0.0
  %v4078 = vadd.f32 %v4076, %v4077
  %v4079 = vsel %vm90, %v3933, 0.0
  %v4080 = vadd.f32 %v4078, %v4079
  %v4081 = vsel %vm90, %v3938, 0.0
  %v4082 = vadd.f32 %v4080, %v4081
  %v4083 = vsel %vm90, %v3943, 0.0
  %v4084 = vadd.f32 %v4082, %v4083
  %v4085 = vsel %vm90, %v3948, 0.0
  %v4086 = vadd.f32 %v4084, %v4085
  %v4087 = vsel %vm90, %v3953, 0.0
  %v4088 = vadd.f32 %v4086, %v4087
  %v4089 = vsel %vm90, %v3958, 0.0
  %v4090 = vadd.f32 %v4088, %v4089
  %v4091 = vsel %vm90, %v3963, 0.0
  %v4092 = vadd.f32 %v4090, %v4091
  %v4093 = vrot.slane %v4092, 4
  %v4094 = vadd.f32 %v4092, %v4093
  %v4095 = vrot.slane %v4094, 2
  %v4096 = vadd.f32 %v4094, %v4095
  %v4097 = vrot.slane %v4096, 1
  %v4098 = vadd.f32 %v4096, %v4097
  %v4099 = vrcp.pop 512.0
  %v4100 = vmul.f32 %v4098, %v4099
  %v4101 = vsub.f32 %v3648, %v4100
  %v4102 = vsub.f32 %v3653, %v4100
  %v4103 = vsub.f32 %v3658, %v4100
  %v4104 = vsub.f32 %v3663, %v4100
  %v4105 = vsub.f32 %v3668, %v4100
  %v4106 = vsub.f32 %v3673, %v4100
  %v4107 = vsub.f32 %v3678, %v4100
  %v4108 = vsub.f32 %v3683, %v4100
  %v4109 = vsub.f32 %v3688, %v4100
  %v4110 = vsub.f32 %v3693, %v4100
  %v4111 = vsub.f32 %v3698, %v4100
  %v4112 = vsub.f32 %v3703, %v4100
  %v4113 = vsub.f32 %v3708, %v4100
  %v4114 = vsub.f32 %v3713, %v4100
  %v4115 = vsub.f32 %v3718, %v4100
  %v4116 = vsub.f32 %v3723, %v4100
  %v4117 = vsub.f32 %v3728, %v4100
  %v4118 = vsub.f32 %v3733, %v4100
  %v4119 = vsub.f32 %v3738, %v4100
  %v4120 = vsub.f32 %v3743, %v4100
  %v4121 = vsub.f32 %v3748, %v4100
  %v4122 = vsub.f32 %v3753, %v4100
  %v4123 = vsub.f32 %v3758, %v4100
  %v4124 = vsub.f32 %v3763, %v4100
  %v4125 = vsub.f32 %v3768, %v4100
  %v4126 = vsub.f32 %v3773, %v4100
  %v4127 = vsub.f32 %v3778, %v4100
  %v4128 = vsub.f32 %v3783, %v4100
  %v4129 = vsub.f32 %v3788, %v4100
  %v4130 = vsub.f32 %v3793, %v4100
  %v4131 = vsub.f32 %v3798, %v4100
  %v4132 = vsub.f32 %v3803, %v4100
  %v4133 = vsub.f32 %v3808, %v4100
  %v4134 = vsub.f32 %v3813, %v4100
  %v4135 = vsub.f32 %v3818, %v4100
  %v4136 = vsub.f32 %v3823, %v4100
  %v4137 = vsub.f32 %v3828, %v4100
  %v4138 = vsub.f32 %v3833, %v4100
  %v4139 = vsub.f32 %v3838, %v4100
  %v4140 = vsub.f32 %v3843, %v4100
  %v4141 = vsub.f32 %v3848, %v4100
  %v4142 = vsub.f32 %v3853, %v4100
  %v4143 = vsub.f32 %v3858, %v4100
  %v4144 = vsub.f32 %v3863, %v4100
  %v4145 = vsub.f32 %v3868, %v4100
  %v4146 = vsub.f32 %v3873, %v4100
  %v4147 = vsub.f32 %v3878, %v4100
  %v4148 = vsub.f32 %v3883, %v4100
  %v4149 = vsub.f32 %v3888, %v4100
  %v4150 = vsub.f32 %v3893, %v4100
  %v4151 = vsub.f32 %v3898, %v4100
  %v4152 = vsub.f32 %v3903, %v4100
  %v4153 = vsub.f32 %v3908, %v4100
  %v4154 = vsub.f32 %v3913, %v4100
  %v4155 = vsub.f32 %v3918, %v4100
  %v4156 = vsub.f32 %v3923, %v4100
  %v4157 = vsub.f32 %v3928, %v4100
  %v4158 = vsub.f32 %v3933, %v4100
  %v4159 = vsub.f32 %v3938, %v4100
  %v4160 = vsub.f32 %v3943, %v4100
  %v4161 = vsub.f32 %v3948, %v4100
  %v4162 = vsub.f32 %v3953, %v4100
  %v4163 = vsub.f32 %v3958, %v4100
  %v4164 = vsub.f32 %v3963, %v4100
  %v4165 = vmul.f32 %v4101, %v4101
  %v4166 = vmul.f32 %v4102, %v4102
  %v4167 = vmul.f32 %v4103, %v4103
  %v4168 = vmul.f32 %v4104, %v4104
  %v4169 = vmul.f32 %v4105, %v4105
  %v4170 = vmul.f32 %v4106, %v4106
  %v4171 = vmul.f32 %v4107, %v4107
  %v4172 = vmul.f32 %v4108, %v4108
  %v4173 = vmul.f32 %v4109, %v4109
  %v4174 = vmul.f32 %v4110, %v4110
  %v4175 = vmul.f32 %v4111, %v4111
  %v4176 = vmul.f32 %v4112, %v4112
  %v4177 = vmul.f32 %v4113, %v4113
  %v4178 = vmul.f32 %v4114, %v4114
  %v4179 = vmul.f32 %v4115, %v4115
  %v4180 = vmul.f32 %v4116, %v4116
  %v4181 = vmul.f32 %v4117, %v4117
  %v4182 = vmul.f32 %v4118, %v4118
  %v4183 = vmul.f32 %v4119, %v4119
  %v4184 = vmul.f32 %v4120, %v4120
  %v4185 = vmul.f32 %v4121, %v4121
  %v4186 = vmul.f32 %v4122, %v4122
  %v4187 = vmul.f32 %v4123, %v4123
  %v4188 = vmul.f32 %v4124, %v4124
  %v4189 = vmul.f32 %v4125, %v4125
  %v4190 = vmul.f32 %v4126, %v4126
  %v4191 = vmul.f32 %v4127, %v4127
  %v4192 = vmul.f32 %v4128, %v4128
  %v4193 = vmul.f32 %v4129, %v4129
  %v4194 = vmul.f32 %v4130, %v4130
  %v4195 = vmul.f32 %v4131, %v4131
  %v4196 = vmul.f32 %v4132, %v4132
  %v4197 = vmul.f32 %v4133, %v4133
  %v4198 = vmul.f32 %v4134, %v4134
  %v4199 = vmul.f32 %v4135, %v4135
  %v4200 = vmul.f32 %v4136, %v4136
  %v4201 = vmul.f32 %v4137, %v4137
  %v4202 = vmul.f32 %v4138, %v4138
  %v4203 = vmul.f32 %v4139, %v4139
  %v4204 = vmul.f32 %v4140, %v4140
  %v4205 = vmul.f32 %v4141, %v4141
  %v4206 = vmul.f32 %v4142, %v4142
  %v4207 = vmul.f32 %v4143, %v4143
  %v4208 = vmul.f32 %v4144, %v4144
  %v4209 = vmul.f32 %v4145, %v4145
  %v4210 = vmul.f32 %v4146, %v4146
  %v4211 = vmul.f32 %v4147, %v4147
  %v4212 = vmul.f32 %v4148, %v4148
  %v4213 = vmul.f32 %v4149, %v4149
  %v4214 = vmul.f32 %v4150, %v4150
  %v4215 = vmul.f32 %v4151, %v4151
  %v4216 = vmul.f32 %v4152, %v4152
  %v4217 = vmul.f32 %v4153, %v4153
  %v4218 = vmul.f32 %v4154, %v4154
  %v4219 = vmul.f32 %v4155, %v4155
  %v4220 = vmul.f32 %v4156, %v4156
  %v4221 = vmul.f32 %v4157, %v4157
  %v4222 = vmul.f32 %v4158, %v4158
  %v4223 = vmul.f32 %v4159, %v4159
  %v4224 = vmul.f32 %v4160, %v4160
  %v4225 = vmul.f32 %v4161, %v4161
  %v4226 = vmul.f32 %v4162, %v4162
  %v4227 = vmul.f32 %v4163, %v4163
  %v4228 = vmul.f32 %v4164, %v4164
  %v4229 = vsel %vm90, %v4165, 0.0
  %v4230 = vsel %vm90, %v4166, 0.0
  %v4231 = vadd.f32 %v4229, %v4230
  %v4232 = vsel %vm90, %v4167, 0.0
  %v4233 = vadd.f32 %v4231, %v4232
  %v4234 = vsel %vm90, %v4168, 0.0
  %v4235 = vadd.f32 %v4233, %v4234
  %v4236 = vsel %vm90, %v4169, 0.0
  %v4237 = vadd.f32 %v4235, %v4236
  %v4238 = vsel %vm90, %v4170, 0.0
  %v4239 = vadd.f32 %v4237, %v4238
  %v4240 = vsel %vm90, %v4171, 0.0
  %v4241 = vadd.f32 %v4239, %v4240
  %v4242 = vsel %vm90, %v4172, 0.0
  %v4243 = vadd.f32 %v4241, %v4242
  %v4244 = vsel %vm90, %v4173, 0.0
  %v4245 = vadd.f32 %v4243, %v4244
  %v4246 = vsel %vm90, %v4174, 0.0
  %v4247 = vadd.f32 %v4245, %v4246
  %v4248 = vsel %vm90, %v4175, 0.0
  %v4249 = vadd.f32 %v4247, %v4248
  %v4250 = vsel %vm90, %v4176, 0.0
  %v4251 = vadd.f32 %v4249, %v4250
  %v4252 = vsel %vm90, %v4177, 0.0
  %v4253 = vadd.f32 %v4251, %v4252
  %v4254 = vsel %vm90, %v4178, 0.0
  %v4255 = vadd.f32 %v4253, %v4254
  %v4256 = vsel %vm90, %v4179, 0.0
  %v4257 = vadd.f32 %v4255, %v4256
  %v4258 = vsel %vm90, %v4180, 0.0
  %v4259 = vadd.f32 %v4257, %v4258
  %v4260 = vsel %vm90, %v4181, 0.0
  %v4261 = vadd.f32 %v4259, %v4260
  %v4262 = vsel %vm90, %v4182, 0.0
  %v4263 = vadd.f32 %v4261, %v4262
  %v4264 = vsel %vm90, %v4183, 0.0
  %v4265 = vadd.f32 %v4263, %v4264
  %v4266 = vsel %vm90, %v4184, 0.0
  %v4267 = vadd.f32 %v4265, %v4266
  %v4268 = vsel %vm90, %v4185, 0.0
  %v4269 = vadd.f32 %v4267, %v4268
  %v4270 = vsel %vm90, %v4186, 0.0
  %v4271 = vadd.f32 %v4269, %v4270
  %v4272 = vsel %vm90, %v4187, 0.0
  %v4273 = vadd.f32 %v4271, %v4272
  %v4274 = vsel %vm90, %v4188, 0.0
  %v4275 = vadd.f32 %v4273, %v4274
  %v4276 = vsel %vm90, %v4189, 0.0
  %v4277 = vadd.f32 %v4275, %v4276
  %v4278 = vsel %vm90, %v4190, 0.0
  %v4279 = vadd.f32 %v4277, %v4278
  %v4280 = vsel %vm90, %v4191, 0.0
  %v4281 = vadd.f32 %v4279, %v4280
  %v4282 = vsel %vm90, %v4192, 0.0
  %v4283 = vadd.f32 %v4281, %v4282
  %v4284 = vsel %vm90, %v4193, 0.0
  %v4285 = vadd.f32 %v4283, %v4284
  %v4286 = vsel %vm90, %v4194, 0.0
  %v4287 = vadd.f32 %v4285, %v4286
  %v4288 = vsel %vm90, %v4195, 0.0
  %v4289 = vadd.f32 %v4287, %v4288
  %v4290 = vsel %vm90, %v4196, 0.0
  %v4291 = vadd.f32 %v4289, %v4290
  %v4292 = vsel %vm90, %v4197, 0.0
  %v4293 = vadd.f32 %v4291, %v4292
  %v4294 = vsel %vm90, %v4198, 0.0
  %v4295 = vadd.f32 %v4293, %v4294
  %v4296 = vsel %vm90, %v4199, 0.0
  %v4297 = vadd.f32 %v4295, %v4296
  %v4298 = vsel %vm90, %v4200, 0.0
  %v4299 = vadd.f32 %v4297, %v4298
  %v4300 = vsel %vm90, %v4201, 0.0
  %v4301 = vadd.f32 %v4299, %v4300
  %v4302 = vsel %vm90, %v4202, 0.0
  %v4303 = vadd.f32 %v4301, %v4302
  %v4304 = vsel %vm90, %v4203, 0.0
  %v4305 = vadd.f32 %v4303, %v4304
  %v4306 = vsel %vm90, %v4204, 0.0
  %v4307 = vadd.f32 %v4305, %v4306
  %v4308 = vsel %vm90, %v4205, 0.0
  %v4309 = vadd.f32 %v4307, %v4308
  %v4310 = vsel %vm90, %v4206, 0.0
  %v4311 = vadd.f32 %v4309, %v4310
  %v4312 = vsel %vm90, %v4207, 0.0
  %v4313 = vadd.f32 %v4311, %v4312
  %v4314 = vsel %vm90, %v4208, 0.0
  %v4315 = vadd.f32 %v4313, %v4314
  %v4316 = vsel %vm90, %v4209, 0.0
  %v4317 = vadd.f32 %v4315, %v4316
  %v4318 = vsel %vm90, %v4210, 0.0
  %v4319 = vadd.f32 %v4317, %v4318
  %v4320 = vsel %vm90, %v4211, 0.0
  %v4321 = vadd.f32 %v4319, %v4320
  %v4322 = vsel %vm90, %v4212, 0.0
  %v4323 = vadd.f32 %v4321, %v4322
  %v4324 = vsel %vm90, %v4213, 0.0
  %v4325 = vadd.f32 %v4323, %v4324
  %v4326 = vsel %vm90, %v4214, 0.0
  %v4327 = vadd.f32 %v4325, %v4326
  %v4328 = vsel %vm90, %v4215, 0.0
  %v4329 = vadd.f32 %v4327, %v4328
  %v4330 = vsel %vm90, %v4216, 0.0
  %v4331 = vadd.f32 %v4329, %v4330
  %v4332 = vsel %vm90, %v4217, 0.0
  %v4333 = vadd.f32 %v4331, %v4332
  %v4334 = vsel %vm90, %v4218, 0.0
  %v4335 = vadd.f32 %v4333, %v4334
  %v4336 = vsel %vm90, %v4219, 0.0
  %v4337 = vadd.f32 %v4335, %v4336
  %v4338 = vsel %vm90, %v4220, 0.0
  %v4339 = vadd.f32 %v4337, %v4338
  %v4340 = vsel %vm90, %v4221, 0.0
  %v4341 = vadd.f32 %v4339, %v4340
  %v4342 = vsel %vm90, %v4222, 0.0
  %v4343 = vadd.f32 %v4341, %v4342
  %v4344 = vsel %vm90, %v4223, 0.0
  %v4345 = vadd.f32 %v4343, %v4344
  %v4346 = vsel %vm90, %v4224, 0.0
  %v4347 = vadd.f32 %v4345, %v4346
  %v4348 = vsel %vm90, %v4225, 0.0
  %v4349 = vadd.f32 %v4347, %v4348
  %v4350 = vsel %vm90, %v4226, 0.0
  %v4351 = vadd.f32 %v4349, %v4350
  %v4352 = vsel %vm90, %v4227, 0.0
  %v4353 = vadd.f32 %v4351, %v4352
  %v4354 = vsel %vm90, %v4228, 0.0
  %v4355 = vadd.f32 %v4353, %v4354
  %v4356 = vrot.slane %v4355, 4
  %v4357 = vadd.f32 %v4355, %v4356
  %v4358 = vrot.slane %v4357, 2
  %v4359 = vadd.f32 %v4357, %v4358
  %v4360 = vrot.slane %v4359, 1
  %v4361 = vadd.f32 %v4359, %v4360
  %v4362 = vmul.f32 %v4361, %v4099
  %v4363 = vld [vmem:[%s3] sm:$0x1]
  %v4364 = vadd.f32 %v4362, 1e-05
  %v4365 = vrsqrt.pop %v4364
  %v4366 = vmul.f32 %v4363, %v4365
  %v4367 = vld [vmem:[%s4] sm:$0x1]
  %v4368 = vmul.f32 %v4100, %v4366
  %v4369 = vsub.f32 %v4367, %v4368
  %v4371 = vlaneseq
  %v4372 = vshrl.u32 %v4371, 7
  %v4373 = vsub.s32 0, %v4372
  %v4374 = vrot.slane %v4366, %v4373
  %v4376 = vmul.f32 %v3648, %v4374
  %v4377 = vmul.f32 %v3653, %v4374
  %v4378 = vmul.f32 %v3658, %v4374
  %v4379 = vmul.f32 %v3663, %v4374
  %v4380 = vmul.f32 %v3668, %v4374
  %v4381 = vmul.f32 %v3673, %v4374
  %v4382 = vmul.f32 %v3678, %v4374
  %v4383 = vmul.f32 %v3683, %v4374
  %v4384 = vmul.f32 %v3688, %v4374
  %v4385 = vmul.f32 %v3693, %v4374
  %v4386 = vmul.f32 %v3698, %v4374
  %v4387 = vmul.f32 %v3703, %v4374
  %v4388 = vmul.f32 %v3708, %v4374
  %v4389 = vmul.f32 %v3713, %v4374
  %v4390 = vmul.f32 %v3718, %v4374
  %v4391 = vmul.f32 %v3723, %v4374
  %v4392 = vmul.f32 %v3728, %v4374
  %v4393 = vmul.f32 %v3733, %v4374
  %v4394 = vmul.f32 %v3738, %v4374
  %v4395 = vmul.f32 %v3743, %v4374
  %v4396 = vmul.f32 %v3748, %v4374
  %v4397 = vmul.f32 %v3753, %v4374
  %v4398 = vmul.f32 %v3758, %v4374
  %v4399 = vmul.f32 %v3763, %v4374
  %v4400 = vmul.f32 %v3768, %v4374
  %v4401 = vmul.f32 %v3773, %v4374
  %v4402 = vmul.f32 %v3778, %v4374
  %v4403 = vmul.f32 %v3783, %v4374
  %v4404 = vmul.f32 %v3788, %v4374
  %v4405 = vmul.f32 %v3793, %v4374
  %v4406 = vmul.f32 %v3798, %v4374
  %v4407 = vmul.f32 %v3803, %v4374
  %v4408 = vmul.f32 %v3808, %v4374
  %v4409 = vmul.f32 %v3813, %v4374
  %v4410 = vmul.f32 %v3818, %v4374
  %v4411 = vmul.f32 %v3823, %v4374
  %v4412 = vmul.f32 %v3828, %v4374
  %v4413 = vmul.f32 %v3833, %v4374
  %v4414 = vmul.f32 %v3838, %v4374
  %v4415 = vmul.f32 %v3843, %v4374
  %v4416 = vmul.f32 %v3848, %v4374
  %v4417 = vmul.f32 %v3853, %v4374
  %v4418 = vmul.f32 %v3858, %v4374
  %v4419 = vmul.f32 %v3863, %v4374
  %v4420 = vmul.f32 %v3868, %v4374
  %v4421 = vmul.f32 %v3873, %v4374
  %v4422 = vmul.f32 %v3878, %v4374
  %v4423 = vmul.f32 %v3883, %v4374
  %v4424 = vmul.f32 %v3888, %v4374
  %v4425 = vmul.f32 %v3893, %v4374
  %v4426 = vmul.f32 %v3898, %v4374
  %v4427 = vmul.f32 %v3903, %v4374
  %v4428 = vmul.f32 %v3908, %v4374
  %v4429 = vmul.f32 %v3913, %v4374
  %v4430 = vmul.f32 %v3918, %v4374
  %v4431 = vmul.f32 %v3923, %v4374
  %v4432 = vmul.f32 %v3928, %v4374
  %v4433 = vmul.f32 %v3933, %v4374
  %v4434 = vmul.f32 %v3938, %v4374
  %v4435 = vmul.f32 %v3943, %v4374
  %v4436 = vmul.f32 %v3948, %v4374
  %v4437 = vmul.f32 %v3953, %v4374
  %v4438 = vmul.f32 %v3958, %v4374
  %v4439 = vmul.f32 %v3963, %v4374
  %v4441 = vlaneseq
  %v4442 = vshrl.u32 %v4441, 7
  %v4443 = vsub.s32 0, %v4442
  %v4444 = vrot.slane %v4369, %v4443
  %v4446 = vadd.f32 %v4376, %v4444
  %v4447 = vadd.f32 %v4377, %v4444
  %v4448 = vadd.f32 %v4378, %v4444
  %v4449 = vadd.f32 %v4379, %v4444
  %v4450 = vadd.f32 %v4380, %v4444
  %v4451 = vadd.f32 %v4381, %v4444
  %v4452 = vadd.f32 %v4382, %v4444
  %v4453 = vadd.f32 %v4383, %v4444
  %v4454 = vadd.f32 %v4384, %v4444
  %v4455 = vadd.f32 %v4385, %v4444
  %v4456 = vadd.f32 %v4386, %v4444
  %v4457 = vadd.f32 %v4387, %v4444
  %v4458 = vadd.f32 %v4388, %v4444
  %v4459 = vadd.f32 %v4389, %v4444
  %v4460 = vadd.f32 %v4390, %v4444
  %v4461 = vadd.f32 %v4391, %v4444
  %v4462 = vadd.f32 %v4392, %v4444
  %v4463 = vadd.f32 %v4393, %v4444
  %v4464 = vadd.f32 %v4394, %v4444
  %v4465 = vadd.f32 %v4395, %v4444
  %v4466 = vadd.f32 %v4396, %v4444
  %v4467 = vadd.f32 %v4397, %v4444
  %v4468 = vadd.f32 %v4398, %v4444
  %v4469 = vadd.f32 %v4399, %v4444
  %v4470 = vadd.f32 %v4400, %v4444
  %v4471 = vadd.f32 %v4401, %v4444
  %v4472 = vadd.f32 %v4402, %v4444
  %v4473 = vadd.f32 %v4403, %v4444
  %v4474 = vadd.f32 %v4404, %v4444
  %v4475 = vadd.f32 %v4405, %v4444
  %v4476 = vadd.f32 %v4406, %v4444
  %v4477 = vadd.f32 %v4407, %v4444
  %v4478 = vadd.f32 %v4408, %v4444
  %v4479 = vadd.f32 %v4409, %v4444
  %v4480 = vadd.f32 %v4410, %v4444
  %v4481 = vadd.f32 %v4411, %v4444
  %v4482 = vadd.f32 %v4412, %v4444
  %v4483 = vadd.f32 %v4413, %v4444
  %v4484 = vadd.f32 %v4414, %v4444
  %v4485 = vadd.f32 %v4415, %v4444
  %v4486 = vadd.f32 %v4416, %v4444
  %v4487 = vadd.f32 %v4417, %v4444
  %v4488 = vadd.f32 %v4418, %v4444
  %v4489 = vadd.f32 %v4419, %v4444
  %v4490 = vadd.f32 %v4420, %v4444
  %v4491 = vadd.f32 %v4421, %v4444
  %v4492 = vadd.f32 %v4422, %v4444
  %v4493 = vadd.f32 %v4423, %v4444
  %v4494 = vadd.f32 %v4424, %v4444
  %v4495 = vadd.f32 %v4425, %v4444
  %v4496 = vadd.f32 %v4426, %v4444
  %v4497 = vadd.f32 %v4427, %v4444
  %v4498 = vadd.f32 %v4428, %v4444
  %v4499 = vadd.f32 %v4429, %v4444
  %v4500 = vadd.f32 %v4430, %v4444
  %v4501 = vadd.f32 %v4431, %v4444
  %v4502 = vadd.f32 %v4432, %v4444
  %v4503 = vadd.f32 %v4433, %v4444
  %v4504 = vadd.f32 %v4434, %v4444
  %v4505 = vadd.f32 %v4435, %v4444
  %v4506 = vadd.f32 %v4436, %v4444
  %v4507 = vadd.f32 %v4437, %v4444
  %v4508 = vadd.f32 %v4438, %v4444
  %v4509 = vadd.f32 %v4439, %v4444
  %v4510 = vmax.f32 %v4446, 0.0
  %v4511 = vmax.f32 %v4447, 0.0
  %v4512 = vmax.f32 %v4448, 0.0
  %v4513 = vmax.f32 %v4449, 0.0
  %v4514 = vmax.f32 %v4450, 0.0
  %v4515 = vmax.f32 %v4451, 0.0
  %v4516 = vmax.f32 %v4452, 0.0
  %v4517 = vmax.f32 %v4453, 0.0
  %v4518 = vmax.f32 %v4454, 0.0
  %v4519 = vmax.f32 %v4455, 0.0
  %v4520 = vmax.f32 %v4456, 0.0
  %v4521 = vmax.f32 %v4457, 0.0
  %v4522 = vmax.f32 %v4458, 0.0
  %v4523 = vmax.f32 %v4459, 0.0
  %v4524 = vmax.f32 %v4460, 0.0
  %v4525 = vmax.f32 %v4461, 0.0
  %v4526 = vmax.f32 %v4462, 0.0
  %v4527 = vmax.f32 %v4463, 0.0
  %v4528 = vmax.f32 %v4464, 0.0
  %v4529 = vmax.f32 %v4465, 0.0
  %v4530 = vmax.f32 %v4466, 0.0
  %v4531 = vmax.f32 %v4467, 0.0
  %v4532 = vmax.f32 %v4468, 0.0
  %v4533 = vmax.f32 %v4469, 0.0
  %v4534 = vmax.f32 %v4470, 0.0
  %v4535 = vmax.f32 %v4471, 0.0
  %v4536 = vmax.f32 %v4472, 0.0
  %v4537 = vmax.f32 %v4473, 0.0
  %v4538 = vmax.f32 %v4474, 0.0
  %v4539 = vmax.f32 %v4475, 0.0
  %v4540 = vmax.f32 %v4476, 0.0
  %v4541 = vmax.f32 %v4477, 0.0
  %v4542 = vmax.f32 %v4478, 0.0
  %v4543 = vmax.f32 %v4479, 0.0
  %v4544 = vmax.f32 %v4480, 0.0
  %v4545 = vmax.f32 %v4481, 0.0
  %v4546 = vmax.f32 %v4482, 0.0
  %v4547 = vmax.f32 %v4483, 0.0
  %v4548 = vmax.f32 %v4484, 0.0
  %v4549 = vmax.f32 %v4485, 0.0
  %v4550 = vmax.f32 %v4486, 0.0
  %v4551 = vmax.f32 %v4487, 0.0
  %v4552 = vmax.f32 %v4488, 0.0
  %v4553 = vmax.f32 %v4489, 0.0
  %v4554 = vmax.f32 %v4490, 0.0
  %v4555 = vmax.f32 %v4491, 0.0
  %v4556 = vmax.f32 %v4492, 0.0
  %v4557 = vmax.f32 %v4493, 0.0
  %v4558 = vmax.f32 %v4494, 0.0
  %v4559 = vmax.f32 %v4495, 0.0
  %v4560 = vmax.f32 %v4496, 0.0
  %v4561 = vmax.f32 %v4497, 0.0
  %v4562 = vmax.f32 %v4498, 0.0
  %v4563 = vmax.f32 %v4499, 0.0
  %v4564 = vmax.f32 %v4500, 0.0
  %v4565 = vmax.f32 %v4501, 0.0
  %v4566 = vmax.f32 %v4502, 0.0
  %v4567 = vmax.f32 %v4503, 0.0
  %v4568 = vmax.f32 %v4504, 0.0
  %v4569 = vmax.f32 %v4505, 0.0
  %v4570 = vmax.f32 %v4506, 0.0
  %v4571 = vmax.f32 %v4507, 0.0
  %v4572 = vmax.f32 %v4508, 0.0
  %v4573 = vmax.f32 %v4509, 0.0
  %4574 = vst.msk [vmem:[%s105 + $0x1] sm:$0xff] %vm90, %v4510
  %4575 = vst.msk [vmem:[%s105 + $0x9] sm:$0xff] %vm90, %v4511
  %4576 = vst.msk [vmem:[%s105 + $0x19] sm:$0xff] %vm90, %v4512
  %4577 = vst.msk [vmem:[%s105 + $0x21] sm:$0xff] %vm90, %v4513
  %4578 = vst.msk [vmem:[%s105 + $0x31] sm:$0xff] %vm90, %v4514
  %4579 = vst.msk [vmem:[%s105 + $0x39] sm:$0xff] %vm90, %v4515
  %4580 = vst.msk [vmem:[%s105 + $0x49] sm:$0xff] %vm90, %v4516
  %4581 = vst.msk [vmem:[%s105 + $0x51] sm:$0xff] %vm90, %v4517
  %4582 = vst.msk [vmem:[%s105 + $0x61] sm:$0xff] %vm90, %v4518
  %4583 = vst.msk [vmem:[%s105 + $0x69] sm:$0xff] %vm90, %v4519
  %4584 = vst.msk [vmem:[%s105 + $0x79] sm:$0xff] %vm90, %v4520
  %4585 = vst.msk [vmem:[%s105 + $0x81] sm:$0xff] %vm90, %v4521
  %4586 = vst.msk [vmem:[%s105 + $0x91] sm:$0xff] %vm90, %v4522
  %4587 = vst.msk [vmem:[%s105 + $0x99] sm:$0xff] %vm90, %v4523
  %4588 = vst.msk [vmem:[%s105 + $0xa9] sm:$0xff] %vm90, %v4524
  %4589 = vst.msk [vmem:[%s105 + $0xb1] sm:$0xff] %vm90, %v4525
  %4590 = vst.msk [vmem:[%s105 + $0xc1] sm:$0xff] %vm90, %v4526
  %4591 = vst.msk [vmem:[%s105 + $0xc9] sm:$0xff] %vm90, %v4527
  %4592 = vst.msk [vmem:[%s105 + $0xd9] sm:$0xff] %vm90, %v4528
  %4593 = vst.msk [vmem:[%s105 + $0xe1] sm:$0xff] %vm90, %v4529
  %4594 = vst.msk [vmem:[%s105 + $0xf1] sm:$0xff] %vm90, %v4530
  %4595 = vst.msk [vmem:[%s105 + $0xf9] sm:$0xff] %vm90, %v4531
  %4596 = vst.msk [vmem:[%s105 + $0x109] sm:$0xff] %vm90, %v4532
  %4597 = vst.msk [vmem:[%s105 + $0x111] sm:$0xff] %vm90, %v4533
  %4598 = vst.msk [vmem:[%s105 + $0x121] sm:$0xff] %vm90, %v4534
  %4599 = vst.msk [vmem:[%s105 + $0x129] sm:$0xff] %vm90, %v4535
  %4600 = vst.msk [vmem:[%s105 + $0x139] sm:$0xff] %vm90, %v4536
  %4601 = vst.msk [vmem:[%s105 + $0x141] sm:$0xff] %vm90, %v4537
  %4602 = vst.msk [vmem:[%s105 + $0x151] sm:$0xff] %vm90, %v4538
  %4603 = vst.msk [vmem:[%s105 + $0x159] sm:$0xff] %vm90, %v4539
  %4604 = vst.msk [vmem:[%s105 + $0x169] sm:$0xff] %vm90, %v4540
  %4605 = vst.msk [vmem:[%s105 + $0x171] sm:$0xff] %vm90, %v4541
  %4606 = vst.msk [vmem:[%s105 + $0x1b1] sm:$0xff] %vm90, %v4542
  %4607 = vst.msk [vmem:[%s105 + $0x1b9] sm:$0xff] %vm90, %v4543
  %4608 = vst.msk [vmem:[%s105 + $0x1c9] sm:$0xff] %vm90, %v4544
  %4609 = vst.msk [vmem:[%s105 + $0x1d1] sm:$0xff] %vm90, %v4545
  %4610 = vst.msk [vmem:[%s105 + $0x1e1] sm:$0xff] %vm90, %v4546
  %4611 = vst.msk [vmem:[%s105 + $0x1e9] sm:$0xff] %vm90, %v4547
  %4612 = vst.msk [vmem:[%s105 + $0x1f9] sm:$0xff] %vm90, %v4548
  %4613 = vst.msk [vmem:[%s105 + $0x201] sm:$0xff] %vm90, %v4549
  %4614 = vst.msk [vmem:[%s105 + $0x211] sm:$0xff] %vm90, %v4550
  %4615 = vst.msk [vmem:[%s105 + $0x219] sm:$0xff] %vm90, %v4551
  %4616 = vst.msk [vmem:[%s105 + $0x229] sm:$0xff] %vm90, %v4552
  %4617 = vst.msk [vmem:[%s105 + $0x231] sm:$0xff] %vm90, %v4553
  %4618 = vst.msk [vmem:[%s105 + $0x241] sm:$0xff] %vm90, %v4554
  %4619 = vst.msk [vmem:[%s105 + $0x249] sm:$0xff] %vm90, %v4555
  %4620 = vst.msk [vmem:[%s105 + $0x259] sm:$0xff] %vm90, %v4556
  %4621 = vst.msk [vmem:[%s105 + $0x261] sm:$0xff] %vm90, %v4557
  %4622 = vst.msk [vmem:[%s105 + $0x271] sm:$0xff] %vm90, %v4558
  %4623 = vst.msk [vmem:[%s105 + $0x279] sm:$0xff] %vm90, %v4559
  %4624 = vst.msk [vmem:[%s105 + $0x289] sm:$0xff] %vm90, %v4560
  %4625 = vst.msk [vmem:[%s105 + $0x291] sm:$0xff] %vm90, %v4561
  %4626 = vst.msk [vmem:[%s105 + $0x2a1] sm:$0xff] %vm90, %v4562
  %4627 = vst.msk [vmem:[%s105 + $0x2a9] sm:$0xff] %vm90, %v4563
  %4628 = vst.msk [vmem:[%s105 + $0x2b9] sm:$0xff] %vm90, %v4564
  %4629 = vst.msk [vmem:[%s105 + $0x2c1] sm:$0xff] %vm90, %v4565
  %4630 = vst.msk [vmem:[%s105 + $0x2d1] sm:$0xff] %vm90, %v4566
  %4631 = vst.msk [vmem:[%s105 + $0x2d9] sm:$0xff] %vm90, %v4567
  %4632 = vst.msk [vmem:[%s105 + $0x2e9] sm:$0xff] %vm90, %v4568
  %4633 = vst.msk [vmem:[%s105 + $0x2f1] sm:$0xff] %vm90, %v4569
  %4634 = vst.msk [vmem:[%s105 + $0x301] sm:$0xff] %vm90, %v4570
  %4635 = vst.msk [vmem:[%s105 + $0x309] sm:$0xff] %vm90, %v4571
  %4636 = vst.msk [vmem:[%s105 + $0x319] sm:$0xff] %vm90, %v4572
  %4637 = vst.msk [vmem:[%s105 + $0x321] sm:$0xff] %vm90, %v4573
  %v4638 = vld [vmem:[#allocation2] sm:$0xff]
  %v4639 = vld [vmem:[#allocation2 + $0x8] sm:$0xff]
  %v4640 = vld [vmem:[#allocation2 + $0x18] sm:$0xff]
  %v4641 = vld [vmem:[#allocation2 + $0x20] sm:$0xff]
  %v4642 = vld [vmem:[#allocation2 + $0x30] sm:$0xff]
  %v4643 = vld [vmem:[#allocation2 + $0x38] sm:$0xff]
  %v4644 = vld [vmem:[#allocation2 + $0x48] sm:$0xff]
  %v4645 = vld [vmem:[#allocation2 + $0x50] sm:$0xff]
  %v4646 = vld [vmem:[#allocation2 + $0x60] sm:$0xff]
  %v4647 = vld [vmem:[#allocation2 + $0x68] sm:$0xff]
  %v4648 = vld [vmem:[#allocation2 + $0x78] sm:$0xff]
  %v4649 = vld [vmem:[#allocation2 + $0x80] sm:$0xff]
  %v4650 = vld [vmem:[#allocation2 + $0x90] sm:$0xff]
  %v4651 = vld [vmem:[#allocation2 + $0x98] sm:$0xff]
  %v4652 = vld [vmem:[#allocation2 + $0xa8] sm:$0xff]
  %v4653 = vld [vmem:[#allocation2 + $0xb0] sm:$0xff]
  %v4654 = vld [vmem:[#allocation2 + $0xc0] sm:$0xff]
  %v4655 = vld [vmem:[#allocation2 + $0xc8] sm:$0xff]
  %v4656 = vld [vmem:[#allocation2 + $0xd8] sm:$0xff]
  %v4657 = vld [vmem:[#allocation2 + $0xe0] sm:$0xff]
  %v4658 = vld [vmem:[#allocation2 + $0xf0] sm:$0xff]
  %v4659 = vld [vmem:[#allocation2 + $0xf8] sm:$0xff]
  %v4660 = vld [vmem:[#allocation2 + $0x108] sm:$0xff]
  %v4661 = vld [vmem:[#allocation2 + $0x110] sm:$0xff]
  %v4662 = vld [vmem:[#allocation2 + $0x120] sm:$0xff]
  %v4663 = vld [vmem:[#allocation2 + $0x128] sm:$0xff]
  %v4664 = vld [vmem:[#allocation2 + $0x138] sm:$0xff]
  %v4665 = vld [vmem:[#allocation2 + $0x140] sm:$0xff]
  %v4666 = vld [vmem:[#allocation2 + $0x150] sm:$0xff]
  %v4667 = vld [vmem:[#allocation2 + $0x158] sm:$0xff]
  %v4668 = vld [vmem:[#allocation2 + $0x168] sm:$0xff]
  %v4669 = vld [vmem:[#allocation2 + $0x170] sm:$0xff]
  %v4670 = vld [vmem:[#allocation2 + $0x1b0] sm:$0xff]
  %v4671 = vld [vmem:[#allocation2 + $0x1b8] sm:$0xff]
  %v4672 = vld [vmem:[#allocation2 + $0x1c8] sm:$0xff]
  %v4673 = vld [vmem:[#allocation2 + $0x1d0] sm:$0xff]
  %v4674 = vld [vmem:[#allocation2 + $0x1e0] sm:$0xff]
  %v4675 = vld [vmem:[#allocation2 + $0x1e8] sm:$0xff]
  %v4676 = vld [vmem:[#allocation2 + $0x1f8] sm:$0xff]
  %v4677 = vld [vmem:[#allocation2 + $0x200] sm:$0xff]
  %v4678 = vld [vmem:[#allocation2 + $0x210] sm:$0xff]
  %v4679 = vld [vmem:[#allocation2 + $0x218] sm:$0xff]
  %v4680 = vld [vmem:[#allocation2 + $0x228] sm:$0xff]
  %v4681 = vld [vmem:[#allocation2 + $0x230] sm:$0xff]
  %v4682 = vld [vmem:[#allocation2 + $0x240] sm:$0xff]
  %v4683 = vld [vmem:[#allocation2 + $0x248] sm:$0xff]
  %v4684 = vld [vmem:[#allocation2 + $0x258] sm:$0xff]
  %v4685 = vld [vmem:[#allocation2 + $0x260] sm:$0xff]
  %v4686 = vld [vmem:[#allocation2 + $0x270] sm:$0xff]
  %v4687 = vld [vmem:[#allocation2 + $0x278] sm:$0xff]
  %v4688 = vld [vmem:[#allocation2 + $0x288] sm:$0xff]
  %v4689 = vld [vmem:[#allocation2 + $0x290] sm:$0xff]
  %v4690 = vld [vmem:[#allocation2 + $0x2a0] sm:$0xff]
  %v4691 = vld [vmem:[#allocation2 + $0x2a8] sm:$0xff]
  %v4692 = vld [vmem:[#allocation2 + $0x2b8] sm:$0xff]
  %v4693 = vld [vmem:[#allocation2 + $0x2c0] sm:$0xff]
  %v4694 = vld [vmem:[#allocation2 + $0x2d0] sm:$0xff]
  %v4695 = vld [vmem:[#allocation2 + $0x2d8] sm:$0xff]
  %v4696 = vld [vmem:[#allocation2 + $0x2e8] sm:$0xff]
  %v4697 = vld [vmem:[#allocation2 + $0x2f0] sm:$0xff]
  %v4698 = vld [vmem:[#allocation2 + $0x300] sm:$0xff]
  %v4699 = vld [vmem:[#allocation2 + $0x308] sm:$0xff]
  %v4700 = vld [vmem:[#allocation2 + $0x318] sm:$0xff]
  %v4701 = vld [vmem:[#allocation2 + $0x320] sm:$0xff]
  %v4702 = vld [vmem:[#allocation2 + $0x1] sm:$0xff]
  %v4703 = vld [vmem:[#allocation2 + $0x9] sm:$0xff]
  %v4704 = vld [vmem:[#allocation2 + $0x19] sm:$0xff]
  %v4705 = vld [vmem:[#allocation2 + $0x21] sm:$0xff]
  %v4706 = vld [vmem:[#allocation2 + $0x31] sm:$0xff]
  %v4707 = vld [vmem:[#allocation2 + $0x39] sm:$0xff]
  %v4708 = vld [vmem:[#allocation2 + $0x49] sm:$0xff]
  %v4709 = vld [vmem:[#allocation2 + $0x51] sm:$0xff]
  %v4710 = vld [vmem:[#allocation2 + $0x61] sm:$0xff]
  %v4711 = vld [vmem:[#allocation2 + $0x69] sm:$0xff]
  %v4712 = vld [vmem:[#allocation2 + $0x79] sm:$0xff]
  %v4713 = vld [vmem:[#allocation2 + $0x81] sm:$0xff]
  %v4714 = vld [vmem:[#allocation2 + $0x91] sm:$0xff]
  %v4715 = vld [vmem:[#allocation2 + $0x99] sm:$0xff]
  %v4716 = vld [vmem:[#allocation2 + $0xa9] sm:$0xff]
  %v4717 = vld [vmem:[#allocation2 + $0xb1] sm:$0xff]
  %v4718 = vld [vmem:[#allocation2 + $0xc1] sm:$0xff]
  %v4719 = vld [vmem:[#allocation2 + $0xc9] sm:$0xff]
  %v4720 = vld [vmem:[#allocation2 + $0xd9] sm:$0xff]
  %v4721 = vld [vmem:[#allocation2 + $0xe1] sm:$0xff]
  %v4722 = vld [vmem:[#allocation2 + $0xf1] sm:$0xff]
  %v4723 = vld [vmem:[#allocation2 + $0xf9] sm:$0xff]
  %v4724 = vld [vmem:[#allocation2 + $0x109] sm:$0xff]
  %v4725 = vld [vmem:[#allocation2 + $0x111] sm:$0xff]
  %v4726 = vld [vmem:[#allocation2 + $0x121] sm:$0xff]
  %v4727 = vld [vmem:[#allocation2 + $0x129] sm:$0xff]
  %v4728 = vld [vmem:[#allocation2 + $0x139] sm:$0xff]
  %v4729 = vld [vmem:[#allocation2 + $0x141] sm:$0xff]
  %v4730 = vld [vmem:[#allocation2 + $0x151] sm:$0xff]
  %v4731 = vld [vmem:[#allocation2 + $0x159] sm:$0xff]
  %v4732 = vld [vmem:[#allocation2 + $0x169] sm:$0xff]
  %v4733 = vld [vmem:[#allocation2 + $0x171] sm:$0xff]
  %v4734 = vld [vmem:[#allocation2 + $0x1b1] sm:$0xff]
  %v4735 = vld [vmem:[#allocation2 + $0x1b9] sm:$0xff]
  %v4736 = vld [vmem:[#allocation2 + $0x1c9] sm:$0xff]
  %v4737 = vld [vmem:[#allocation2 + $0x1d1] sm:$0xff]
  %v4738 = vld [vmem:[#allocation2 + $0x1e1] sm:$0xff]
  %v4739 = vld [vmem:[#allocation2 + $0x1e9] sm:$0xff]
  %v4740 = vld [vmem:[#allocation2 + $0x1f9] sm:$0xff]
  %v4741 = vld [vmem:[#allocation2 + $0x201] sm:$0xff]
  %v4742 = vld [vmem:[#allocation2 + $0x211] sm:$0xff]
  %v4743 = vld [vmem:[#allocation2 + $0x219] sm:$0xff]
  %v4744 = vld [vmem:[#allocation2 + $0x229] sm:$0xff]
  %v4745 = vld [vmem:[#allocation2 + $0x231] sm:$0xff]
  %v4746 = vld [vmem:[#allocation2 + $0x241] sm:$0xff]
  %v4747 = vld [vmem:[#allocation2 + $0x249] sm:$0xff]
  %v4748 = vld [vmem:[#allocation2 + $0x259] sm:$0xff]
  %v4749 = vld [vmem:[#allocation2 + $0x261] sm:$0xff]
  %v4750 = vld [vmem:[#allocation2 + $0x271] sm:$0xff]
  %v4751 = vld [vmem:[#allocation2 + $0x279] sm:$0xff]
  %v4752 = vld [vmem:[#allocation2 + $0x289] sm:$0xff]
  %v4753 = vld [vmem:[#allocation2 + $0x291] sm:$0xff]
  %v4754 = vld [vmem:[#allocation2 + $0x2a1] sm:$0xff]
  %v4755 = vld [vmem:[#allocation2 + $0x2a9] sm:$0xff]
  %v4756 = vld [vmem:[#allocation2 + $0x2b9] sm:$0xff]
  %v4757 = vld [vmem:[#allocation2 + $0x2c1] sm:$0xff]
  %v4758 = vld [vmem:[#allocation2 + $0x2d1] sm:$0xff]
  %v4759 = vld [vmem:[#allocation2 + $0x2d9] sm:$0xff]
  %v4760 = vld [vmem:[#allocation2 + $0x2e9] sm:$0xff]
  %v4761 = vld [vmem:[#allocation2 + $0x2f1] sm:$0xff]
  %v4762 = vld [vmem:[#allocation2 + $0x301] sm:$0xff]
  %v4763 = vld [vmem:[#allocation2 + $0x309] sm:$0xff]
  %v4764 = vld [vmem:[#allocation2 + $0x319] sm:$0xff]
  %v4765 = vld [vmem:[#allocation2 + $0x321] sm:$0xff]
  %v4766 = vld [vmem:[#allocation2 + $0x2] sm:$0xff]
  %v4767 = vld [vmem:[#allocation2 + $0xa] sm:$0xff]
  %v4768 = vld [vmem:[#allocation2 + $0x1a] sm:$0xff]
  %v4769 = vld [vmem:[#allocation2 + $0x22] sm:$0xff]
  %v4770 = vld [vmem:[#allocation2 + $0x32] sm:$0xff]
  %v4771 = vld [vmem:[#allocation2 + $0x3a] sm:$0xff]
  %v4772 = vld [vmem:[#allocation2 + $0x4a] sm:$0xff]
  %v4773 = vld [vmem:[#allocation2 + $0x52] sm:$0xff]
  %v4774 = vld [vmem:[#allocation2 + $0x62] sm:$0xff]
  %v4775 = vld [vmem:[#allocation2 + $0x6a] sm:$0xff]
  %v4776 = vld [vmem:[#allocation2 + $0x7a] sm:$0xff]
  %v4777 = vld [vmem:[#allocation2 + $0x82] sm:$0xff]
  %v4778 = vld [vmem:[#allocation2 + $0x92] sm:$0xff]
  %v4779 = vld [vmem:[#allocation2 + $0x9a] sm:$0xff]
  %v4780 = vld [vmem:[#allocation2 + $0xaa] sm:$0xff]
  %v4781 = vld [vmem:[#allocation2 + $0xb2] sm:$0xff]
  %v4782 = vld [vmem:[#allocation2 + $0xc2] sm:$0xff]
  %v4783 = vld [vmem:[#allocation2 + $0xca] sm:$0xff]
  %v4784 = vld [vmem:[#allocation2 + $0xda] sm:$0xff]
  %v4785 = vld [vmem:[#allocation2 + $0xe2] sm:$0xff]
  %v4786 = vld [vmem:[#allocation2 + $0xf2] sm:$0xff]
  %v4787 = vld [vmem:[#allocation2 + $0xfa] sm:$0xff]
  %v4788 = vld [vmem:[#allocation2 + $0x10a] sm:$0xff]
  %v4789 = vld [vmem:[#allocation2 + $0x112] sm:$0xff]
  %v4790 = vld [vmem:[#allocation2 + $0x122] sm:$0xff]
  %v4791 = vld [vmem:[#allocation2 + $0x12a] sm:$0xff]
  %v4792 = vld [vmem:[#allocation2 + $0x13a] sm:$0xff]
  %v4793 = vld [vmem:[#allocation2 + $0x142] sm:$0xff]
  %v4794 = vld [vmem:[#allocation2 + $0x152] sm:$0xff]
  %v4795 = vld [vmem:[#allocation2 + $0x15a] sm:$0xff]
  %v4796 = vld [vmem:[#allocation2 + $0x16a] sm:$0xff]
  %v4797 = vld [vmem:[#allocation2 + $0x172] sm:$0xff]
  %v4798 = vld [vmem:[#allocation2 + $0x1b2] sm:$0xff]
  %v4799 = vld [vmem:[#allocation2 + $0x1ba] sm:$0xff]
  %v4800 = vld [vmem:[#allocation2 + $0x1ca] sm:$0xff]
  %v4801 = vld [vmem:[#allocation2 + $0x1d2] sm:$0xff]
  %v4802 = vld [vmem:[#allocation2 + $0x1e2] sm:$0xff]
  %v4803 = vld [vmem:[#allocation2 + $0x1ea] sm:$0xff]
  %v4804 = vld [vmem:[#allocation2 + $0x1fa] sm:$0xff]
  %v4805 = vld [vmem:[#allocation2 + $0x202] sm:$0xff]
  %v4806 = vld [vmem:[#allocation2 + $0x212] sm:$0xff]
  %v4807 = vld [vmem:[#allocation2 + $0x21a] sm:$0xff]
  %v4808 = vld [vmem:[#allocation2 + $0x22a] sm:$0xff]
  %v4809 = vld [vmem:[#allocation2 + $0x232] sm:$0xff]
  %v4810 = vld [vmem:[#allocation2 + $0x242] sm:$0xff]
  %v4811 = vld [vmem:[#allocation2 + $0x24a] sm:$0xff]
  %v4812 = vld [vmem:[#allocation2 + $0x25a] sm:$0xff]
  %v4813 = vld [vmem:[#allocation2 + $0x262] sm:$0xff]
  %v4814 = vld [vmem:[#allocation2 + $0x272] sm:$0xff]
  %v4815 = vld [vmem:[#allocation2 + $0x27a] sm:$0xff]
  %v4816 = vld [vmem:[#allocation2 + $0x28a] sm:$0xff]
  %v4817 = vld [vmem:[#allocation2 + $0x292] sm:$0xff]
  %v4818 = vld [vmem:[#allocation2 + $0x2a2] sm:$0xff]
  %v4819 = vld [vmem:[#allocation2 + $0x2aa] sm:$0xff]
  %v4820 = vld [vmem:[#allocation2 + $0x2ba] sm:$0xff]
  %v4821 = vld [vmem:[#allocation2 + $0x2c2] sm:$0xff]
  %v4822 = vld [vmem:[#allocation2 + $0x2d2] sm:$0xff]
  %v4823 = vld [vmem:[#allocation2 + $0x2da] sm:$0xff]
  %v4824 = vld [vmem:[#allocation2 + $0x2ea] sm:$0xff]
  %v4825 = vld [vmem:[#allocation2 + $0x2f2] sm:$0xff]
  %v4826 = vld [vmem:[#allocation2 + $0x302] sm:$0xff]
  %v4827 = vld [vmem:[#allocation2 + $0x30a] sm:$0xff]
  %v4828 = vld [vmem:[#allocation2 + $0x31a] sm:$0xff]
  %v4829 = vld [vmem:[#allocation2 + $0x322] sm:$0xff]
  %v4830 = vld [vmem:[%s105] sm:$0xff]
  %v4831 = vld [vmem:[%s105 + $0x8] sm:$0xff]
  %v4832 = vld [vmem:[%s105 + $0x18] sm:$0xff]
  %v4833 = vld [vmem:[%s105 + $0x20] sm:$0xff]
  %v4834 = vld [vmem:[%s105 + $0x30] sm:$0xff]
  %v4835 = vld [vmem:[%s105 + $0x38] sm:$0xff]
  %v4836 = vld [vmem:[%s105 + $0x48] sm:$0xff]
  %v4837 = vld [vmem:[%s105 + $0x50] sm:$0xff]
  %v4838 = vld [vmem:[%s105 + $0x60] sm:$0xff]
  %v4839 = vld [vmem:[%s105 + $0x68] sm:$0xff]
  %v4840 = vld [vmem:[%s105 + $0x78] sm:$0xff]
  %v4841 = vld [vmem:[%s105 + $0x80] sm:$0xff]
  %v4842 = vld [vmem:[%s105 + $0x90] sm:$0xff]
  %v4843 = vld [vmem:[%s105 + $0x98] sm:$0xff]
  %v4844 = vld [vmem:[%s105 + $0xa8] sm:$0xff]
  %v4845 = vld [vmem:[%s105 + $0xb0] sm:$0xff]
  %v4846 = vld [vmem:[%s105 + $0xc0] sm:$0xff]
  %v4847 = vld [vmem:[%s105 + $0xc8] sm:$0xff]
  %v4848 = vld [vmem:[%s105 + $0xd8] sm:$0xff]
  %v4849 = vld [vmem:[%s105 + $0xe0] sm:$0xff]
  %v4850 = vld [vmem:[%s105 + $0xf0] sm:$0xff]
  %v4851 = vld [vmem:[%s105 + $0xf8] sm:$0xff]
  %v4852 = vld [vmem:[%s105 + $0x108] sm:$0xff]
  %v4853 = vld [vmem:[%s105 + $0x110] sm:$0xff]
  %v4854 = vld [vmem:[%s105 + $0x120] sm:$0xff]
  %v4855 = vld [vmem:[%s105 + $0x128] sm:$0xff]
  %v4856 = vld [vmem:[%s105 + $0x138] sm:$0xff]
  %v4857 = vld [vmem:[%s105 + $0x140] sm:$0xff]
  %v4858 = vld [vmem:[%s105 + $0x150] sm:$0xff]
  %v4859 = vld [vmem:[%s105 + $0x158] sm:$0xff]
  %v4860 = vld [vmem:[%s105 + $0x168] sm:$0xff]
  %v4861 = vld [vmem:[%s105 + $0x170] sm:$0xff]
  %v4862 = vld [vmem:[%s105 + $0x1b0] sm:$0xff]
  %v4863 = vld [vmem:[%s105 + $0x1b8] sm:$0xff]
  %v4864 = vld [vmem:[%s105 + $0x1c8] sm:$0xff]
  %v4865 = vld [vmem:[%s105 + $0x1d0] sm:$0xff]
  %v4866 = vld [vmem:[%s105 + $0x1e0] sm:$0xff]
  %v4867 = vld [vmem:[%s105 + $0x1e8] sm:$0xff]
  %v4868 = vld [vmem:[%s105 + $0x1f8] sm:$0xff]
  %v4869 = vld [vmem:[%s105 + $0x200] sm:$0xff]
  %v4870 = vld [vmem:[%s105 + $0x210] sm:$0xff]
  %v4871 = vld [vmem:[%s105 + $0x218] sm:$0xff]
  %v4872 = vld [vmem:[%s105 + $0x228] sm:$0xff]
  %v4873 = vld [vmem:[%s105 + $0x230] sm:$0xff]
  %v4874 = vld [vmem:[%s105 + $0x240] sm:$0xff]
  %v4875 = vld [vmem:[%s105 + $0x248] sm:$0xff]
  %v4876 = vld [vmem:[%s105 + $0x258] sm:$0xff]
  %v4877 = vld [vmem:[%s105 + $0x260] sm:$0xff]
  %v4878 = vld [vmem:[%s105 + $0x270] sm:$0xff]
  %v4879 = vld [vmem:[%s105 + $0x278] sm:$0xff]
  %v4880 = vld [vmem:[%s105 + $0x288] sm:$0xff]
  %v4881 = vld [vmem:[%s105 + $0x290] sm:$0xff]
  %v4882 = vld [vmem:[%s105 + $0x2a0] sm:$0xff]
  %v4883 = vld [vmem:[%s105 + $0x2a8] sm:$0xff]
  %v4884 = vld [vmem:[%s105 + $0x2b8] sm:$0xff]
  %v4885 = vld [vmem:[%s105 + $0x2c0] sm:$0xff]
  %v4886 = vld [vmem:[%s105 + $0x2d0] sm:$0xff]
  %v4887 = vld [vmem:[%s105 + $0x2d8] sm:$0xff]
  %v4888 = vld [vmem:[%s105 + $0x2e8] sm:$0xff]
  %v4889 = vld [vmem:[%s105 + $0x2f0] sm:$0xff]
  %v4890 = vld [vmem:[%s105 + $0x300] sm:$0xff]
  %v4891 = vld [vmem:[%s105 + $0x308] sm:$0xff]
  %v4892 = vld [vmem:[%s105 + $0x318] sm:$0xff]
  %v4893 = vld [vmem:[%s105 + $0x320] sm:$0xff]
  %v4894 = vld [vmem:[%s105 + $0x1] sm:$0xff]
  %v4895 = vld [vmem:[%s105 + $0x9] sm:$0xff]
  %v4896 = vld [vmem:[%s105 + $0x19] sm:$0xff]
  %v4897 = vld [vmem:[%s105 + $0x21] sm:$0xff]
  %v4898 = vld [vmem:[%s105 + $0x31] sm:$0xff]
  %v4899 = vld [vmem:[%s105 + $0x39] sm:$0xff]
  %v4900 = vld [vmem:[%s105 + $0x49] sm:$0xff]
  %v4901 = vld [vmem:[%s105 + $0x51] sm:$0xff]
  %v4902 = vld [vmem:[%s105 + $0x61] sm:$0xff]
  %v4903 = vld [vmem:[%s105 + $0x69] sm:$0xff]
  %v4904 = vld [vmem:[%s105 + $0x79] sm:$0xff]
  %v4905 = vld [vmem:[%s105 + $0x81] sm:$0xff]
  %v4906 = vld [vmem:[%s105 + $0x91] sm:$0xff]
  %v4907 = vld [vmem:[%s105 + $0x99] sm:$0xff]
  %v4908 = vld [vmem:[%s105 + $0xa9] sm:$0xff]
  %v4909 = vld [vmem:[%s105 + $0xb1] sm:$0xff]
  %v4910 = vld [vmem:[%s105 + $0xc1] sm:$0xff]
  %v4911 = vld [vmem:[%s105 + $0xc9] sm:$0xff]
  %v4912 = vld [vmem:[%s105 + $0xd9] sm:$0xff]
  %v4913 = vld [vmem:[%s105 + $0xe1] sm:$0xff]
  %v4914 = vld [vmem:[%s105 + $0xf1] sm:$0xff]
  %v4915 = vld [vmem:[%s105 + $0xf9] sm:$0xff]
  %v4916 = vld [vmem:[%s105 + $0x109] sm:$0xff]
  %v4917 = vld [vmem:[%s105 + $0x111] sm:$0xff]
  %v4918 = vld [vmem:[%s105 + $0x121] sm:$0xff]
  %v4919 = vld [vmem:[%s105 + $0x129] sm:$0xff]
  %v4920 = vld [vmem:[%s105 + $0x139] sm:$0xff]
  %v4921 = vld [vmem:[%s105 + $0x141] sm:$0xff]
  %v4922 = vld [vmem:[%s105 + $0x151] sm:$0xff]
  %v4923 = vld [vmem:[%s105 + $0x159] sm:$0xff]
  %v4924 = vld [vmem:[%s105 + $0x169] sm:$0xff]
  %v4925 = vld [vmem:[%s105 + $0x171] sm:$0xff]
  %v4926 = vld [vmem:[%s105 + $0x1b1] sm:$0xff]
  %v4927 = vld [vmem:[%s105 + $0x1b9] sm:$0xff]
  %v4928 = vld [vmem:[%s105 + $0x1c9] sm:$0xff]
  %v4929 = vld [vmem:[%s105 + $0x1d1] sm:$0xff]
  %v4930 = vld [vmem:[%s105 + $0x1e1] sm:$0xff]
  %v4931 = vld [vmem:[%s105 + $0x1e9] sm:$0xff]
  %v4932 = vld [vmem:[%s105 + $0x1f9] sm:$0xff]
  %v4933 = vld [vmem:[%s105 + $0x201] sm:$0xff]
  %v4934 = vld [vmem:[%s105 + $0x211] sm:$0xff]
  %v4935 = vld [vmem:[%s105 + $0x219] sm:$0xff]
  %v4936 = vld [vmem:[%s105 + $0x229] sm:$0xff]
  %v4937 = vld [vmem:[%s105 + $0x231] sm:$0xff]
  %v4938 = vld [vmem:[%s105 + $0x241] sm:$0xff]
  %v4939 = vld [vmem:[%s105 + $0x249] sm:$0xff]
  %v4940 = vld [vmem:[%s105 + $0x259] sm:$0xff]
  %v4941 = vld [vmem:[%s105 + $0x261] sm:$0xff]
  %v4942 = vld [vmem:[%s105 + $0x271] sm:$0xff]
  %v4943 = vld [vmem:[%s105 + $0x279] sm:$0xff]
  %v4944 = vld [vmem:[%s105 + $0x289] sm:$0xff]
  %v4945 = vld [vmem:[%s105 + $0x291] sm:$0xff]
  %v4946 = vld [vmem:[%s105 + $0x2a1] sm:$0xff]
  %v4947 = vld [vmem:[%s105 + $0x2a9] sm:$0xff]
  %v4948 = vld [vmem:[%s105 + $0x2b9] sm:$0xff]
  %v4949 = vld [vmem:[%s105 + $0x2c1] sm:$0xff]
  %v4950 = vld [vmem:[%s105 + $0x2d1] sm:$0xff]
  %v4951 = vld [vmem:[%s105 + $0x2d9] sm:$0xff]
  %v4952 = vld [vmem:[%s105 + $0x2e9] sm:$0xff]
  %v4953 = vld [vmem:[%s105 + $0x2f1] sm:$0xff]
  %v4954 = vld [vmem:[%s105 + $0x301] sm:$0xff]
  %v4955 = vld [vmem:[%s105 + $0x309] sm:$0xff]
  %v4956 = vld [vmem:[%s105 + $0x319] sm:$0xff]
  %v4957 = vld [vmem:[%s105 + $0x321] sm:$0xff]
  %v4958 = vld [vmem:[%s105 + $0x2] sm:$0xff]
  %v4959 = vld [vmem:[%s105 + $0xa] sm:$0xff]
  %v4960 = vld [vmem:[%s105 + $0x1a] sm:$0xff]
  %v4961 = vld [vmem:[%s105 + $0x22] sm:$0xff]
  %v4962 = vld [vmem:[%s105 + $0x32] sm:$0xff]
  %v4963 = vld [vmem:[%s105 + $0x3a] sm:$0xff]
  %v4964 = vld [vmem:[%s105 + $0x4a] sm:$0xff]
  %v4965 = vld [vmem:[%s105 + $0x52] sm:$0xff]
  %v4966 = vld [vmem:[%s105 + $0x62] sm:$0xff]
  %v4967 = vld [vmem:[%s105 + $0x6a] sm:$0xff]
  %v4968 = vld [vmem:[%s105 + $0x7a] sm:$0xff]
  %v4969 = vld [vmem:[%s105 + $0x82] sm:$0xff]
  %v4970 = vld [vmem:[%s105 + $0x92] sm:$0xff]
  %v4971 = vld [vmem:[%s105 + $0x9a] sm:$0xff]
  %v4972 = vld [vmem:[%s105 + $0xaa] sm:$0xff]
  %v4973 = vld [vmem:[%s105 + $0xb2] sm:$0xff]
  %v4974 = vld [vmem:[%s105 + $0xc2] sm:$0xff]
  %v4975 = vld [vmem:[%s105 + $0xca] sm:$0xff]
  %v4976 = vld [vmem:[%s105 + $0xda] sm:$0xff]
  %v4977 = vld [vmem:[%s105 + $0xe2] sm:$0xff]
  %v4978 = vld [vmem:[%s105 + $0xf2] sm:$0xff]
  %v4979 = vld [vmem:[%s105 + $0xfa] sm:$0xff]
  %v4980 = vld [vmem:[%s105 + $0x10a] sm:$0xff]
  %v4981 = vld [vmem:[%s105 + $0x112] sm:$0xff]
  %v4982 = vld [vmem:[%s105 + $0x122] sm:$0xff]
  %v4983 = vld [vmem:[%s105 + $0x12a] sm:$0xff]
  %v4984 = vld [vmem:[%s105 + $0x13a] sm:$0xff]
  %v4985 = vld [vmem:[%s105 + $0x142] sm:$0xff]
  %v4986 = vld [vmem:[%s105 + $0x152] sm:$0xff]
  %v4987 = vld [vmem:[%s105 + $0x15a] sm:$0xff]
  %v4988 = vld [vmem:[%s105 + $0x16a] sm:$0xff]
  %v4989 = vld [vmem:[%s105 + $0x172] sm:$0xff]
  %v4990 = vld [vmem:[%s105 + $0x1b2] sm:$0xff]
  %v4991 = vld [vmem:[%s105 + $0x1ba] sm:$0xff]
  %v4992 = vld [vmem:[%s105 + $0x1ca] sm:$0xff]
  %v4993 = vld [vmem:[%s105 + $0x1d2] sm:$0xff]
  %v4994 = vld [vmem:[%s105 + $0x1e2] sm:$0xff]
  %v4995 = vld [vmem:[%s105 + $0x1ea] sm:$0xff]
  %v4996 = vld [vmem:[%s105 + $0x1fa] sm:$0xff]
  %v4997 = vld [vmem:[%s105 + $0x202] sm:$0xff]
  %v4998 = vld [vmem:[%s105 + $0x212] sm:$0xff]
  %v4999 = vld [vmem:[%s105 + $0x21a] sm:$0xff]
  %v5000 = vld [vmem:[%s105 + $0x22a] sm:$0xff]
  %v5001 = vld [vmem:[%s105 + $0x232] sm:$0xff]
  %v5002 = vld [vmem:[%s105 + $0x242] sm:$0xff]
  %v5003 = vld [vmem:[%s105 + $0x24a] sm:$0xff]
  %v5004 = vld [vmem:[%s105 + $0x25a] sm:$0xff]
  %v5005 = vld [vmem:[%s105 + $0x262] sm:$0xff]
  %v5006 = vld [vmem:[%s105 + $0x272] sm:$0xff]
  %v5007 = vld [vmem:[%s105 + $0x27a] sm:$0xff]
  %v5008 = vld [vmem:[%s105 + $0x28a] sm:$0xff]
  %v5009 = vld [vmem:[%s105 + $0x292] sm:$0xff]
  %v5010 = vld [vmem:[%s105 + $0x2a2] sm:$0xff]
  %v5011 = vld [vmem:[%s105 + $0x2aa] sm:$0xff]
  %v5012 = vld [vmem:[%s105 + $0x2ba] sm:$0xff]
  %v5013 = vld [vmem:[%s105 + $0x2c2] sm:$0xff]
  %v5014 = vld [vmem:[%s105 + $0x2d2] sm:$0xff]
  %v5015 = vld [vmem:[%s105 + $0x2da] sm:$0xff]
  %v5016 = vld [vmem:[%s105 + $0x2ea] sm:$0xff]
  %v5017 = vld [vmem:[%s105 + $0x2f2] sm:$0xff]
  %v5018 = vld [vmem:[%s105 + $0x302] sm:$0xff]
  %v5019 = vld [vmem:[%s105 + $0x30a] sm:$0xff]
  %v5020 = vld [vmem:[%s105 + $0x31a] sm:$0xff]
  %v5021 = vld [vmem:[%s105 + $0x322] sm:$0xff]
  %v5022 = vld [vmem:[%s619] sm:$0xff]
  %v5023 = vld [vmem:[%s619 + $0x8] sm:$0xff]
  %v5024 = vld [vmem:[%s619 + $0x18] sm:$0xff]
  %v5025 = vld [vmem:[%s619 + $0x20] sm:$0xff]
  %v5026 = vld [vmem:[%s619 + $0x30] sm:$0xff]
  %v5027 = vld [vmem:[%s619 + $0x38] sm:$0xff]
  %v5028 = vld [vmem:[%s619 + $0x48] sm:$0xff]
  %v5029 = vld [vmem:[%s619 + $0x50] sm:$0xff]
  %v5030 = vld [vmem:[%s619 + $0x60] sm:$0xff]
  %v5031 = vld [vmem:[%s619 + $0x68] sm:$0xff]
  %v5032 = vld [vmem:[%s619 + $0x78] sm:$0xff]
  %v5033 = vld [vmem:[%s619 + $0x80] sm:$0xff]
  %v5034 = vld [vmem:[%s619 + $0x90] sm:$0xff]
  %v5035 = vld [vmem:[%s619 + $0x98] sm:$0xff]
  %v5036 = vld [vmem:[%s619 + $0xa8] sm:$0xff]
  %v5037 = vld [vmem:[%s619 + $0xb0] sm:$0xff]
  %v5038 = vld [vmem:[%s619 + $0xc0] sm:$0xff]
  %v5039 = vld [vmem:[%s619 + $0xc8] sm:$0xff]
  %v5040 = vld [vmem:[%s619 + $0xd8] sm:$0xff]
  %v5041 = vld [vmem:[%s619 + $0xe0] sm:$0xff]
  %v5042 = vld [vmem:[%s619 + $0xf0] sm:$0xff]
  %v5043 = vld [vmem:[%s619 + $0xf8] sm:$0xff]
  %v5044 = vld [vmem:[%s619 + $0x108] sm:$0xff]
  %v5045 = vld [vmem:[%s619 + $0x110] sm:$0xff]
  %v5046 = vld [vmem:[%s619 + $0x120] sm:$0xff]
  %v5047 = vld [vmem:[%s619 + $0x128] sm:$0xff]
  %v5048 = vld [vmem:[%s619 + $0x138] sm:$0xff]
  %v5049 = vld [vmem:[%s619 + $0x140] sm:$0xff]
  %v5050 = vld [vmem:[%s619 + $0x150] sm:$0xff]
  %v5051 = vld [vmem:[%s619 + $0x158] sm:$0xff]
  %v5052 = vld [vmem:[%s619 + $0x168] sm:$0xff]
  %v5053 = vld [vmem:[%s619 + $0x170] sm:$0xff]
  %v5054 = vld [vmem:[%s619 + $0x1b0] sm:$0xff]
  %v5055 = vld [vmem:[%s619 + $0x1b8] sm:$0xff]
  %v5056 = vld [vmem:[%s619 + $0x1c8] sm:$0xff]
  %v5057 = vld [vmem:[%s619 + $0x1d0] sm:$0xff]
  %v5058 = vld [vmem:[%s619 + $0x1e0] sm:$0xff]
  %v5059 = vld [vmem:[%s619 + $0x1e8] sm:$0xff]
  %v5060 = vld [vmem:[%s619 + $0x1f8] sm:$0xff]
  %v5061 = vld [vmem:[%s619 + $0x200] sm:$0xff]
  %v5062 = vld [vmem:[%s619 + $0x210] sm:$0xff]
  %v5063 = vld [vmem:[%s619 + $0x218] sm:$0xff]
  %v5064 = vld [vmem:[%s619 + $0x228] sm:$0xff]
  %v5065 = vld [vmem:[%s619 + $0x230] sm:$0xff]
  %v5066 = vld [vmem:[%s619 + $0x240] sm:$0xff]
  %v5067 = vld [vmem:[%s619 + $0x248] sm:$0xff]
  %v5068 = vld [vmem:[%s619 + $0x258] sm:$0xff]
  %v5069 = vld [vmem:[%s619 + $0x260] sm:$0xff]
  %v5070 = vld [vmem:[%s619 + $0x270] sm:$0xff]
  %v5071 = vld [vmem:[%s619 + $0x278] sm:$0xff]
  %v5072 = vld [vmem:[%s619 + $0x288] sm:$0xff]
  %v5073 = vld [vmem:[%s619 + $0x290] sm:$0xff]
  %v5074 = vld [vmem:[%s619 + $0x2a0] sm:$0xff]
  %v5075 = vld [vmem:[%s619 + $0x2a8] sm:$0xff]
  %v5076 = vld [vmem:[%s619 + $0x2b8] sm:$0xff]
  %v5077 = vld [vmem:[%s619 + $0x2c0] sm:$0xff]
  %v5078 = vld [vmem:[%s619 + $0x2d0] sm:$0xff]
  %v5079 = vld [vmem:[%s619 + $0x2d8] sm:$0xff]
  %v5080 = vld [vmem:[%s619 + $0x2e8] sm:$0xff]
  %v5081 = vld [vmem:[%s619 + $0x2f0] sm:$0xff]
  %v5082 = vld [vmem:[%s619 + $0x300] sm:$0xff]
  %v5083 = vld [vmem:[%s619 + $0x308] sm:$0xff]
  %v5084 = vld [vmem:[%s619 + $0x318] sm:$0xff]
  %v5085 = vld [vmem:[%s619 + $0x320] sm:$0xff]
  %v5086 = vld [vmem:[%s619 + $0x1] sm:$0xff]
  %v5087 = vld [vmem:[%s619 + $0x9] sm:$0xff]
  %v5088 = vld [vmem:[%s619 + $0x19] sm:$0xff]
  %v5089 = vld [vmem:[%s619 + $0x21] sm:$0xff]
  %v5090 = vld [vmem:[%s619 + $0x31] sm:$0xff]
  %v5091 = vld [vmem:[%s619 + $0x39] sm:$0xff]
  %v5092 = vld [vmem:[%s619 + $0x49] sm:$0xff]
  %v5093 = vld [vmem:[%s619 + $0x51] sm:$0xff]
  %v5094 = vld [vmem:[%s619 + $0x61] sm:$0xff]
  %v5095 = vld [vmem:[%s619 + $0x69] sm:$0xff]
  %v5096 = vld [vmem:[%s619 + $0x79] sm:$0xff]
  %v5097 = vld [vmem:[%s619 + $0x81] sm:$0xff]
  %v5098 = vld [vmem:[%s619 + $0x91] sm:$0xff]
  %v5099 = vld [vmem:[%s619 + $0x99] sm:$0xff]
  %v5100 = vld [vmem:[%s619 + $0xa9] sm:$0xff]
  %v5101 = vld [vmem:[%s619 + $0xb1] sm:$0xff]
  %v5102 = vld [vmem:[%s619 + $0xc1] sm:$0xff]
  %v5103 = vld [vmem:[%s619 + $0xc9] sm:$0xff]
  %v5104 = vld [vmem:[%s619 + $0xd9] sm:$0xff]
  %v5105 = vld [vmem:[%s619 + $0xe1] sm:$0xff]
  %v5106 = vld [vmem:[%s619 + $0xf1] sm:$0xff]
  %v5107 = vld [vmem:[%s619 + $0xf9] sm:$0xff]
  %v5108 = vld [vmem:[%s619 + $0x109] sm:$0xff]
  %v5109 = vld [vmem:[%s619 + $0x111] sm:$0xff]
  %v5110 = vld [vmem:[%s619 + $0x121] sm:$0xff]
  %v5111 = vld [vmem:[%s619 + $0x129] sm:$0xff]
  %v5112 = vld [vmem:[%s619 + $0x139] sm:$0xff]
  %v5113 = vld [vmem:[%s619 + $0x141] sm:$0xff]
  %v5114 = vld [vmem:[%s619 + $0x151] sm:$0xff]
  %v5115 = vld [vmem:[%s619 + $0x159] sm:$0xff]
  %v5116 = vld [vmem:[%s619 + $0x169] sm:$0xff]
  %v5117 = vld [vmem:[%s619 + $0x171] sm:$0xff]
  %v5118 = vld [vmem:[%s619 + $0x1b1] sm:$0xff]
  %v5119 = vld [vmem:[%s619 + $0x1b9] sm:$0xff]
  %v5120 = vld [vmem:[%s619 + $0x1c9] sm:$0xff]
  %v5121 = vld [vmem:[%s619 + $0x1d1] sm:$0xff]
  %v5122 = vld [vmem:[%s619 + $0x1e1] sm:$0xff]
  %v5123 = vld [vmem:[%s619 + $0x1e9] sm:$0xff]
  %v5124 = vld [vmem:[%s619 + $0x1f9] sm:$0xff]
  %v5125 = vld [vmem:[%s619 + $0x201] sm:$0xff]
  %v5126 = vld [vmem:[%s619 + $0x211] sm:$0xff]
  %v5127 = vld [vmem:[%s619 + $0x219] sm:$0xff]
  %v5128 = vld [vmem:[%s619 + $0x229] sm:$0xff]
  %v5129 = vld [vmem:[%s619 + $0x231] sm:$0xff]
  %v5130 = vld [vmem:[%s619 + $0x241] sm:$0xff]
  %v5131 = vld [vmem:[%s619 + $0x249] sm:$0xff]
  %v5132 = vld [vmem:[%s619 + $0x259] sm:$0xff]
  %v5133 = vld [vmem:[%s619 + $0x261] sm:$0xff]
  %v5134 = vld [vmem:[%s619 + $0x271] sm:$0xff]
  %v5135 = vld [vmem:[%s619 + $0x279] sm:$0xff]
  %v5136 = vld [vmem:[%s619 + $0x289] sm:$0xff]
  %v5137 = vld [vmem:[%s619 + $0x291] sm:$0xff]
  %v5138 = vld [vmem:[%s619 + $0x2a1] sm:$0xff]
  %v5139 = vld [vmem:[%s619 + $0x2a9] sm:$0xff]
  %v5140 = vld [vmem:[%s619 + $0x2b9] sm:$0xff]
  %v5141 = vld [vmem:[%s619 + $0x2c1] sm:$0xff]
  %v5142 = vld [vmem:[%s619 + $0x2d1] sm:$0xff]
  %v5143 = vld [vmem:[%s619 + $0x2d9] sm:$0xff]
  %v5144 = vld [vmem:[%s619 + $0x2e9] sm:$0xff]
  %v5145 = vld [vmem:[%s619 + $0x2f1] sm:$0xff]
  %v5146 = vld [vmem:[%s619 + $0x301] sm:$0xff]
  %v5147 = vld [vmem:[%s619 + $0x309] sm:$0xff]
  %v5148 = vld [vmem:[%s619 + $0x319] sm:$0xff]
  %v5149 = vld [vmem:[%s619 + $0x321] sm:$0xff]
  %v5150 = vld [vmem:[%s619 + $0x2] sm:$0xff]
  %v5151 = vld [vmem:[%s619 + $0xa] sm:$0xff]
  %v5152 = vld [vmem:[%s619 + $0x1a] sm:$0xff]
  %v5153 = vld [vmem:[%s619 + $0x22] sm:$0xff]
  %v5154 = vld [vmem:[%s619 + $0x32] sm:$0xff]
  %v5155 = vld [vmem:[%s619 + $0x3a] sm:$0xff]
  %v5156 = vld [vmem:[%s619 + $0x4a] sm:$0xff]
  %v5157 = vld [vmem:[%s619 + $0x52] sm:$0xff]
  %v5158 = vld [vmem:[%s619 + $0x62] sm:$0xff]
  %v5159 = vld [vmem:[%s619 + $0x6a] sm:$0xff]
  %v5160 = vld [vmem:[%s619 + $0x7a] sm:$0xff]
  %v5161 = vld [vmem:[%s619 + $0x82] sm:$0xff]
  %v5162 = vld [vmem:[%s619 + $0x92] sm:$0xff]
  %v5163 = vld [vmem:[%s619 + $0x9a] sm:$0xff]
  %v5164 = vld [vmem:[%s619 + $0xaa] sm:$0xff]
  %v5165 = vld [vmem:[%s619 + $0xb2] sm:$0xff]
  %v5166 = vld [vmem:[%s619 + $0xc2] sm:$0xff]
  %v5167 = vld [vmem:[%s619 + $0xca] sm:$0xff]
  %v5168 = vld [vmem:[%s619 + $0xda] sm:$0xff]
  %v5169 = vld [vmem:[%s619 + $0xe2] sm:$0xff]
  %v5170 = vld [vmem:[%s619 + $0xf2] sm:$0xff]
  %v5171 = vld [vmem:[%s619 + $0xfa] sm:$0xff]
  %v5172 = vld [vmem:[%s619 + $0x10a] sm:$0xff]
  %v5173 = vld [vmem:[%s619 + $0x112] sm:$0xff]
  %v5174 = vld [vmem:[%s619 + $0x122] sm:$0xff]
  %v5175 = vld [vmem:[%s619 + $0x12a] sm:$0xff]
  %v5176 = vld [vmem:[%s619 + $0x13a] sm:$0xff]
  %v5177 = vld [vmem:[%s619 + $0x142] sm:$0xff]
  %v5178 = vld [vmem:[%s619 + $0x152] sm:$0xff]
  %v5179 = vld [vmem:[%s619 + $0x15a] sm:$0xff]
  %v5180 = vld [vmem:[%s619 + $0x16a] sm:$0xff]
  %v5181 = vld [vmem:[%s619 + $0x172] sm:$0xff]
  %v5182 = vld [vmem:[%s619 + $0x1b2] sm:$0xff]
  %v5183 = vld [vmem:[%s619 + $0x1ba] sm:$0xff]
  %v5184 = vld [vmem:[%s619 + $0x1ca] sm:$0xff]
  %v5185 = vld [vmem:[%s619 + $0x1d2] sm:$0xff]
  %v5186 = vld [vmem:[%s619 + $0x1e2] sm:$0xff]
  %v5187 = vld [vmem:[%s619 + $0x1ea] sm:$0xff]
  %v5188 = vld [vmem:[%s619 + $0x1fa] sm:$0xff]
  %v5189 = vld [vmem:[%s619 + $0x202] sm:$0xff]
  %v5190 = vld [vmem:[%s619 + $0x212] sm:$0xff]
  %v5191 = vld [vmem:[%s619 + $0x21a] sm:$0xff]
  %v5192 = vld [vmem:[%s619 + $0x22a] sm:$0xff]
  %v5193 = vld [vmem:[%s619 + $0x232] sm:$0xff]
  %v5194 = vld [vmem:[%s619 + $0x242] sm:$0xff]
  %v5195 = vld [vmem:[%s619 + $0x24a] sm:$0xff]
  %v5196 = vld [vmem:[%s619 + $0x25a] sm:$0xff]
  %v5197 = vld [vmem:[%s619 + $0x262] sm:$0xff]
  %v5198 = vld [vmem:[%s619 + $0x272] sm:$0xff]
  %v5199 = vld [vmem:[%s619 + $0x27a] sm:$0xff]
  %v5200 = vld [vmem:[%s619 + $0x28a] sm:$0xff]
  %v5201 = vld [vmem:[%s619 + $0x292] sm:$0xff]
  %v5202 = vld [vmem:[%s619 + $0x2a2] sm:$0xff]
  %v5203 = vld [vmem:[%s619 + $0x2aa] sm:$0xff]
  %v5204 = vld [vmem:[%s619 + $0x2ba] sm:$0xff]
  %v5205 = vld [vmem:[%s619 + $0x2c2] sm:$0xff]
  %v5206 = vld [vmem:[%s619 + $0x2d2] sm:$0xff]
  %v5207 = vld [vmem:[%s619 + $0x2da] sm:$0xff]
  %v5208 = vld [vmem:[%s619 + $0x2ea] sm:$0xff]
  %v5209 = vld [vmem:[%s619 + $0x2f2] sm:$0xff]
  %v5210 = vld [vmem:[%s619 + $0x302] sm:$0xff]
  %v5211 = vld [vmem:[%s619 + $0x30a] sm:$0xff]
  %v5212 = vld [vmem:[%s619 + $0x31a] sm:$0xff]
  %v5213 = vld [vmem:[%s619 + $0x322] sm:$0xff]
  %5278 = vrot.lane.b32.xlu0 %v4702, 4
  %v5279 = vpop.permute.xlu0 %5278
  %5280 = vrot.lane.b32.xlu0 %v4703, 4
  %v5281 = vpop.permute.xlu0 %5280
  %5282 = vrot.lane.b32.xlu0 %v4704, 4
  %v5283 = vpop.permute.xlu0 %5282
  %5284 = vrot.lane.b32.xlu0 %v4705, 4
  %v5285 = vpop.permute.xlu0 %5284
  %5286 = vrot.lane.b32.xlu0 %v4706, 4
  %v5287 = vpop.permute.xlu0 %5286
  %5288 = vrot.lane.b32.xlu0 %v4707, 4
  %v5289 = vpop.permute.xlu0 %5288
  %5290 = vrot.lane.b32.xlu0 %v4708, 4
  %v5291 = vpop.permute.xlu0 %5290
  %5292 = vrot.lane.b32.xlu0 %v4709, 4
  %v5293 = vpop.permute.xlu0 %5292
  %5294 = vrot.lane.b32.xlu0 %v4710, 4
  %v5295 = vpop.permute.xlu0 %5294
  %5296 = vrot.lane.b32.xlu0 %v4711, 4
  %v5297 = vpop.permute.xlu0 %5296
  %5298 = vrot.lane.b32.xlu0 %v4712, 4
  %v5299 = vpop.permute.xlu0 %5298
  %5300 = vrot.lane.b32.xlu0 %v4713, 4
  %v5301 = vpop.permute.xlu0 %5300
  %5302 = vrot.lane.b32.xlu0 %v4714, 4
  %v5303 = vpop.permute.xlu0 %5302
  %5304 = vrot.lane.b32.xlu0 %v4715, 4
  %v5305 = vpop.permute.xlu0 %5304
  %5306 = vrot.lane.b32.xlu0 %v4716, 4
  %v5307 = vpop.permute.xlu0 %5306
  %5308 = vrot.lane.b32.xlu0 %v4717, 4
  %v5309 = vpop.permute.xlu0 %5308
  %5310 = vrot.lane.b32.xlu0 %v4718, 4
  %v5311 = vpop.permute.xlu0 %5310
  %5312 = vrot.lane.b32.xlu0 %v4719, 4
  %v5313 = vpop.permute.xlu0 %5312
  %5314 = vrot.lane.b32.xlu0 %v4720, 4
  %v5315 = vpop.permute.xlu0 %5314
  %5316 = vrot.lane.b32.xlu0 %v4721, 4
  %v5317 = vpop.permute.xlu0 %5316
  %5318 = vrot.lane.b32.xlu0 %v4722, 4
  %v5319 = vpop.permute.xlu0 %5318
  %5320 = vrot.lane.b32.xlu0 %v4723, 4
  %v5321 = vpop.permute.xlu0 %5320
  %5322 = vrot.lane.b32.xlu0 %v4724, 4
  %v5323 = vpop.permute.xlu0 %5322
  %5324 = vrot.lane.b32.xlu0 %v4725, 4
  %v5325 = vpop.permute.xlu0 %5324
  %5326 = vrot.lane.b32.xlu0 %v4726, 4
  %v5327 = vpop.permute.xlu0 %5326
  %5328 = vrot.lane.b32.xlu0 %v4727, 4
  %v5329 = vpop.permute.xlu0 %5328
  %5330 = vrot.lane.b32.xlu0 %v4728, 4
  %v5331 = vpop.permute.xlu0 %5330
  %5332 = vrot.lane.b32.xlu0 %v4729, 4
  %v5333 = vpop.permute.xlu0 %5332
  %5334 = vrot.lane.b32.xlu0 %v4730, 4
  %v5335 = vpop.permute.xlu0 %5334
  %5336 = vrot.lane.b32.xlu0 %v4731, 4
  %v5337 = vpop.permute.xlu0 %5336
  %5338 = vrot.lane.b32.xlu0 %v4732, 4
  %v5339 = vpop.permute.xlu0 %5338
  %5340 = vrot.lane.b32.xlu0 %v4733, 4
  %v5341 = vpop.permute.xlu0 %5340
  %5342 = vrot.lane.b32.xlu0 %v4734, 4
  %v5343 = vpop.permute.xlu0 %5342
  %5344 = vrot.lane.b32.xlu0 %v4735, 4
  %v5345 = vpop.permute.xlu0 %5344
  %5346 = vrot.lane.b32.xlu0 %v4736, 4
  %v5347 = vpop.permute.xlu0 %5346
  %5348 = vrot.lane.b32.xlu0 %v4737, 4
  %v5349 = vpop.permute.xlu0 %5348
  %5350 = vrot.lane.b32.xlu0 %v4738, 4
  %v5351 = vpop.permute.xlu0 %5350
  %5352 = vrot.lane.b32.xlu0 %v4739, 4
  %v5353 = vpop.permute.xlu0 %5352
  %5354 = vrot.lane.b32.xlu0 %v4740, 4
  %v5355 = vpop.permute.xlu0 %5354
  %5356 = vrot.lane.b32.xlu0 %v4741, 4
  %v5357 = vpop.permute.xlu0 %5356
  %5358 = vrot.lane.b32.xlu0 %v4742, 4
  %v5359 = vpop.permute.xlu0 %5358
  %5360 = vrot.lane.b32.xlu0 %v4743, 4
  %v5361 = vpop.permute.xlu0 %5360
  %5362 = vrot.lane.b32.xlu0 %v4744, 4
  %v5363 = vpop.permute.xlu0 %5362
  %5364 = vrot.lane.b32.xlu0 %v4745, 4
  %v5365 = vpop.permute.xlu0 %5364
  %5366 = vrot.lane.b32.xlu0 %v4746, 4
  %v5367 = vpop.permute.xlu0 %5366
  %5368 = vrot.lane.b32.xlu0 %v4747, 4
  %v5369 = vpop.permute.xlu0 %5368
  %5370 = vrot.lane.b32.xlu0 %v4748, 4
  %v5371 = vpop.permute.xlu0 %5370
  %5372 = vrot.lane.b32.xlu0 %v4749, 4
  %v5373 = vpop.permute.xlu0 %5372
  %5374 = vrot.lane.b32.xlu0 %v4750, 4
  %v5375 = vpop.permute.xlu0 %5374
  %5376 = vrot.lane.b32.xlu0 %v4751, 4
  %v5377 = vpop.permute.xlu0 %5376
  %5378 = vrot.lane.b32.xlu0 %v4752, 4
  %v5379 = vpop.permute.xlu0 %5378
  %5380 = vrot.lane.b32.xlu0 %v4753, 4
  %v5381 = vpop.permute.xlu0 %5380
  %5382 = vrot.lane.b32.xlu0 %v4754, 4
  %v5383 = vpop.permute.xlu0 %5382
  %5384 = vrot.lane.b32.xlu0 %v4755, 4
  %v5385 = vpop.permute.xlu0 %5384
  %5386 = vrot.lane.b32.xlu0 %v4756, 4
  %v5387 = vpop.permute.xlu0 %5386
  %5388 = vrot.lane.b32.xlu0 %v4757, 4
  %v5389 = vpop.permute.xlu0 %5388
  %5390 = vrot.lane.b32.xlu0 %v4758, 4
  %v5391 = vpop.permute.xlu0 %5390
  %5392 = vrot.lane.b32.xlu0 %v4759, 4
  %v5393 = vpop.permute.xlu0 %5392
  %5394 = vrot.lane.b32.xlu0 %v4760, 4
  %v5395 = vpop.permute.xlu0 %5394
  %5396 = vrot.lane.b32.xlu0 %v4761, 4
  %v5397 = vpop.permute.xlu0 %5396
  %5398 = vrot.lane.b32.xlu0 %v4762, 4
  %v5399 = vpop.permute.xlu0 %5398
  %5400 = vrot.lane.b32.xlu0 %v4763, 4
  %v5401 = vpop.permute.xlu0 %5400
  %5402 = vrot.lane.b32.xlu0 %v4764, 4
  %v5403 = vpop.permute.xlu0 %5402
  %5404 = vrot.lane.b32.xlu0 %v4765, 4
  %v5405 = vpop.permute.xlu0 %5404
  %5534 = vrot.lane.b32.xlu0 %v4766, 8
  %v5535 = vpop.permute.xlu0 %5534
  %5536 = vrot.lane.b32.xlu0 %v4767, 8
  %v5537 = vpop.permute.xlu0 %5536
  %5538 = vrot.lane.b32.xlu0 %v4768, 8
  %v5539 = vpop.permute.xlu0 %5538
  %5540 = vrot.lane.b32.xlu0 %v4769, 8
  %v5541 = vpop.permute.xlu0 %5540
  %5542 = vrot.lane.b32.xlu0 %v4770, 8
  %v5543 = vpop.permute.xlu0 %5542
  %5544 = vrot.lane.b32.xlu0 %v4771, 8
  %v5545 = vpop.permute.xlu0 %5544
  %5546 = vrot.lane.b32.xlu0 %v4772, 8
  %v5547 = vpop.permute.xlu0 %5546
  %5548 = vrot.lane.b32.xlu0 %v4773, 8
  %v5549 = vpop.permute.xlu0 %5548
  %5550 = vrot.lane.b32.xlu0 %v4774, 8
  %v5551 = vpop.permute.xlu0 %5550
  %5552 = vrot.lane.b32.xlu0 %v4775, 8
  %v5553 = vpop.permute.xlu0 %5552
  %5554 = vrot.lane.b32.xlu0 %v4776, 8
  %v5555 = vpop.permute.xlu0 %5554
  %5556 = vrot.lane.b32.xlu0 %v4777, 8
  %v5557 = vpop.permute.xlu0 %5556
  %5558 = vrot.lane.b32.xlu0 %v4778, 8
  %v5559 = vpop.permute.xlu0 %5558
  %5560 = vrot.lane.b32.xlu0 %v4779, 8
  %v5561 = vpop.permute.xlu0 %5560
  %5562 = vrot.lane.b32.xlu0 %v4780, 8
  %v5563 = vpop.permute.xlu0 %5562
  %5564 = vrot.lane.b32.xlu0 %v4781, 8
  %v5565 = vpop.permute.xlu0 %5564
  %5566 = vrot.lane.b32.xlu0 %v4782, 8
  %v5567 = vpop.permute.xlu0 %5566
  %5568 = vrot.lane.b32.xlu0 %v4783, 8
  %v5569 = vpop.permute.xlu0 %5568
  %5570 = vrot.lane.b32.xlu0 %v4784, 8
  %v5571 = vpop.permute.xlu0 %5570
  %5572 = vrot.lane.b32.xlu0 %v4785, 8
  %v5573 = vpop.permute.xlu0 %5572
  %5574 = vrot.lane.b32.xlu0 %v4786, 8
  %v5575 = vpop.permute.xlu0 %5574
  %5576 = vrot.lane.b32.xlu0 %v4787, 8
  %v5577 = vpop.permute.xlu0 %5576
  %5578 = vrot.lane.b32.xlu0 %v4788, 8
  %v5579 = vpop.permute.xlu0 %5578
  %5580 = vrot.lane.b32.xlu0 %v4789, 8
  %v5581 = vpop.permute.xlu0 %5580
  %5582 = vrot.lane.b32.xlu0 %v4790, 8
  %v5583 = vpop.permute.xlu0 %5582
  %5584 = vrot.lane.b32.xlu0 %v4791, 8
  %v5585 = vpop.permute.xlu0 %5584
  %5586 = vrot.lane.b32.xlu0 %v4792, 8
  %v5587 = vpop.permute.xlu0 %5586
  %5588 = vrot.lane.b32.xlu0 %v4793, 8
  %v5589 = vpop.permute.xlu0 %5588
  %5590 = vrot.lane.b32.xlu0 %v4794, 8
  %v5591 = vpop.permute.xlu0 %5590
  %5592 = vrot.lane.b32.xlu0 %v4795, 8
  %v5593 = vpop.permute.xlu0 %5592
  %5594 = vrot.lane.b32.xlu0 %v4796, 8
  %v5595 = vpop.permute.xlu0 %5594
  %5596 = vrot.lane.b32.xlu0 %v4797, 8
  %v5597 = vpop.permute.xlu0 %5596
  %5598 = vrot.lane.b32.xlu0 %v4798, 8
  %v5599 = vpop.permute.xlu0 %5598
  %5600 = vrot.lane.b32.xlu0 %v4799, 8
  %v5601 = vpop.permute.xlu0 %5600
  %5602 = vrot.lane.b32.xlu0 %v4800, 8
  %v5603 = vpop.permute.xlu0 %5602
  %5604 = vrot.lane.b32.xlu0 %v4801, 8
  %v5605 = vpop.permute.xlu0 %5604
  %5606 = vrot.lane.b32.xlu0 %v4802, 8
  %v5607 = vpop.permute.xlu0 %5606
  %5608 = vrot.lane.b32.xlu0 %v4803, 8
  %v5609 = vpop.permute.xlu0 %5608
  %5610 = vrot.lane.b32.xlu0 %v4804, 8
  %v5611 = vpop.permute.xlu0 %5610
  %5612 = vrot.lane.b32.xlu0 %v4805, 8
  %v5613 = vpop.permute.xlu0 %5612
  %5614 = vrot.lane.b32.xlu0 %v4806, 8
  %v5615 = vpop.permute.xlu0 %5614
  %5616 = vrot.lane.b32.xlu0 %v4807, 8
  %v5617 = vpop.permute.xlu0 %5616
  %5618 = vrot.lane.b32.xlu0 %v4808, 8
  %v5619 = vpop.permute.xlu0 %5618
  %5620 = vrot.lane.b32.xlu0 %v4809, 8
  %v5621 = vpop.permute.xlu0 %5620
  %5622 = vrot.lane.b32.xlu0 %v4810, 8
  %v5623 = vpop.permute.xlu0 %5622
  %5624 = vrot.lane.b32.xlu0 %v4811, 8
  %v5625 = vpop.permute.xlu0 %5624
  %5626 = vrot.lane.b32.xlu0 %v4812, 8
  %v5627 = vpop.permute.xlu0 %5626
  %5628 = vrot.lane.b32.xlu0 %v4813, 8
  %v5629 = vpop.permute.xlu0 %5628
  %5630 = vrot.lane.b32.xlu0 %v4814, 8
  %v5631 = vpop.permute.xlu0 %5630
  %5632 = vrot.lane.b32.xlu0 %v4815, 8
  %v5633 = vpop.permute.xlu0 %5632
  %5634 = vrot.lane.b32.xlu0 %v4816, 8
  %v5635 = vpop.permute.xlu0 %5634
  %5636 = vrot.lane.b32.xlu0 %v4817, 8
  %v5637 = vpop.permute.xlu0 %5636
  %5638 = vrot.lane.b32.xlu0 %v4818, 8
  %v5639 = vpop.permute.xlu0 %5638
  %5640 = vrot.lane.b32.xlu0 %v4819, 8
  %v5641 = vpop.permute.xlu0 %5640
  %5642 = vrot.lane.b32.xlu0 %v4820, 8
  %v5643 = vpop.permute.xlu0 %5642
  %5644 = vrot.lane.b32.xlu0 %v4821, 8
  %v5645 = vpop.permute.xlu0 %5644
  %5646 = vrot.lane.b32.xlu0 %v4822, 8
  %v5647 = vpop.permute.xlu0 %5646
  %5648 = vrot.lane.b32.xlu0 %v4823, 8
  %v5649 = vpop.permute.xlu0 %5648
  %5650 = vrot.lane.b32.xlu0 %v4824, 8
  %v5651 = vpop.permute.xlu0 %5650
  %5652 = vrot.lane.b32.xlu0 %v4825, 8
  %v5653 = vpop.permute.xlu0 %5652
  %5654 = vrot.lane.b32.xlu0 %v4826, 8
  %v5655 = vpop.permute.xlu0 %5654
  %5656 = vrot.lane.b32.xlu0 %v4827, 8
  %v5657 = vpop.permute.xlu0 %5656
  %5658 = vrot.lane.b32.xlu0 %v4828, 8
  %v5659 = vpop.permute.xlu0 %5658
  %5660 = vrot.lane.b32.xlu0 %v4829, 8
  %v5661 = vpop.permute.xlu0 %5660
  %5790 = vrot.lane.b32.xlu0 %v4830, 12
  %v5791 = vpop.permute.xlu0 %5790
  %5792 = vrot.lane.b32.xlu0 %v4831, 12
  %v5793 = vpop.permute.xlu0 %5792
  %5794 = vrot.lane.b32.xlu0 %v4832, 12
  %v5795 = vpop.permute.xlu0 %5794
  %5796 = vrot.lane.b32.xlu0 %v4833, 12
  %v5797 = vpop.permute.xlu0 %5796
  %5798 = vrot.lane.b32.xlu0 %v4834, 12
  %v5799 = vpop.permute.xlu0 %5798
  %5800 = vrot.lane.b32.xlu0 %v4835, 12
  %v5801 = vpop.permute.xlu0 %5800
  %5802 = vrot.lane.b32.xlu0 %v4836, 12
  %v5803 = vpop.permute.xlu0 %5802
  %5804 = vrot.lane.b32.xlu0 %v4837, 12
  %v5805 = vpop.permute.xlu0 %5804
  %5806 = vrot.lane.b32.xlu0 %v4838, 12
  %v5807 = vpop.permute.xlu0 %5806
  %5808 = vrot.lane.b32.xlu0 %v4839, 12
  %v5809 = vpop.permute.xlu0 %5808
  %5810 = vrot.lane.b32.xlu0 %v4840, 12
  %v5811 = vpop.permute.xlu0 %5810
  %5812 = vrot.lane.b32.xlu0 %v4841, 12
  %v5813 = vpop.permute.xlu0 %5812
  %5814 = vrot.lane.b32.xlu0 %v4842, 12
  %v5815 = vpop.permute.xlu0 %5814
  %5816 = vrot.lane.b32.xlu0 %v4843, 12
  %v5817 = vpop.permute.xlu0 %5816
  %5818 = vrot.lane.b32.xlu0 %v4844, 12
  %v5819 = vpop.permute.xlu0 %5818
  %5820 = vrot.lane.b32.xlu0 %v4845, 12
  %v5821 = vpop.permute.xlu0 %5820
  %5822 = vrot.lane.b32.xlu0 %v4846, 12
  %v5823 = vpop.permute.xlu0 %5822
  %5824 = vrot.lane.b32.xlu0 %v4847, 12
  %v5825 = vpop.permute.xlu0 %5824
  %5826 = vrot.lane.b32.xlu0 %v4848, 12
  %v5827 = vpop.permute.xlu0 %5826
  %5828 = vrot.lane.b32.xlu0 %v4849, 12
  %v5829 = vpop.permute.xlu0 %5828
  %5830 = vrot.lane.b32.xlu0 %v4850, 12
  %v5831 = vpop.permute.xlu0 %5830
  %5832 = vrot.lane.b32.xlu0 %v4851, 12
  %v5833 = vpop.permute.xlu0 %5832
  %5834 = vrot.lane.b32.xlu0 %v4852, 12
  %v5835 = vpop.permute.xlu0 %5834
  %5836 = vrot.lane.b32.xlu0 %v4853, 12
  %v5837 = vpop.permute.xlu0 %5836
  %5838 = vrot.lane.b32.xlu0 %v4854, 12
  %v5839 = vpop.permute.xlu0 %5838
  %5840 = vrot.lane.b32.xlu0 %v4855, 12
  %v5841 = vpop.permute.xlu0 %5840
  %5842 = vrot.lane.b32.xlu0 %v4856, 12
  %v5843 = vpop.permute.xlu0 %5842
  %5844 = vrot.lane.b32.xlu0 %v4857, 12
  %v5845 = vpop.permute.xlu0 %5844
  %5846 = vrot.lane.b32.xlu0 %v4858, 12
  %v5847 = vpop.permute.xlu0 %5846
  %5848 = vrot.lane.b32.xlu0 %v4859, 12
  %v5849 = vpop.permute.xlu0 %5848
  %5850 = vrot.lane.b32.xlu0 %v4860, 12
  %v5851 = vpop.permute.xlu0 %5850
  %5852 = vrot.lane.b32.xlu0 %v4861, 12
  %v5853 = vpop.permute.xlu0 %5852
  %5854 = vrot.lane.b32.xlu0 %v4862, 12
  %v5855 = vpop.permute.xlu0 %5854
  %5856 = vrot.lane.b32.xlu0 %v4863, 12
  %v5857 = vpop.permute.xlu0 %5856
  %5858 = vrot.lane.b32.xlu0 %v4864, 12
  %v5859 = vpop.permute.xlu0 %5858
  %5860 = vrot.lane.b32.xlu0 %v4865, 12
  %v5861 = vpop.permute.xlu0 %5860
  %5862 = vrot.lane.b32.xlu0 %v4866, 12
  %v5863 = vpop.permute.xlu0 %5862
  %5864 = vrot.lane.b32.xlu0 %v4867, 12
  %v5865 = vpop.permute.xlu0 %5864
  %5866 = vrot.lane.b32.xlu0 %v4868, 12
  %v5867 = vpop.permute.xlu0 %5866
  %5868 = vrot.lane.b32.xlu0 %v4869, 12
  %v5869 = vpop.permute.xlu0 %5868
  %5870 = vrot.lane.b32.xlu0 %v4870, 12
  %v5871 = vpop.permute.xlu0 %5870
  %5872 = vrot.lane.b32.xlu0 %v4871, 12
  %v5873 = vpop.permute.xlu0 %5872
  %5874 = vrot.lane.b32.xlu0 %v4872, 12
  %v5875 = vpop.permute.xlu0 %5874
  %5876 = vrot.lane.b32.xlu0 %v4873, 12
  %v5877 = vpop.permute.xlu0 %5876
  %5878 = vrot.lane.b32.xlu0 %v4874, 12
  %v5879 = vpop.permute.xlu0 %5878
  %5880 = vrot.lane.b32.xlu0 %v4875, 12
  %v5881 = vpop.permute.xlu0 %5880
  %5882 = vrot.lane.b32.xlu0 %v4876, 12
  %v5883 = vpop.permute.xlu0 %5882
  %5884 = vrot.lane.b32.xlu0 %v4877, 12
  %v5885 = vpop.permute.xlu0 %5884
  %5886 = vrot.lane.b32.xlu0 %v4878, 12
  %v5887 = vpop.permute.xlu0 %5886
  %5888 = vrot.lane.b32.xlu0 %v4879, 12
  %v5889 = vpop.permute.xlu0 %5888
  %5890 = vrot.lane.b32.xlu0 %v4880, 12
  %v5891 = vpop.permute.xlu0 %5890
  %5892 = vrot.lane.b32.xlu0 %v4881, 12
  %v5893 = vpop.permute.xlu0 %5892
  %5894 = vrot.lane.b32.xlu0 %v4882, 12
  %v5895 = vpop.permute.xlu0 %5894
  %5896 = vrot.lane.b32.xlu0 %v4883, 12
  %v5897 = vpop.permute.xlu0 %5896
  %5898 = vrot.lane.b32.xlu0 %v4884, 12
  %v5899 = vpop.permute.xlu0 %5898
  %5900 = vrot.lane.b32.xlu0 %v4885, 12
  %v5901 = vpop.permute.xlu0 %5900
  %5902 = vrot.lane.b32.xlu0 %v4886, 12
  %v5903 = vpop.permute.xlu0 %5902
  %5904 = vrot.lane.b32.xlu0 %v4887, 12
  %v5905 = vpop.permute.xlu0 %5904
  %5906 = vrot.lane.b32.xlu0 %v4888, 12
  %v5907 = vpop.permute.xlu0 %5906
  %5908 = vrot.lane.b32.xlu0 %v4889, 12
  %v5909 = vpop.permute.xlu0 %5908
  %5910 = vrot.lane.b32.xlu0 %v4890, 12
  %v5911 = vpop.permute.xlu0 %5910
  %5912 = vrot.lane.b32.xlu0 %v4891, 12
  %v5913 = vpop.permute.xlu0 %5912
  %5914 = vrot.lane.b32.xlu0 %v4892, 12
  %v5915 = vpop.permute.xlu0 %5914
  %5916 = vrot.lane.b32.xlu0 %v4893, 12
  %v5917 = vpop.permute.xlu0 %5916
  %6046 = vrot.lane.b32.xlu0 %v4894, 16
  %v6047 = vpop.permute.xlu0 %6046
  %6048 = vrot.lane.b32.xlu0 %v4895, 16
  %v6049 = vpop.permute.xlu0 %6048
  %6050 = vrot.lane.b32.xlu0 %v4896, 16
  %v6051 = vpop.permute.xlu0 %6050
  %6052 = vrot.lane.b32.xlu0 %v4897, 16
  %v6053 = vpop.permute.xlu0 %6052
  %6054 = vrot.lane.b32.xlu0 %v4898, 16
  %v6055 = vpop.permute.xlu0 %6054
  %6056 = vrot.lane.b32.xlu0 %v4899, 16
  %v6057 = vpop.permute.xlu0 %6056
  %6058 = vrot.lane.b32.xlu0 %v4900, 16
  %v6059 = vpop.permute.xlu0 %6058
  %6060 = vrot.lane.b32.xlu0 %v4901, 16
  %v6061 = vpop.permute.xlu0 %6060
  %6062 = vrot.lane.b32.xlu0 %v4902, 16
  %v6063 = vpop.permute.xlu0 %6062
  %6064 = vrot.lane.b32.xlu0 %v4903, 16
  %v6065 = vpop.permute.xlu0 %6064
  %6066 = vrot.lane.b32.xlu0 %v4904, 16
  %v6067 = vpop.permute.xlu0 %6066
  %6068 = vrot.lane.b32.xlu0 %v4905, 16
  %v6069 = vpop.permute.xlu0 %6068
  %6070 = vrot.lane.b32.xlu0 %v4906, 16
  %v6071 = vpop.permute.xlu0 %6070
  %6072 = vrot.lane.b32.xlu0 %v4907, 16
  %v6073 = vpop.permute.xlu0 %6072
  %6074 = vrot.lane.b32.xlu0 %v4908, 16
  %v6075 = vpop.permute.xlu0 %6074
  %6076 = vrot.lane.b32.xlu0 %v4909, 16
  %v6077 = vpop.permute.xlu0 %6076
  %6078 = vrot.lane.b32.xlu0 %v4910, 16
  %v6079 = vpop.permute.xlu0 %6078
  %6080 = vrot.lane.b32.xlu0 %v4911, 16
  %v6081 = vpop.permute.xlu0 %6080
  %6082 = vrot.lane.b32.xlu0 %v4912, 16
  %v6083 = vpop.permute.xlu0 %6082
  %6084 = vrot.lane.b32.xlu0 %v4913, 16
  %v6085 = vpop.permute.xlu0 %6084
  %6086 = vrot.lane.b32.xlu0 %v4914, 16
  %v6087 = vpop.permute.xlu0 %6086
  %6088 = vrot.lane.b32.xlu0 %v4915, 16
  %v6089 = vpop.permute.xlu0 %6088
  %6090 = vrot.lane.b32.xlu0 %v4916, 16
  %v6091 = vpop.permute.xlu0 %6090
  %6092 = vrot.lane.b32.xlu0 %v4917, 16
  %v6093 = vpop.permute.xlu0 %6092
  %6094 = vrot.lane.b32.xlu0 %v4918, 16
  %v6095 = vpop.permute.xlu0 %6094
  %6096 = vrot.lane.b32.xlu0 %v4919, 16
  %v6097 = vpop.permute.xlu0 %6096
  %6098 = vrot.lane.b32.xlu0 %v4920, 16
  %v6099 = vpop.permute.xlu0 %6098
  %6100 = vrot.lane.b32.xlu0 %v4921, 16
  %v6101 = vpop.permute.xlu0 %6100
  %6102 = vrot.lane.b32.xlu0 %v4922, 16
  %v6103 = vpop.permute.xlu0 %6102
  %6104 = vrot.lane.b32.xlu0 %v4923, 16
  %v6105 = vpop.permute.xlu0 %6104
  %6106 = vrot.lane.b32.xlu0 %v4924, 16
  %v6107 = vpop.permute.xlu0 %6106
  %6108 = vrot.lane.b32.xlu0 %v4925, 16
  %v6109 = vpop.permute.xlu0 %6108
  %6110 = vrot.lane.b32.xlu0 %v4926, 16
  %v6111 = vpop.permute.xlu0 %6110
  %6112 = vrot.lane.b32.xlu0 %v4927, 16
  %v6113 = vpop.permute.xlu0 %6112
  %6114 = vrot.lane.b32.xlu0 %v4928, 16
  %v6115 = vpop.permute.xlu0 %6114
  %6116 = vrot.lane.b32.xlu0 %v4929, 16
  %v6117 = vpop.permute.xlu0 %6116
  %6118 = vrot.lane.b32.xlu0 %v4930, 16
  %v6119 = vpop.permute.xlu0 %6118
  %6120 = vrot.lane.b32.xlu0 %v4931, 16
  %v6121 = vpop.permute.xlu0 %6120
  %6122 = vrot.lane.b32.xlu0 %v4932, 16
  %v6123 = vpop.permute.xlu0 %6122
  %6124 = vrot.lane.b32.xlu0 %v4933, 16
  %v6125 = vpop.permute.xlu0 %6124
  %6126 = vrot.lane.b32.xlu0 %v4934, 16
  %v6127 = vpop.permute.xlu0 %6126
  %6128 = vrot.lane.b32.xlu0 %v4935, 16
  %v6129 = vpop.permute.xlu0 %6128
  %6130 = vrot.lane.b32.xlu0 %v4936, 16
  %v6131 = vpop.permute.xlu0 %6130
  %6132 = vrot.lane.b32.xlu0 %v4937, 16
  %v6133 = vpop.permute.xlu0 %6132
  %6134 = vrot.lane.b32.xlu0 %v4938, 16
  %v6135 = vpop.permute.xlu0 %6134
  %6136 = vrot.lane.b32.xlu0 %v4939, 16
  %v6137 = vpop.permute.xlu0 %6136
  %6138 = vrot.lane.b32.xlu0 %v4940, 16
  %v6139 = vpop.permute.xlu0 %6138
  %6140 = vrot.lane.b32.xlu0 %v4941, 16
  %v6141 = vpop.permute.xlu0 %6140
  %6142 = vrot.lane.b32.xlu0 %v4942, 16
  %v6143 = vpop.permute.xlu0 %6142
  %6144 = vrot.lane.b32.xlu0 %v4943, 16
  %v6145 = vpop.permute.xlu0 %6144
  %6146 = vrot.lane.b32.xlu0 %v4944, 16
  %v6147 = vpop.permute.xlu0 %6146
  %6148 = vrot.lane.b32.xlu0 %v4945, 16
  %v6149 = vpop.permute.xlu0 %6148
  %6150 = vrot.lane.b32.xlu0 %v4946, 16
  %v6151 = vpop.permute.xlu0 %6150
  %6152 = vrot.lane.b32.xlu0 %v4947, 16
  %v6153 = vpop.permute.xlu0 %6152
  %6154 = vrot.lane.b32.xlu0 %v4948, 16
  %v6155 = vpop.permute.xlu0 %6154
  %6156 = vrot.lane.b32.xlu0 %v4949, 16
  %v6157 = vpop.permute.xlu0 %6156
  %6158 = vrot.lane.b32.xlu0 %v4950, 16
  %v6159 = vpop.permute.xlu0 %6158
  %6160 = vrot.lane.b32.xlu0 %v4951, 16
  %v6161 = vpop.permute.xlu0 %6160
  %6162 = vrot.lane.b32.xlu0 %v4952, 16
  %v6163 = vpop.permute.xlu0 %6162
  %6164 = vrot.lane.b32.xlu0 %v4953, 16
  %v6165 = vpop.permute.xlu0 %6164
  %6166 = vrot.lane.b32.xlu0 %v4954, 16
  %v6167 = vpop.permute.xlu0 %6166
  %6168 = vrot.lane.b32.xlu0 %v4955, 16
  %v6169 = vpop.permute.xlu0 %6168
  %6170 = vrot.lane.b32.xlu0 %v4956, 16
  %v6171 = vpop.permute.xlu0 %6170
  %6172 = vrot.lane.b32.xlu0 %v4957, 16
  %v6173 = vpop.permute.xlu0 %6172
  %6302 = vrot.lane.b32.xlu0 %v4958, 20
  %v6303 = vpop.permute.xlu0 %6302
  %6304 = vrot.lane.b32.xlu0 %v4959, 20
  %v6305 = vpop.permute.xlu0 %6304
  %6306 = vrot.lane.b32.xlu0 %v4960, 20
  %v6307 = vpop.permute.xlu0 %6306
  %6308 = vrot.lane.b32.xlu0 %v4961, 20
  %v6309 = vpop.permute.xlu0 %6308
  %6310 = vrot.lane.b32.xlu0 %v4962, 20
  %v6311 = vpop.permute.xlu0 %6310
  %6312 = vrot.lane.b32.xlu0 %v4963, 20
  %v6313 = vpop.permute.xlu0 %6312
  %6314 = vrot.lane.b32.xlu0 %v4964, 20
  %v6315 = vpop.permute.xlu0 %6314
  %6316 = vrot.lane.b32.xlu0 %v4965, 20
  %v6317 = vpop.permute.xlu0 %6316
  %6318 = vrot.lane.b32.xlu0 %v4966, 20
  %v6319 = vpop.permute.xlu0 %6318
  %6320 = vrot.lane.b32.xlu0 %v4967, 20
  %v6321 = vpop.permute.xlu0 %6320
  %6322 = vrot.lane.b32.xlu0 %v4968, 20
  %v6323 = vpop.permute.xlu0 %6322
  %6324 = vrot.lane.b32.xlu0 %v4969, 20
  %v6325 = vpop.permute.xlu0 %6324
  %6326 = vrot.lane.b32.xlu0 %v4970, 20
  %v6327 = vpop.permute.xlu0 %6326
  %6328 = vrot.lane.b32.xlu0 %v4971, 20
  %v6329 = vpop.permute.xlu0 %6328
  %6330 = vrot.lane.b32.xlu0 %v4972, 20
  %v6331 = vpop.permute.xlu0 %6330
  %6332 = vrot.lane.b32.xlu0 %v4973, 20
  %v6333 = vpop.permute.xlu0 %6332
  %6334 = vrot.lane.b32.xlu0 %v4974, 20
  %v6335 = vpop.permute.xlu0 %6334
  %6336 = vrot.lane.b32.xlu0 %v4975, 20
  %v6337 = vpop.permute.xlu0 %6336
  %6338 = vrot.lane.b32.xlu0 %v4976, 20
  %v6339 = vpop.permute.xlu0 %6338
  %6340 = vrot.lane.b32.xlu0 %v4977, 20
  %v6341 = vpop.permute.xlu0 %6340
  %6342 = vrot.lane.b32.xlu0 %v4978, 20
  %v6343 = vpop.permute.xlu0 %6342
  %6344 = vrot.lane.b32.xlu0 %v4979, 20
  %v6345 = vpop.permute.xlu0 %6344
  %6346 = vrot.lane.b32.xlu0 %v4980, 20
  %v6347 = vpop.permute.xlu0 %6346
  %6348 = vrot.lane.b32.xlu0 %v4981, 20
  %v6349 = vpop.permute.xlu0 %6348
  %6350 = vrot.lane.b32.xlu0 %v4982, 20
  %v6351 = vpop.permute.xlu0 %6350
  %6352 = vrot.lane.b32.xlu0 %v4983, 20
  %v6353 = vpop.permute.xlu0 %6352
  %6354 = vrot.lane.b32.xlu0 %v4984, 20
  %v6355 = vpop.permute.xlu0 %6354
  %6356 = vrot.lane.b32.xlu0 %v4985, 20
  %v6357 = vpop.permute.xlu0 %6356
  %6358 = vrot.lane.b32.xlu0 %v4986, 20
  %v6359 = vpop.permute.xlu0 %6358
  %6360 = vrot.lane.b32.xlu0 %v4987, 20
  %v6361 = vpop.permute.xlu0 %6360
  %6362 = vrot.lane.b32.xlu0 %v4988, 20
  %v6363 = vpop.permute.xlu0 %6362
  %6364 = vrot.lane.b32.xlu0 %v4989, 20
  %v6365 = vpop.permute.xlu0 %6364
  %6366 = vrot.lane.b32.xlu0 %v4990, 20
  %v6367 = vpop.permute.xlu0 %6366
  %6368 = vrot.lane.b32.xlu0 %v4991, 20
  %v6369 = vpop.permute.xlu0 %6368
  %6370 = vrot.lane.b32.xlu0 %v4992, 20
  %v6371 = vpop.permute.xlu0 %6370
  %6372 = vrot.lane.b32.xlu0 %v4993, 20
  %v6373 = vpop.permute.xlu0 %6372
  %6374 = vrot.lane.b32.xlu0 %v4994, 20
  %v6375 = vpop.permute.xlu0 %6374
  %6376 = vrot.lane.b32.xlu0 %v4995, 20
  %v6377 = vpop.permute.xlu0 %6376
  %6378 = vrot.lane.b32.xlu0 %v4996, 20
  %v6379 = vpop.permute.xlu0 %6378
  %6380 = vrot.lane.b32.xlu0 %v4997, 20
  %v6381 = vpop.permute.xlu0 %6380
  %6382 = vrot.lane.b32.xlu0 %v4998, 20
  %v6383 = vpop.permute.xlu0 %6382
  %6384 = vrot.lane.b32.xlu0 %v4999, 20
  %v6385 = vpop.permute.xlu0 %6384
  %6386 = vrot.lane.b32.xlu0 %v5000, 20
  %v6387 = vpop.permute.xlu0 %6386
  %6388 = vrot.lane.b32.xlu0 %v5001, 20
  %v6389 = vpop.permute.xlu0 %6388
  %6390 = vrot.lane.b32.xlu0 %v5002, 20
  %v6391 = vpop.permute.xlu0 %6390
  %6392 = vrot.lane.b32.xlu0 %v5003, 20
  %v6393 = vpop.permute.xlu0 %6392
  %6394 = vrot.lane.b32.xlu0 %v5004, 20
  %v6395 = vpop.permute.xlu0 %6394
  %6396 = vrot.lane.b32.xlu0 %v5005, 20
  %v6397 = vpop.permute.xlu0 %6396
  %6398 = vrot.lane.b32.xlu0 %v5006, 20
  %v6399 = vpop.permute.xlu0 %6398
  %6400 = vrot.lane.b32.xlu0 %v5007, 20
  %v6401 = vpop.permute.xlu0 %6400
  %6402 = vrot.lane.b32.xlu0 %v5008, 20
  %v6403 = vpop.permute.xlu0 %6402
  %6404 = vrot.lane.b32.xlu0 %v5009, 20
  %v6405 = vpop.permute.xlu0 %6404
  %6406 = vrot.lane.b32.xlu0 %v5010, 20
  %v6407 = vpop.permute.xlu0 %6406
  %6408 = vrot.lane.b32.xlu0 %v5011, 20
  %v6409 = vpop.permute.xlu0 %6408
  %6410 = vrot.lane.b32.xlu0 %v5012, 20
  %v6411 = vpop.permute.xlu0 %6410
  %6412 = vrot.lane.b32.xlu0 %v5013, 20
  %v6413 = vpop.permute.xlu0 %6412
  %6414 = vrot.lane.b32.xlu0 %v5014, 20
  %v6415 = vpop.permute.xlu0 %6414
  %6416 = vrot.lane.b32.xlu0 %v5015, 20
  %v6417 = vpop.permute.xlu0 %6416
  %6418 = vrot.lane.b32.xlu0 %v5016, 20
  %v6419 = vpop.permute.xlu0 %6418
  %6420 = vrot.lane.b32.xlu0 %v5017, 20
  %v6421 = vpop.permute.xlu0 %6420
  %6422 = vrot.lane.b32.xlu0 %v5018, 20
  %v6423 = vpop.permute.xlu0 %6422
  %6424 = vrot.lane.b32.xlu0 %v5019, 20
  %v6425 = vpop.permute.xlu0 %6424
  %6426 = vrot.lane.b32.xlu0 %v5020, 20
  %v6427 = vpop.permute.xlu0 %6426
  %6428 = vrot.lane.b32.xlu0 %v5021, 20
  %v6429 = vpop.permute.xlu0 %6428
  %6558 = vrot.lane.b32.xlu0 %v5022, 24
  %v6559 = vpop.permute.xlu0 %6558
  %6560 = vrot.lane.b32.xlu0 %v5023, 24
  %v6561 = vpop.permute.xlu0 %6560
  %6562 = vrot.lane.b32.xlu0 %v5024, 24
  %v6563 = vpop.permute.xlu0 %6562
  %6564 = vrot.lane.b32.xlu0 %v5025, 24
  %v6565 = vpop.permute.xlu0 %6564
  %6566 = vrot.lane.b32.xlu0 %v5026, 24
  %v6567 = vpop.permute.xlu0 %6566
  %6568 = vrot.lane.b32.xlu0 %v5027, 24
  %v6569 = vpop.permute.xlu0 %6568
  %6570 = vrot.lane.b32.xlu0 %v5028, 24
  %v6571 = vpop.permute.xlu0 %6570
  %6572 = vrot.lane.b32.xlu0 %v5029, 24
  %v6573 = vpop.permute.xlu0 %6572
  %6574 = vrot.lane.b32.xlu0 %v5030, 24
  %v6575 = vpop.permute.xlu0 %6574
  %6576 = vrot.lane.b32.xlu0 %v5031, 24
  %v6577 = vpop.permute.xlu0 %6576
  %6578 = vrot.lane.b32.xlu0 %v5032, 24
  %v6579 = vpop.permute.xlu0 %6578
  %6580 = vrot.lane.b32.xlu0 %v5033, 24
  %v6581 = vpop.permute.xlu0 %6580
  %6582 = vrot.lane.b32.xlu0 %v5034, 24
  %v6583 = vpop.permute.xlu0 %6582
  %6584 = vrot.lane.b32.xlu0 %v5035, 24
  %v6585 = vpop.permute.xlu0 %6584
  %6586 = vrot.lane.b32.xlu0 %v5036, 24
  %v6587 = vpop.permute.xlu0 %6586
  %6588 = vrot.lane.b32.xlu0 %v5037, 24
  %v6589 = vpop.permute.xlu0 %6588
  %6590 = vrot.lane.b32.xlu0 %v5038, 24
  %v6591 = vpop.permute.xlu0 %6590
  %6592 = vrot.lane.b32.xlu0 %v5039, 24
  %v6593 = vpop.permute.xlu0 %6592
  %6594 = vrot.lane.b32.xlu0 %v5040, 24
  %v6595 = vpop.permute.xlu0 %6594
  %6596 = vrot.lane.b32.xlu0 %v5041, 24
  %v6597 = vpop.permute.xlu0 %6596
  %6598 = vrot.lane.b32.xlu0 %v5042, 24
  %v6599 = vpop.permute.xlu0 %6598
  %6600 = vrot.lane.b32.xlu0 %v5043, 24
  %v6601 = vpop.permute.xlu0 %6600
  %6602 = vrot.lane.b32.xlu0 %v5044, 24
  %v6603 = vpop.permute.xlu0 %6602
  %6604 = vrot.lane.b32.xlu0 %v5045, 24
  %v6605 = vpop.permute.xlu0 %6604
  %6606 = vrot.lane.b32.xlu0 %v5046, 24
  %v6607 = vpop.permute.xlu0 %6606
  %6608 = vrot.lane.b32.xlu0 %v5047, 24
  %v6609 = vpop.permute.xlu0 %6608
  %6610 = vrot.lane.b32.xlu0 %v5048, 24
  %v6611 = vpop.permute.xlu0 %6610
  %6612 = vrot.lane.b32.xlu0 %v5049, 24
  %v6613 = vpop.permute.xlu0 %6612
  %6614 = vrot.lane.b32.xlu0 %v5050, 24
  %v6615 = vpop.permute.xlu0 %6614
  %6616 = vrot.lane.b32.xlu0 %v5051, 24
  %v6617 = vpop.permute.xlu0 %6616
  %6618 = vrot.lane.b32.xlu0 %v5052, 24
  %v6619 = vpop.permute.xlu0 %6618
  %6620 = vrot.lane.b32.xlu0 %v5053, 24
  %v6621 = vpop.permute.xlu0 %6620
  %6622 = vrot.lane.b32.xlu0 %v5054, 24
  %v6623 = vpop.permute.xlu0 %6622
  %6624 = vrot.lane.b32.xlu0 %v5055, 24
  %v6625 = vpop.permute.xlu0 %6624
  %6626 = vrot.lane.b32.xlu0 %v5056, 24
  %v6627 = vpop.permute.xlu0 %6626
  %6628 = vrot.lane.b32.xlu0 %v5057, 24
  %v6629 = vpop.permute.xlu0 %6628
  %6630 = vrot.lane.b32.xlu0 %v5058, 24
  %v6631 = vpop.permute.xlu0 %6630
  %6632 = vrot.lane.b32.xlu0 %v5059, 24
  %v6633 = vpop.permute.xlu0 %6632
  %6634 = vrot.lane.b32.xlu0 %v5060, 24
  %v6635 = vpop.permute.xlu0 %6634
  %6636 = vrot.lane.b32.xlu0 %v5061, 24
  %v6637 = vpop.permute.xlu0 %6636
  %6638 = vrot.lane.b32.xlu0 %v5062, 24
  %v6639 = vpop.permute.xlu0 %6638
  %6640 = vrot.lane.b32.xlu0 %v5063, 24
  %v6641 = vpop.permute.xlu0 %6640
  %6642 = vrot.lane.b32.xlu0 %v5064, 24
  %v6643 = vpop.permute.xlu0 %6642
  %6644 = vrot.lane.b32.xlu0 %v5065, 24
  %v6645 = vpop.permute.xlu0 %6644
  %6646 = vrot.lane.b32.xlu0 %v5066, 24
  %v6647 = vpop.permute.xlu0 %6646
  %6648 = vrot.lane.b32.xlu0 %v5067, 24
  %v6649 = vpop.permute.xlu0 %6648
  %6650 = vrot.lane.b32.xlu0 %v5068, 24
  %v6651 = vpop.permute.xlu0 %6650
  %6652 = vrot.lane.b32.xlu0 %v5069, 24
  %v6653 = vpop.permute.xlu0 %6652
  %6654 = vrot.lane.b32.xlu0 %v5070, 24
  %v6655 = vpop.permute.xlu0 %6654
  %6656 = vrot.lane.b32.xlu0 %v5071, 24
  %v6657 = vpop.permute.xlu0 %6656
  %6658 = vrot.lane.b32.xlu0 %v5072, 24
  %v6659 = vpop.permute.xlu0 %6658
  %6660 = vrot.lane.b32.xlu0 %v5073, 24
  %v6661 = vpop.permute.xlu0 %6660
  %6662 = vrot.lane.b32.xlu0 %v5074, 24
  %v6663 = vpop.permute.xlu0 %6662
  %6664 = vrot.lane.b32.xlu0 %v5075, 24
  %v6665 = vpop.permute.xlu0 %6664
  %6666 = vrot.lane.b32.xlu0 %v5076, 24
  %v6667 = vpop.permute.xlu0 %6666
  %6668 = vrot.lane.b32.xlu0 %v5077, 24
  %v6669 = vpop.permute.xlu0 %6668
  %6670 = vrot.lane.b32.xlu0 %v5078, 24
  %v6671 = vpop.permute.xlu0 %6670
  %6672 = vrot.lane.b32.xlu0 %v5079, 24
  %v6673 = vpop.permute.xlu0 %6672
  %6674 = vrot.lane.b32.xlu0 %v5080, 24
  %v6675 = vpop.permute.xlu0 %6674
  %6676 = vrot.lane.b32.xlu0 %v5081, 24
  %v6677 = vpop.permute.xlu0 %6676
  %6678 = vrot.lane.b32.xlu0 %v5082, 24
  %v6679 = vpop.permute.xlu0 %6678
  %6680 = vrot.lane.b32.xlu0 %v5083, 24
  %v6681 = vpop.permute.xlu0 %6680
  %6682 = vrot.lane.b32.xlu0 %v5084, 24
  %v6683 = vpop.permute.xlu0 %6682
  %6684 = vrot.lane.b32.xlu0 %v5085, 24
  %v6685 = vpop.permute.xlu0 %6684
  %6814 = vrot.lane.b32.xlu0 %v5086, 28
  %v6815 = vpop.permute.xlu0 %6814
  %6816 = vrot.lane.b32.xlu0 %v5087, 28
  %v6817 = vpop.permute.xlu0 %6816
  %6818 = vrot.lane.b32.xlu0 %v5088, 28
  %v6819 = vpop.permute.xlu0 %6818
  %6820 = vrot.lane.b32.xlu0 %v5089, 28
  %v6821 = vpop.permute.xlu0 %6820
  %6822 = vrot.lane.b32.xlu0 %v5090, 28
  %v6823 = vpop.permute.xlu0 %6822
  %6824 = vrot.lane.b32.xlu0 %v5091, 28
  %v6825 = vpop.permute.xlu0 %6824
  %6826 = vrot.lane.b32.xlu0 %v5092, 28
  %v6827 = vpop.permute.xlu0 %6826
  %6828 = vrot.lane.b32.xlu0 %v5093, 28
  %v6829 = vpop.permute.xlu0 %6828
  %6830 = vrot.lane.b32.xlu0 %v5094, 28
  %v6831 = vpop.permute.xlu0 %6830
  %6832 = vrot.lane.b32.xlu0 %v5095, 28
  %v6833 = vpop.permute.xlu0 %6832
  %6834 = vrot.lane.b32.xlu0 %v5096, 28
  %v6835 = vpop.permute.xlu0 %6834
  %6836 = vrot.lane.b32.xlu0 %v5097, 28
  %v6837 = vpop.permute.xlu0 %6836
  %6838 = vrot.lane.b32.xlu0 %v5098, 28
  %v6839 = vpop.permute.xlu0 %6838
  %6840 = vrot.lane.b32.xlu0 %v5099, 28
  %v6841 = vpop.permute.xlu0 %6840
  %6842 = vrot.lane.b32.xlu0 %v5100, 28
  %v6843 = vpop.permute.xlu0 %6842
  %6844 = vrot.lane.b32.xlu0 %v5101, 28
  %v6845 = vpop.permute.xlu0 %6844
  %6846 = vrot.lane.b32.xlu0 %v5102, 28
  %v6847 = vpop.permute.xlu0 %6846
  %6848 = vrot.lane.b32.xlu0 %v5103, 28
  %v6849 = vpop.permute.xlu0 %6848
  %6850 = vrot.lane.b32.xlu0 %v5104, 28
  %v6851 = vpop.permute.xlu0 %6850
  %6852 = vrot.lane.b32.xlu0 %v5105, 28
  %v6853 = vpop.permute.xlu0 %6852
  %6854 = vrot.lane.b32.xlu0 %v5106, 28
  %v6855 = vpop.permute.xlu0 %6854
  %6856 = vrot.lane.b32.xlu0 %v5107, 28
  %v6857 = vpop.permute.xlu0 %6856
  %6858 = vrot.lane.b32.xlu0 %v5108, 28
  %v6859 = vpop.permute.xlu0 %6858
  %6860 = vrot.lane.b32.xlu0 %v5109, 28
  %v6861 = vpop.permute.xlu0 %6860
  %6862 = vrot.lane.b32.xlu0 %v5110, 28
  %v6863 = vpop.permute.xlu0 %6862
  %6864 = vrot.lane.b32.xlu0 %v5111, 28
  %v6865 = vpop.permute.xlu0 %6864
  %6866 = vrot.lane.b32.xlu0 %v5112, 28
  %v6867 = vpop.permute.xlu0 %6866
  %6868 = vrot.lane.b32.xlu0 %v5113, 28
  %v6869 = vpop.permute.xlu0 %6868
  %6870 = vrot.lane.b32.xlu0 %v5114, 28
  %v6871 = vpop.permute.xlu0 %6870
  %6872 = vrot.lane.b32.xlu0 %v5115, 28
  %v6873 = vpop.permute.xlu0 %6872
  %6874 = vrot.lane.b32.xlu0 %v5116, 28
  %v6875 = vpop.permute.xlu0 %6874
  %6876 = vrot.lane.b32.xlu0 %v5117, 28
  %v6877 = vpop.permute.xlu0 %6876
  %6878 = vrot.lane.b32.xlu0 %v5118, 28
  %v6879 = vpop.permute.xlu0 %6878
  %6880 = vrot.lane.b32.xlu0 %v5119, 28
  %v6881 = vpop.permute.xlu0 %6880
  %6882 = vrot.lane.b32.xlu0 %v5120, 28
  %v6883 = vpop.permute.xlu0 %6882
  %6884 = vrot.lane.b32.xlu0 %v5121, 28
  %v6885 = vpop.permute.xlu0 %6884
  %6886 = vrot.lane.b32.xlu0 %v5122, 28
  %v6887 = vpop.permute.xlu0 %6886
  %6888 = vrot.lane.b32.xlu0 %v5123, 28
  %v6889 = vpop.permute.xlu0 %6888
  %6890 = vrot.lane.b32.xlu0 %v5124, 28
  %v6891 = vpop.permute.xlu0 %6890
  %6892 = vrot.lane.b32.xlu0 %v5125, 28
  %v6893 = vpop.permute.xlu0 %6892
  %6894 = vrot.lane.b32.xlu0 %v5126, 28
  %v6895 = vpop.permute.xlu0 %6894
  %6896 = vrot.lane.b32.xlu0 %v5127, 28
  %v6897 = vpop.permute.xlu0 %6896
  %6898 = vrot.lane.b32.xlu0 %v5128, 28
  %v6899 = vpop.permute.xlu0 %6898
  %6900 = vrot.lane.b32.xlu0 %v5129, 28
  %v6901 = vpop.permute.xlu0 %6900
  %6902 = vrot.lane.b32.xlu0 %v5130, 28
  %v6903 = vpop.permute.xlu0 %6902
  %6904 = vrot.lane.b32.xlu0 %v5131, 28
  %v6905 = vpop.permute.xlu0 %6904
  %6906 = vrot.lane.b32.xlu0 %v5132, 28
  %v6907 = vpop.permute.xlu0 %6906
  %6908 = vrot.lane.b32.xlu0 %v5133, 28
  %v6909 = vpop.permute.xlu0 %6908
  %6910 = vrot.lane.b32.xlu0 %v5134, 28
  %v6911 = vpop.permute.xlu0 %6910
  %6912 = vrot.lane.b32.xlu0 %v5135, 28
  %v6913 = vpop.permute.xlu0 %6912
  %6914 = vrot.lane.b32.xlu0 %v5136, 28
  %v6915 = vpop.permute.xlu0 %6914
  %6916 = vrot.lane.b32.xlu0 %v5137, 28
  %v6917 = vpop.permute.xlu0 %6916
  %6918 = vrot.lane.b32.xlu0 %v5138, 28
  %v6919 = vpop.permute.xlu0 %6918
  %6920 = vrot.lane.b32.xlu0 %v5139, 28
  %v6921 = vpop.permute.xlu0 %6920
  %6922 = vrot.lane.b32.xlu0 %v5140, 28
  %v6923 = vpop.permute.xlu0 %6922
  %6924 = vrot.lane.b32.xlu0 %v5141, 28
  %v6925 = vpop.permute.xlu0 %6924
  %6926 = vrot.lane.b32.xlu0 %v5142, 28
  %v6927 = vpop.permute.xlu0 %6926
  %6928 = vrot.lane.b32.xlu0 %v5143, 28
  %v6929 = vpop.permute.xlu0 %6928
  %6930 = vrot.lane.b32.xlu0 %v5144, 28
  %v6931 = vpop.permute.xlu0 %6930
  %6932 = vrot.lane.b32.xlu0 %v5145, 28
  %v6933 = vpop.permute.xlu0 %6932
  %6934 = vrot.lane.b32.xlu0 %v5146, 28
  %v6935 = vpop.permute.xlu0 %6934
  %6936 = vrot.lane.b32.xlu0 %v5147, 28
  %v6937 = vpop.permute.xlu0 %6936
  %6938 = vrot.lane.b32.xlu0 %v5148, 28
  %v6939 = vpop.permute.xlu0 %6938
  %6940 = vrot.lane.b32.xlu0 %v5149, 28
  %v6941 = vpop.permute.xlu0 %6940
  %7070 = vrot.lane.b32.xlu0 %v5150, 32
  %v7071 = vpop.permute.xlu0 %7070
  %7072 = vrot.lane.b32.xlu0 %v5151, 32
  %v7073 = vpop.permute.xlu0 %7072
  %7074 = vrot.lane.b32.xlu0 %v5152, 32
  %v7075 = vpop.permute.xlu0 %7074
  %7076 = vrot.lane.b32.xlu0 %v5153, 32
  %v7077 = vpop.permute.xlu0 %7076
  %7078 = vrot.lane.b32.xlu0 %v5154, 32
  %v7079 = vpop.permute.xlu0 %7078
  %7080 = vrot.lane.b32.xlu0 %v5155, 32
  %v7081 = vpop.permute.xlu0 %7080
  %7082 = vrot.lane.b32.xlu0 %v5156, 32
  %v7083 = vpop.permute.xlu0 %7082
  %7084 = vrot.lane.b32.xlu0 %v5157, 32
  %v7085 = vpop.permute.xlu0 %7084
  %7086 = vrot.lane.b32.xlu0 %v5158, 32
  %v7087 = vpop.permute.xlu0 %7086
  %7088 = vrot.lane.b32.xlu0 %v5159, 32
  %v7089 = vpop.permute.xlu0 %7088
  %7090 = vrot.lane.b32.xlu0 %v5160, 32
  %v7091 = vpop.permute.xlu0 %7090
  %7092 = vrot.lane.b32.xlu0 %v5161, 32
  %v7093 = vpop.permute.xlu0 %7092
  %7094 = vrot.lane.b32.xlu0 %v5162, 32
  %v7095 = vpop.permute.xlu0 %7094
  %7096 = vrot.lane.b32.xlu0 %v5163, 32
  %v7097 = vpop.permute.xlu0 %7096
  %7098 = vrot.lane.b32.xlu0 %v5164, 32
  %v7099 = vpop.permute.xlu0 %7098
  %7100 = vrot.lane.b32.xlu0 %v5165, 32
  %v7101 = vpop.permute.xlu0 %7100
  %7102 = vrot.lane.b32.xlu0 %v5166, 32
  %v7103 = vpop.permute.xlu0 %7102
  %7104 = vrot.lane.b32.xlu0 %v5167, 32
  %v7105 = vpop.permute.xlu0 %7104
  %7106 = vrot.lane.b32.xlu0 %v5168, 32
  %v7107 = vpop.permute.xlu0 %7106
  %7108 = vrot.lane.b32.xlu0 %v5169, 32
  %v7109 = vpop.permute.xlu0 %7108
  %7110 = vrot.lane.b32.xlu0 %v5170, 32
  %v7111 = vpop.permute.xlu0 %7110
  %7112 = vrot.lane.b32.xlu0 %v5171, 32
  %v7113 = vpop.permute.xlu0 %7112
  %7114 = vrot.lane.b32.xlu0 %v5172, 32
  %v7115 = vpop.permute.xlu0 %7114
  %7116 = vrot.lane.b32.xlu0 %v5173, 32
  %v7117 = vpop.permute.xlu0 %7116
  %7118 = vrot.lane.b32.xlu0 %v5174, 32
  %v7119 = vpop.permute.xlu0 %7118
  %7120 = vrot.lane.b32.xlu0 %v5175, 32
  %v7121 = vpop.permute.xlu0 %7120
  %7122 = vrot.lane.b32.xlu0 %v5176, 32
  %v7123 = vpop.permute.xlu0 %7122
  %7124 = vrot.lane.b32.xlu0 %v5177, 32
  %v7125 = vpop.permute.xlu0 %7124
  %7126 = vrot.lane.b32.xlu0 %v5178, 32
  %v7127 = vpop.permute.xlu0 %7126
  %7128 = vrot.lane.b32.xlu0 %v5179, 32
  %v7129 = vpop.permute.xlu0 %7128
  %7130 = vrot.lane.b32.xlu0 %v5180, 32
  %v7131 = vpop.permute.xlu0 %7130
  %7132 = vrot.lane.b32.xlu0 %v5181, 32
  %v7133 = vpop.permute.xlu0 %7132
  %7134 = vrot.lane.b32.xlu0 %v5182, 32
  %v7135 = vpop.permute.xlu0 %7134
  %7136 = vrot.lane.b32.xlu0 %v5183, 32
  %v7137 = vpop.permute.xlu0 %7136
  %7138 = vrot.lane.b32.xlu0 %v5184, 32
  %v7139 = vpop.permute.xlu0 %7138
  %7140 = vrot.lane.b32.xlu0 %v5185, 32
  %v7141 = vpop.permute.xlu0 %7140
  %7142 = vrot.lane.b32.xlu0 %v5186, 32
  %v7143 = vpop.permute.xlu0 %7142
  %7144 = vrot.lane.b32.xlu0 %v5187, 32
  %v7145 = vpop.permute.xlu0 %7144
  %7146 = vrot.lane.b32.xlu0 %v5188, 32
  %v7147 = vpop.permute.xlu0 %7146
  %7148 = vrot.lane.b32.xlu0 %v5189, 32
  %v7149 = vpop.permute.xlu0 %7148
  %7150 = vrot.lane.b32.xlu0 %v5190, 32
  %v7151 = vpop.permute.xlu0 %7150
  %7152 = vrot.lane.b32.xlu0 %v5191, 32
  %v7153 = vpop.permute.xlu0 %7152
  %7154 = vrot.lane.b32.xlu0 %v5192, 32
  %v7155 = vpop.permute.xlu0 %7154
  %7156 = vrot.lane.b32.xlu0 %v5193, 32
  %v7157 = vpop.permute.xlu0 %7156
  %7158 = vrot.lane.b32.xlu0 %v5194, 32
  %v7159 = vpop.permute.xlu0 %7158
  %7160 = vrot.lane.b32.xlu0 %v5195, 32
  %v7161 = vpop.permute.xlu0 %7160
  %7162 = vrot.lane.b32.xlu0 %v5196, 32
  %v7163 = vpop.permute.xlu0 %7162
  %7164 = vrot.lane.b32.xlu0 %v5197, 32
  %v7165 = vpop.permute.xlu0 %7164
  %7166 = vrot.lane.b32.xlu0 %v5198, 32
  %v7167 = vpop.permute.xlu0 %7166
  %7168 = vrot.lane.b32.xlu0 %v5199, 32
  %v7169 = vpop.permute.xlu0 %7168
  %7170 = vrot.lane.b32.xlu0 %v5200, 32
  %v7171 = vpop.permute.xlu0 %7170
  %7172 = vrot.lane.b32.xlu0 %v5201, 32
  %v7173 = vpop.permute.xlu0 %7172
  %7174 = vrot.lane.b32.xlu0 %v5202, 32
  %v7175 = vpop.permute.xlu0 %7174
  %7176 = vrot.lane.b32.xlu0 %v5203, 32
  %v7177 = vpop.permute.xlu0 %7176
  %7178 = vrot.lane.b32.xlu0 %v5204, 32
  %v7179 = vpop.permute.xlu0 %7178
  %7180 = vrot.lane.b32.xlu0 %v5205, 32
  %v7181 = vpop.permute.xlu0 %7180
  %7182 = vrot.lane.b32.xlu0 %v5206, 32
  %v7183 = vpop.permute.xlu0 %7182
  %7184 = vrot.lane.b32.xlu0 %v5207, 32
  %v7185 = vpop.permute.xlu0 %7184
  %7186 = vrot.lane.b32.xlu0 %v5208, 32
  %v7187 = vpop.permute.xlu0 %7186
  %7188 = vrot.lane.b32.xlu0 %v5209, 32
  %v7189 = vpop.permute.xlu0 %7188
  %7190 = vrot.lane.b32.xlu0 %v5210, 32
  %v7191 = vpop.permute.xlu0 %7190
  %7192 = vrot.lane.b32.xlu0 %v5211, 32
  %v7193 = vpop.permute.xlu0 %7192
  %7194 = vrot.lane.b32.xlu0 %v5212, 32
  %v7195 = vpop.permute.xlu0 %7194
  %7196 = vrot.lane.b32.xlu0 %v5213, 32
  %v7197 = vpop.permute.xlu0 %7196
  %v7262 = vsel %vm90, %v4638, %v5279
  %v7263 = vsel %vm90, %v4639, %v5281
  %v7264 = vsel %vm90, %v4640, %v5283
  %v7265 = vsel %vm90, %v4641, %v5285
  %v7266 = vsel %vm90, %v4642, %v5287
  %v7267 = vsel %vm90, %v4643, %v5289
  %v7268 = vsel %vm90, %v4644, %v5291
  %v7269 = vsel %vm90, %v4645, %v5293
  %v7270 = vsel %vm90, %v4646, %v5295
  %v7271 = vsel %vm90, %v4647, %v5297
  %v7272 = vsel %vm90, %v4648, %v5299
  %v7273 = vsel %vm90, %v4649, %v5301
  %v7274 = vsel %vm90, %v4650, %v5303
  %v7275 = vsel %vm90, %v4651, %v5305
  %v7276 = vsel %vm90, %v4652, %v5307
  %v7277 = vsel %vm90, %v4653, %v5309
  %v7278 = vsel %vm90, %v4654, %v5311
  %v7279 = vsel %vm90, %v4655, %v5313
  %v7280 = vsel %vm90, %v4656, %v5315
  %v7281 = vsel %vm90, %v4657, %v5317
  %v7282 = vsel %vm90, %v4658, %v5319
  %v7283 = vsel %vm90, %v4659, %v5321
  %v7284 = vsel %vm90, %v4660, %v5323
  %v7285 = vsel %vm90, %v4661, %v5325
  %v7286 = vsel %vm90, %v4662, %v5327
  %v7287 = vsel %vm90, %v4663, %v5329
  %v7288 = vsel %vm90, %v4664, %v5331
  %v7289 = vsel %vm90, %v4665, %v5333
  %v7290 = vsel %vm90, %v4666, %v5335
  %v7291 = vsel %vm90, %v4667, %v5337
  %v7292 = vsel %vm90, %v4668, %v5339
  %v7293 = vsel %vm90, %v4669, %v5341
  %v7294 = vsel %vm90, %v4670, %v5343
  %v7295 = vsel %vm90, %v4671, %v5345
  %v7296 = vsel %vm90, %v4672, %v5347
  %v7297 = vsel %vm90, %v4673, %v5349
  %v7298 = vsel %vm90, %v4674, %v5351
  %v7299 = vsel %vm90, %v4675, %v5353
  %v7300 = vsel %vm90, %v4676, %v5355
  %v7301 = vsel %vm90, %v4677, %v5357
  %v7302 = vsel %vm90, %v4678, %v5359
  %v7303 = vsel %vm90, %v4679, %v5361
  %v7304 = vsel %vm90, %v4680, %v5363
  %v7305 = vsel %vm90, %v4681, %v5365
  %v7306 = vsel %vm90, %v4682, %v5367
  %v7307 = vsel %vm90, %v4683, %v5369
  %v7308 = vsel %vm90, %v4684, %v5371
  %v7309 = vsel %vm90, %v4685, %v5373
  %v7310 = vsel %vm90, %v4686, %v5375
  %v7311 = vsel %vm90, %v4687, %v5377
  %v7312 = vsel %vm90, %v4688, %v5379
  %v7313 = vsel %vm90, %v4689, %v5381
  %v7314 = vsel %vm90, %v4690, %v5383
  %v7315 = vsel %vm90, %v4691, %v5385
  %v7316 = vsel %vm90, %v4692, %v5387
  %v7317 = vsel %vm90, %v4693, %v5389
  %v7318 = vsel %vm90, %v4694, %v5391
  %v7319 = vsel %vm90, %v4695, %v5393
  %v7320 = vsel %vm90, %v4696, %v5395
  %v7321 = vsel %vm90, %v4697, %v5397
  %v7322 = vsel %vm90, %v4698, %v5399
  %v7323 = vsel %vm90, %v4699, %v5401
  %v7324 = vsel %vm90, %v4700, %v5403
  %v7325 = vsel %vm90, %v4701, %v5405
  %v7326 = vsel %vm2924, %v7262, %v5535
  %v7327 = vsel %vm2924, %v7263, %v5537
  %v7328 = vsel %vm2924, %v7264, %v5539
  %v7329 = vsel %vm2924, %v7265, %v5541
  %v7330 = vsel %vm2924, %v7266, %v5543
  %v7331 = vsel %vm2924, %v7267, %v5545
  %v7332 = vsel %vm2924, %v7268, %v5547
  %v7333 = vsel %vm2924, %v7269, %v5549
  %v7334 = vsel %vm2924, %v7270, %v5551
  %v7335 = vsel %vm2924, %v7271, %v5553
  %v7336 = vsel %vm2924, %v7272, %v5555
  %v7337 = vsel %vm2924, %v7273, %v5557
  %v7338 = vsel %vm2924, %v7274, %v5559
  %v7339 = vsel %vm2924, %v7275, %v5561
  %v7340 = vsel %vm2924, %v7276, %v5563
  %v7341 = vsel %vm2924, %v7277, %v5565
  %v7342 = vsel %vm2924, %v7278, %v5567
  %v7343 = vsel %vm2924, %v7279, %v5569
  %v7344 = vsel %vm2924, %v7280, %v5571
  %v7345 = vsel %vm2924, %v7281, %v5573
  %v7346 = vsel %vm2924, %v7282, %v5575
  %v7347 = vsel %vm2924, %v7283, %v5577
  %v7348 = vsel %vm2924, %v7284, %v5579
  %v7349 = vsel %vm2924, %v7285, %v5581
  %v7350 = vsel %vm2924, %v7286, %v5583
  %v7351 = vsel %vm2924, %v7287, %v5585
  %v7352 = vsel %vm2924, %v7288, %v5587
  %v7353 = vsel %vm2924, %v7289, %v5589
  %v7354 = vsel %vm2924, %v7290, %v5591
  %v7355 = vsel %vm2924, %v7291, %v5593
  %v7356 = vsel %vm2924, %v7292, %v5595
  %v7357 = vsel %vm2924, %v7293, %v5597
  %v7358 = vsel %vm2924, %v7294, %v5599
  %v7359 = vsel %vm2924, %v7295, %v5601
  %v7360 = vsel %vm2924, %v7296, %v5603
  %v7361 = vsel %vm2924, %v7297, %v5605
  %v7362 = vsel %vm2924, %v7298, %v5607
  %v7363 = vsel %vm2924, %v7299, %v5609
  %v7364 = vsel %vm2924, %v7300, %v5611
  %v7365 = vsel %vm2924, %v7301, %v5613
  %v7366 = vsel %vm2924, %v7302, %v5615
  %v7367 = vsel %vm2924, %v7303, %v5617
  %v7368 = vsel %vm2924, %v7304, %v5619
  %v7369 = vsel %vm2924, %v7305, %v5621
  %v7370 = vsel %vm2924, %v7306, %v5623
  %v7371 = vsel %vm2924, %v7307, %v5625
  %v7372 = vsel %vm2924, %v7308, %v5627
  %v7373 = vsel %vm2924, %v7309, %v5629
  %v7374 = vsel %vm2924, %v7310, %v5631
  %v7375 = vsel %vm2924, %v7311, %v5633
  %v7376 = vsel %vm2924, %v7312, %v5635
  %v7377 = vsel %vm2924, %v7313, %v5637
  %v7378 = vsel %vm2924, %v7314, %v5639
  %v7379 = vsel %vm2924, %v7315, %v5641
  %v7380 = vsel %vm2924, %v7316, %v5643
  %v7381 = vsel %vm2924, %v7317, %v5645
  %v7382 = vsel %vm2924, %v7318, %v5647
  %v7383 = vsel %vm2924, %v7319, %v5649
  %v7384 = vsel %vm2924, %v7320, %v5651
  %v7385 = vsel %vm2924, %v7321, %v5653
  %v7386 = vsel %vm2924, %v7322, %v5655
  %v7387 = vsel %vm2924, %v7323, %v5657
  %v7388 = vsel %vm2924, %v7324, %v5659
  %v7389 = vsel %vm2924, %v7325, %v5661
  %v7390 = vsel %vm2989, %v7326, %v5791
  %v7391 = vsel %vm2989, %v7327, %v5793
  %v7392 = vsel %vm2989, %v7328, %v5795
  %v7393 = vsel %vm2989, %v7329, %v5797
  %v7394 = vsel %vm2989, %v7330, %v5799
  %v7395 = vsel %vm2989, %v7331, %v5801
  %v7396 = vsel %vm2989, %v7332, %v5803
  %v7397 = vsel %vm2989, %v7333, %v5805
  %v7398 = vsel %vm2989, %v7334, %v5807
  %v7399 = vsel %vm2989, %v7335, %v5809
  %v7400 = vsel %vm2989, %v7336, %v5811
  %v7401 = vsel %vm2989, %v7337, %v5813
  %v7402 = vsel %vm2989, %v7338, %v5815
  %v7403 = vsel %vm2989, %v7339, %v5817
  %v7404 = vsel %vm2989, %v7340, %v5819
  %v7405 = vsel %vm2989, %v7341, %v5821
  %v7406 = vsel %vm2989, %v7342, %v5823
  %v7407 = vsel %vm2989, %v7343, %v5825
  %v7408 = vsel %vm2989, %v7344, %v5827
  %v7409 = vsel %vm2989, %v7345, %v5829
  %v7410 = vsel %vm2989, %v7346, %v5831
  %v7411 = vsel %vm2989, %v7347, %v5833
  %v7412 = vsel %vm2989, %v7348, %v5835
  %v7413 = vsel %vm2989, %v7349, %v5837
  %v7414 = vsel %vm2989, %v7350, %v5839
  %v7415 = vsel %vm2989, %v7351, %v5841
  %v7416 = vsel %vm2989, %v7352, %v5843
  %v7417 = vsel %vm2989, %v7353, %v5845
  %v7418 = vsel %vm2989, %v7354, %v5847
  %v7419 = vsel %vm2989, %v7355, %v5849
  %v7420 = vsel %vm2989, %v7356, %v5851
  %v7421 = vsel %vm2989, %v7357, %v5853
  %v7422 = vsel %vm2989, %v7358, %v5855
  %v7423 = vsel %vm2989, %v7359, %v5857
  %v7424 = vsel %vm2989, %v7360, %v5859
  %v7425 = vsel %vm2989, %v7361, %v5861
  %v7426 = vsel %vm2989, %v7362, %v5863
  %v7427 = vsel %vm2989, %v7363, %v5865
  %v7428 = vsel %vm2989, %v7364, %v5867
  %v7429 = vsel %vm2989, %v7365, %v5869
  %v7430 = vsel %vm2989, %v7366, %v5871
  %v7431 = vsel %vm2989, %v7367, %v5873
  %v7432 = vsel %vm2989, %v7368, %v5875
  %v7433 = vsel %vm2989, %v7369, %v5877
  %v7434 = vsel %vm2989, %v7370, %v5879
  %v7435 = vsel %vm2989, %v7371, %v5881
  %v7436 = vsel %vm2989, %v7372, %v5883
  %v7437 = vsel %vm2989, %v7373, %v5885
  %v7438 = vsel %vm2989, %v7374, %v5887
  %v7439 = vsel %vm2989, %v7375, %v5889
  %v7440 = vsel %vm2989, %v7376, %v5891
  %v7441 = vsel %vm2989, %v7377, %v5893
  %v7442 = vsel %vm2989, %v7378, %v5895
  %v7443 = vsel %vm2989, %v7379, %v5897
  %v7444 = vsel %vm2989, %v7380, %v5899
  %v7445 = vsel %vm2989, %v7381, %v5901
  %v7446 = vsel %vm2989, %v7382, %v5903
  %v7447 = vsel %vm2989, %v7383, %v5905
  %v7448 = vsel %vm2989, %v7384, %v5907
  %v7449 = vsel %vm2989, %v7385, %v5909
  %v7450 = vsel %vm2989, %v7386, %v5911
  %v7451 = vsel %vm2989, %v7387, %v5913
  %v7452 = vsel %vm2989, %v7388, %v5915
  %v7453 = vsel %vm2989, %v7389, %v5917
  %v7454 = vsel %vm3054, %v7390, %v6047
  %v7455 = vsel %vm3054, %v7391, %v6049
  %v7456 = vsel %vm3054, %v7392, %v6051
  %v7457 = vsel %vm3054, %v7393, %v6053
  %v7458 = vsel %vm3054, %v7394, %v6055
  %v7459 = vsel %vm3054, %v7395, %v6057
  %v7460 = vsel %vm3054, %v7396, %v6059
  %v7461 = vsel %vm3054, %v7397, %v6061
  %v7462 = vsel %vm3054, %v7398, %v6063
  %v7463 = vsel %vm3054, %v7399, %v6065
  %v7464 = vsel %vm3054, %v7400, %v6067
  %v7465 = vsel %vm3054, %v7401, %v6069
  %v7466 = vsel %vm3054, %v7402, %v6071
  %v7467 = vsel %vm3054, %v7403, %v6073
  %v7468 = vsel %vm3054, %v7404, %v6075
  %v7469 = vsel %vm3054, %v7405, %v6077
  %v7470 = vsel %vm3054, %v7406, %v6079
  %v7471 = vsel %vm3054, %v7407, %v6081
  %v7472 = vsel %vm3054, %v7408, %v6083
  %v7473 = vsel %vm3054, %v7409, %v6085
  %v7474 = vsel %vm3054, %v7410, %v6087
  %v7475 = vsel %vm3054, %v7411, %v6089
  %v7476 = vsel %vm3054, %v7412, %v6091
  %v7477 = vsel %vm3054, %v7413, %v6093
  %v7478 = vsel %vm3054, %v7414, %v6095
  %v7479 = vsel %vm3054, %v7415, %v6097
  %v7480 = vsel %vm3054, %v7416, %v6099
  %v7481 = vsel %vm3054, %v7417, %v6101
  %v7482 = vsel %vm3054, %v7418, %v6103
  %v7483 = vsel %vm3054, %v7419, %v6105
  %v7484 = vsel %vm3054, %v7420, %v6107
  %v7485 = vsel %vm3054, %v7421, %v6109
  %v7486 = vsel %vm3054, %v7422, %v6111
  %v7487 = vsel %vm3054, %v7423, %v6113
  %v7488 = vsel %vm3054, %v7424, %v6115
  %v7489 = vsel %vm3054, %v7425, %v6117
  %v7490 = vsel %vm3054, %v7426, %v6119
  %v7491 = vsel %vm3054, %v7427, %v6121
  %v7492 = vsel %vm3054, %v7428, %v6123
  %v7493 = vsel %vm3054, %v7429, %v6125
  %v7494 = vsel %vm3054, %v7430, %v6127
  %v7495 = vsel %vm3054, %v7431, %v6129
  %v7496 = vsel %vm3054, %v7432, %v6131
  %v7497 = vsel %vm3054, %v7433, %v6133
  %v7498 = vsel %vm3054, %v7434, %v6135
  %v7499 = vsel %vm3054, %v7435, %v6137
  %v7500 = vsel %vm3054, %v7436, %v6139
  %v7501 = vsel %vm3054, %v7437, %v6141
  %v7502 = vsel %vm3054, %v7438, %v6143
  %v7503 = vsel %vm3054, %v7439, %v6145
  %v7504 = vsel %vm3054, %v7440, %v6147
  %v7505 = vsel %vm3054, %v7441, %v6149
  %v7506 = vsel %vm3054, %v7442, %v6151
  %v7507 = vsel %vm3054, %v7443, %v6153
  %v7508 = vsel %vm3054, %v7444, %v6155
  %v7509 = vsel %vm3054, %v7445, %v6157
  %v7510 = vsel %vm3054, %v7446, %v6159
  %v7511 = vsel %vm3054, %v7447, %v6161
  %v7512 = vsel %vm3054, %v7448, %v6163
  %v7513 = vsel %vm3054, %v7449, %v6165
  %v7514 = vsel %vm3054, %v7450, %v6167
  %v7515 = vsel %vm3054, %v7451, %v6169
  %v7516 = vsel %vm3054, %v7452, %v6171
  %v7517 = vsel %vm3054, %v7453, %v6173
  %v7518 = vsel %vm3119, %v7454, %v6303
  %v7519 = vsel %vm3119, %v7455, %v6305
  %v7520 = vsel %vm3119, %v7456, %v6307
  %v7521 = vsel %vm3119, %v7457, %v6309
  %v7522 = vsel %vm3119, %v7458, %v6311
  %v7523 = vsel %vm3119, %v7459, %v6313
  %v7524 = vsel %vm3119, %v7460, %v6315
  %v7525 = vsel %vm3119, %v7461, %v6317
  %v7526 = vsel %vm3119, %v7462, %v6319
  %v7527 = vsel %vm3119, %v7463, %v6321
  %v7528 = vsel %vm3119, %v7464, %v6323
  %v7529 = vsel %vm3119, %v7465, %v6325
  %v7530 = vsel %vm3119, %v7466, %v6327
  %v7531 = vsel %vm3119, %v7467, %v6329
  %v7532 = vsel %vm3119, %v7468, %v6331
  %v7533 = vsel %vm3119, %v7469, %v6333
  %v7534 = vsel %vm3119, %v7470, %v6335
  %v7535 = vsel %vm3119, %v7471, %v6337
  %v7536 = vsel %vm3119, %v7472, %v6339
  %v7537 = vsel %vm3119, %v7473, %v6341
  %v7538 = vsel %vm3119, %v7474, %v6343
  %v7539 = vsel %vm3119, %v7475, %v6345
  %v7540 = vsel %vm3119, %v7476, %v6347
  %v7541 = vsel %vm3119, %v7477, %v6349
  %v7542 = vsel %vm3119, %v7478, %v6351
  %v7543 = vsel %vm3119, %v7479, %v6353
  %v7544 = vsel %vm3119, %v7480, %v6355
  %v7545 = vsel %vm3119, %v7481, %v6357
  %v7546 = vsel %vm3119, %v7482, %v6359
  %v7547 = vsel %vm3119, %v7483, %v6361
  %v7548 = vsel %vm3119, %v7484, %v6363
  %v7549 = vsel %vm3119, %v7485, %v6365
  %v7550 = vsel %vm3119, %v7486, %v6367
  %v7551 = vsel %vm3119, %v7487, %v6369
  %v7552 = vsel %vm3119, %v7488, %v6371
  %v7553 = vsel %vm3119, %v7489, %v6373
  %v7554 = vsel %vm3119, %v7490, %v6375
  %v7555 = vsel %vm3119, %v7491, %v6377
  %v7556 = vsel %vm3119, %v7492, %v6379
  %v7557 = vsel %vm3119, %v7493, %v6381
  %v7558 = vsel %vm3119, %v7494, %v6383
  %v7559 = vsel %vm3119, %v7495, %v6385
  %v7560 = vsel %vm3119, %v7496, %v6387
  %v7561 = vsel %vm3119, %v7497, %v6389
  %v7562 = vsel %vm3119, %v7498, %v6391
  %v7563 = vsel %vm3119, %v7499, %v6393
  %v7564 = vsel %vm3119, %v7500, %v6395
  %v7565 = vsel %vm3119, %v7501, %v6397
  %v7566 = vsel %vm3119, %v7502, %v6399
  %v7567 = vsel %vm3119, %v7503, %v6401
  %v7568 = vsel %vm3119, %v7504, %v6403
  %v7569 = vsel %vm3119, %v7505, %v6405
  %v7570 = vsel %vm3119, %v7506, %v6407
  %v7571 = vsel %vm3119, %v7507, %v6409
  %v7572 = vsel %vm3119, %v7508, %v6411
  %v7573 = vsel %vm3119, %v7509, %v6413
  %v7574 = vsel %vm3119, %v7510, %v6415
  %v7575 = vsel %vm3119, %v7511, %v6417
  %v7576 = vsel %vm3119, %v7512, %v6419
  %v7577 = vsel %vm3119, %v7513, %v6421
  %v7578 = vsel %vm3119, %v7514, %v6423
  %v7579 = vsel %vm3119, %v7515, %v6425
  %v7580 = vsel %vm3119, %v7516, %v6427
  %v7581 = vsel %vm3119, %v7517, %v6429
  %v7582 = vsel %vm3184, %v7518, %v6559
  %v7583 = vsel %vm3184, %v7519, %v6561
  %v7584 = vsel %vm3184, %v7520, %v6563
  %v7585 = vsel %vm3184, %v7521, %v6565
  %v7586 = vsel %vm3184, %v7522, %v6567
  %v7587 = vsel %vm3184, %v7523, %v6569
  %v7588 = vsel %vm3184, %v7524, %v6571
  %v7589 = vsel %vm3184, %v7525, %v6573
  %v7590 = vsel %vm3184, %v7526, %v6575
  %v7591 = vsel %vm3184, %v7527, %v6577
  %v7592 = vsel %vm3184, %v7528, %v6579
  %v7593 = vsel %vm3184, %v7529, %v6581
  %v7594 = vsel %vm3184, %v7530, %v6583
  %v7595 = vsel %vm3184, %v7531, %v6585
  %v7596 = vsel %vm3184, %v7532, %v6587
  %v7597 = vsel %vm3184, %v7533, %v6589
  %v7598 = vsel %vm3184, %v7534, %v6591
  %v7599 = vsel %vm3184, %v7535, %v6593
  %v7600 = vsel %vm3184, %v7536, %v6595
  %v7601 = vsel %vm3184, %v7537, %v6597
  %v7602 = vsel %vm3184, %v7538, %v6599
  %v7603 = vsel %vm3184, %v7539, %v6601
  %v7604 = vsel %vm3184, %v7540, %v6603
  %v7605 = vsel %vm3184, %v7541, %v6605
  %v7606 = vsel %vm3184, %v7542, %v6607
  %v7607 = vsel %vm3184, %v7543, %v6609
  %v7608 = vsel %vm3184, %v7544, %v6611
  %v7609 = vsel %vm3184, %v7545, %v6613
  %v7610 = vsel %vm3184, %v7546, %v6615
  %v7611 = vsel %vm3184, %v7547, %v6617
  %v7612 = vsel %vm3184, %v7548, %v6619
  %v7613 = vsel %vm3184, %v7549, %v6621
  %v7614 = vsel %vm3184, %v7550, %v6623
  %v7615 = vsel %vm3184, %v7551, %v6625
  %v7616 = vsel %vm3184, %v7552, %v6627
  %v7617 = vsel %vm3184, %v7553, %v6629
  %v7618 = vsel %vm3184, %v7554, %v6631
  %v7619 = vsel %vm3184, %v7555, %v6633
  %v7620 = vsel %vm3184, %v7556, %v6635
  %v7621 = vsel %vm3184, %v7557, %v6637
  %v7622 = vsel %vm3184, %v7558, %v6639
  %v7623 = vsel %vm3184, %v7559, %v6641
  %v7624 = vsel %vm3184, %v7560, %v6643
  %v7625 = vsel %vm3184, %v7561, %v6645
  %v7626 = vsel %vm3184, %v7562, %v6647
  %v7627 = vsel %vm3184, %v7563, %v6649
  %v7628 = vsel %vm3184, %v7564, %v6651
  %v7629 = vsel %vm3184, %v7565, %v6653
  %v7630 = vsel %vm3184, %v7566, %v6655
  %v7631 = vsel %vm3184, %v7567, %v6657
  %v7632 = vsel %vm3184, %v7568, %v6659
  %v7633 = vsel %vm3184, %v7569, %v6661
  %v7634 = vsel %vm3184, %v7570, %v6663
  %v7635 = vsel %vm3184, %v7571, %v6665
  %v7636 = vsel %vm3184, %v7572, %v6667
  %v7637 = vsel %vm3184, %v7573, %v6669
  %v7638 = vsel %vm3184, %v7574, %v6671
  %v7639 = vsel %vm3184, %v7575, %v6673
  %v7640 = vsel %vm3184, %v7576, %v6675
  %v7641 = vsel %vm3184, %v7577, %v6677
  %v7642 = vsel %vm3184, %v7578, %v6679
  %v7643 = vsel %vm3184, %v7579, %v6681
  %v7644 = vsel %vm3184, %v7580, %v6683
  %v7645 = vsel %vm3184, %v7581, %v6685
  %v7646 = vsel %vm3249, %v7582, %v6815
  %v7647 = vsel %vm3249, %v7583, %v6817
  %v7648 = vsel %vm3249, %v7584, %v6819
  %v7649 = vsel %vm3249, %v7585, %v6821
  %v7650 = vsel %vm3249, %v7586, %v6823
  %v7651 = vsel %vm3249, %v7587, %v6825
  %v7652 = vsel %vm3249, %v7588, %v6827
  %v7653 = vsel %vm3249, %v7589, %v6829
  %v7654 = vsel %vm3249, %v7590, %v6831
  %v7655 = vsel %vm3249, %v7591, %v6833
  %v7656 = vsel %vm3249, %v7592, %v6835
  %v7657 = vsel %vm3249, %v7593, %v6837
  %v7658 = vsel %vm3249, %v7594, %v6839
  %v7659 = vsel %vm3249, %v7595, %v6841
  %v7660 = vsel %vm3249, %v7596, %v6843
  %v7661 = vsel %vm3249, %v7597, %v6845
  %v7662 = vsel %vm3249, %v7598, %v6847
  %v7663 = vsel %vm3249, %v7599, %v6849
  %v7664 = vsel %vm3249, %v7600, %v6851
  %v7665 = vsel %vm3249, %v7601, %v6853
  %v7666 = vsel %vm3249, %v7602, %v6855
  %v7667 = vsel %vm3249, %v7603, %v6857
  %v7668 = vsel %vm3249, %v7604, %v6859
  %v7669 = vsel %vm3249, %v7605, %v6861
  %v7670 = vsel %vm3249, %v7606, %v6863
  %v7671 = vsel %vm3249, %v7607, %v6865
  %v7672 = vsel %vm3249, %v7608, %v6867
  %v7673 = vsel %vm3249, %v7609, %v6869
  %v7674 = vsel %vm3249, %v7610, %v6871
  %v7675 = vsel %vm3249, %v7611, %v6873
  %v7676 = vsel %vm3249, %v7612, %v6875
  %v7677 = vsel %vm3249, %v7613, %v6877
  %v7678 = vsel %vm3249, %v7614, %v6879
  %v7679 = vsel %vm3249, %v7615, %v6881
  %v7680 = vsel %vm3249, %v7616, %v6883
  %v7681 = vsel %vm3249, %v7617, %v6885
  %v7682 = vsel %vm3249, %v7618, %v6887
  %v7683 = vsel %vm3249, %v7619, %v6889
  %v7684 = vsel %vm3249, %v7620, %v6891
  %v7685 = vsel %vm3249, %v7621, %v6893
  %v7686 = vsel %vm3249, %v7622, %v6895
  %v7687 = vsel %vm3249, %v7623, %v6897
  %v7688 = vsel %vm3249, %v7624, %v6899
  %v7689 = vsel %vm3249, %v7625, %v6901
  %v7690 = vsel %vm3249, %v7626, %v6903
  %v7691 = vsel %vm3249, %v7627, %v6905
  %v7692 = vsel %vm3249, %v7628, %v6907
  %v7693 = vsel %vm3249, %v7629, %v6909
  %v7694 = vsel %vm3249, %v7630, %v6911
  %v7695 = vsel %vm3249, %v7631, %v6913
  %v7696 = vsel %vm3249, %v7632, %v6915
  %v7697 = vsel %vm3249, %v7633, %v6917
  %v7698 = vsel %vm3249, %v7634, %v6919
  %v7699 = vsel %vm3249, %v7635, %v6921
  %v7700 = vsel %vm3249, %v7636, %v6923
  %v7701 = vsel %vm3249, %v7637, %v6925
  %v7702 = vsel %vm3249, %v7638, %v6927
  %v7703 = vsel %vm3249, %v7639, %v6929
  %v7704 = vsel %vm3249, %v7640, %v6931
  %v7705 = vsel %vm3249, %v7641, %v6933
  %v7706 = vsel %vm3249, %v7642, %v6935
  %v7707 = vsel %vm3249, %v7643, %v6937
  %v7708 = vsel %vm3249, %v7644, %v6939
  %v7709 = vsel %vm3249, %v7645, %v6941
  %v7710 = vsel %vm3314, %v7646, %v7071
  %v7711 = vsel %vm3314, %v7647, %v7073
  %v7712 = vsel %vm3314, %v7648, %v7075
  %v7713 = vsel %vm3314, %v7649, %v7077
  %v7714 = vsel %vm3314, %v7650, %v7079
  %v7715 = vsel %vm3314, %v7651, %v7081
  %v7716 = vsel %vm3314, %v7652, %v7083
  %v7717 = vsel %vm3314, %v7653, %v7085
  %v7718 = vsel %vm3314, %v7654, %v7087
  %v7719 = vsel %vm3314, %v7655, %v7089
  %v7720 = vsel %vm3314, %v7656, %v7091
  %v7721 = vsel %vm3314, %v7657, %v7093
  %v7722 = vsel %vm3314, %v7658, %v7095
  %v7723 = vsel %vm3314, %v7659, %v7097
  %v7724 = vsel %vm3314, %v7660, %v7099
  %v7725 = vsel %vm3314, %v7661, %v7101
  %v7726 = vsel %vm3314, %v7662, %v7103
  %v7727 = vsel %vm3314, %v7663, %v7105
  %v7728 = vsel %vm3314, %v7664, %v7107
  %v7729 = vsel %vm3314, %v7665, %v7109
  %v7730 = vsel %vm3314, %v7666, %v7111
  %v7731 = vsel %vm3314, %v7667, %v7113
  %v7732 = vsel %vm3314, %v7668, %v7115
  %v7733 = vsel %vm3314, %v7669, %v7117
  %v7734 = vsel %vm3314, %v7670, %v7119
  %v7735 = vsel %vm3314, %v7671, %v7121
  %v7736 = vsel %vm3314, %v7672, %v7123
  %v7737 = vsel %vm3314, %v7673, %v7125
  %v7738 = vsel %vm3314, %v7674, %v7127
  %v7739 = vsel %vm3314, %v7675, %v7129
  %v7740 = vsel %vm3314, %v7676, %v7131
  %v7741 = vsel %vm3314, %v7677, %v7133
  %v7742 = vsel %vm3314, %v7678, %v7135
  %v7743 = vsel %vm3314, %v7679, %v7137
  %v7744 = vsel %vm3314, %v7680, %v7139
  %v7745 = vsel %vm3314, %v7681, %v7141
  %v7746 = vsel %vm3314, %v7682, %v7143
  %v7747 = vsel %vm3314, %v7683, %v7145
  %v7748 = vsel %vm3314, %v7684, %v7147
  %v7749 = vsel %vm3314, %v7685, %v7149
  %v7750 = vsel %vm3314, %v7686, %v7151
  %v7751 = vsel %vm3314, %v7687, %v7153
  %v7752 = vsel %vm3314, %v7688, %v7155
  %v7753 = vsel %vm3314, %v7689, %v7157
  %v7754 = vsel %vm3314, %v7690, %v7159
  %v7755 = vsel %vm3314, %v7691, %v7161
  %v7756 = vsel %vm3314, %v7692, %v7163
  %v7757 = vsel %vm3314, %v7693, %v7165
  %v7758 = vsel %vm3314, %v7694, %v7167
  %v7759 = vsel %vm3314, %v7695, %v7169
  %v7760 = vsel %vm3314, %v7696, %v7171
  %v7761 = vsel %vm3314, %v7697, %v7173
  %v7762 = vsel %vm3314, %v7698, %v7175
  %v7763 = vsel %vm3314, %v7699, %v7177
  %v7764 = vsel %vm3314, %v7700, %v7179
  %v7765 = vsel %vm3314, %v7701, %v7181
  %v7766 = vsel %vm3314, %v7702, %v7183
  %v7767 = vsel %vm3314, %v7703, %v7185
  %v7768 = vsel %vm3314, %v7704, %v7187
  %v7769 = vsel %vm3314, %v7705, %v7189
  %v7770 = vsel %vm3314, %v7706, %v7191
  %v7771 = vsel %vm3314, %v7707, %v7193
  %v7772 = vsel %vm3314, %v7708, %v7195
  %v7773 = vsel %vm3314, %v7709, %v7197
  %v7774 = vld [vmem:[%s2] sm:$0xff]
  %v7775 = vld [vmem:[%s2 + $0x8] sm:$0xff]
  %v7776 = vld [vmem:[%s2 + $0x10] sm:$0xff]
  %v7777 = vld [vmem:[%s2 + $0x18] sm:$0xff]
  %v7778 = vld [vmem:[%s2 + $0x20] sm:$0xf]
  %v7780 = vsel %vm3384, %v7710, 0
  %v7783 = vsel %vm3384, %v7711, 0
  %v7786 = vsel %vm3384, %v7712, 0
  %v7789 = vsel %vm3384, %v7713, 0
  %v7792 = vsel %vm3384, %v7714, 0
  %v7795 = vsel %vm3384, %v7715, 0
  %v7798 = vsel %vm3384, %v7716, 0
  %v7801 = vsel %vm3384, %v7717, 0
  %v7804 = vsel %vm3384, %v7718, 0
  %v7807 = vsel %vm3384, %v7719, 0
  %v7810 = vsel %vm3384, %v7720, 0
  %v7813 = vsel %vm3384, %v7721, 0
  %v7816 = vsel %vm3384, %v7722, 0
  %v7819 = vsel %vm3384, %v7723, 0
  %v7822 = vsel %vm3384, %v7724, 0
  %v7825 = vsel %vm3384, %v7725, 0
  %v7828 = vsel %vm3384, %v7726, 0
  %v7831 = vsel %vm3384, %v7727, 0
  %v7834 = vsel %vm3384, %v7728, 0
  %v7837 = vsel %vm3384, %v7729, 0
  %v7840 = vsel %vm3384, %v7730, 0
  %v7843 = vsel %vm3384, %v7731, 0
  %v7846 = vsel %vm3384, %v7732, 0
  %v7849 = vsel %vm3384, %v7733, 0
  %v7852 = vsel %vm3384, %v7734, 0
  %v7855 = vsel %vm3384, %v7735, 0
  %v7858 = vsel %vm3384, %v7736, 0
  %v7861 = vsel %vm3384, %v7737, 0
  %v7864 = vsel %vm3384, %v7738, 0
  %v7867 = vsel %vm3384, %v7739, 0
  %v7870 = vsel %vm3384, %v7740, 0
  %v7873 = vsel %vm3384, %v7741, 0
  %v7876 = vsel %vm3384, %v7742, 0
  %v7879 = vsel %vm3384, %v7743, 0
  %v7882 = vsel %vm3384, %v7744, 0
  %v7885 = vsel %vm3384, %v7745, 0
  %v7888 = vsel %vm3384, %v7746, 0
  %v7891 = vsel %vm3384, %v7747, 0
  %v7894 = vsel %vm3384, %v7748, 0
  %v7897 = vsel %vm3384, %v7749, 0
  %v7900 = vsel %vm3384, %v7750, 0
  %v7903 = vsel %vm3384, %v7751, 0
  %v7906 = vsel %vm3384, %v7752, 0
  %v7909 = vsel %vm3384, %v7753, 0
  %v7912 = vsel %vm3384, %v7754, 0
  %v7915 = vsel %vm3384, %v7755, 0
  %v7918 = vsel %vm3384, %v7756, 0
  %v7921 = vsel %vm3384, %v7757, 0
  %v7924 = vsel %vm3384, %v7758, 0
  %v7927 = vsel %vm3384, %v7759, 0
  %v7930 = vsel %vm3384, %v7760, 0
  %v7933 = vsel %vm3384, %v7761, 0
  %v7936 = vsel %vm3384, %v7762, 0
  %v7939 = vsel %vm3384, %v7763, 0
  %v7942 = vsel %vm3384, %v7764, 0
  %v7945 = vsel %vm3384, %v7765, 0
  %v7948 = vsel %vm3384, %v7766, 0
  %v7951 = vsel %vm3384, %v7767, 0
  %v7954 = vsel %vm3384, %v7768, 0
  %v7957 = vsel %vm3384, %v7769, 0
  %v7960 = vsel %vm3384, %v7770, 0
  %v7963 = vsel %vm3384, %v7771, 0
  %v7966 = vsel %vm3384, %v7772, 0
  %v7969 = vsel %vm3384, %v7773, 0
  %v7972 = vsel %vm3577, %v7778, 0
  %7974 = vmatprep.subr.mxu0 0.0
  %7975 = vmatpush1.msra.mxu0 %v7774
  %7976 = vmatprep.subr.mxu0 0.0
  %7977 = vmatpush1.msra.mxu0 %v7775
  %7978 = vmatprep.subr.mxu0 0.0
  %7979 = vmatpush1.msra.mxu0 %v7776
  %7980 = vmatprep.subr.mxu0 0.0
  %7981 = vmatpush1.msra.mxu0 %v7777
  %7982 = vmatprep.subr.mxu0 0.0
  %7983 = vmatpush1.msra.mxu0 %v7972
  %7984 = vmatprep.subr.mxu0 0.0
  %7985 = vmatpush1.msra.mxu0 0.0
  %7986 = vmatprep.subr.mxu0 0.0
  %7987 = vmatpush1.msra.mxu0 0.0
  %7988 = vmatprep.subr.mxu0 0.0
  %7989 = vmatpush1.msra.mxu0 0.0
  %7990 = vmatprep.subr.mxu0 0.0
  %7991 = vmatpush1.msra.mxu0 0.0
  %7992 = vmatprep.subr.mxu0 0.0
  %7993 = vmatpush1.msra.mxu0 0.0
  %7994 = vmatprep.subr.mxu0 0.0
  %7995 = vmatpush1.msra.mxu0 0.0
  %7996 = vmatprep.subr.mxu0 0.0
  %7997 = vmatpush1.msra.mxu0 0.0
  %7998 = vmatprep.subr.mxu0 0.0
  %7999 = vmatpush1.msra.mxu0 0.0
  %8000 = vmatprep.subr.mxu0 0.0
  %8001 = vmatpush1.msra.mxu0 0.0
  %8002 = vmatprep.subr.mxu0 0.0
  %8003 = vmatpush1.msra.mxu0 0.0
  %8004 = vmatprep.subr.mxu0 0.0
  %8005 = vmatpush1.msra.mxu0 0.0
  %8006 = vmatprep.subr.mxu0 0.0
  %8007 = vmatpush1.msra.mxu0 0.0
  %8008 = vmatprep.subr.mxu0 0.0
  %8009 = vmatpush1.msra.mxu0 0.0
  %8010 = vmatprep.subr.mxu0 0.0
  %8011 = vmatpush1.msra.mxu0 0.0
  %8012 = vmatprep.subr.mxu0 0.0
  %8013 = vmatpush1.msra.mxu0 0.0
  %8014 = vmatprep.subr.mxu0 0.0
  %8015 = vmatpush1.msra.mxu0 0.0
  %8016 = vmatprep.subr.mxu0 0.0
  %8017 = vmatpush1.msra.mxu0 0.0
  %8018 = vmatprep.subr.mxu0 0.0
  %8019 = vmatpush1.msra.mxu0 0.0
  %8020 = vmatprep.subr.mxu0 0.0
  %8021 = vmatpush1.msra.mxu0 0.0
  %8022 = vmatprep.subr.mxu0 0.0
  %8023 = vmatpush1.msra.mxu0 0.0
  %8024 = vmatprep.subr.mxu0 0.0
  %8025 = vmatpush1.msra.mxu0 0.0
  %8026 = vmatprep.subr.mxu0 0.0
  %8027 = vmatpush1.msra.mxu0 0.0
  %8028 = vmatprep.subr.mxu0 0.0
  %8029 = vmatpush1.msra.mxu0 0.0
  %8030 = vmatprep.subr.mxu0 0.0
  %8031 = vmatpush1.msra.mxu0 0.0
  %8032 = vmatprep.subr.mxu0 0.0
  %8033 = vmatpush1.msra.mxu0 0.0
  %8034 = vmatprep.subr.mxu0 0.0
  %8035 = vmatpush1.msra.mxu0 0.0
  %8036 = vmatprep.subr.mxu0 0.0
  %8037 = vmatpush1.msra.mxu0 0.0
  %8038 = vmatprep.mubr.f32.mxu0 0.0
  %8039 = vmatmul.mubr.f32.gmra.mrb[0].mxu0 %v7780
  %v8040 = vpop.f32.mrb[0].mxu0
  %v8041 = vadd.f32 0.0, %v8040
  %v8042 = vpop.f32.mrb[0].mxu0
  %8043 = vmatprep.mubr.f32.mxu0 0.0
  %8044 = vmatmul.mubr.f32.gmra.mrb[0].mxu0 %v7783
  %v8045 = vpop.f32.mrb[0].mxu0
  %v8046 = vadd.f32 0.0, %v8045
  %v8047 = vpop.f32.mrb[0].mxu0
  %8048 = vmatprep.mubr.f32.mxu0 0.0
  %8049 = vmatmul.mubr.f32.gmra.mrb[0].mxu0 %v7786
  %v8050 = vpop.f32.mrb[0].mxu0
  %v8051 = vadd.f32 0.0, %v8050
  %v8052 = vpop.f32.mrb[0].mxu0
  %8053 = vmatprep.mubr.f32.mxu0 0.0
  %8054 = vmatmul.mubr.f32.gmra.mrb[0].mxu0 %v7789
  %v8055 = vpop.f32.mrb[0].mxu0
  %v8056 = vadd.f32 0.0, %v8055
  %v8057 = vpop.f32.mrb[0].mxu0
  %8058 = vmatprep.mubr.f32.mxu0 0.0
  %8059 = vmatmul.mubr.f32.gmra.mrb[0].mxu0 %v7792
  %v8060 = vpop.f32.mrb[0].mxu0
  %v8061 = vadd.f32 0.0, %v8060
  %v8062 = vpop.f32.mrb[0].mxu0
  %8063 = vmatprep.mubr.f32.mxu0 0.0
  %8064 = vmatmul.mubr.f32.gmra.mrb[0].mxu0 %v7795
  %v8065 = vpop.f32.mrb[0].mxu0
  %v8066 = vadd.f32 0.0, %v8065
  %v8067 = vpop.f32.mrb[0].mxu0
  %8068 = vmatprep.mubr.f32.mxu0 0.0
  %8069 = vmatmul.mubr.f32.gmra.mrb[0].mxu0 %v7798
  %v8070 = vpop.f32.mrb[0].mxu0
  %v8071 = vadd.f32 0.0, %v8070
  %v8072 = vpop.f32.mrb[0].mxu0
  %8073 = vmatprep.mubr.f32.mxu0 0.0
  %8074 = vmatmul.mubr.f32.gmra.mrb[0].mxu0 %v7801
  %v8075 = vpop.f32.mrb[0].mxu0
  %v8076 = vadd.f32 0.0, %v8075
  %v8077 = vpop.f32.mrb[0].mxu0
  %8078 = vmatprep.mubr.f32.mxu0 0.0
  %8079 = vmatmul.mubr.f32.gmra.mrb[0].mxu0 %v7804
  %v8080 = vpop.f32.mrb[0].mxu0
  %v8081 = vadd.f32 0.0, %v8080
  %v8082 = vpop.f32.mrb[0].mxu0
  %8083 = vmatprep.mubr.f32.mxu0 0.0
  %8084 = vmatmul.mubr.f32.gmra.mrb[0].mxu0 %v7807
  %v8085 = vpop.f32.mrb[0].mxu0
  %v8086 = vadd.f32 0.0, %v8085
  %v8087 = vpop.f32.mrb[0].mxu0
  %8088 = vmatprep.mubr.f32.mxu0 0.0
  %8089 = vmatmul.mubr.f32.gmra.mrb[0].mxu0 %v7810
  %v8090 = vpop.f32.mrb[0].mxu0
  %v8091 = vadd.f32 0.0, %v8090
  %v8092 = vpop.f32.mrb[0].mxu0
  %8093 = vmatprep.mubr.f32.mxu0 0.0
  %8094 = vmatmul.mubr.f32.gmra.mrb[0].mxu0 %v7813
  %v8095 = vpop.f32.mrb[0].mxu0
  %v8096 = vadd.f32 0.0, %v8095
  %v8097 = vpop.f32.mrb[0].mxu0
  %8098 = vmatprep.mubr.f32.mxu0 0.0
  %8099 = vmatmul.mubr.f32.gmra.mrb[0].mxu0 %v7816
  %v8100 = vpop.f32.mrb[0].mxu0
  %v8101 = vadd.f32 0.0, %v8100
  %v8102 = vpop.f32.mrb[0].mxu0
  %8103 = vmatprep.mubr.f32.mxu0 0.0
  %8104 = vmatmul.mubr.f32.gmra.mrb[0].mxu0 %v7819
  %v8105 = vpop.f32.mrb[0].mxu0
  %v8106 = vadd.f32 0.0, %v8105
  %v8107 = vpop.f32.mrb[0].mxu0
  %8108 = vmatprep.mubr.f32.mxu0 0.0
  %8109 = vmatmul.mubr.f32.gmra.mrb[0].mxu0 %v7822
  %v8110 = vpop.f32.mrb[0].mxu0
  %v8111 = vadd.f32 0.0, %v8110
  %v8112 = vpop.f32.mrb[0].mxu0
  %8113 = vmatprep.mubr.f32.mxu0 0.0
  %8114 = vmatmul.mubr.f32.gmra.mrb[0].mxu0 %v7825
  %v8115 = vpop.f32.mrb[0].mxu0
  %v8116 = vadd.f32 0.0, %v8115
  %v8117 = vpop.f32.mrb[0].mxu0
  %8118 = vmatprep.mubr.f32.mxu0 0.0
  %8119 = vmatmul.mubr.f32.gmra.mrb[0].mxu0 %v7828
  %v8120 = vpop.f32.mrb[0].mxu0
  %v8121 = vadd.f32 0.0, %v8120
  %v8122 = vpop.f32.mrb[0].mxu0
  %8123 = vmatprep.mubr.f32.mxu0 0.0
  %8124 = vmatmul.mubr.f32.gmra.mrb[0].mxu0 %v7831
  %v8125 = vpop.f32.mrb[0].mxu0
  %v8126 = vadd.f32 0.0, %v8125
  %v8127 = vpop.f32.mrb[0].mxu0
  %8128 = vmatprep.mubr.f32.mxu0 0.0
  %8129 = vmatmul.mubr.f32.gmra.mrb[0].mxu0 %v7834
  %v8130 = vpop.f32.mrb[0].mxu0
  %v8131 = vadd.f32 0.0, %v8130
  %v8132 = vpop.f32.mrb[0].mxu0
  %8133 = vmatprep.mubr.f32.mxu0 0.0
  %8134 = vmatmul.mubr.f32.gmra.mrb[0].mxu0 %v7837
  %v8135 = vpop.f32.mrb[0].mxu0
  %v8136 = vadd.f32 0.0, %v8135
  %v8137 = vpop.f32.mrb[0].mxu0
  %8138 = vmatprep.mubr.f32.mxu0 0.0
  %8139 = vmatmul.mubr.f32.gmra.mrb[0].mxu0 %v7840
  %v8140 = vpop.f32.mrb[0].mxu0
  %v8141 = vadd.f32 0.0, %v8140
  %v8142 = vpop.f32.mrb[0].mxu0
  %8143 = vmatprep.mubr.f32.mxu0 0.0
  %8144 = vmatmul.mubr.f32.gmra.mrb[0].mxu0 %v7843
  %v8145 = vpop.f32.mrb[0].mxu0
  %v8146 = vadd.f32 0.0, %v8145
  %v8147 = vpop.f32.mrb[0].mxu0
  %8148 = vmatprep.mubr.f32.mxu0 0.0
  %8149 = vmatmul.mubr.f32.gmra.mrb[0].mxu0 %v7846
  %v8150 = vpop.f32.mrb[0].mxu0
  %v8151 = vadd.f32 0.0, %v8150
  %v8152 = vpop.f32.mrb[0].mxu0
  %8153 = vmatprep.mubr.f32.mxu0 0.0
  %8154 = vmatmul.mubr.f32.gmra.mrb[0].mxu0 %v7849
  %v8155 = vpop.f32.mrb[0].mxu0
  %v8156 = vadd.f32 0.0, %v8155
  %v8157 = vpop.f32.mrb[0].mxu0
  %8158 = vmatprep.mubr.f32.mxu0 0.0
  %8159 = vmatmul.mubr.f32.gmra.mrb[0].mxu0 %v7852
  %v8160 = vpop.f32.mrb[0].mxu0
  %v8161 = vadd.f32 0.0, %v8160
  %v8162 = vpop.f32.mrb[0].mxu0
  %8163 = vmatprep.mubr.f32.mxu0 0.0
  %8164 = vmatmul.mubr.f32.gmra.mrb[0].mxu0 %v7855
  %v8165 = vpop.f32.mrb[0].mxu0
  %v8166 = vadd.f32 0.0, %v8165
  %v8167 = vpop.f32.mrb[0].mxu0
  %8168 = vmatprep.mubr.f32.mxu0 0.0
  %8169 = vmatmul.mubr.f32.gmra.mrb[0].mxu0 %v7858
  %v8170 = vpop.f32.mrb[0].mxu0
  %v8171 = vadd.f32 0.0, %v8170
  %v8172 = vpop.f32.mrb[0].mxu0
  %8173 = vmatprep.mubr.f32.mxu0 0.0
  %8174 = vmatmul.mubr.f32.gmra.mrb[0].mxu0 %v7861
  %v8175 = vpop.f32.mrb[0].mxu0
  %v8176 = vadd.f32 0.0, %v8175
  %v8177 = vpop.f32.mrb[0].mxu0
  %8178 = vmatprep.mubr.f32.mxu0 0.0
  %8179 = vmatmul.mubr.f32.gmra.mrb[0].mxu0 %v7864
  %v8180 = vpop.f32.mrb[0].mxu0
  %v8181 = vadd.f32 0.0, %v8180
  %v8182 = vpop.f32.mrb[0].mxu0
  %8183 = vmatprep.mubr.f32.mxu0 0.0
  %8184 = vmatmul.mubr.f32.gmra.mrb[0].mxu0 %v7867
  %v8185 = vpop.f32.mrb[0].mxu0
  %v8186 = vadd.f32 0.0, %v8185
  %v8187 = vpop.f32.mrb[0].mxu0
  %8188 = vmatprep.mubr.f32.mxu0 0.0
  %8189 = vmatmul.mubr.f32.gmra.mrb[0].mxu0 %v7870
  %v8190 = vpop.f32.mrb[0].mxu0
  %v8191 = vadd.f32 0.0, %v8190
  %v8192 = vpop.f32.mrb[0].mxu0
  %8193 = vmatprep.mubr.f32.mxu0 0.0
  %8194 = vmatmul.mubr.f32.gmra.mrb[0].mxu0 %v7873
  %v8195 = vpop.f32.mrb[0].mxu0
  %v8196 = vadd.f32 0.0, %v8195
  %v8197 = vpop.f32.mrb[0].mxu0
  %8198 = vmatprep.mubr.f32.mxu0 0.0
  %8199 = vmatmul.mubr.f32.gmra.mrb[0].mxu0 %v7876
  %v8200 = vpop.f32.mrb[0].mxu0
  %v8201 = vadd.f32 0.0, %v8200
  %v8202 = vpop.f32.mrb[0].mxu0
  %8203 = vmatprep.mubr.f32.mxu0 0.0
  %8204 = vmatmul.mubr.f32.gmra.mrb[0].mxu0 %v7879
  %v8205 = vpop.f32.mrb[0].mxu0
  %v8206 = vadd.f32 0.0, %v8205
  %v8207 = vpop.f32.mrb[0].mxu0
  %8208 = vmatprep.mubr.f32.mxu0 0.0
  %8209 = vmatmul.mubr.f32.gmra.mrb[0].mxu0 %v7882
  %v8210 = vpop.f32.mrb[0].mxu0
  %v8211 = vadd.f32 0.0, %v8210
  %v8212 = vpop.f32.mrb[0].mxu0
  %8213 = vmatprep.mubr.f32.mxu0 0.0
  %8214 = vmatmul.mubr.f32.gmra.mrb[0].mxu0 %v7885
  %v8215 = vpop.f32.mrb[0].mxu0
  %v8216 = vadd.f32 0.0, %v8215
  %v8217 = vpop.f32.mrb[0].mxu0
  %8218 = vmatprep.mubr.f32.mxu0 0.0
  %8219 = vmatmul.mubr.f32.gmra.mrb[0].mxu0 %v7888
  %v8220 = vpop.f32.mrb[0].mxu0
  %v8221 = vadd.f32 0.0, %v8220
  %v8222 = vpop.f32.mrb[0].mxu0
  %8223 = vmatprep.mubr.f32.mxu0 0.0
  %8224 = vmatmul.mubr.f32.gmra.mrb[0].mxu0 %v7891
  %v8225 = vpop.f32.mrb[0].mxu0
  %v8226 = vadd.f32 0.0, %v8225
  %v8227 = vpop.f32.mrb[0].mxu0
  %8228 = vmatprep.mubr.f32.mxu0 0.0
  %8229 = vmatmul.mubr.f32.gmra.mrb[0].mxu0 %v7894
  %v8230 = vpop.f32.mrb[0].mxu0
  %v8231 = vadd.f32 0.0, %v8230
  %v8232 = vpop.f32.mrb[0].mxu0
  %8233 = vmatprep.mubr.f32.mxu0 0.0
  %8234 = vmatmul.mubr.f32.gmra.mrb[0].mxu0 %v7897
  %v8235 = vpop.f32.mrb[0].mxu0
  %v8236 = vadd.f32 0.0, %v8235
  %v8237 = vpop.f32.mrb[0].mxu0
  %8238 = vmatprep.mubr.f32.mxu0 0.0
  %8239 = vmatmul.mubr.f32.gmra.mrb[0].mxu0 %v7900
  %v8240 = vpop.f32.mrb[0].mxu0
  %v8241 = vadd.f32 0.0, %v8240
  %v8242 = vpop.f32.mrb[0].mxu0
  %8243 = vmatprep.mubr.f32.mxu0 0.0
  %8244 = vmatmul.mubr.f32.gmra.mrb[0].mxu0 %v7903
  %v8245 = vpop.f32.mrb[0].mxu0
  %v8246 = vadd.f32 0.0, %v8245
  %v8247 = vpop.f32.mrb[0].mxu0
  %8248 = vmatprep.mubr.f32.mxu0 0.0
  %8249 = vmatmul.mubr.f32.gmra.mrb[0].mxu0 %v7906
  %v8250 = vpop.f32.mrb[0].mxu0
  %v8251 = vadd.f32 0.0, %v8250
  %v8252 = vpop.f32.mrb[0].mxu0
  %8253 = vmatprep.mubr.f32.mxu0 0.0
  %8254 = vmatmul.mubr.f32.gmra.mrb[0].mxu0 %v7909
  %v8255 = vpop.f32.mrb[0].mxu0
  %v8256 = vadd.f32 0.0, %v8255
  %v8257 = vpop.f32.mrb[0].mxu0
  %8258 = vmatprep.mubr.f32.mxu0 0.0
  %8259 = vmatmul.mubr.f32.gmra.mrb[0].mxu0 %v7912
  %v8260 = vpop.f32.mrb[0].mxu0
  %v8261 = vadd.f32 0.0, %v8260
  %v8262 = vpop.f32.mrb[0].mxu0
  %8263 = vmatprep.mubr.f32.mxu0 0.0
  %8264 = vmatmul.mubr.f32.gmra.mrb[0].mxu0 %v7915
  %v8265 = vpop.f32.mrb[0].mxu0
  %v8266 = vadd.f32 0.0, %v8265
  %v8267 = vpop.f32.mrb[0].mxu0
  %8268 = vmatprep.mubr.f32.mxu0 0.0
  %8269 = vmatmul.mubr.f32.gmra.mrb[0].mxu0 %v7918
  %v8270 = vpop.f32.mrb[0].mxu0
  %v8271 = vadd.f32 0.0, %v8270
  %v8272 = vpop.f32.mrb[0].mxu0
  %8273 = vmatprep.mubr.f32.mxu0 0.0
  %8274 = vmatmul.mubr.f32.gmra.mrb[0].mxu0 %v7921
  %v8275 = vpop.f32.mrb[0].mxu0
  %v8276 = vadd.f32 0.0, %v8275
  %v8277 = vpop.f32.mrb[0].mxu0
  %8278 = vmatprep.mubr.f32.mxu0 0.0
  %8279 = vmatmul.mubr.f32.gmra.mrb[0].mxu0 %v7924
  %v8280 = vpop.f32.mrb[0].mxu0
  %v8281 = vadd.f32 0.0, %v8280
  %v8282 = vpop.f32.mrb[0].mxu0
  %8283 = vmatprep.mubr.f32.mxu0 0.0
  %8284 = vmatmul.mubr.f32.gmra.mrb[0].mxu0 %v7927
  %v8285 = vpop.f32.mrb[0].mxu0
  %v8286 = vadd.f32 0.0, %v8285
  %v8287 = vpop.f32.mrb[0].mxu0
  %8288 = vmatprep.mubr.f32.mxu0 0.0
  %8289 = vmatmul.mubr.f32.gmra.mrb[0].mxu0 %v7930
  %v8290 = vpop.f32.mrb[0].mxu0
  %v8291 = vadd.f32 0.0, %v8290
  %v8292 = vpop.f32.mrb[0].mxu0
  %8293 = vmatprep.mubr.f32.mxu0 0.0
  %8294 = vmatmul.mubr.f32.gmra.mrb[0].mxu0 %v7933
  %v8295 = vpop.f32.mrb[0].mxu0
  %v8296 = vadd.f32 0.0, %v8295
  %v8297 = vpop.f32.mrb[0].mxu0
  %8298 = vmatprep.mubr.f32.mxu0 0.0
  %8299 = vmatmul.mubr.f32.gmra.mrb[0].mxu0 %v7936
  %v8300 = vpop.f32.mrb[0].mxu0
  %v8301 = vadd.f32 0.0, %v8300
  %v8302 = vpop.f32.mrb[0].mxu0
  %8303 = vmatprep.mubr.f32.mxu0 0.0
  %8304 = vmatmul.mubr.f32.gmra.mrb[0].mxu0 %v7939
  %v8305 = vpop.f32.mrb[0].mxu0
  %v8306 = vadd.f32 0.0, %v8305
  %v8307 = vpop.f32.mrb[0].mxu0
  %8308 = vmatprep.mubr.f32.mxu0 0.0
  %8309 = vmatmul.mubr.f32.gmra.mrb[0].mxu0 %v7942
  %v8310 = vpop.f32.mrb[0].mxu0
  %v8311 = vadd.f32 0.0, %v8310
  %v8312 = vpop.f32.mrb[0].mxu0
  %8313 = vmatprep.mubr.f32.mxu0 0.0
  %8314 = vmatmul.mubr.f32.gmra.mrb[0].mxu0 %v7945
  %v8315 = vpop.f32.mrb[0].mxu0
  %v8316 = vadd.f32 0.0, %v8315
  %v8317 = vpop.f32.mrb[0].mxu0
  %8318 = vmatprep.mubr.f32.mxu0 0.0
  %8319 = vmatmul.mubr.f32.gmra.mrb[0].mxu0 %v7948
  %v8320 = vpop.f32.mrb[0].mxu0
  %v8321 = vadd.f32 0.0, %v8320
  %v8322 = vpop.f32.mrb[0].mxu0
  %8323 = vmatprep.mubr.f32.mxu0 0.0
  %8324 = vmatmul.mubr.f32.gmra.mrb[0].mxu0 %v7951
  %v8325 = vpop.f32.mrb[0].mxu0
  %v8326 = vadd.f32 0.0, %v8325
  %v8327 = vpop.f32.mrb[0].mxu0
  %8328 = vmatprep.mubr.f32.mxu0 0.0
  %8329 = vmatmul.mubr.f32.gmra.mrb[0].mxu0 %v7954
  %v8330 = vpop.f32.mrb[0].mxu0
  %v8331 = vadd.f32 0.0, %v8330
  %v8332 = vpop.f32.mrb[0].mxu0
  %8333 = vmatprep.mubr.f32.mxu0 0.0
  %8334 = vmatmul.mubr.f32.gmra.mrb[0].mxu0 %v7957
  %v8335 = vpop.f32.mrb[0].mxu0
  %v8336 = vadd.f32 0.0, %v8335
  %v8337 = vpop.f32.mrb[0].mxu0
  %8338 = vmatprep.mubr.f32.mxu0 0.0
  %8339 = vmatmul.mubr.f32.gmra.mrb[0].mxu0 %v7960
  %v8340 = vpop.f32.mrb[0].mxu0
  %v8341 = vadd.f32 0.0, %v8340
  %v8342 = vpop.f32.mrb[0].mxu0
  %8343 = vmatprep.mubr.f32.mxu0 0.0
  %8344 = vmatmul.mubr.f32.gmra.mrb[0].mxu0 %v7963
  %v8345 = vpop.f32.mrb[0].mxu0
  %v8346 = vadd.f32 0.0, %v8345
  %v8347 = vpop.f32.mrb[0].mxu0
  %8348 = vmatprep.mubr.f32.mxu0 0.0
  %8349 = vmatmul.mubr.f32.gmra.mrb[0].mxu0 %v7966
  %v8350 = vpop.f32.mrb[0].mxu0
  %v8351 = vadd.f32 0.0, %v8350
  %v8352 = vpop.f32.mrb[0].mxu0
  %8353 = vmatprep.mubr.f32.mxu0 0.0
  %8354 = vmatmul.mubr.f32.gmra.mrb[0].mxu0 %v7969
  %v8355 = vpop.f32.mrb[0].mxu0
  %v8356 = vadd.f32 0.0, %v8355
  %v8357 = vpop.f32.mrb[0].mxu0
  %8358 = vdwg.mxu0
  %v8359 = vsel %vm90, %v8041, 0.0
  %v8360 = vsel %vm90, %v8046, 0.0
  %v8361 = vadd.f32 %v8359, %v8360
  %v8362 = vsel %vm90, %v8051, 0.0
  %v8363 = vadd.f32 %v8361, %v8362
  %v8364 = vsel %vm90, %v8056, 0.0
  %v8365 = vadd.f32 %v8363, %v8364
  %v8366 = vsel %vm90, %v8061, 0.0
  %v8367 = vadd.f32 %v8365, %v8366
  %v8368 = vsel %vm90, %v8066, 0.0
  %v8369 = vadd.f32 %v8367, %v8368
  %v8370 = vsel %vm90, %v8071, 0.0
  %v8371 = vadd.f32 %v8369, %v8370
  %v8372 = vsel %vm90, %v8076, 0.0
  %v8373 = vadd.f32 %v8371, %v8372
  %v8374 = vsel %vm90, %v8081, 0.0
  %v8375 = vadd.f32 %v8373, %v8374
  %v8376 = vsel %vm90, %v8086, 0.0
  %v8377 = vadd.f32 %v8375, %v8376
  %v8378 = vsel %vm90, %v8091, 0.0
  %v8379 = vadd.f32 %v8377, %v8378
  %v8380 = vsel %vm90, %v8096, 0.0
  %v8381 = vadd.f32 %v8379, %v8380
  %v8382 = vsel %vm90, %v8101, 0.0
  %v8383 = vadd.f32 %v8381, %v8382
  %v8384 = vsel %vm90, %v8106, 0.0
  %v8385 = vadd.f32 %v8383, %v8384
  %v8386 = vsel %vm90, %v8111, 0.0
  %v8387 = vadd.f32 %v8385, %v8386
  %v8388 = vsel %vm90, %v8116, 0.0
  %v8389 = vadd.f32 %v8387, %v8388
  %v8390 = vsel %vm90, %v8121, 0.0
  %v8391 = vadd.f32 %v8389, %v8390
  %v8392 = vsel %vm90, %v8126, 0.0
  %v8393 = vadd.f32 %v8391, %v8392
  %v8394 = vsel %vm90, %v8131, 0.0
  %v8395 = vadd.f32 %v8393, %v8394
  %v8396 = vsel %vm90, %v8136, 0.0
  %v8397 = vadd.f32 %v8395, %v8396
  %v8398 = vsel %vm90, %v8141, 0.0
  %v8399 = vadd.f32 %v8397, %v8398
  %v8400 = vsel %vm90, %v8146, 0.0
  %v8401 = vadd.f32 %v8399, %v8400
  %v8402 = vsel %vm90, %v8151, 0.0
  %v8403 = vadd.f32 %v8401, %v8402
  %v8404 = vsel %vm90, %v8156, 0.0
  %v8405 = vadd.f32 %v8403, %v8404
  %v8406 = vsel %vm90, %v8161, 0.0
  %v8407 = vadd.f32 %v8405, %v8406
  %v8408 = vsel %vm90, %v8166, 0.0
  %v8409 = vadd.f32 %v8407, %v8408
  %v8410 = vsel %vm90, %v8171, 0.0
  %v8411 = vadd.f32 %v8409, %v8410
  %v8412 = vsel %vm90, %v8176, 0.0
  %v8413 = vadd.f32 %v8411, %v8412
  %v8414 = vsel %vm90, %v8181, 0.0
  %v8415 = vadd.f32 %v8413, %v8414
  %v8416 = vsel %vm90, %v8186, 0.0
  %v8417 = vadd.f32 %v8415, %v8416
  %v8418 = vsel %vm90, %v8191, 0.0
  %v8419 = vadd.f32 %v8417, %v8418
  %v8420 = vsel %vm90, %v8196, 0.0
  %v8421 = vadd.f32 %v8419, %v8420
  %v8422 = vsel %vm90, %v8201, 0.0
  %v8423 = vadd.f32 %v8421, %v8422
  %v8424 = vsel %vm90, %v8206, 0.0
  %v8425 = vadd.f32 %v8423, %v8424
  %v8426 = vsel %vm90, %v8211, 0.0
  %v8427 = vadd.f32 %v8425, %v8426
  %v8428 = vsel %vm90, %v8216, 0.0
  %v8429 = vadd.f32 %v8427, %v8428
  %v8430 = vsel %vm90, %v8221, 0.0
  %v8431 = vadd.f32 %v8429, %v8430
  %v8432 = vsel %vm90, %v8226, 0.0
  %v8433 = vadd.f32 %v8431, %v8432
  %v8434 = vsel %vm90, %v8231, 0.0
  %v8435 = vadd.f32 %v8433, %v8434
  %v8436 = vsel %vm90, %v8236, 0.0
  %v8437 = vadd.f32 %v8435, %v8436
  %v8438 = vsel %vm90, %v8241, 0.0
  %v8439 = vadd.f32 %v8437, %v8438
  %v8440 = vsel %vm90, %v8246, 0.0
  %v8441 = vadd.f32 %v8439, %v8440
  %v8442 = vsel %vm90, %v8251, 0.0
  %v8443 = vadd.f32 %v8441, %v8442
  %v8444 = vsel %vm90, %v8256, 0.0
  %v8445 = vadd.f32 %v8443, %v8444
  %v8446 = vsel %vm90, %v8261, 0.0
  %v8447 = vadd.f32 %v8445, %v8446
  %v8448 = vsel %vm90, %v8266, 0.0
  %v8449 = vadd.f32 %v8447, %v8448
  %v8450 = vsel %vm90, %v8271, 0.0
  %v8451 = vadd.f32 %v8449, %v8450
  %v8452 = vsel %vm90, %v8276, 0.0
  %v8453 = vadd.f32 %v8451, %v8452
  %v8454 = vsel %vm90, %v8281, 0.0
  %v8455 = vadd.f32 %v8453, %v8454
  %v8456 = vsel %vm90, %v8286, 0.0
  %v8457 = vadd.f32 %v8455, %v8456
  %v8458 = vsel %vm90, %v8291, 0.0
  %v8459 = vadd.f32 %v8457, %v8458
  %v8460 = vsel %vm90, %v8296, 0.0
  %v8461 = vadd.f32 %v8459, %v8460
  %v8462 = vsel %vm90, %v8301, 0.0
  %v8463 = vadd.f32 %v8461, %v8462
  %v8464 = vsel %vm90, %v8306, 0.0
  %v8465 = vadd.f32 %v8463, %v8464
  %v8466 = vsel %vm90, %v8311, 0.0
  %v8467 = vadd.f32 %v8465, %v8466
  %v8468 = vsel %vm90, %v8316, 0.0
  %v8469 = vadd.f32 %v8467, %v8468
  %v8470 = vsel %vm90, %v8321, 0.0
  %v8471 = vadd.f32 %v8469, %v8470
  %v8472 = vsel %vm90, %v8326, 0.0
  %v8473 = vadd.f32 %v8471, %v8472
  %v8474 = vsel %vm90, %v8331, 0.0
  %v8475 = vadd.f32 %v8473, %v8474
  %v8476 = vsel %vm90, %v8336, 0.0
  %v8477 = vadd.f32 %v8475, %v8476
  %v8478 = vsel %vm90, %v8341, 0.0
  %v8479 = vadd.f32 %v8477, %v8478
  %v8480 = vsel %vm90, %v8346, 0.0
  %v8481 = vadd.f32 %v8479, %v8480
  %v8482 = vsel %vm90, %v8351, 0.0
  %v8483 = vadd.f32 %v8481, %v8482
  %v8484 = vsel %vm90, %v8356, 0.0
  %v8485 = vadd.f32 %v8483, %v8484
  %v8486 = vrot.slane %v8485, 4
  %v8487 = vadd.f32 %v8485, %v8486
  %v8488 = vrot.slane %v8487, 2
  %v8489 = vadd.f32 %v8487, %v8488
  %v8490 = vrot.slane %v8489, 1
  %v8491 = vadd.f32 %v8489, %v8490
  %v8492 = vmul.f32 %v8491, %v4099
  %v8493 = vsub.f32 %v8041, %v8492
  %v8494 = vsub.f32 %v8046, %v8492
  %v8495 = vsub.f32 %v8051, %v8492
  %v8496 = vsub.f32 %v8056, %v8492
  %v8497 = vsub.f32 %v8061, %v8492
  %v8498 = vsub.f32 %v8066, %v8492
  %v8499 = vsub.f32 %v8071, %v8492
  %v8500 = vsub.f32 %v8076, %v8492
  %v8501 = vsub.f32 %v8081, %v8492
  %v8502 = vsub.f32 %v8086, %v8492
  %v8503 = vsub.f32 %v8091, %v8492
  %v8504 = vsub.f32 %v8096, %v8492
  %v8505 = vsub.f32 %v8101, %v8492
  %v8506 = vsub.f32 %v8106, %v8492
  %v8507 = vsub.f32 %v8111, %v8492
  %v8508 = vsub.f32 %v8116, %v8492
  %v8509 = vsub.f32 %v8121, %v8492
  %v8510 = vsub.f32 %v8126, %v8492
  %v8511 = vsub.f32 %v8131, %v8492
  %v8512 = vsub.f32 %v8136, %v8492
  %v8513 = vsub.f32 %v8141, %v8492
  %v8514 = vsub.f32 %v8146, %v8492
  %v8515 = vsub.f32 %v8151, %v8492
  %v8516 = vsub.f32 %v8156, %v8492
  %v8517 = vsub.f32 %v8161, %v8492
  %v8518 = vsub.f32 %v8166, %v8492
  %v8519 = vsub.f32 %v8171, %v8492
  %v8520 = vsub.f32 %v8176, %v8492
  %v8521 = vsub.f32 %v8181, %v8492
  %v8522 = vsub.f32 %v8186, %v8492
  %v8523 = vsub.f32 %v8191, %v8492
  %v8524 = vsub.f32 %v8196, %v8492
  %v8525 = vsub.f32 %v8201, %v8492
  %v8526 = vsub.f32 %v8206, %v8492
  %v8527 = vsub.f32 %v8211, %v8492
  %v8528 = vsub.f32 %v8216, %v8492
  %v8529 = vsub.f32 %v8221, %v8492
  %v8530 = vsub.f32 %v8226, %v8492
  %v8531 = vsub.f32 %v8231, %v8492
  %v8532 = vsub.f32 %v8236, %v8492
  %v8533 = vsub.f32 %v8241, %v8492
  %v8534 = vsub.f32 %v8246, %v8492
  %v8535 = vsub.f32 %v8251, %v8492
  %v8536 = vsub.f32 %v8256, %v8492
  %v8537 = vsub.f32 %v8261, %v8492
  %v8538 = vsub.f32 %v8266, %v8492
  %v8539 = vsub.f32 %v8271, %v8492
  %v8540 = vsub.f32 %v8276, %v8492
  %v8541 = vsub.f32 %v8281, %v8492
  %v8542 = vsub.f32 %v8286, %v8492
  %v8543 = vsub.f32 %v8291, %v8492
  %v8544 = vsub.f32 %v8296, %v8492
  %v8545 = vsub.f32 %v8301, %v8492
  %v8546 = vsub.f32 %v8306, %v8492
  %v8547 = vsub.f32 %v8311, %v8492
  %v8548 = vsub.f32 %v8316, %v8492
  %v8549 = vsub.f32 %v8321, %v8492
  %v8550 = vsub.f32 %v8326, %v8492
  %v8551 = vsub.f32 %v8331, %v8492
  %v8552 = vsub.f32 %v8336, %v8492
  %v8553 = vsub.f32 %v8341, %v8492
  %v8554 = vsub.f32 %v8346, %v8492
  %v8555 = vsub.f32 %v8351, %v8492
  %v8556 = vsub.f32 %v8356, %v8492
  %v8557 = vmul.f32 %v8493, %v8493
  %v8558 = vmul.f32 %v8494, %v8494
  %v8559 = vmul.f32 %v8495, %v8495
  %v8560 = vmul.f32 %v8496, %v8496
  %v8561 = vmul.f32 %v8497, %v8497
  %v8562 = vmul.f32 %v8498, %v8498
  %v8563 = vmul.f32 %v8499, %v8499
  %v8564 = vmul.f32 %v8500, %v8500
  %v8565 = vmul.f32 %v8501, %v8501
  %v8566 = vmul.f32 %v8502, %v8502
  %v8567 = vmul.f32 %v8503, %v8503
  %v8568 = vmul.f32 %v8504, %v8504
  %v8569 = vmul.f32 %v8505, %v8505
  %v8570 = vmul.f32 %v8506, %v8506
  %v8571 = vmul.f32 %v8507, %v8507
  %v8572 = vmul.f32 %v8508, %v8508
  %v8573 = vmul.f32 %v8509, %v8509
  %v8574 = vmul.f32 %v8510, %v8510
  %v8575 = vmul.f32 %v8511, %v8511
  %v8576 = vmul.f32 %v8512, %v8512
  %v8577 = vmul.f32 %v8513, %v8513
  %v8578 = vmul.f32 %v8514, %v8514
  %v8579 = vmul.f32 %v8515, %v8515
  %v8580 = vmul.f32 %v8516, %v8516
  %v8581 = vmul.f32 %v8517, %v8517
  %v8582 = vmul.f32 %v8518, %v8518
  %v8583 = vmul.f32 %v8519, %v8519
  %v8584 = vmul.f32 %v8520, %v8520
  %v8585 = vmul.f32 %v8521, %v8521
  %v8586 = vmul.f32 %v8522, %v8522
  %v8587 = vmul.f32 %v8523, %v8523
  %v8588 = vmul.f32 %v8524, %v8524
  %v8589 = vmul.f32 %v8525, %v8525
  %v8590 = vmul.f32 %v8526, %v8526
  %v8591 = vmul.f32 %v8527, %v8527
  %v8592 = vmul.f32 %v8528, %v8528
  %v8593 = vmul.f32 %v8529, %v8529
  %v8594 = vmul.f32 %v8530, %v8530
  %v8595 = vmul.f32 %v8531, %v8531
  %v8596 = vmul.f32 %v8532, %v8532
  %v8597 = vmul.f32 %v8533, %v8533
  %v8598 = vmul.f32 %v8534, %v8534
  %v8599 = vmul.f32 %v8535, %v8535
  %v8600 = vmul.f32 %v8536, %v8536
  %v8601 = vmul.f32 %v8537, %v8537
  %v8602 = vmul.f32 %v8538, %v8538
  %v8603 = vmul.f32 %v8539, %v8539
  %v8604 = vmul.f32 %v8540, %v8540
  %v8605 = vmul.f32 %v8541, %v8541
  %v8606 = vmul.f32 %v8542, %v8542
  %v8607 = vmul.f32 %v8543, %v8543
  %v8608 = vmul.f32 %v8544, %v8544
  %v8609 = vmul.f32 %v8545, %v8545
  %v8610 = vmul.f32 %v8546, %v8546
  %v8611 = vmul.f32 %v8547, %v8547
  %v8612 = vmul.f32 %v8548, %v8548
  %v8613 = vmul.f32 %v8549, %v8549
  %v8614 = vmul.f32 %v8550, %v8550
  %v8615 = vmul.f32 %v8551, %v8551
  %v8616 = vmul.f32 %v8552, %v8552
  %v8617 = vmul.f32 %v8553, %v8553
  %v8618 = vmul.f32 %v8554, %v8554
  %v8619 = vmul.f32 %v8555, %v8555
  %v8620 = vmul.f32 %v8556, %v8556
  %v8621 = vsel %vm90, %v8557, 0.0
  %v8622 = vsel %vm90, %v8558, 0.0
  %v8623 = vadd.f32 %v8621, %v8622
  %v8624 = vsel %vm90, %v8559, 0.0
  %v8625 = vadd.f32 %v8623, %v8624
  %v8626 = vsel %vm90, %v8560, 0.0
  %v8627 = vadd.f32 %v8625, %v8626
  %v8628 = vsel %vm90, %v8561, 0.0
  %v8629 = vadd.f32 %v8627, %v8628
  %v8630 = vsel %vm90, %v8562, 0.0
  %v8631 = vadd.f32 %v8629, %v8630
  %v8632 = vsel %vm90, %v8563, 0.0
  %v8633 = vadd.f32 %v8631, %v8632
  %v8634 = vsel %vm90, %v8564, 0.0
  %v8635 = vadd.f32 %v8633, %v8634
  %v8636 = vsel %vm90, %v8565, 0.0
  %v8637 = vadd.f32 %v8635, %v8636
  %v8638 = vsel %vm90, %v8566, 0.0
  %v8639 = vadd.f32 %v8637, %v8638
  %v8640 = vsel %vm90, %v8567, 0.0
  %v8641 = vadd.f32 %v8639, %v8640
  %v8642 = vsel %vm90, %v8568, 0.0
  %v8643 = vadd.f32 %v8641, %v8642
  %v8644 = vsel %vm90, %v8569, 0.0
  %v8645 = vadd.f32 %v8643, %v8644
  %v8646 = vsel %vm90, %v8570, 0.0
  %v8647 = vadd.f32 %v8645, %v8646
  %v8648 = vsel %vm90, %v8571, 0.0
  %v8649 = vadd.f32 %v8647, %v8648
  %v8650 = vsel %vm90, %v8572, 0.0
  %v8651 = vadd.f32 %v8649, %v8650
  %v8652 = vsel %vm90, %v8573, 0.0
  %v8653 = vadd.f32 %v8651, %v8652
  %v8654 = vsel %vm90, %v8574, 0.0
  %v8655 = vadd.f32 %v8653, %v8654
  %v8656 = vsel %vm90, %v8575, 0.0
  %v8657 = vadd.f32 %v8655, %v8656
  %v8658 = vsel %vm90, %v8576, 0.0
  %v8659 = vadd.f32 %v8657, %v8658
  %v8660 = vsel %vm90, %v8577, 0.0
  %v8661 = vadd.f32 %v8659, %v8660
  %v8662 = vsel %vm90, %v8578, 0.0
  %v8663 = vadd.f32 %v8661, %v8662
  %v8664 = vsel %vm90, %v8579, 0.0
  %v8665 = vadd.f32 %v8663, %v8664
  %v8666 = vsel %vm90, %v8580, 0.0
  %v8667 = vadd.f32 %v8665, %v8666
  %v8668 = vsel %vm90, %v8581, 0.0
  %v8669 = vadd.f32 %v8667, %v8668
  %v8670 = vsel %vm90, %v8582, 0.0
  %v8671 = vadd.f32 %v8669, %v8670
  %v8672 = vsel %vm90, %v8583, 0.0
  %v8673 = vadd.f32 %v8671, %v8672
  %v8674 = vsel %vm90, %v8584, 0.0
  %v8675 = vadd.f32 %v8673, %v8674
  %v8676 = vsel %vm90, %v8585, 0.0
  %v8677 = vadd.f32 %v8675, %v8676
  %v8678 = vsel %vm90, %v8586, 0.0
  %v8679 = vadd.f32 %v8677, %v8678
  %v8680 = vsel %vm90, %v8587, 0.0
  %v8681 = vadd.f32 %v8679, %v8680
  %v8682 = vsel %vm90, %v8588, 0.0
  %v8683 = vadd.f32 %v8681, %v8682
  %v8684 = vsel %vm90, %v8589, 0.0
  %v8685 = vadd.f32 %v8683, %v8684
  %v8686 = vsel %vm90, %v8590, 0.0
  %v8687 = vadd.f32 %v8685, %v8686
  %v8688 = vsel %vm90, %v8591, 0.0
  %v8689 = vadd.f32 %v8687, %v8688
  %v8690 = vsel %vm90, %v8592, 0.0
  %v8691 = vadd.f32 %v8689, %v8690
  %v8692 = vsel %vm90, %v8593, 0.0
  %v8693 = vadd.f32 %v8691, %v8692
  %v8694 = vsel %vm90, %v8594, 0.0
  %v8695 = vadd.f32 %v8693, %v8694
  %v8696 = vsel %vm90, %v8595, 0.0
  %v8697 = vadd.f32 %v8695, %v8696
  %v8698 = vsel %vm90, %v8596, 0.0
  %v8699 = vadd.f32 %v8697, %v8698
  %v8700 = vsel %vm90, %v8597, 0.0
  %v8701 = vadd.f32 %v8699, %v8700
  %v8702 = vsel %vm90, %v8598, 0.0
  %v8703 = vadd.f32 %v8701, %v8702
  %v8704 = vsel %vm90, %v8599, 0.0
  %v8705 = vadd.f32 %v8703, %v8704
  %v8706 = vsel %vm90, %v8600, 0.0
  %v8707 = vadd.f32 %v8705, %v8706
  %v8708 = vsel %vm90, %v8601, 0.0
  %v8709 = vadd.f32 %v8707, %v8708
  %v8710 = vsel %vm90, %v8602, 0.0
  %v8711 = vadd.f32 %v8709, %v8710
  %v8712 = vsel %vm90, %v8603, 0.0
  %v8713 = vadd.f32 %v8711, %v8712
  %v8714 = vsel %vm90, %v8604, 0.0
  %v8715 = vadd.f32 %v8713, %v8714
  %v8716 = vsel %vm90, %v8605, 0.0
  %v8717 = vadd.f32 %v8715, %v8716
  %v8718 = vsel %vm90, %v8606, 0.0
  %v8719 = vadd.f32 %v8717, %v8718
  %v8720 = vsel %vm90, %v8607, 0.0
  %v8721 = vadd.f32 %v8719, %v8720
  %v8722 = vsel %vm90, %v8608, 0.0
  %v8723 = vadd.f32 %v8721, %v8722
  %v8724 = vsel %vm90, %v8609, 0.0
  %v8725 = vadd.f32 %v8723, %v8724
  %v8726 = vsel %vm90, %v8610, 0.0
  %v8727 = vadd.f32 %v8725, %v8726
  %v8728 = vsel %vm90, %v8611, 0.0
  %v8729 = vadd.f32 %v8727, %v8728
  %v8730 = vsel %vm90, %v8612, 0.0
  %v8731 = vadd.f32 %v8729, %v8730
  %v8732 = vsel %vm90, %v8613, 0.0
  %v8733 = vadd.f32 %v8731, %v8732
  %v8734 = vsel %vm90, %v8614, 0.0
  %v8735 = vadd.f32 %v8733, %v8734
  %v8736 = vsel %vm90, %v8615, 0.0
  %v8737 = vadd.f32 %v8735, %v8736
  %v8738 = vsel %vm90, %v8616, 0.0
  %v8739 = vadd.f32 %v8737, %v8738
  %v8740 = vsel %vm90, %v8617, 0.0
  %v8741 = vadd.f32 %v8739, %v8740
  %v8742 = vsel %vm90, %v8618, 0.0
  %v8743 = vadd.f32 %v8741, %v8742
  %v8744 = vsel %vm90, %v8619, 0.0
  %v8745 = vadd.f32 %v8743, %v8744
  %v8746 = vsel %vm90, %v8620, 0.0
  %v8747 = vadd.f32 %v8745, %v8746
  %v8748 = vrot.slane %v8747, 4
  %v8749 = vadd.f32 %v8747, %v8748
  %v8750 = vrot.slane %v8749, 2
  %v8751 = vadd.f32 %v8749, %v8750
  %v8752 = vrot.slane %v8751, 1
  %v8753 = vadd.f32 %v8751, %v8752
  %v8754 = vmul.f32 %v8753, %v4099
  %v8755 = vld [vmem:[%s5] sm:$0x1]
  %v8756 = vadd.f32 %v8754, 1e-05
  %v8757 = vrsqrt.pop %v8756
  %v8758 = vmul.f32 %v8755, %v8757
  %v8759 = vld [vmem:[%s6] sm:$0x1]
  %v8760 = vmul.f32 %v8492, %v8758
  %v8761 = vsub.f32 %v8759, %v8760
  %v8763 = vlaneseq
  %v8764 = vshrl.u32 %v8763, 7
  %v8765 = vsub.s32 0, %v8764
  %v8766 = vrot.slane %v8758, %v8765
  %v8768 = vmul.f32 %v8041, %v8766
  %v8769 = vmul.f32 %v8046, %v8766
  %v8770 = vmul.f32 %v8051, %v8766
  %v8771 = vmul.f32 %v8056, %v8766
  %v8772 = vmul.f32 %v8061, %v8766
  %v8773 = vmul.f32 %v8066, %v8766
  %v8774 = vmul.f32 %v8071, %v8766
  %v8775 = vmul.f32 %v8076, %v8766
  %v8776 = vmul.f32 %v8081, %v8766
  %v8777 = vmul.f32 %v8086, %v8766
  %v8778 = vmul.f32 %v8091, %v8766
  %v8779 = vmul.f32 %v8096, %v8766
  %v8780 = vmul.f32 %v8101, %v8766
  %v8781 = vmul.f32 %v8106, %v8766
  %v8782 = vmul.f32 %v8111, %v8766
  %v8783 = vmul.f32 %v8116, %v8766
  %v8784 = vmul.f32 %v8121, %v8766
  %v8785 = vmul.f32 %v8126, %v8766
  %v8786 = vmul.f32 %v8131, %v8766
  %v8787 = vmul.f32 %v8136, %v8766
  %v8788 = vmul.f32 %v8141, %v8766
  %v8789 = vmul.f32 %v8146, %v8766
  %v8790 = vmul.f32 %v8151, %v8766
  %v8791 = vmul.f32 %v8156, %v8766
  %v8792 = vmul.f32 %v8161, %v8766
  %v8793 = vmul.f32 %v8166, %v8766
  %v8794 = vmul.f32 %v8171, %v8766
  %v8795 = vmul.f32 %v8176, %v8766
  %v8796 = vmul.f32 %v8181, %v8766
  %v8797 = vmul.f32 %v8186, %v8766
  %v8798 = vmul.f32 %v8191, %v8766
  %v8799 = vmul.f32 %v8196, %v8766
  %v8800 = vmul.f32 %v8201, %v8766
  %v8801 = vmul.f32 %v8206, %v8766
  %v8802 = vmul.f32 %v8211, %v8766
  %v8803 = vmul.f32 %v8216, %v8766
  %v8804 = vmul.f32 %v8221, %v8766
  %v8805 = vmul.f32 %v8226, %v8766
  %v8806 = vmul.f32 %v8231, %v8766
  %v8807 = vmul.f32 %v8236, %v8766
  %v8808 = vmul.f32 %v8241, %v8766
  %v8809 = vmul.f32 %v8246, %v8766
  %v8810 = vmul.f32 %v8251, %v8766
  %v8811 = vmul.f32 %v8256, %v8766
  %v8812 = vmul.f32 %v8261, %v8766
  %v8813 = vmul.f32 %v8266, %v8766
  %v8814 = vmul.f32 %v8271, %v8766
  %v8815 = vmul.f32 %v8276, %v8766
  %v8816 = vmul.f32 %v8281, %v8766
  %v8817 = vmul.f32 %v8286, %v8766
  %v8818 = vmul.f32 %v8291, %v8766
  %v8819 = vmul.f32 %v8296, %v8766
  %v8820 = vmul.f32 %v8301, %v8766
  %v8821 = vmul.f32 %v8306, %v8766
  %v8822 = vmul.f32 %v8311, %v8766
  %v8823 = vmul.f32 %v8316, %v8766
  %v8824 = vmul.f32 %v8321, %v8766
  %v8825 = vmul.f32 %v8326, %v8766
  %v8826 = vmul.f32 %v8331, %v8766
  %v8827 = vmul.f32 %v8336, %v8766
  %v8828 = vmul.f32 %v8341, %v8766
  %v8829 = vmul.f32 %v8346, %v8766
  %v8830 = vmul.f32 %v8351, %v8766
  %v8831 = vmul.f32 %v8356, %v8766
  %v8833 = vlaneseq
  %v8834 = vshrl.u32 %v8833, 7
  %v8835 = vsub.s32 0, %v8834
  %v8836 = vrot.slane %v8761, %v8835
  %v8838 = vadd.f32 %v8768, %v8836
  %v8839 = vadd.f32 %v8769, %v8836
  %v8840 = vadd.f32 %v8770, %v8836
  %v8841 = vadd.f32 %v8771, %v8836
  %v8842 = vadd.f32 %v8772, %v8836
  %v8843 = vadd.f32 %v8773, %v8836
  %v8844 = vadd.f32 %v8774, %v8836
  %v8845 = vadd.f32 %v8775, %v8836
  %v8846 = vadd.f32 %v8776, %v8836
  %v8847 = vadd.f32 %v8777, %v8836
  %v8848 = vadd.f32 %v8778, %v8836
  %v8849 = vadd.f32 %v8779, %v8836
  %v8850 = vadd.f32 %v8780, %v8836
  %v8851 = vadd.f32 %v8781, %v8836
  %v8852 = vadd.f32 %v8782, %v8836
  %v8853 = vadd.f32 %v8783, %v8836
  %v8854 = vadd.f32 %v8784, %v8836
  %v8855 = vadd.f32 %v8785, %v8836
  %v8856 = vadd.f32 %v8786, %v8836
  %v8857 = vadd.f32 %v8787, %v8836
  %v8858 = vadd.f32 %v8788, %v8836
  %v8859 = vadd.f32 %v8789, %v8836
  %v8860 = vadd.f32 %v8790, %v8836
  %v8861 = vadd.f32 %v8791, %v8836
  %v8862 = vadd.f32 %v8792, %v8836
  %v8863 = vadd.f32 %v8793, %v8836
  %v8864 = vadd.f32 %v8794, %v8836
  %v8865 = vadd.f32 %v8795, %v8836
  %v8866 = vadd.f32 %v8796, %v8836
  %v8867 = vadd.f32 %v8797, %v8836
  %v8868 = vadd.f32 %v8798, %v8836
  %v8869 = vadd.f32 %v8799, %v8836
  %v8870 = vadd.f32 %v8800, %v8836
  %v8871 = vadd.f32 %v8801, %v8836
  %v8872 = vadd.f32 %v8802, %v8836
  %v8873 = vadd.f32 %v8803, %v8836
  %v8874 = vadd.f32 %v8804, %v8836
  %v8875 = vadd.f32 %v8805, %v8836
  %v8876 = vadd.f32 %v8806, %v8836
  %v8877 = vadd.f32 %v8807, %v8836
  %v8878 = vadd.f32 %v8808, %v8836
  %v8879 = vadd.f32 %v8809, %v8836
  %v8880 = vadd.f32 %v8810, %v8836
  %v8881 = vadd.f32 %v8811, %v8836
  %v8882 = vadd.f32 %v8812, %v8836
  %v8883 = vadd.f32 %v8813, %v8836
  %v8884 = vadd.f32 %v8814, %v8836
  %v8885 = vadd.f32 %v8815, %v8836
  %v8886 = vadd.f32 %v8816, %v8836
  %v8887 = vadd.f32 %v8817, %v8836
  %v8888 = vadd.f32 %v8818, %v8836
  %v8889 = vadd.f32 %v8819, %v8836
  %v8890 = vadd.f32 %v8820, %v8836
  %v8891 = vadd.f32 %v8821, %v8836
  %v8892 = vadd.f32 %v8822, %v8836
  %v8893 = vadd.f32 %v8823, %v8836
  %v8894 = vadd.f32 %v8824, %v8836
  %v8895 = vadd.f32 %v8825, %v8836
  %v8896 = vadd.f32 %v8826, %v8836
  %v8897 = vadd.f32 %v8827, %v8836
  %v8898 = vadd.f32 %v8828, %v8836
  %v8899 = vadd.f32 %v8829, %v8836
  %v8900 = vadd.f32 %v8830, %v8836
  %v8901 = vadd.f32 %v8831, %v8836
  %v8902 = vadd.f32 %v8838, %v26
  %v8903 = vadd.f32 %v8839, %v27
  %v8904 = vadd.f32 %v8840, %v28
  %v8905 = vadd.f32 %v8841, %v29
  %v8906 = vadd.f32 %v8842, %v30
  %v8907 = vadd.f32 %v8843, %v31
  %v8908 = vadd.f32 %v8844, %v32
  %v8909 = vadd.f32 %v8845, %v33
  %v8910 = vadd.f32 %v8846, %v34
  %v8911 = vadd.f32 %v8847, %v35
  %v8912 = vadd.f32 %v8848, %v36
  %v8913 = vadd.f32 %v8849, %v37
  %v8914 = vadd.f32 %v8850, %v38
  %v8915 = vadd.f32 %v8851, %v39
  %v8916 = vadd.f32 %v8852, %v40
  %v8917 = vadd.f32 %v8853, %v41
  %v8918 = vadd.f32 %v8854, %v42
  %v8919 = vadd.f32 %v8855, %v43
  %v8920 = vadd.f32 %v8856, %v44
  %v8921 = vadd.f32 %v8857, %v45
  %v8922 = vadd.f32 %v8858, %v46
  %v8923 = vadd.f32 %v8859, %v47
  %v8924 = vadd.f32 %v8860, %v48
  %v8925 = vadd.f32 %v8861, %v49
  %v8926 = vadd.f32 %v8862, %v50
  %v8927 = vadd.f32 %v8863, %v51
  %v8928 = vadd.f32 %v8864, %v52
  %v8929 = vadd.f32 %v8865, %v53
  %v8930 = vadd.f32 %v8866, %v54
  %v8931 = vadd.f32 %v8867, %v55
  %v8932 = vadd.f32 %v8868, %v56
  %v8933 = vadd.f32 %v8869, %v57
  %v8934 = vadd.f32 %v8870, %v58
  %v8935 = vadd.f32 %v8871, %v59
  %v8936 = vadd.f32 %v8872, %v60
  %v8937 = vadd.f32 %v8873, %v61
  %v8938 = vadd.f32 %v8874, %v62
  %v8939 = vadd.f32 %v8875, %v63
  %v8940 = vadd.f32 %v8876, %v64
  %v8941 = vadd.f32 %v8877, %v65
  %v8942 = vadd.f32 %v8878, %v66
  %v8943 = vadd.f32 %v8879, %v67
  %v8944 = vadd.f32 %v8880, %v68
  %v8945 = vadd.f32 %v8881, %v69
  %v8946 = vadd.f32 %v8882, %v70
  %v8947 = vadd.f32 %v8883, %v71
  %v8948 = vadd.f32 %v8884, %v72
  %v8949 = vadd.f32 %v8885, %v73
  %v8950 = vadd.f32 %v8886, %v74
  %v8951 = vadd.f32 %v8887, %v75
  %v8952 = vadd.f32 %v8888, %v76
  %v8953 = vadd.f32 %v8889, %v77
  %v8954 = vadd.f32 %v8890, %v78
  %v8955 = vadd.f32 %v8891, %v79
  %v8956 = vadd.f32 %v8892, %v80
  %v8957 = vadd.f32 %v8893, %v81
  %v8958 = vadd.f32 %v8894, %v82
  %v8959 = vadd.f32 %v8895, %v83
  %v8960 = vadd.f32 %v8896, %v84
  %v8961 = vadd.f32 %v8897, %v85
  %v8962 = vadd.f32 %v8898, %v86
  %v8963 = vadd.f32 %v8899, %v87
  %v8964 = vadd.f32 %v8900, %v88
  %v8965 = vadd.f32 %v8901, %v89
  %v8966 = vmax.f32 %v8902, 0.0
  %v8967 = vmax.f32 %v8903, 0.0
  %v8968 = vmax.f32 %v8904, 0.0
  %v8969 = vmax.f32 %v8905, 0.0
  %v8970 = vmax.f32 %v8906, 0.0
  %v8971 = vmax.f32 %v8907, 0.0
  %v8972 = vmax.f32 %v8908, 0.0
  %v8973 = vmax.f32 %v8909, 0.0
  %v8974 = vmax.f32 %v8910, 0.0
  %v8975 = vmax.f32 %v8911, 0.0
  %v8976 = vmax.f32 %v8912, 0.0
  %v8977 = vmax.f32 %v8913, 0.0
  %v8978 = vmax.f32 %v8914, 0.0
  %v8979 = vmax.f32 %v8915, 0.0
  %v8980 = vmax.f32 %v8916, 0.0
  %v8981 = vmax.f32 %v8917, 0.0
  %v8982 = vmax.f32 %v8918, 0.0
  %v8983 = vmax.f32 %v8919, 0.0
  %v8984 = vmax.f32 %v8920, 0.0
  %v8985 = vmax.f32 %v8921, 0.0
  %v8986 = vmax.f32 %v8922, 0.0
  %v8987 = vmax.f32 %v8923, 0.0
  %v8988 = vmax.f32 %v8924, 0.0
  %v8989 = vmax.f32 %v8925, 0.0
  %v8990 = vmax.f32 %v8926, 0.0
  %v8991 = vmax.f32 %v8927, 0.0
  %v8992 = vmax.f32 %v8928, 0.0
  %v8993 = vmax.f32 %v8929, 0.0
  %v8994 = vmax.f32 %v8930, 0.0
  %v8995 = vmax.f32 %v8931, 0.0
  %v8996 = vmax.f32 %v8932, 0.0
  %v8997 = vmax.f32 %v8933, 0.0
  %v8998 = vmax.f32 %v8934, 0.0
  %v8999 = vmax.f32 %v8935, 0.0
  %v9000 = vmax.f32 %v8936, 0.0
  %v9001 = vmax.f32 %v8937, 0.0
  %v9002 = vmax.f32 %v8938, 0.0
  %v9003 = vmax.f32 %v8939, 0.0
  %v9004 = vmax.f32 %v8940, 0.0
  %v9005 = vmax.f32 %v8941, 0.0
  %v9006 = vmax.f32 %v8942, 0.0
  %v9007 = vmax.f32 %v8943, 0.0
  %v9008 = vmax.f32 %v8944, 0.0
  %v9009 = vmax.f32 %v8945, 0.0
  %v9010 = vmax.f32 %v8946, 0.0
  %v9011 = vmax.f32 %v8947, 0.0
  %v9012 = vmax.f32 %v8948, 0.0
  %v9013 = vmax.f32 %v8949, 0.0
  %v9014 = vmax.f32 %v8950, 0.0
  %v9015 = vmax.f32 %v8951, 0.0
  %v9016 = vmax.f32 %v8952, 0.0
  %v9017 = vmax.f32 %v8953, 0.0
  %v9018 = vmax.f32 %v8954, 0.0
  %v9019 = vmax.f32 %v8955, 0.0
  %v9020 = vmax.f32 %v8956, 0.0
  %v9021 = vmax.f32 %v8957, 0.0
  %v9022 = vmax.f32 %v8958, 0.0
  %v9023 = vmax.f32 %v8959, 0.0
  %v9024 = vmax.f32 %v8960, 0.0
  %v9025 = vmax.f32 %v8961, 0.0
  %v9026 = vmax.f32 %v8962, 0.0
  %v9027 = vmax.f32 %v8963, 0.0
  %v9028 = vmax.f32 %v8964, 0.0
  %v9029 = vmax.f32 %v8965, 0.0
  %9030 = vst.msk [vmem:[%s7] sm:$0xff] %vm90, %v8966
  %9031 = vst.msk [vmem:[%s7 + $0x8] sm:$0xff] %vm90, %v8967
  %9032 = vst.msk [vmem:[%s7 + $0x10] sm:$0xff] %vm90, %v8968
  %9033 = vst.msk [vmem:[%s7 + $0x18] sm:$0xff] %vm90, %v8969
  %9034 = vst.msk [vmem:[%s7 + $0x20] sm:$0xff] %vm90, %v8970
  %9035 = vst.msk [vmem:[%s7 + $0x28] sm:$0xff] %vm90, %v8971
  %9036 = vst.msk [vmem:[%s7 + $0x30] sm:$0xff] %vm90, %v8972
  %9037 = vst.msk [vmem:[%s7 + $0x38] sm:$0xff] %vm90, %v8973
  %9038 = vst.msk [vmem:[%s7 + $0x40] sm:$0xff] %vm90, %v8974
  %9039 = vst.msk [vmem:[%s7 + $0x48] sm:$0xff] %vm90, %v8975
  %9040 = vst.msk [vmem:[%s7 + $0x50] sm:$0xff] %vm90, %v8976
  %9041 = vst.msk [vmem:[%s7 + $0x58] sm:$0xff] %vm90, %v8977
  %9042 = vst.msk [vmem:[%s7 + $0x60] sm:$0xff] %vm90, %v8978
  %9043 = vst.msk [vmem:[%s7 + $0x68] sm:$0xff] %vm90, %v8979
  %9044 = vst.msk [vmem:[%s7 + $0x70] sm:$0xff] %vm90, %v8980
  %9045 = vst.msk [vmem:[%s7 + $0x78] sm:$0xff] %vm90, %v8981
  %9046 = vst.msk [vmem:[%s7 + $0x80] sm:$0xff] %vm90, %v8982
  %9047 = vst.msk [vmem:[%s7 + $0x88] sm:$0xff] %vm90, %v8983
  %9048 = vst.msk [vmem:[%s7 + $0x90] sm:$0xff] %vm90, %v8984
  %9049 = vst.msk [vmem:[%s7 + $0x98] sm:$0xff] %vm90, %v8985
  %9050 = vst.msk [vmem:[%s7 + $0xa0] sm:$0xff] %vm90, %v8986
  %9051 = vst.msk [vmem:[%s7 + $0xa8] sm:$0xff] %vm90, %v8987
  %9052 = vst.msk [vmem:[%s7 + $0xb0] sm:$0xff] %vm90, %v8988
  %9053 = vst.msk [vmem:[%s7 + $0xb8] sm:$0xff] %vm90, %v8989
  %9054 = vst.msk [vmem:[%s7 + $0xc0] sm:$0xff] %vm90, %v8990
  %9055 = vst.msk [vmem:[%s7 + $0xc8] sm:$0xff] %vm90, %v8991
  %9056 = vst.msk [vmem:[%s7 + $0xd0] sm:$0xff] %vm90, %v8992
  %9057 = vst.msk [vmem:[%s7 + $0xd8] sm:$0xff] %vm90, %v8993
  %9058 = vst.msk [vmem:[%s7 + $0xe0] sm:$0xff] %vm90, %v8994
  %9059 = vst.msk [vmem:[%s7 + $0xe8] sm:$0xff] %vm90, %v8995
  %9060 = vst.msk [vmem:[%s7 + $0xf0] sm:$0xff] %vm90, %v8996
  %9061 = vst.msk [vmem:[%s7 + $0xf8] sm:$0xff] %vm90, %v8997
  %9062 = vst.msk [vmem:[%s7 + $0x100] sm:$0xff] %vm90, %v8998
  %9063 = vst.msk [vmem:[%s7 + $0x108] sm:$0xff] %vm90, %v8999
  %9064 = vst.msk [vmem:[%s7 + $0x110] sm:$0xff] %vm90, %v9000
  %9065 = vst.msk [vmem:[%s7 + $0x118] sm:$0xff] %vm90, %v9001
  %9066 = vst.msk [vmem:[%s7 + $0x120] sm:$0xff] %vm90, %v9002
  %9067 = vst.msk [vmem:[%s7 + $0x128] sm:$0xff] %vm90, %v9003
  %9068 = vst.msk [vmem:[%s7 + $0x130] sm:$0xff] %vm90, %v9004
  %9069 = vst.msk [vmem:[%s7 + $0x138] sm:$0xff] %vm90, %v9005
  %9070 = vst.msk [vmem:[%s7 + $0x140] sm:$0xff] %vm90, %v9006
  %9071 = vst.msk [vmem:[%s7 + $0x148] sm:$0xff] %vm90, %v9007
  %9072 = vst.msk [vmem:[%s7 + $0x150] sm:$0xff] %vm90, %v9008
  %9073 = vst.msk [vmem:[%s7 + $0x158] sm:$0xff] %vm90, %v9009
  %9074 = vst.msk [vmem:[%s7 + $0x160] sm:$0xff] %vm90, %v9010
  %9075 = vst.msk [vmem:[%s7 + $0x168] sm:$0xff] %vm90, %v9011
  %9076 = vst.msk [vmem:[%s7 + $0x170] sm:$0xff] %vm90, %v9012
  %9077 = vst.msk [vmem:[%s7 + $0x178] sm:$0xff] %vm90, %v9013
  %9078 = vst.msk [vmem:[%s7 + $0x180] sm:$0xff] %vm90, %v9014
  %9079 = vst.msk [vmem:[%s7 + $0x188] sm:$0xff] %vm90, %v9015
  %9080 = vst.msk [vmem:[%s7 + $0x190] sm:$0xff] %vm90, %v9016
  %9081 = vst.msk [vmem:[%s7 + $0x198] sm:$0xff] %vm90, %v9017
  %9082 = vst.msk [vmem:[%s7 + $0x1a0] sm:$0xff] %vm90, %v9018
  %9083 = vst.msk [vmem:[%s7 + $0x1a8] sm:$0xff] %vm90, %v9019
  %9084 = vst.msk [vmem:[%s7 + $0x1b0] sm:$0xff] %vm90, %v9020
  %9085 = vst.msk [vmem:[%s7 + $0x1b8] sm:$0xff] %vm90, %v9021
  %9086 = vst.msk [vmem:[%s7 + $0x1c0] sm:$0xff] %vm90, %v9022
  %9087 = vst.msk [vmem:[%s7 + $0x1c8] sm:$0xff] %vm90, %v9023
  %9088 = vst.msk [vmem:[%s7 + $0x1d0] sm:$0xff] %vm90, %v9024
  %9089 = vst.msk [vmem:[%s7 + $0x1d8] sm:$0xff] %vm90, %v9025
  %9090 = vst.msk [vmem:[%s7 + $0x1e0] sm:$0xff] %vm90, %v9026
  %9091 = vst.msk [vmem:[%s7 + $0x1e8] sm:$0xff] %vm90, %v9027
  %9092 = vst.msk [vmem:[%s7 + $0x1f0] sm:$0xff] %vm90, %v9028
  %9093 = vst.msk [vmem:[%s7 + $0x1f8] sm:$0xff] %vm90, %v9029
  // Predicated region
  $region30: #{tpu_custom_call.1} parent=0 // pred_check
    _
  $region31: #{tpu_custom_call.1} parent=0 // pred_check_branch
    %9095 = sbr.rel (0) target = $region33
  $region32: #{tpu_custom_call.1} parent=0 // pred_region
    _
  $region33: #{tpu_custom_call.1} parent=0 // pred_fallthru
    _
  // Predicated region
  $region34: #{tpu_custom_call.1} parent=0 // pred_check
    _
  $region35: #{tpu_custom_call.1} parent=0 // pred_check_branch
    %9097 = sbr.rel (0) target = $region37
  $region36: #{tpu_custom_call.1} parent=0 // pred_region
    _
  $region37: #{tpu_custom_call.1} parent=0 // pred_fallthru
    _

</llo_original>
